<compile_context>
chip_gen: v7x
topology: tpu7x:2x2x1
jax: 0.10.0
libtpu: 0.0.40
codegen_flags: <defaults>
</compile_context>

<pallas_src>
import functools

import jax
import jax.numpy as jnp
from jax.experimental import pallas as pl
from jax.experimental.pallas import tpu as pltpu

# real (unpadded) channel counts of the synthetic VGG feature extractor
CIN, C1, C2 = 3, 16, 32
# hardware-friendly padded widths (padded channels/taps are exact zeros)
K1_PAD = 32       # conv1 contraction: 9 taps * 3 channels = 27 -> 32
C1_PAD = 128      # conv1 outputs 16 -> 128 (lane dense)
C2_PAD = 128      # conv2 outputs 32 -> 128 (lane dense)


def _round_up(x, m):
    return (x + m - 1) // m * m


def _vmem_limit_bytes():
    """~75% of physical VMEM: ~96 MiB on v5e/v6e (128 MiB), ~48 MiB on v7x."""
    try:
        cap = pltpu.get_tpu_info().vmem_capacity_bytes
        return int(min(max(cap * 3 // 4, 32 * 1024 * 1024), 112 * 1024 * 1024))
    except Exception:
        return 48 * 1024 * 1024   # safe on every generation


def _pick_row_tile(H, Wp, vmem_limit):
    """Largest divisor R of H whose per-tile VMEM footprint fits the budget."""
    budget = max(vmem_limit // 3, 2 * 1024 * 1024)
    for R in range(H, 0, -1):
        if H % R:
            continue
        m_tile = (R + 4) * Wp
        m_out = R * Wp
        est = (m_tile * 3 * C1_PAD * 2        # packed bf16 scratch (conv2 LHS)
               + m_tile * C1_PAD * 8          # conv1 acc + mask (f32 values)
               + 3 * m_out * C2_PAD * 4       # h2_true, h2_pred, sq (f32)
               + m_tile * K1_PAD * 2)         # conv1 LHS slice (bf16)
        if est <= budget:
            return R
    return 1


# ---------------------------------------------------------------------------
# Fused kernel: conv3x3+ReLU -> conv3x3+ReLU for a (y_true, y_pred) pair on a
# row tile, plus the partial MSE sum — everything stays in VMEM.
# ---------------------------------------------------------------------------

def _pair_feature_mse_kernel(H, W, R, Wp, xt_ref, xp_ref, w1_ref, b1_ref,
                             w2_ref, b2_ref, o_ref, packed_ref):
    """One grid step = one image pair x one row tile.

    The image lives in a zero-padded frame of (H+4) x Wp positions (2-wide
    halo + width-alignment padding), flattened row-major.  A row tile covers
    R real rows; conv1 is evaluated on the R+4 surrounding frame rows so
    conv2's 3x3 support stays local to the tile.
    """
    m_tile = (R + 4) * Wp            # conv1 positions in this tile
    m_out = R * Wp                   # conv2 output positions in this tile
    t = pl.program_id(1)
    row0 = t * R                     # first frame row of this tile
    row_start = pl.multiple_of(row0 * Wp, 16)

    # Interior mask (1.0 inside the true HxW image): reproduces the zero
    # padding conv2 must see.  Built in-kernel from iotas (no DMA'd masks,
    # no integer div/mod).
    r3 = jax.lax.broadcasted_iota(jnp.int32, (R + 4, Wp, C1_PAD), 0) + row0
    c3 = jax.lax.broadcasted_iota(jnp.int32, (R + 4, Wp, C1_PAD), 1)
    h1_mask = ((r3 >= 2) & (r3 <= H + 1) & (c3 >= 2) & (c3 <= W + 1))
    h1_mask = h1_mask.astype(jnp.float32).reshape(m_tile, C1_PAD)

    # Column mask for conv2 outputs (all tile output rows are real rows).
    oc3 = jax.lax.broadcasted_iota(jnp.int32, (R, Wp, C2_PAD), 1)
    out_mask = ((oc3 >= 2) & (oc3 <= W + 1)).astype(jnp.float32)
    out_mask = out_mask.reshape(m_out, C2_PAD)

    def features(x_ref):
        # conv1: all 9 taps folded into the contraction (im2col, K=32) -> one
        # MXU matmul instead of nine K=8 matmuls.
        lhs1 = x_ref[0, pl.ds(row_start, m_tile), :]            # [m_tile, 32]
        acc1 = jnp.dot(lhs1, w1_ref[...], preferred_element_type=jnp.float32)
        h1 = jnp.maximum(acc1 + b1_ref[...], 0.0) * h1_mask     # f32 [m,128]

        # Pack the kw = -1 / 0 / +1 neighbours along lanes so conv2 runs with
        # K = 3*128 = 384.  pltpu.roll's wrap-around rows (p=0 / p=m_tile-1)
        # are never read by the conv2 slices below.
        packed_ref[:, 0:C1_PAD] = (
            pltpu.roll(h1, shift=1, axis=0).astype(jnp.bfloat16))
        packed_ref[:, C1_PAD:2 * C1_PAD] = h1.astype(jnp.bfloat16)
        packed_ref[:, 2 * C1_PAD:3 * C1_PAD] = (
            pltpu.roll(h1, shift=m_tile - 1, axis=0).astype(jnp.bfloat16))

        # conv2: one K=384 matmul per kh row tap; partials summed as values
        # (no per-tap scratch read-modify-write), result written once.
        acc2 = None
        for kh in range(3):
            lhs2 = packed_ref[(kh + 1) * Wp:(kh + 1) * Wp + m_out, :]
            part = jnp.dot(lhs2, w2_ref[kh],
                           preferred_element_type=jnp.float32)
            acc2 = part if acc2 is None else acc2 + part
        return jnp.maximum(acc2 + b2_ref[...], 0.0)             # f32 [m,128]

    f_true = features(xt_ref)
    f_pred = features(xp_ref)
    diff = f_true - f_pred
    sq = diff * diff * out_mask
    o_ref[0] = jnp.sum(jnp.sum(sq, axis=1, keepdims=True), axis=0,
                       keepdims=True)


# ---------------------------------------------------------------------------
# Wrapper-side packing + the PerceptualLoss forward
# ---------------------------------------------------------------------------

def _im2col_frame(x_nchw, Hp, Wp):
    """NCHW image -> flattened zero-haloed frame im2col: [B, Hp*Wp, 32] bf16."""
    B, cin, H, W = x_nchw.shape
    x = jnp.transpose(x_nchw, (0, 2, 3, 1))                         # NHWC
    x = jnp.pad(x, ((0, 0), (2, Hp - H - 2), (2, Wp - W - 2), (0, 0)))
    xg = jnp.pad(x, ((0, 0), (1, 1), (1, 1), (0, 0)))               # tap ring
    taps = [xg[:, kh:kh + Hp, kw:kw + Wp, :]
            for kh in range(3) for kw in range(3)]
    x9 = jnp.concatenate(taps, axis=-1)                             # 9*cin ch
    x9 = jnp.pad(x9, ((0, 0), (0, 0), (0, 0), (0, K1_PAD - 9 * cin)))
    return x9.reshape(B, Hp * Wp, K1_PAD).astype(jnp.bfloat16)


def make_vgg_params(key):
    """Deterministic synthetic 2x(conv3x3+ReLU) backbone, raw f32 weights."""
    k1, k2, k3, k4 = jax.random.split(key, 4)
    w1 = jax.random.normal(k1, (3, 3, CIN, C1), jnp.float32) * 0.1
    b1 = jax.random.normal(k2, (C1,), jnp.float32) * 0.1
    w2 = jax.random.normal(k3, (3, 3, C1, C2), jnp.float32) * 0.1
    b2 = jax.random.normal(k4, (C2,), jnp.float32) * 0.1
    return w1, b1, w2, b2


def pack_vgg_params(w1, b1, w2, b2):
    """Pad/reorder weights to the kernel's lane-dense packed layout."""
    w1p = jnp.zeros((K1_PAD, C1_PAD), jnp.float32)
    w1p = w1p.at[:9 * CIN, :C1].set(w1.reshape(9 * CIN, C1))   # (kh,kw,cin)
    b1p = jnp.zeros((1, C1_PAD), jnp.float32).at[0, :C1].set(b1)
    w2p = jnp.zeros((3, 3, C1_PAD, C2_PAD), jnp.float32)
    w2p = w2p.at[:, :, :C1, :C2].set(w2)
    b2p = jnp.zeros((1, C2_PAD), jnp.float32).at[0, :C2].set(b2)
    return (w1p.astype(jnp.bfloat16),
            b1p,
            w2p.reshape(3, 3 * C1_PAD, C2_PAD).astype(jnp.bfloat16),
            b2p)


def perceptual_loss(y_true, y_pred, packed_params):
    """mse_loss(vgg(y_true), vgg(y_pred)) with a single fused Pallas call."""
    w1p, b1p, w2p, b2p = packed_params
    B, cin, H, W = y_true.shape
    assert cin == CIN and y_pred.shape == y_true.shape
    Hp = H + 4
    Wp = _round_up(W + 4, 16)       # sublane-aligned frame width
    m_in = Hp * Wp

    xt = _im2col_frame(y_true, Hp, Wp)
    xp = _im2col_frame(y_pred, Hp, Wp)

    vmem_limit = _vmem_limit_bytes()
    R = _pick_row_tile(H, Wp, vmem_limit)
    T = H // R
    m_tile = (R + 4) * Wp
    m_out = R * Wp

    flops = 4 * B * (T * m_tile * K1_PAD * C1_PAD
                     + H * Wp * 9 * C1_PAD * C2_PAD)
    bytes_accessed = ((xt.size + xp.size) * 2 + w1p.size * 2 + w2p.size * 2
                      + (b1p.size + b2p.size) * 4 + B * T * 4)

    kernel = functools.partial(_pair_feature_mse_kernel, H, W, R, Wp)
    partials = pl.pallas_call(
        kernel,
        out_shape=jax.ShapeDtypeStruct((B * T, 1, 1), jnp.float32),
        grid=(B, T),
        in_specs=[
            pl.BlockSpec((1, m_in, K1_PAD), lambda b, t: (b, 0, 0)),
            pl.BlockSpec((1, m_in, K1_PAD), lambda b, t: (b, 0, 0)),
            pl.BlockSpec((K1_PAD, C1_PAD), lambda b, t: (0, 0)),
            pl.BlockSpec((1, C1_PAD), lambda b, t: (0, 0)),
            pl.BlockSpec((3, 3 * C1_PAD, C2_PAD), lambda b, t: (0, 0, 0)),
            pl.BlockSpec((1, C2_PAD), lambda b, t: (0, 0)),
        ],
        out_specs=pl.BlockSpec((1, 1, 1), lambda b, t: (b * T + t, 0, 0)),
        scratch_shapes=[pltpu.VMEM((m_tile, 3 * C1_PAD), jnp.bfloat16)],
        compiler_params=pltpu.CompilerParams(
            dimension_semantics=("parallel", "parallel"),
            vmem_limit_bytes=vmem_limit),
        cost_estimate=pl.CostEstimate(flops=int(flops), transcendentals=0,
                                      bytes_accessed=int(bytes_accessed)),
    )(xt, xp, w1p, b1p, w2p, b2p)

    # Per-(image, tile) partials reduced in JAX; mean over real feature elems.
    return jnp.sum(partials) / (B * H * W * C2)


# ---------------------------------------------------------------------------
# Pure-JAX reference (bf16-matched) for the self-check
# ---------------------------------------------------------------------------

def _reference_loss(y_true, y_pred, raw_params):
    w1, b1, w2, b2 = raw_params

    def bf(x):
        return x.astype(jnp.bfloat16).astype(jnp.float32)

    def feats(x):
        x = bf(jnp.transpose(x, (0, 2, 3, 1)))
        h = jax.lax.conv_general_dilated(
            x, bf(w1), (1, 1), "SAME",
            dimension_numbers=("NHWC", "HWIO", "NHWC"),
            precision=jax.lax.Precision.HIGHEST) + b1
        h = bf(jnp.maximum(h, 0.0))
        h = jax.lax.conv_general_dilated(
            h, bf(w2), (1, 1), "SAME",
            dimension_numbers=("NHWC", "HWIO", "NHWC"),
            precision=jax.lax.Precision.HIGHEST) + b2
        return jnp.maximum(h, 0.0)

    ft, fp = feats(y_true), feats(y_pred)
    return jnp.mean((ft - fp) ** 2)


if __name__ == "__main__":
    key = jax.random.PRNGKey(0)
    kp, kt, kq = jax.random.split(key, 3)
    raw_params = make_vgg_params(kp)
    packed_params = pack_vgg_params(*raw_params)

    y_true = jax.random.normal(kt, (2, 3, 16, 16), jnp.float32)
    y_pred = jax.random.normal(kq, (2, 3, 16, 16), jnp.float32)

    loss = jax.jit(perceptual_loss)(y_true, y_pred, packed_params)
    jax.block_until_ready(loss)

    ref = _reference_loss(y_true, y_pred, raw_params)
    rel_err = abs(float(loss) - float(ref)) / max(abs(float(ref)), 1e-8)
    assert rel_err < 5e-2, f"mismatch: kernel={float(loss)} ref={float(ref)}"
    print("KERNEL_OK")
</pallas_src>

<mosaic_0001>
module attributes {stable_mosaic.version = 11 : i64} {
  func.func @_pair_feature_mse_kernel(%arg0: i32, %arg1: i32, %arg2: memref<1x640x32xbf16, #tpu.memory_space<vmem>>, %arg3: memref<1x640x32xbf16, #tpu.memory_space<vmem>>, %arg4: memref<32x128xbf16, #tpu.memory_space<vmem>>, %arg5: memref<1x128xf32, #tpu.memory_space<vmem>>, %arg6: memref<3x384x128xbf16, #tpu.memory_space<vmem>>, %arg7: memref<1x128xf32, #tpu.memory_space<vmem>>, %arg8: memref<1x1x1xf32, #tpu.memory_space<vmem>>, %arg9: memref<640x384xbf16, #tpu.memory_space<vmem>>) attributes {dimension_semantics = [#tpu.dimension_semantics<parallel>, #tpu.dimension_semantics<parallel>], iteration_bounds = array<i64: 2, 1>, scalar_prefetch = 0 : i64, scratch_operands = 1 : i64, tpu.core_type = #tpu.core_type<tc>, window_params = [{transform_indices = @transform_0, window_bounds = array<i64: 1, 640, 32>}, {transform_indices = @transform_1, window_bounds = array<i64: 1, 640, 32>}, {pipeline_mode = #tpu.pipeline_mode<synchronous>, transform_indices = @transform_2, window_bounds = array<i64: 32, 128>}, {pipeline_mode = #tpu.pipeline_mode<synchronous>, transform_indices = @transform_3, window_bounds = array<i64: 1, 128>}, {pipeline_mode = #tpu.pipeline_mode<synchronous>, transform_indices = @transform_4, window_bounds = array<i64: 3, 384, 128>}, {pipeline_mode = #tpu.pipeline_mode<synchronous>, transform_indices = @transform_5, window_bounds = array<i64: 1, 128>}, {transform_indices = @transform_6, window_bounds = array<i64: 1, 1, 1>}]} {
    %c16_i32 = arith.constant 16 : i32
    %0 = arith.muli %arg1, %c16_i32 : i32
    %c32_i32 = arith.constant 32 : i32
    %1 = arith.muli %0, %c32_i32 : i32
    %2 = tpu.assume_multiple %1, 16 : i32
    %3 = tpu.iota {dimensions = array<i32: 0>} : vector<20x32x128xi32>
    %4 = vector.broadcast %0 : i32 to vector<20x32x128xi32>
    %5 = arith.addi %3, %4 : vector<20x32x128xi32>
    %6 = tpu.iota {dimensions = array<i32: 1>} : vector<20x32x128xi32>
    %c2_i32 = arith.constant 2 : i32
    %7 = vector.broadcast %c2_i32 : i32 to vector<20x32x128xi32>
    %8 = arith.cmpi sge, %5, %7 : vector<20x32x128xi32>
    %c17_i32 = arith.constant 17 : i32
    %9 = vector.broadcast %c17_i32 : i32 to vector<20x32x128xi32>
    %10 = arith.cmpi sle, %5, %9 : vector<20x32x128xi32>
    %11 = arith.andi %8, %10 : vector<20x32x128xi1>
    %c2_i32_0 = arith.constant 2 : i32
    %12 = vector.broadcast %c2_i32_0 : i32 to vector<20x32x128xi32>
    %13 = arith.cmpi sge, %6, %12 : vector<20x32x128xi32>
    %14 = arith.andi %11, %13 : vector<20x32x128xi1>
    %c17_i32_1 = arith.constant 17 : i32
    %15 = vector.broadcast %c17_i32_1 : i32 to vector<20x32x128xi32>
    %16 = arith.cmpi sle, %6, %15 : vector<20x32x128xi32>
    %17 = arith.andi %14, %16 : vector<20x32x128xi1>
    %18 = arith.extui %17 : vector<20x32x128xi1> to vector<20x32x128xi32>
    %19 = arith.sitofp %18 : vector<20x32x128xi32> to vector<20x32x128xf32>
    %20 = vector.shape_cast %19 : vector<20x32x128xf32> to vector<640x128xf32>
    %21 = tpu.iota {dimensions = array<i32: 1>} : vector<16x32x128xi32>
    %c2_i32_2 = arith.constant 2 : i32
    %22 = vector.broadcast %c2_i32_2 : i32 to vector<16x32x128xi32>
    %23 = arith.cmpi sge, %21, %22 : vector<16x32x128xi32>
    %c17_i32_3 = arith.constant 17 : i32
    %24 = vector.broadcast %c17_i32_3 : i32 to vector<16x32x128xi32>
    %25 = arith.cmpi sle, %21, %24 : vector<16x32x128xi32>
    %26 = arith.andi %23, %25 : vector<16x32x128xi1>
    %27 = arith.extui %26 : vector<16x32x128xi1> to vector<16x32x128xi32>
    %28 = arith.sitofp %27 : vector<16x32x128xi32> to vector<16x32x128xf32>
    %29 = vector.shape_cast %28 : vector<16x32x128xf32> to vector<512x128xf32>
    %c0 = arith.constant 0 : index
    %30 = arith.index_cast %2 : i32 to index
    %c0_4 = arith.constant 0 : index
    %31 = vector.load %arg2[%c0, %30, %c0_4] : memref<1x640x32xbf16, #tpu.memory_space<vmem>>, vector<1x640x32xbf16>
    %32 = vector.shape_cast %31 : vector<1x640x32xbf16> to vector<640x32xbf16>
    %c0_5 = arith.constant 0 : index
    %c0_6 = arith.constant 0 : index
    %33 = vector.load %arg4[%c0_5, %c0_6] : memref<32x128xbf16, #tpu.memory_space<vmem>>, vector<32x128xbf16>
    %cst = arith.constant dense<0.000000e+00> : vector<640x128xf32>
    %34 = tpu.matmul %32, %33, %cst {dimension_numbers = #tpu.dot_dimension_numbers<[1], [0], [0], [1], [0, 0, 1, 1], [], []>} : vector<640x32xbf16>, vector<32x128xbf16>, vector<640x128xf32> -> vector<640x128xf32>
    %c0_7 = arith.constant 0 : index
    %c0_8 = arith.constant 0 : index
    %35 = vector.load %arg5[%c0_7, %c0_8] : memref<1x128xf32, #tpu.memory_space<vmem>>, vector<1x128xf32>
    %36 = vector.broadcast %35 : vector<1x128xf32> to vector<640x128xf32>
    %37 = arith.addf %34, %36 : vector<640x128xf32>
    %cst_9 = arith.constant 0.000000e+00 : f32
    %38 = vector.broadcast %cst_9 : f32 to vector<640x128xf32>
    %39 = arith.maximumf %37, %38 : vector<640x128xf32>
    %40 = arith.mulf %39, %20 : vector<640x128xf32>
    %c1_i32 = arith.constant 1 : i32
    %41 = tpu.dynamic_rotate %40 by %c1_i32 dim 0 : vector<640x128xf32>, i32 -> vector<640x128xf32>
    %42 = arith.truncf %41 : vector<640x128xf32> to vector<640x128xbf16>
    %c0_10 = arith.constant 0 : index
    %c0_11 = arith.constant 0 : index
    %43 = vector.load %arg9[%c0_10, %c0_11] : memref<640x384xbf16, #tpu.memory_space<vmem>>, vector<640x128xbf16>
    tpu.vector_store %arg9[%c0_10, %c0_11], %42 {strides = array<i32>} : memref<640x384xbf16, #tpu.memory_space<vmem>>, vector<640x128xbf16>,
    %44 = arith.truncf %40 : vector<640x128xf32> to vector<640x128xbf16>
    %c0_12 = arith.constant 0 : index
    %c128 = arith.constant 128 : index
    %45 = vector.load %arg9[%c0_12, %c128] : memref<640x384xbf16, #tpu.memory_space<vmem>>, vector<640x128xbf16>
    tpu.vector_store %arg9[%c0_12, %c128], %44 {strides = array<i32>} : memref<640x384xbf16, #tpu.memory_space<vmem>>, vector<640x128xbf16>,
    %c639_i32 = arith.constant 639 : i32
    %46 = tpu.dynamic_rotate %40 by %c639_i32 dim 0 : vector<640x128xf32>, i32 -> vector<640x128xf32>
    %47 = arith.truncf %46 : vector<640x128xf32> to vector<640x128xbf16>
    %c0_13 = arith.constant 0 : index
    %c256 = arith.constant 256 : index
    %48 = vector.load %arg9[%c0_13, %c256] : memref<640x384xbf16, #tpu.memory_space<vmem>>, vector<640x128xbf16>
    tpu.vector_store %arg9[%c0_13, %c256], %47 {strides = array<i32>} : memref<640x384xbf16, #tpu.memory_space<vmem>>, vector<640x128xbf16>,
    %c32 = arith.constant 32 : index
    %c0_14 = arith.constant 0 : index
    %49 = vector.load %arg9[%c32, %c0_14] : memref<640x384xbf16, #tpu.memory_space<vmem>>, vector<512x384xbf16>
    %c0_15 = arith.constant 0 : index
    %c0_16 = arith.constant 0 : index
    %c0_17 = arith.constant 0 : index
    %50 = vector.load %arg6[%c0_15, %c0_16, %c0_17] : memref<3x384x128xbf16, #tpu.memory_space<vmem>>, vector<1x384x128xbf16>
    %51 = vector.shape_cast %50 : vector<1x384x128xbf16> to vector<384x128xbf16>
    %cst_18 = arith.constant dense<0.000000e+00> : vector<512x128xf32>
    %52 = tpu.matmul %49, %51, %cst_18 {dimension_numbers = #tpu.dot_dimension_numbers<[1], [0], [0], [1], [0, 0, 1, 1], [], []>} : vector<512x384xbf16>, vector<384x128xbf16>, vector<512x128xf32> -> vector<512x128xf32>
    %c64 = arith.constant 64 : index
    %c0_19 = arith.constant 0 : index
    %53 = vector.load %arg9[%c64, %c0_19] : memref<640x384xbf16, #tpu.memory_space<vmem>>, vector<512x384xbf16>
    %c1 = arith.constant 1 : index
    %c0_20 = arith.constant 0 : index
    %c0_21 = arith.constant 0 : index
    %54 = vector.load %arg6[%c1, %c0_20, %c0_21] : memref<3x384x128xbf16, #tpu.memory_space<vmem>>, vector<1x384x128xbf16>
    %55 = vector.shape_cast %54 : vector<1x384x128xbf16> to vector<384x128xbf16>
    %cst_22 = arith.constant dense<0.000000e+00> : vector<512x128xf32>
    %56 = tpu.matmul %53, %55, %cst_22 {dimension_numbers = #tpu.dot_dimension_numbers<[1], [0], [0], [1], [0, 0, 1, 1], [], []>} : vector<512x384xbf16>, vector<384x128xbf16>, vector<512x128xf32> -> vector<512x128xf32>
    %57 = arith.addf %52, %56 : vector<512x128xf32>
    %c96 = arith.constant 96 : index
    %c0_23 = arith.constant 0 : index
    %58 = vector.load %arg9[%c96, %c0_23] : memref<640x384xbf16, #tpu.memory_space<vmem>>, vector<512x384xbf16>
    %c2 = arith.constant 2 : index
    %c0_24 = arith.constant 0 : index
    %c0_25 = arith.constant 0 : index
    %59 = vector.load %arg6[%c2, %c0_24, %c0_25] : memref<3x384x128xbf16, #tpu.memory_space<vmem>>, vector<1x384x128xbf16>
    %60 = vector.shape_cast %59 : vector<1x384x128xbf16> to vector<384x128xbf16>
    %cst_26 = arith.constant dense<0.000000e+00> : vector<512x128xf32>
    %61 = tpu.matmul %58, %60, %cst_26 {dimension_numbers = #tpu.dot_dimension_numbers<[1], [0], [0], [1], [0, 0, 1, 1], [], []>} : vector<512x384xbf16>, vector<384x128xbf16>, vector<512x128xf32> -> vector<512x128xf32>
    %62 = arith.addf %57, %61 : vector<512x128xf32>
    %c0_27 = arith.constant 0 : index
    %c0_28 = arith.constant 0 : index
    %63 = vector.load %arg7[%c0_27, %c0_28] : memref<1x128xf32, #tpu.memory_space<vmem>>, vector<1x128xf32>
    %64 = vector.broadcast %63 : vector<1x128xf32> to vector<512x128xf32>
    %65 = arith.addf %62, %64 : vector<512x128xf32>
    %cst_29 = arith.constant 0.000000e+00 : f32
    %66 = vector.broadcast %cst_29 : f32 to vector<512x128xf32>
    %67 = arith.maximumf %65, %66 : vector<512x128xf32>
    %c0_30 = arith.constant 0 : index
    %68 = arith.index_cast %2 : i32 to index
    %c0_31 = arith.constant 0 : index
    %69 = vector.load %arg3[%c0_30, %68, %c0_31] : memref<1x640x32xbf16, #tpu.memory_space<vmem>>, vector<1x640x32xbf16>
    %70 = vector.shape_cast %69 : vector<1x640x32xbf16> to vector<640x32xbf16>
    %c0_32 = arith.constant 0 : index
    %c0_33 = arith.constant 0 : index
    %71 = vector.load %arg4[%c0_32, %c0_33] : memref<32x128xbf16, #tpu.memory_space<vmem>>, vector<32x128xbf16>
    %cst_34 = arith.constant dense<0.000000e+00> : vector<640x128xf32>
    %72 = tpu.matmul %70, %71, %cst_34 {dimension_numbers = #tpu.dot_dimension_numbers<[1], [0], [0], [1], [0, 0, 1, 1], [], []>} : vector<640x32xbf16>, vector<32x128xbf16>, vector<640x128xf32> -> vector<640x128xf32>
    %c0_35 = arith.constant 0 : index
    %c0_36 = arith.constant 0 : index
    %73 = vector.load %arg5[%c0_35, %c0_36] : memref<1x128xf32, #tpu.memory_space<vmem>>, vector<1x128xf32>
    %74 = vector.broadcast %73 : vector<1x128xf32> to vector<640x128xf32>
    %75 = arith.addf %72, %74 : vector<640x128xf32>
    %cst_37 = arith.constant 0.000000e+00 : f32
    %76 = vector.broadcast %cst_37 : f32 to vector<640x128xf32>
    %77 = arith.maximumf %75, %76 : vector<640x128xf32>
    %78 = arith.mulf %77, %20 : vector<640x128xf32>
    %c1_i32_38 = arith.constant 1 : i32
    %79 = tpu.dynamic_rotate %78 by %c1_i32_38 dim 0 : vector<640x128xf32>, i32 -> vector<640x128xf32>
    %80 = arith.truncf %79 : vector<640x128xf32> to vector<640x128xbf16>
    %c0_39 = arith.constant 0 : index
    %c0_40 = arith.constant 0 : index
    %81 = vector.load %arg9[%c0_39, %c0_40] : memref<640x384xbf16, #tpu.memory_space<vmem>>, vector<640x128xbf16>
    tpu.vector_store %arg9[%c0_39, %c0_40], %80 {strides = array<i32>} : memref<640x384xbf16, #tpu.memory_space<vmem>>, vector<640x128xbf16>,
    %82 = arith.truncf %78 : vector<640x128xf32> to vector<640x128xbf16>
    %c0_41 = arith.constant 0 : index
    %c128_42 = arith.constant 128 : index
    %83 = vector.load %arg9[%c0_41, %c128_42] : memref<640x384xbf16, #tpu.memory_space<vmem>>, vector<640x128xbf16>
    tpu.vector_store %arg9[%c0_41, %c128_42], %82 {strides = array<i32>} : memref<640x384xbf16, #tpu.memory_space<vmem>>, vector<640x128xbf16>,
    %c639_i32_43 = arith.constant 639 : i32
    %84 = tpu.dynamic_rotate %78 by %c639_i32_43 dim 0 : vector<640x128xf32>, i32 -> vector<640x128xf32>
    %85 = arith.truncf %84 : vector<640x128xf32> to vector<640x128xbf16>
    %c0_44 = arith.constant 0 : index
    %c256_45 = arith.constant 256 : index
    %86 = vector.load %arg9[%c0_44, %c256_45] : memref<640x384xbf16, #tpu.memory_space<vmem>>, vector<640x128xbf16>
    tpu.vector_store %arg9[%c0_44, %c256_45], %85 {strides = array<i32>} : memref<640x384xbf16, #tpu.memory_space<vmem>>, vector<640x128xbf16>,
    %c32_46 = arith.constant 32 : index
    %c0_47 = arith.constant 0 : index
    %87 = vector.load %arg9[%c32_46, %c0_47] : memref<640x384xbf16, #tpu.memory_space<vmem>>, vector<512x384xbf16>
    %c0_48 = arith.constant 0 : index
    %c0_49 = arith.constant 0 : index
    %c0_50 = arith.constant 0 : index
    %88 = vector.load %arg6[%c0_48, %c0_49, %c0_50] : memref<3x384x128xbf16, #tpu.memory_space<vmem>>, vector<1x384x128xbf16>
    %89 = vector.shape_cast %88 : vector<1x384x128xbf16> to vector<384x128xbf16>
    %cst_51 = arith.constant dense<0.000000e+00> : vector<512x128xf32>
    %90 = tpu.matmul %87, %89, %cst_51 {dimension_numbers = #tpu.dot_dimension_numbers<[1], [0], [0], [1], [0, 0, 1, 1], [], []>} : vector<512x384xbf16>, vector<384x128xbf16>, vector<512x128xf32> -> vector<512x128xf32>
    %c64_52 = arith.constant 64 : index
    %c0_53 = arith.constant 0 : index
    %91 = vector.load %arg9[%c64_52, %c0_53] : memref<640x384xbf16, #tpu.memory_space<vmem>>, vector<512x384xbf16>
    %c1_54 = arith.constant 1 : index
    %c0_55 = arith.constant 0 : index
    %c0_56 = arith.constant 0 : index
    %92 = vector.load %arg6[%c1_54, %c0_55, %c0_56] : memref<3x384x128xbf16, #tpu.memory_space<vmem>>, vector<1x384x128xbf16>
    %93 = vector.shape_cast %92 : vector<1x384x128xbf16> to vector<384x128xbf16>
    %cst_57 = arith.constant dense<0.000000e+00> : vector<512x128xf32>
    %94 = tpu.matmul %91, %93, %cst_57 {dimension_numbers = #tpu.dot_dimension_numbers<[1], [0], [0], [1], [0, 0, 1, 1], [], []>} : vector<512x384xbf16>, vector<384x128xbf16>, vector<512x128xf32> -> vector<512x128xf32>
    %95 = arith.addf %90, %94 : vector<512x128xf32>
    %c96_58 = arith.constant 96 : index
    %c0_59 = arith.constant 0 : index
    %96 = vector.load %arg9[%c96_58, %c0_59] : memref<640x384xbf16, #tpu.memory_space<vmem>>, vector<512x384xbf16>
    %c2_60 = arith.constant 2 : index
    %c0_61 = arith.constant 0 : index
    %c0_62 = arith.constant 0 : index
    %97 = vector.load %arg6[%c2_60, %c0_61, %c0_62] : memref<3x384x128xbf16, #tpu.memory_space<vmem>>, vector<1x384x128xbf16>
    %98 = vector.shape_cast %97 : vector<1x384x128xbf16> to vector<384x128xbf16>
    %cst_63 = arith.constant dense<0.000000e+00> : vector<512x128xf32>
    %99 = tpu.matmul %96, %98, %cst_63 {dimension_numbers = #tpu.dot_dimension_numbers<[1], [0], [0], [1], [0, 0, 1, 1], [], []>} : vector<512x384xbf16>, vector<384x128xbf16>, vector<512x128xf32> -> vector<512x128xf32>
    %100 = arith.addf %95, %99 : vector<512x128xf32>
    %c0_64 = arith.constant 0 : index
    %c0_65 = arith.constant 0 : index
    %101 = vector.load %arg7[%c0_64, %c0_65] : memref<1x128xf32, #tpu.memory_space<vmem>>, vector<1x128xf32>
    %102 = vector.broadcast %101 : vector<1x128xf32> to vector<512x128xf32>
    %103 = arith.addf %100, %102 : vector<512x128xf32>
    %cst_66 = arith.constant 0.000000e+00 : f32
    %104 = vector.broadcast %cst_66 : f32 to vector<512x128xf32>
    %105 = arith.maximumf %103, %104 : vector<512x128xf32>
    %106 = arith.subf %67, %105 : vector<512x128xf32>
    %107 = arith.mulf %106, %106 : vector<512x128xf32>
    %108 = arith.mulf %107, %29 : vector<512x128xf32>
    %cst_67 = arith.constant dense<0.000000e+00> : vector<512xf32>
    %109 = vector.multi_reduction <add>, %108, %cst_67 [1] : vector<512x128xf32> to vector<512xf32>
    %110 = vector.shape_cast %109 : vector<512xf32> to vector<512x1xf32>
    %cst_68 = arith.constant dense<0.000000e+00> : vector<1xf32>
    %111 = vector.multi_reduction <add>, %110, %cst_68 [0] : vector<512x1xf32> to vector<1xf32>
    %112 = vector.shape_cast %111 : vector<1xf32> to vector<1x1xf32>
    %c0_69 = arith.constant 0 : index
    %c0_70 = arith.constant 0 : index
    %c0_71 = arith.constant 0 : index
    %113 = vector.load %arg8[%c0_69, %c0_70, %c0_71] : memref<1x1x1xf32, #tpu.memory_space<vmem>>, vector<1x1x1xf32>
    %114 = vector.shape_cast %113 : vector<1x1x1xf32> to vector<1x1xf32>
    %115 = vector.shape_cast %112 : vector<1x1xf32> to vector<1x1x1xf32>
    tpu.vector_store %arg8[%c0_69, %c0_70, %c0_71], %115 {strides = array<i32>} : memref<1x1x1xf32, #tpu.memory_space<vmem>>, vector<1x1x1xf32>,
    return
  }
  func.func @transform_0(%arg0: i32, %arg1: i32) -> (i32, i32, i32) {
    %c0_i32 = arith.constant 0 : i32
    %c0_i32_0 = arith.constant 0 : i32
    %c0_i32_1 = arith.constant 0 : i32
    return %arg0, %c0_i32, %c0_i32_0 : i32, i32, i32
  }
  func.func @transform_1(%arg0: i32, %arg1: i32) -> (i32, i32, i32) {
    %c0_i32 = arith.constant 0 : i32
    %c0_i32_0 = arith.constant 0 : i32
    %c0_i32_1 = arith.constant 0 : i32
    return %arg0, %c0_i32, %c0_i32_0 : i32, i32, i32
  }
  func.func @transform_2(%arg0: i32, %arg1: i32) -> (i32, i32) {
    %c0_i32 = arith.constant 0 : i32
    %c0_i32_0 = arith.constant 0 : i32
    %c0_i32_1 = arith.constant 0 : i32
    return %c0_i32, %c0_i32_0 : i32, i32
  }
  func.func @transform_3(%arg0: i32, %arg1: i32) -> (i32, i32) {
    %c0_i32 = arith.constant 0 : i32
    %c0_i32_0 = arith.constant 0 : i32
    %c0_i32_1 = arith.constant 0 : i32
    return %c0_i32, %c0_i32_0 : i32, i32
  }
  func.func @transform_4(%arg0: i32, %arg1: i32) -> (i32, i32, i32) {
    %c0_i32 = arith.constant 0 : i32
    %c0_i32_0 = arith.constant 0 : i32
    %c0_i32_1 = arith.constant 0 : i32
    %c0_i32_2 = arith.constant 0 : i32
    return %c0_i32, %c0_i32_0, %c0_i32_1 : i32, i32, i32
  }
  func.func @transform_5(%arg0: i32, %arg1: i32) -> (i32, i32) {
    %c0_i32 = arith.constant 0 : i32
    %c0_i32_0 = arith.constant 0 : i32
    %c0_i32_1 = arith.constant 0 : i32
    return %c0_i32, %c0_i32_0 : i32, i32
  }
  func.func @transform_6(%arg0: i32, %arg1: i32) -> (i32, i32, i32) {
    %c1_i32 = arith.constant 1 : i32
    %0 = arith.muli %arg0, %c1_i32 : i32
    %1 = arith.addi %0, %arg1 : i32
    %c0_i32 = arith.constant 0 : i32
    %c0_i32_0 = arith.constant 0 : i32
    %c0_i32_1 = arith.constant 0 : i32
    return %1, %c0_i32, %c0_i32_0 : i32, i32, i32
  }
}

</mosaic_0001>

<llo_original>
// kernel: perceptual_loss.1
$region0: #{perceptual_loss.1}
  #allocation0 [shape = 'u32[]', space=smem, size = 0x4, offset = 0x4, fixed_abs, tag = 'smem constant byte address 0x4 - core index']
  #allocation1 [shape = 'u32[144,128]{1,0:T(1,128)}', space=vmem, size = 0x12000, scoped, tag = 'internal scratch']
  #allocation2 [shape = 'bf16[640,384]{1,0:T(16,128)(2,1)}', space=vmem, size = 0x78000, scoped, tag = 'scratch operand']
  %s0 = inlined_call_operand.vmem [shape: bf16[2,640,32], index: 0, kind: input, shape index: {}]
  %s1 = inlined_call_operand.vmem [shape: bf16[2,640,32], index: 1, kind: input, shape index: {}]
  %s2 = inlined_call_operand.vmem [shape: bf16[32,128], index: 2, kind: input, shape index: {}]
  %s3 = inlined_call_operand.vmem [shape: f32[1,128], index: 3, kind: input, shape index: {}]
  %s4 = inlined_call_operand.vmem [shape: bf16[3,384,128], index: 4, kind: input, shape index: {}]
  %s5 = inlined_call_operand.vmem [shape: f32[1,128], index: 5, kind: input, shape index: {}]
  %s6 = inlined_call_operand.vmem [shape: f32[2,1,1], index: 6, kind: output, shape index: {}]
  %s7 = sld [smem:[#allocation0]]
  $region57: #{perceptual_loss.1} parent=0
    _
  %s9 = ssub.s32 1, %s7
  %s10 = scalar_select 0, %s9, %s7
  loop: start=0, step=1, limit=4
  $region2: #{perceptual_loss.1} parent=0 // loop_pre_header
    _
  $region3: #{perceptual_loss.1} parent=0 // loop_header
    %s12 = sphi 0, %s16
    %p13 = scmp.ge.s32.totalorder %s12, 4
    %s19 = sphi 0, %s31
    %s20 = sphi 0, %s27
    %s21 = sphi 0, %s19
    %s22 = sphi 0, %s20
    %s23 = sphi 0, %s21
    %s24 = sphi 0, %s22
    %s34 = sphi 0, %s36
    %s37 = sphi 0, %s34
    %s38 = sphi 0, %s37
    %s54 = sphi 0, %s38
    %s60 = sphi 0, %s62
    %s63 = sphi 0, %s60
    %s64 = sphi 0, %s63
    %s80 = sphi 0, %s64
    %s84 = sphi 0, %s84
    %s86 = sphi 0, %s84
    %s87 = sphi 0, %s86
    %s101 = sphi 0, %s87
    %s105 = sphi 0, %s105
    %s107 = sphi 0, %s105
    %s108 = sphi 0, %s107
    %s122 = sphi 0, %s108
    %s126 = sphi 0, %s126
    %s128 = sphi 0, %s126
    %s129 = sphi 0, %s128
    %s143 = sphi 0, %s129
    %s147 = sphi 0, %s147
    %s149 = sphi 0, %s147
    %s150 = sphi 0, %s149
    %s164 = sphi 0, %s150
    %s172 = sphi 0, %s174
    %s175 = sphi 0, %s172
    %s176 = sphi 0, %s175
    %s192 = sphi 0, %s176
  $region4: #{perceptual_loss.1} parent=0 // loop_header_branch
    %15 = sbr.rel (%p13) target = $region8
  $region5: #{perceptual_loss.1} parent=0 // loop_body
    %s17 = ssub.s32 %s12, 1
    %s18 = ssub.s32 %s12, 2
    %s25 = sadd.s32 1, %s20
    %p26 = scmp.ge.s32.totalorder %s25, 1
    %s27 = scalar_select %p26, 0, %s25
    %s28 = sadd.s32 1, %s19
    %s29 = scalar_select %p26, %s28, %s19
    %p30 = scmp.ge.s32.totalorder %s29, 2
    %s31 = scalar_select %p30, 0, %s29
    %s32 = ssub.s32 %s19, %s31
    %p33 = scmp.eq.s32.totalorder %s32, 0
    %s35 = sadd.s32 %s34, 1
    %s36 = scalar_select %p33, %s34, %s35
    %p39 = pneg %p33
    %p40 = scmp.eq.s32.totalorder %s12, 1
    %p41 = por %p39, %p40
    %p42 = scmp.ne.s32.totalorder %s34, %s37
    %p43 = scmp.eq.s32.totalorder %s12, 0
    %p44 = por %p42, %p43
    %p45 = scmp.ne.s32.totalorder %s34, %s37
    %p46 = scmp.eq.s32.totalorder %s17, 1
    %p47 = por %p45, %p46
    %p48 = scmp.ne.s32.totalorder %s37, %s38
    %p49 = scmp.eq.s32.totalorder %s17, 0
    %p50 = por %p48, %p49
    %p51 = scmp.ne.s32.totalorder %s37, %s38
    %p52 = scmp.eq.s32.totalorder %s18, 1
    %p53 = por %p51, %p52
    %p55 = scmp.ne.s32.totalorder %s38, %s54
    %p56 = scmp.eq.s32.totalorder %s18, 0
    %p57 = por %p55, %p56
    %s58 = ssub.s32 %s19, %s31
    %p59 = scmp.eq.s32.totalorder %s58, 0
    %s61 = sadd.s32 %s60, 1
    %s62 = scalar_select %p59, %s60, %s61
    %p65 = pneg %p59
    %p66 = scmp.eq.s32.totalorder %s12, 1
    %p67 = por %p65, %p66
    %p68 = scmp.ne.s32.totalorder %s60, %s63
    %p69 = scmp.eq.s32.totalorder %s12, 0
    %p70 = por %p68, %p69
    %p71 = scmp.ne.s32.totalorder %s60, %s63
    %p72 = scmp.eq.s32.totalorder %s17, 1
    %p73 = por %p71, %p72
    %p74 = scmp.ne.s32.totalorder %s63, %s64
    %p75 = scmp.eq.s32.totalorder %s17, 0
    %p76 = por %p74, %p75
    %p77 = scmp.ne.s32.totalorder %s63, %s64
    %p78 = scmp.eq.s32.totalorder %s18, 1
    %p79 = por %p77, %p78
    %p81 = scmp.ne.s32.totalorder %s64, %s80
    %p82 = scmp.eq.s32.totalorder %s18, 0
    %p83 = por %p81, %p82
    %s85 = sadd.s32 %s84, 1
    %p88 = scmp.eq.s32.totalorder %s12, 1
    %p89 = scmp.ne.s32.totalorder %s84, %s86
    %p90 = scmp.eq.s32.totalorder %s12, 0
    %p91 = por %p89, %p90
    %p92 = scmp.ne.s32.totalorder %s84, %s86
    %p93 = scmp.eq.s32.totalorder %s17, 1
    %p94 = por %p92, %p93
    %p95 = scmp.ne.s32.totalorder %s86, %s87
    %p96 = scmp.eq.s32.totalorder %s17, 0
    %p97 = por %p95, %p96
    %p98 = scmp.ne.s32.totalorder %s86, %s87
    %p99 = scmp.eq.s32.totalorder %s18, 1
    %p100 = por %p98, %p99
    %p102 = scmp.ne.s32.totalorder %s87, %s101
    %p103 = scmp.eq.s32.totalorder %s18, 0
    %p104 = por %p102, %p103
    %s106 = sadd.s32 %s105, 1
    %p109 = scmp.eq.s32.totalorder %s12, 1
    %p110 = scmp.ne.s32.totalorder %s105, %s107
    %p111 = scmp.eq.s32.totalorder %s12, 0
    %p112 = por %p110, %p111
    %p113 = scmp.ne.s32.totalorder %s105, %s107
    %p114 = scmp.eq.s32.totalorder %s17, 1
    %p115 = por %p113, %p114
    %p116 = scmp.ne.s32.totalorder %s107, %s108
    %p117 = scmp.eq.s32.totalorder %s17, 0
    %p118 = por %p116, %p117
    %p119 = scmp.ne.s32.totalorder %s107, %s108
    %p120 = scmp.eq.s32.totalorder %s18, 1
    %p121 = por %p119, %p120
    %p123 = scmp.ne.s32.totalorder %s108, %s122
    %p124 = scmp.eq.s32.totalorder %s18, 0
    %p125 = por %p123, %p124
    %s127 = sadd.s32 %s126, 1
    %p130 = scmp.eq.s32.totalorder %s12, 1
    %p131 = scmp.ne.s32.totalorder %s126, %s128
    %p132 = scmp.eq.s32.totalorder %s12, 0
    %p133 = por %p131, %p132
    %p134 = scmp.ne.s32.totalorder %s126, %s128
    %p135 = scmp.eq.s32.totalorder %s17, 1
    %p136 = por %p134, %p135
    %p137 = scmp.ne.s32.totalorder %s128, %s129
    %p138 = scmp.eq.s32.totalorder %s17, 0
    %p139 = por %p137, %p138
    %p140 = scmp.ne.s32.totalorder %s128, %s129
    %p141 = scmp.eq.s32.totalorder %s18, 1
    %p142 = por %p140, %p141
    %p144 = scmp.ne.s32.totalorder %s129, %s143
    %p145 = scmp.eq.s32.totalorder %s18, 0
    %p146 = por %p144, %p145
    %s148 = sadd.s32 %s147, 1
    %p151 = scmp.eq.s32.totalorder %s12, 1
    %p152 = scmp.ne.s32.totalorder %s147, %s149
    %p153 = scmp.eq.s32.totalorder %s12, 0
    %p154 = por %p152, %p153
    %p155 = scmp.ne.s32.totalorder %s147, %s149
    %p156 = scmp.eq.s32.totalorder %s17, 1
    %p157 = por %p155, %p156
    %p158 = scmp.ne.s32.totalorder %s149, %s150
    %p159 = scmp.eq.s32.totalorder %s17, 0
    %p160 = por %p158, %p159
    %p161 = scmp.ne.s32.totalorder %s149, %s150
    %p162 = scmp.eq.s32.totalorder %s18, 1
    %p163 = por %p161, %p162
    %p165 = scmp.ne.s32.totalorder %s150, %s164
    %p166 = scmp.eq.s32.totalorder %s18, 0
    %p167 = por %p165, %p166
    %s168 = sadd.s32 %s19, %s20
    %s169 = sadd.s32 %s31, %s27
    %s170 = ssub.s32 %s168, %s169
    %p171 = scmp.eq.s32.totalorder %s170, 0
    %s173 = sadd.s32 %s172, 1
    %s174 = scalar_select %p171, %s172, %s173
    %p177 = pneg %p171
    %p178 = scmp.eq.s32.totalorder %s12, 1
    %p179 = por %p177, %p178
    %p180 = scmp.ne.s32.totalorder %s172, %s175
    %p181 = scmp.eq.s32.totalorder %s12, 0
    %p182 = por %p180, %p181
    %p183 = scmp.ne.s32.totalorder %s172, %s175
    %p184 = scmp.eq.s32.totalorder %s17, 1
    %p185 = por %p183, %p184
    %p186 = scmp.ne.s32.totalorder %s175, %s176
    %p187 = scmp.eq.s32.totalorder %s17, 0
    %p188 = por %p186, %p187
    %p189 = scmp.ne.s32.totalorder %s175, %s176
    %p190 = scmp.eq.s32.totalorder %s18, 1
    %p191 = por %p189, %p190
    %p193 = scmp.ne.s32.totalorder %s176, %s192
    %p194 = scmp.eq.s32.totalorder %s18, 0
    %p195 = por %p193, %p194
    %p196 = scmp.le.s32.totalorder 1, %s12
    %p197 = scmp.lt.s32.totalorder %s12, 3
    %p198 = pnand %p196, %p197
    %p199 = pneg %p198
    // Predicated region
    $region9: #{perceptual_loss.1} parent=5 // pred_check
      _
    $region10: #{perceptual_loss.1} parent=5 // pred_check_branch
      %201 = sbr.rel (%p198) target = $region12
    $region11: #{perceptual_loss.1} parent=5 // pred_region
      %s202 = ssub.s32 %s12, 1
      // Predicated region
      $region13: #{perceptual_loss.1} parent=11 // pred_check
        %p203 = pneg %p97
      $region14: #{perceptual_loss.1} parent=11 // pred_check_branch
        %205 = sbr.rel (%p203) target = $region16
      $region15: #{perceptual_loss.1} parent=11 // pred_region
        _
      $region16: #{perceptual_loss.1} parent=11 // pred_fallthru
        _
      // Predicated region
      $region17: #{perceptual_loss.1} parent=11 // pred_check
        %p206 = pneg %p118
      $region18: #{perceptual_loss.1} parent=11 // pred_check_branch
        %208 = sbr.rel (%p206) target = $region20
      $region19: #{perceptual_loss.1} parent=11 // pred_region
        _
      $region20: #{perceptual_loss.1} parent=11 // pred_fallthru
        _
      // Predicated region
      $region21: #{perceptual_loss.1} parent=11 // pred_check
        %p209 = pneg %p139
      $region22: #{perceptual_loss.1} parent=11 // pred_check_branch
        %211 = sbr.rel (%p209) target = $region24
      $region23: #{perceptual_loss.1} parent=11 // pred_region
        _
      $region24: #{perceptual_loss.1} parent=11 // pred_fallthru
        _
      // Predicated region
      $region25: #{perceptual_loss.1} parent=11 // pred_check
        %p212 = pneg %p160
      $region26: #{perceptual_loss.1} parent=11 // pred_check_branch
        %214 = sbr.rel (%p212) target = $region28
      $region27: #{perceptual_loss.1} parent=11 // pred_region
        _
      $region28: #{perceptual_loss.1} parent=11 // pred_fallthru
        _
    $region12: #{perceptual_loss.1} parent=5 // pred_fallthru
      _
    %p215 = scmp.lt.s32.totalorder %s12, 2
    // Predicated region
    $region29: #{perceptual_loss.1} parent=5 // pred_check
      %p216 = pneg %p215
    $region30: #{perceptual_loss.1} parent=5 // pred_check_branch
      %218 = sbr.rel (%p216) target = $region32
    $region31: #{perceptual_loss.1} parent=5 // pred_region
      // Predicated region
      $region33: #{perceptual_loss.1} parent=31 // pred_check
        %p219 = pneg %p44
      $region34: #{perceptual_loss.1} parent=31 // pred_check_branch
        %221 = sbr.rel (%p219) target = $region36
      $region35: #{perceptual_loss.1} parent=31 // pred_region
        %p222 = scmp.lt.s32.totalorder %s19, 1
        %s223 = scalar_select %p222, %s19, 1
        %s224 = smul.addr %s223, 80
        %s225 = smul.addr %s224, 4
        %s226 = scalar_lea.vmem %s0, %s225
      $region36: #{perceptual_loss.1} parent=31 // pred_fallthru
        _
      // Predicated region
      $region37: #{perceptual_loss.1} parent=31 // pred_check
        %p227 = pneg %p70
      $region38: #{perceptual_loss.1} parent=31 // pred_check_branch
        %229 = sbr.rel (%p227) target = $region40
      $region39: #{perceptual_loss.1} parent=31 // pred_region
        %p230 = scmp.lt.s32.totalorder %s19, 1
        %s231 = scalar_select %p230, %s19, 1
        %s232 = smul.addr %s231, 80
        %s233 = smul.addr %s232, 4
        %s234 = scalar_lea.vmem %s1, %s233
      $region40: #{perceptual_loss.1} parent=31 // pred_fallthru
        _
    $region32: #{perceptual_loss.1} parent=5 // pred_fallthru
      _
    %p235 = scmp.le.s32.totalorder 1, %s12
    %p236 = scmp.lt.s32.totalorder %s12, 3
    %p237 = pnand %p235, %p236
    %p238 = pneg %p237
    // Predicated region
    $region41: #{perceptual_loss.1} parent=5 // pred_check
      _
    $region42: #{perceptual_loss.1} parent=5 // pred_check_branch
      %240 = sbr.rel (%p237) target = $region44
    $region43: #{perceptual_loss.1} parent=5 // pred_region
      %s241 = ssub.s32 %s12, 1
      %p242 = scmp.lt.s32.totalorder %s21, 1
      %s243 = scalar_select %p242, %s21, 1
      %s244 = smul.addr %s243, 80
      %s245 = smul.addr %s244, 4
      %s246 = scalar_lea.vmem %s0, %s245
      %p247 = pneg %p50
      %p248 = pneg %p47
      %p249 = scmp.lt.s32.totalorder %s21, 1
      %s250 = scalar_select %p249, %s21, 1
      %s251 = smul.addr %s250, 80
      %s252 = smul.addr %s251, 4
      %s253 = scalar_lea.vmem %s1, %s252
      %p254 = pneg %p76
      %p255 = pneg %p73
      %p256 = pneg %p97
      %p257 = pneg %p94
      %p258 = pneg %p118
      %p259 = pneg %p115
      %p260 = pneg %p139
      %p261 = pneg %p136
      %p262 = pneg %p160
      %p263 = pneg %p157
      %p264 = pneg %p188
      %p265 = pneg %p185
      %s266 = sadd.s32 %s21, %s22
      %p267 = scmp.lt.s32.totalorder %s266, 1
      %s268 = scalar_select %p267, %s266, 1
      %s269 = scalar_lea.vmem %s6, %s268
      %p270 = scmp.lt.s32.totalorder %s21, 1
      %s271 = scalar_select %p270, %s21, 1
      %s272 = smul.addr %s271, 80
      %s273 = smul.addr %s272, 4
      %s274 = scalar_lea.vmem %s0, %s273
      %p275 = scmp.lt.s32.totalorder %s21, 1
      %s276 = scalar_select %p275, %s21, 1
      %s277 = smul.addr %s276, 80
      %s278 = smul.addr %s277, 4
      %s279 = scalar_lea.vmem %s1, %s278
      %s280 = sadd.s32 %s21, %s22
      %p281 = scmp.lt.s32.totalorder %s280, 1
      %s282 = scalar_select %p281, %s280, 1
      %s283 = scalar_lea.vmem %s6, %s282
      %s284 = sadd.s32 %s21, %s22
      %s286 = smul.u32 %s22, 16
      %s287 = smul.u32 %s22, 512
      %v288 = vstv %s286
      %v289 = vadd.s32 %v288, 1
      %v290 = vadd.s32 %v288, 2
      %v291 = vadd.s32 %v288, 3
      %v292 = vadd.s32 %v288, 4
      %v293 = vadd.s32 %v288, 5
      %v294 = vadd.s32 %v288, 6
      %v295 = vadd.s32 %v288, 7
      %v296 = vadd.s32 %v288, 8
      %v297 = vadd.s32 %v288, 9
      %v298 = vadd.s32 %v288, 10
      %v299 = vadd.s32 %v288, 11
      %v300 = vadd.s32 %v288, 12
      %v301 = vadd.s32 %v288, 13
      %v302 = vadd.s32 %v288, 14
      %v303 = vadd.s32 %v288, 15
      %v304 = vadd.s32 %v288, 16
      %v305 = vadd.s32 %v288, 17
      %v306 = vadd.s32 %v288, 18
      %v307 = vadd.s32 %v288, 19
      %v308 = vlaneseq
      %v309 = vshrl.u32 %v308, 7
      %v310 = vadd.s32 %v309, 8
      %v311 = vadd.s32 %v309, 16
      %v312 = vadd.s32 %v309, 24
      %vm313 = vcmp.ge.s32.totalorder %v288, 2
      %vm314 = vcmp.ge.s32.totalorder %v289, 2
      %vm315 = vcmp.ge.s32.totalorder %v290, 2
      %vm316 = vcmp.ge.s32.totalorder %v291, 2
      %vm317 = vcmp.ge.s32.totalorder %v292, 2
      %vm318 = vcmp.ge.s32.totalorder %v293, 2
      %vm319 = vcmp.ge.s32.totalorder %v294, 2
      %vm320 = vcmp.ge.s32.totalorder %v295, 2
      %vm321 = vcmp.ge.s32.totalorder %v296, 2
      %vm322 = vcmp.ge.s32.totalorder %v297, 2
      %vm323 = vcmp.ge.s32.totalorder %v298, 2
      %vm324 = vcmp.ge.s32.totalorder %v299, 2
      %vm325 = vcmp.ge.s32.totalorder %v300, 2
      %vm326 = vcmp.ge.s32.totalorder %v301, 2
      %vm327 = vcmp.ge.s32.totalorder %v302, 2
      %vm328 = vcmp.ge.s32.totalorder %v303, 2
      %vm329 = vcmp.ge.s32.totalorder %v304, 2
      %vm330 = vcmp.ge.s32.totalorder %v305, 2
      %vm331 = vcmp.ge.s32.totalorder %v306, 2
      %vm332 = vcmp.ge.s32.totalorder %v307, 2
      %vm333 = vcmp.le.s32.totalorder %v288, 17
      %vm334 = vcmp.le.s32.totalorder %v289, 17
      %vm335 = vcmp.le.s32.totalorder %v290, 17
      %vm336 = vcmp.le.s32.totalorder %v291, 17
      %vm337 = vcmp.le.s32.totalorder %v292, 17
      %vm338 = vcmp.le.s32.totalorder %v293, 17
      %vm339 = vcmp.le.s32.totalorder %v294, 17
      %vm340 = vcmp.le.s32.totalorder %v295, 17
      %vm341 = vcmp.le.s32.totalorder %v296, 17
      %vm342 = vcmp.le.s32.totalorder %v297, 17
      %vm343 = vcmp.le.s32.totalorder %v298, 17
      %vm344 = vcmp.le.s32.totalorder %v299, 17
      %vm345 = vcmp.le.s32.totalorder %v300, 17
      %vm346 = vcmp.le.s32.totalorder %v301, 17
      %vm347 = vcmp.le.s32.totalorder %v302, 17
      %vm348 = vcmp.le.s32.totalorder %v303, 17
      %vm349 = vcmp.le.s32.totalorder %v304, 17
      %vm350 = vcmp.le.s32.totalorder %v305, 17
      %vm351 = vcmp.le.s32.totalorder %v306, 17
      %vm352 = vcmp.le.s32.totalorder %v307, 17
      %vm353 = vmand %vm313, %vm333
      %vm354 = vmand %vm314, %vm334
      %vm355 = vmand %vm315, %vm335
      %vm356 = vmand %vm316, %vm336
      %vm357 = vmand %vm317, %vm337
      %vm358 = vmand %vm318, %vm338
      %vm359 = vmand %vm319, %vm339
      %vm360 = vmand %vm320, %vm340
      %vm361 = vmand %vm321, %vm341
      %vm362 = vmand %vm322, %vm342
      %vm363 = vmand %vm323, %vm343
      %vm364 = vmand %vm324, %vm344
      %vm365 = vmand %vm325, %vm345
      %vm366 = vmand %vm326, %vm346
      %vm367 = vmand %vm327, %vm347
      %vm368 = vmand %vm328, %vm348
      %vm369 = vmand %vm329, %vm349
      %vm370 = vmand %vm330, %vm350
      %vm371 = vmand %vm331, %vm351
      %vm372 = vmand %vm332, %vm352
      %vm373 = vcmp.ge.s32.totalorder %v309, 2
      %vm374 = vcmp.ge.s32.totalorder %v310, 2
      %vm375 = vcmp.ge.s32.totalorder %v311, 2
      %vm376 = vcmp.ge.s32.totalorder %v312, 2
      %vm377 = vmand %vm353, %vm373
      %vm378 = vmand %vm353, %vm374
      %vm379 = vmand %vm353, %vm375
      %vm380 = vmand %vm353, %vm376
      %vm381 = vmand %vm354, %vm373
      %vm382 = vmand %vm354, %vm374
      %vm383 = vmand %vm354, %vm375
      %vm384 = vmand %vm354, %vm376
      %vm385 = vmand %vm355, %vm373
      %vm386 = vmand %vm355, %vm374
      %vm387 = vmand %vm355, %vm375
      %vm388 = vmand %vm355, %vm376
      %vm389 = vmand %vm356, %vm373
      %vm390 = vmand %vm356, %vm374
      %vm391 = vmand %vm356, %vm375
      %vm392 = vmand %vm356, %vm376
      %vm393 = vmand %vm357, %vm373
      %vm394 = vmand %vm357, %vm374
      %vm395 = vmand %vm357, %vm375
      %vm396 = vmand %vm357, %vm376
      %vm397 = vmand %vm358, %vm373
      %vm398 = vmand %vm358, %vm374
      %vm399 = vmand %vm358, %vm375
      %vm400 = vmand %vm358, %vm376
      %vm401 = vmand %vm359, %vm373
      %vm402 = vmand %vm359, %vm374
      %vm403 = vmand %vm359, %vm375
      %vm404 = vmand %vm359, %vm376
      %vm405 = vmand %vm360, %vm373
      %vm406 = vmand %vm360, %vm374
      %vm407 = vmand %vm360, %vm375
      %vm408 = vmand %vm360, %vm376
      %vm409 = vmand %vm361, %vm373
      %vm410 = vmand %vm361, %vm374
      %vm411 = vmand %vm361, %vm375
      %vm412 = vmand %vm361, %vm376
      %vm413 = vmand %vm362, %vm373
      %vm414 = vmand %vm362, %vm374
      %vm415 = vmand %vm362, %vm375
      %vm416 = vmand %vm362, %vm376
      %vm417 = vmand %vm363, %vm373
      %vm418 = vmand %vm363, %vm374
      %vm419 = vmand %vm363, %vm375
      %vm420 = vmand %vm363, %vm376
      %vm421 = vmand %vm364, %vm373
      %vm422 = vmand %vm364, %vm374
      %vm423 = vmand %vm364, %vm375
      %vm424 = vmand %vm364, %vm376
      %vm425 = vmand %vm365, %vm373
      %vm426 = vmand %vm365, %vm374
      %vm427 = vmand %vm365, %vm375
      %vm428 = vmand %vm365, %vm376
      %vm429 = vmand %vm366, %vm373
      %vm430 = vmand %vm366, %vm374
      %vm431 = vmand %vm366, %vm375
      %vm432 = vmand %vm366, %vm376
      %vm433 = vmand %vm367, %vm373
      %vm434 = vmand %vm367, %vm374
      %vm435 = vmand %vm367, %vm375
      %vm436 = vmand %vm367, %vm376
      %vm437 = vmand %vm368, %vm373
      %vm438 = vmand %vm368, %vm374
      %vm439 = vmand %vm368, %vm375
      %vm440 = vmand %vm368, %vm376
      %vm441 = vmand %vm369, %vm373
      %vm442 = vmand %vm369, %vm374
      %vm443 = vmand %vm369, %vm375
      %vm444 = vmand %vm369, %vm376
      %vm445 = vmand %vm370, %vm373
      %vm446 = vmand %vm370, %vm374
      %vm447 = vmand %vm370, %vm375
      %vm448 = vmand %vm370, %vm376
      %vm449 = vmand %vm371, %vm373
      %vm450 = vmand %vm371, %vm374
      %vm451 = vmand %vm371, %vm375
      %vm452 = vmand %vm371, %vm376
      %vm453 = vmand %vm372, %vm373
      %vm454 = vmand %vm372, %vm374
      %vm455 = vmand %vm372, %vm375
      %vm456 = vmand %vm372, %vm376
      %vm457 = vcmp.le.s32.totalorder %v309, 17
      %vm458 = vcmp.le.s32.totalorder %v310, 17
      %vm459 = vcmp.le.s32.totalorder %v311, 17
      %vm460 = vcmp.le.s32.totalorder %v312, 17
      %vm461 = vmand %vm377, %vm457
      %vm462 = vmand %vm378, %vm458
      %vm463 = vmand %vm379, %vm459
      %vm464 = vmand %vm380, %vm460
      %vm465 = vmand %vm381, %vm457
      %vm466 = vmand %vm382, %vm458
      %vm467 = vmand %vm383, %vm459
      %vm468 = vmand %vm384, %vm460
      %vm469 = vmand %vm385, %vm457
      %vm470 = vmand %vm386, %vm458
      %vm471 = vmand %vm387, %vm459
      %vm472 = vmand %vm388, %vm460
      %vm473 = vmand %vm389, %vm457
      %vm474 = vmand %vm390, %vm458
      %vm475 = vmand %vm391, %vm459
      %vm476 = vmand %vm392, %vm460
      %vm477 = vmand %vm393, %vm457
      %vm478 = vmand %vm394, %vm458
      %vm479 = vmand %vm395, %vm459
      %vm480 = vmand %vm396, %vm460
      %vm481 = vmand %vm397, %vm457
      %vm482 = vmand %vm398, %vm458
      %vm483 = vmand %vm399, %vm459
      %vm484 = vmand %vm400, %vm460
      %vm485 = vmand %vm401, %vm457
      %vm486 = vmand %vm402, %vm458
      %vm487 = vmand %vm403, %vm459
      %vm488 = vmand %vm404, %vm460
      %vm489 = vmand %vm405, %vm457
      %vm490 = vmand %vm406, %vm458
      %vm491 = vmand %vm407, %vm459
      %vm492 = vmand %vm408, %vm460
      %vm493 = vmand %vm409, %vm457
      %vm494 = vmand %vm410, %vm458
      %vm495 = vmand %vm411, %vm459
      %vm496 = vmand %vm412, %vm460
      %vm497 = vmand %vm413, %vm457
      %vm498 = vmand %vm414, %vm458
      %vm499 = vmand %vm415, %vm459
      %vm500 = vmand %vm416, %vm460
      %vm501 = vmand %vm417, %vm457
      %vm502 = vmand %vm418, %vm458
      %vm503 = vmand %vm419, %vm459
      %vm504 = vmand %vm420, %vm460
      %vm505 = vmand %vm421, %vm457
      %vm506 = vmand %vm422, %vm458
      %vm507 = vmand %vm423, %vm459
      %vm508 = vmand %vm424, %vm460
      %vm509 = vmand %vm425, %vm457
      %vm510 = vmand %vm426, %vm458
      %vm511 = vmand %vm427, %vm459
      %vm512 = vmand %vm428, %vm460
      %vm513 = vmand %vm429, %vm457
      %vm514 = vmand %vm430, %vm458
      %vm515 = vmand %vm431, %vm459
      %vm516 = vmand %vm432, %vm460
      %vm517 = vmand %vm433, %vm457
      %vm518 = vmand %vm434, %vm458
      %vm519 = vmand %vm435, %vm459
      %vm520 = vmand %vm436, %vm460
      %vm521 = vmand %vm437, %vm457
      %vm522 = vmand %vm438, %vm458
      %vm523 = vmand %vm439, %vm459
      %vm524 = vmand %vm440, %vm460
      %vm525 = vmand %vm441, %vm457
      %vm526 = vmand %vm442, %vm458
      %vm527 = vmand %vm443, %vm459
      %vm528 = vmand %vm444, %vm460
      %vm529 = vmand %vm445, %vm457
      %vm530 = vmand %vm446, %vm458
      %vm531 = vmand %vm447, %vm459
      %vm532 = vmand %vm448, %vm460
      %vm533 = vmand %vm449, %vm457
      %vm534 = vmand %vm450, %vm458
      %vm535 = vmand %vm451, %vm459
      %vm536 = vmand %vm452, %vm460
      %vm537 = vmand %vm453, %vm457
      %vm538 = vmand %vm454, %vm458
      %vm539 = vmand %vm455, %vm459
      %vm540 = vmand %vm456, %vm460
      %v541 = vsel %vm461, 1, 0
      %v542 = vsel %vm462, 1, 0
      %v543 = vsel %vm463, 1, 0
      %v544 = vsel %vm464, 1, 0
      %v545 = vsel %vm465, 1, 0
      %v546 = vsel %vm466, 1, 0
      %v547 = vsel %vm467, 1, 0
      %v548 = vsel %vm468, 1, 0
      %v549 = vsel %vm469, 1, 0
      %v550 = vsel %vm470, 1, 0
      %v551 = vsel %vm471, 1, 0
      %v552 = vsel %vm472, 1, 0
      %v553 = vsel %vm473, 1, 0
      %v554 = vsel %vm474, 1, 0
      %v555 = vsel %vm475, 1, 0
      %v556 = vsel %vm476, 1, 0
      %v557 = vsel %vm477, 1, 0
      %v558 = vsel %vm478, 1, 0
      %v559 = vsel %vm479, 1, 0
      %v560 = vsel %vm480, 1, 0
      %v561 = vsel %vm481, 1, 0
      %v562 = vsel %vm482, 1, 0
      %v563 = vsel %vm483, 1, 0
      %v564 = vsel %vm484, 1, 0
      %v565 = vsel %vm485, 1, 0
      %v566 = vsel %vm486, 1, 0
      %v567 = vsel %vm487, 1, 0
      %v568 = vsel %vm488, 1, 0
      %v569 = vsel %vm489, 1, 0
      %v570 = vsel %vm490, 1, 0
      %v571 = vsel %vm491, 1, 0
      %v572 = vsel %vm492, 1, 0
      %v573 = vsel %vm493, 1, 0
      %v574 = vsel %vm494, 1, 0
      %v575 = vsel %vm495, 1, 0
      %v576 = vsel %vm496, 1, 0
      %v577 = vsel %vm497, 1, 0
      %v578 = vsel %vm498, 1, 0
      %v579 = vsel %vm499, 1, 0
      %v580 = vsel %vm500, 1, 0
      %v581 = vsel %vm501, 1, 0
      %v582 = vsel %vm502, 1, 0
      %v583 = vsel %vm503, 1, 0
      %v584 = vsel %vm504, 1, 0
      %v585 = vsel %vm505, 1, 0
      %v586 = vsel %vm506, 1, 0
      %v587 = vsel %vm507, 1, 0
      %v588 = vsel %vm508, 1, 0
      %v589 = vsel %vm509, 1, 0
      %v590 = vsel %vm510, 1, 0
      %v591 = vsel %vm511, 1, 0
      %v592 = vsel %vm512, 1, 0
      %v593 = vsel %vm513, 1, 0
      %v594 = vsel %vm514, 1, 0
      %v595 = vsel %vm515, 1, 0
      %v596 = vsel %vm516, 1, 0
      %v597 = vsel %vm517, 1, 0
      %v598 = vsel %vm518, 1, 0
      %v599 = vsel %vm519, 1, 0
      %v600 = vsel %vm520, 1, 0
      %v601 = vsel %vm521, 1, 0
      %v602 = vsel %vm522, 1, 0
      %v603 = vsel %vm523, 1, 0
      %v604 = vsel %vm524, 1, 0
      %v605 = vsel %vm525, 1, 0
      %v606 = vsel %vm526, 1, 0
      %v607 = vsel %vm527, 1, 0
      %v608 = vsel %vm528, 1, 0
      %v609 = vsel %vm529, 1, 0
      %v610 = vsel %vm530, 1, 0
      %v611 = vsel %vm531, 1, 0
      %v612 = vsel %vm532, 1, 0
      %v613 = vsel %vm533, 1, 0
      %v614 = vsel %vm534, 1, 0
      %v615 = vsel %vm535, 1, 0
      %v616 = vsel %vm536, 1, 0
      %v617 = vsel %vm537, 1, 0
      %v618 = vsel %vm538, 1, 0
      %v619 = vsel %vm539, 1, 0
      %v620 = vsel %vm540, 1, 0
      %v621 = vcvt.s32.f32 %v541
      %v622 = vcvt.s32.f32 %v542
      %v623 = vcvt.s32.f32 %v543
      %v624 = vcvt.s32.f32 %v544
      %v625 = vcvt.s32.f32 %v545
      %v626 = vcvt.s32.f32 %v546
      %v627 = vcvt.s32.f32 %v547
      %v628 = vcvt.s32.f32 %v548
      %v629 = vcvt.s32.f32 %v549
      %v630 = vcvt.s32.f32 %v550
      %v631 = vcvt.s32.f32 %v551
      %v632 = vcvt.s32.f32 %v552
      %v633 = vcvt.s32.f32 %v553
      %v634 = vcvt.s32.f32 %v554
      %v635 = vcvt.s32.f32 %v555
      %v636 = vcvt.s32.f32 %v556
      %v637 = vcvt.s32.f32 %v557
      %v638 = vcvt.s32.f32 %v558
      %v639 = vcvt.s32.f32 %v559
      %v640 = vcvt.s32.f32 %v560
      %v641 = vcvt.s32.f32 %v561
      %v642 = vcvt.s32.f32 %v562
      %v643 = vcvt.s32.f32 %v563
      %v644 = vcvt.s32.f32 %v564
      %v645 = vcvt.s32.f32 %v565
      %v646 = vcvt.s32.f32 %v566
      %v647 = vcvt.s32.f32 %v567
      %v648 = vcvt.s32.f32 %v568
      %v649 = vcvt.s32.f32 %v569
      %v650 = vcvt.s32.f32 %v570
      %v651 = vcvt.s32.f32 %v571
      %v652 = vcvt.s32.f32 %v572
      %v653 = vcvt.s32.f32 %v573
      %v654 = vcvt.s32.f32 %v574
      %v655 = vcvt.s32.f32 %v575
      %v656 = vcvt.s32.f32 %v576
      %v657 = vcvt.s32.f32 %v577
      %v658 = vcvt.s32.f32 %v578
      %v659 = vcvt.s32.f32 %v579
      %v660 = vcvt.s32.f32 %v580
      %v661 = vcvt.s32.f32 %v581
      %v662 = vcvt.s32.f32 %v582
      %v663 = vcvt.s32.f32 %v583
      %v664 = vcvt.s32.f32 %v584
      %v665 = vcvt.s32.f32 %v585
      %v666 = vcvt.s32.f32 %v586
      %v667 = vcvt.s32.f32 %v587
      %v668 = vcvt.s32.f32 %v588
      %v669 = vcvt.s32.f32 %v589
      %v670 = vcvt.s32.f32 %v590
      %v671 = vcvt.s32.f32 %v591
      %v672 = vcvt.s32.f32 %v592
      %v673 = vcvt.s32.f32 %v593
      %v674 = vcvt.s32.f32 %v594
      %v675 = vcvt.s32.f32 %v595
      %v676 = vcvt.s32.f32 %v596
      %v677 = vcvt.s32.f32 %v597
      %v678 = vcvt.s32.f32 %v598
      %v679 = vcvt.s32.f32 %v599
      %v680 = vcvt.s32.f32 %v600
      %v681 = vcvt.s32.f32 %v601
      %v682 = vcvt.s32.f32 %v602
      %v683 = vcvt.s32.f32 %v603
      %v684 = vcvt.s32.f32 %v604
      %v685 = vcvt.s32.f32 %v605
      %v686 = vcvt.s32.f32 %v606
      %v687 = vcvt.s32.f32 %v607
      %v688 = vcvt.s32.f32 %v608
      %v689 = vcvt.s32.f32 %v609
      %v690 = vcvt.s32.f32 %v610
      %v691 = vcvt.s32.f32 %v611
      %v692 = vcvt.s32.f32 %v612
      %v693 = vcvt.s32.f32 %v613
      %v694 = vcvt.s32.f32 %v614
      %v695 = vcvt.s32.f32 %v615
      %v696 = vcvt.s32.f32 %v616
      %v697 = vcvt.s32.f32 %v617
      %v698 = vcvt.s32.f32 %v618
      %v699 = vcvt.s32.f32 %v619
      %v700 = vcvt.s32.f32 %v620
      %vm701 = vmand %vm373, %vm457
      %vm702 = vmand %vm374, %vm458
      %vm703 = vmand %vm375, %vm459
      %vm704 = vmand %vm376, %vm460
      %v705 = vsel %vm701, 1, 0
      %v706 = vsel %vm702, 1, 0
      %v707 = vsel %vm703, 1, 0
      %v708 = vsel %vm704, 1, 0
      %v709 = vcvt.s32.f32 %v705
      %v710 = vcvt.s32.f32 %v706
      %v711 = vcvt.s32.f32 %v707
      %v712 = vcvt.s32.f32 %v708
      %s713 = sshra.s32 %s287, 3
      %s714 = sand.u32 %s287, 7
      %s715 = smul.addr %s713, 4
      %s716 = scalar_lea.vmem %s274, %s715
      %v717 = vld [vmem:[%s716] sm:$0xf]
      %v718 = vld [vmem:[%s716 + $0x4] sm:$0xf]
      %v719 = vld [vmem:[%s716 + $0x8] sm:$0xf]
      %v720 = vld [vmem:[%s716 + $0xc] sm:$0xf]
      %v721 = vld [vmem:[%s716 + $0x10] sm:$0xf]
      %v722 = vld [vmem:[%s716 + $0x14] sm:$0xf]
      %v723 = vld [vmem:[%s716 + $0x18] sm:$0xf]
      %v724 = vld [vmem:[%s716 + $0x1c] sm:$0xf]
      %v725 = vld [vmem:[%s716 + $0x20] sm:$0xf]
      %v726 = vld [vmem:[%s716 + $0x24] sm:$0xf]
      %v727 = vld [vmem:[%s716 + $0x28] sm:$0xf]
      %v728 = vld [vmem:[%s716 + $0x2c] sm:$0xf]
      %v729 = vld [vmem:[%s716 + $0x30] sm:$0xf]
      %v730 = vld [vmem:[%s716 + $0x34] sm:$0xf]
      %v731 = vld [vmem:[%s716 + $0x38] sm:$0xf]
      %v732 = vld [vmem:[%s716 + $0x3c] sm:$0xf]
      %v733 = vld [vmem:[%s716 + $0x40] sm:$0xf]
      %v734 = vld [vmem:[%s716 + $0x44] sm:$0xf]
      %v735 = vld [vmem:[%s716 + $0x48] sm:$0xf]
      %v736 = vld [vmem:[%s716 + $0x4c] sm:$0xf]
      %v737 = vld [vmem:[%s716 + $0x50] sm:$0xf]
      %v738 = vld [vmem:[%s716 + $0x54] sm:$0xf]
      %v739 = vld [vmem:[%s716 + $0x58] sm:$0xf]
      %v740 = vld [vmem:[%s716 + $0x5c] sm:$0xf]
      %v741 = vld [vmem:[%s716 + $0x60] sm:$0xf]
      %v742 = vld [vmem:[%s716 + $0x64] sm:$0xf]
      %v743 = vld [vmem:[%s716 + $0x68] sm:$0xf]
      %v744 = vld [vmem:[%s716 + $0x6c] sm:$0xf]
      %v745 = vld [vmem:[%s716 + $0x70] sm:$0xf]
      %v746 = vld [vmem:[%s716 + $0x74] sm:$0xf]
      %v747 = vld [vmem:[%s716 + $0x78] sm:$0xf]
      %v748 = vld [vmem:[%s716 + $0x7c] sm:$0xf]
      %v749 = vld [vmem:[%s716 + $0x80] sm:$0xf]
      %v750 = vld [vmem:[%s716 + $0x84] sm:$0xf]
      %v751 = vld [vmem:[%s716 + $0x88] sm:$0xf]
      %v752 = vld [vmem:[%s716 + $0x8c] sm:$0xf]
      %v753 = vld [vmem:[%s716 + $0x90] sm:$0xf]
      %v754 = vld [vmem:[%s716 + $0x94] sm:$0xf]
      %v755 = vld [vmem:[%s716 + $0x98] sm:$0xf]
      %v756 = vld [vmem:[%s716 + $0x9c] sm:$0xf]
      %v757 = vld [vmem:[%s716 + $0xa0] sm:$0xf]
      %v758 = vld [vmem:[%s716 + $0xa4] sm:$0xf]
      %v759 = vld [vmem:[%s716 + $0xa8] sm:$0xf]
      %v760 = vld [vmem:[%s716 + $0xac] sm:$0xf]
      %v761 = vld [vmem:[%s716 + $0xb0] sm:$0xf]
      %v762 = vld [vmem:[%s716 + $0xb4] sm:$0xf]
      %v763 = vld [vmem:[%s716 + $0xb8] sm:$0xf]
      %v764 = vld [vmem:[%s716 + $0xbc] sm:$0xf]
      %v765 = vld [vmem:[%s716 + $0xc0] sm:$0xf]
      %v766 = vld [vmem:[%s716 + $0xc4] sm:$0xf]
      %v767 = vld [vmem:[%s716 + $0xc8] sm:$0xf]
      %v768 = vld [vmem:[%s716 + $0xcc] sm:$0xf]
      %v769 = vld [vmem:[%s716 + $0xd0] sm:$0xf]
      %v770 = vld [vmem:[%s716 + $0xd4] sm:$0xf]
      %v771 = vld [vmem:[%s716 + $0xd8] sm:$0xf]
      %v772 = vld [vmem:[%s716 + $0xdc] sm:$0xf]
      %v773 = vld [vmem:[%s716 + $0xe0] sm:$0xf]
      %v774 = vld [vmem:[%s716 + $0xe4] sm:$0xf]
      %v775 = vld [vmem:[%s716 + $0xe8] sm:$0xf]
      %v776 = vld [vmem:[%s716 + $0xec] sm:$0xf]
      %v777 = vld [vmem:[%s716 + $0xf0] sm:$0xf]
      %v778 = vld [vmem:[%s716 + $0xf4] sm:$0xf]
      %v779 = vld [vmem:[%s716 + $0xf8] sm:$0xf]
      %v780 = vld [vmem:[%s716 + $0xfc] sm:$0xf]
      %v781 = vld [vmem:[%s716 + $0x100] sm:$0xf]
      %v782 = vld [vmem:[%s716 + $0x104] sm:$0xf]
      %v783 = vld [vmem:[%s716 + $0x108] sm:$0xf]
      %v784 = vld [vmem:[%s716 + $0x10c] sm:$0xf]
      %v785 = vld [vmem:[%s716 + $0x110] sm:$0xf]
      %v786 = vld [vmem:[%s716 + $0x114] sm:$0xf]
      %v787 = vld [vmem:[%s716 + $0x118] sm:$0xf]
      %v788 = vld [vmem:[%s716 + $0x11c] sm:$0xf]
      %v789 = vld [vmem:[%s716 + $0x120] sm:$0xf]
      %v790 = vld [vmem:[%s716 + $0x124] sm:$0xf]
      %v791 = vld [vmem:[%s716 + $0x128] sm:$0xf]
      %v792 = vld [vmem:[%s716 + $0x12c] sm:$0xf]
      %v793 = vld [vmem:[%s716 + $0x130] sm:$0xf]
      %v794 = vld [vmem:[%s716 + $0x134] sm:$0xf]
      %v795 = vld [vmem:[%s716 + $0x138] sm:$0xf]
      %v796 = vld [vmem:[%s716 + $0x13c] sm:$0xf]
      %v797 = vld [vmem:[%s2] sm:$0xf]
      %v798 = vld [vmem:[%s2 + $0x4] sm:$0xf]
      %v799 = vld [vmem:[%s2 + $0x8] sm:$0xf]
      %v800 = vld [vmem:[%s2 + $0xc] sm:$0xf]
      %v801 = vld [vmem:[%s3] sm:$0x1]
      %v803 = vlaneseq
      %v804 = vshrl.u32 %v803, 7
      %v805 = vsub.s32 0, %v804
      %v806 = vrot.slane %v801, %v805
      %v888 = vunpack.c.l.b16 %v717
      %v889 = vunpack.c.l.b16 %v718
      %v890 = vunpack.c.l.b16 %v719
      %v891 = vunpack.c.l.b16 %v720
      %v892 = vunpack.c.l.b16 %v721
      %v893 = vunpack.c.l.b16 %v722
      %v894 = vunpack.c.l.b16 %v723
      %v895 = vunpack.c.l.b16 %v724
      %v896 = vunpack.c.l.b16 %v725
      %v897 = vunpack.c.l.b16 %v726
      %v898 = vunpack.c.l.b16 %v727
      %v899 = vunpack.c.l.b16 %v728
      %v900 = vunpack.c.l.b16 %v729
      %v901 = vunpack.c.l.b16 %v730
      %v902 = vunpack.c.l.b16 %v731
      %v903 = vunpack.c.l.b16 %v732
      %v904 = vunpack.c.l.b16 %v733
      %v905 = vunpack.c.l.b16 %v734
      %v906 = vunpack.c.l.b16 %v735
      %v907 = vunpack.c.l.b16 %v736
      %v908 = vunpack.c.l.b16 %v737
      %v909 = vunpack.c.l.b16 %v738
      %v910 = vunpack.c.l.b16 %v739
      %v911 = vunpack.c.l.b16 %v740
      %v912 = vunpack.c.l.b16 %v741
      %v913 = vunpack.c.l.b16 %v742
      %v914 = vunpack.c.l.b16 %v743
      %v915 = vunpack.c.l.b16 %v744
      %v916 = vunpack.c.l.b16 %v745
      %v917 = vunpack.c.l.b16 %v746
      %v918 = vunpack.c.l.b16 %v747
      %v919 = vunpack.c.l.b16 %v748
      %v920 = vunpack.c.l.b16 %v749
      %v921 = vunpack.c.l.b16 %v750
      %v922 = vunpack.c.l.b16 %v751
      %v923 = vunpack.c.l.b16 %v752
      %v924 = vunpack.c.l.b16 %v753
      %v925 = vunpack.c.l.b16 %v754
      %v926 = vunpack.c.l.b16 %v755
      %v927 = vunpack.c.l.b16 %v756
      %v928 = vunpack.c.l.b16 %v757
      %v929 = vunpack.c.l.b16 %v758
      %v930 = vunpack.c.l.b16 %v759
      %v931 = vunpack.c.l.b16 %v760
      %v932 = vunpack.c.l.b16 %v761
      %v933 = vunpack.c.l.b16 %v762
      %v934 = vunpack.c.l.b16 %v763
      %v935 = vunpack.c.l.b16 %v764
      %v936 = vunpack.c.l.b16 %v765
      %v937 = vunpack.c.l.b16 %v766
      %v938 = vunpack.c.l.b16 %v767
      %v939 = vunpack.c.l.b16 %v768
      %v940 = vunpack.c.l.b16 %v769
      %v941 = vunpack.c.l.b16 %v770
      %v942 = vunpack.c.l.b16 %v771
      %v943 = vunpack.c.l.b16 %v772
      %v944 = vunpack.c.l.b16 %v773
      %v945 = vunpack.c.l.b16 %v774
      %v946 = vunpack.c.l.b16 %v775
      %v947 = vunpack.c.l.b16 %v776
      %v948 = vunpack.c.l.b16 %v777
      %v949 = vunpack.c.l.b16 %v778
      %v950 = vunpack.c.l.b16 %v779
      %v951 = vunpack.c.l.b16 %v780
      %v952 = vunpack.c.l.b16 %v781
      %v953 = vunpack.c.l.b16 %v782
      %v954 = vunpack.c.l.b16 %v783
      %v955 = vunpack.c.l.b16 %v784
      %v956 = vunpack.c.l.b16 %v785
      %v957 = vunpack.c.l.b16 %v786
      %v958 = vunpack.c.l.b16 %v787
      %v959 = vunpack.c.l.b16 %v788
      %v960 = vunpack.c.l.b16 %v789
      %v961 = vunpack.c.l.b16 %v790
      %v962 = vunpack.c.l.b16 %v791
      %v963 = vunpack.c.l.b16 %v792
      %v964 = vunpack.c.l.b16 %v793
      %v965 = vunpack.c.l.b16 %v794
      %v966 = vunpack.c.l.b16 %v795
      %v967 = vunpack.c.l.b16 %v796
      %v968 = vpack.c.b16 %v889, %v888
      %v969 = vpack.c.b16 %v891, %v890
      %v970 = vpack.c.b16 %v893, %v892
      %v971 = vpack.c.b16 %v895, %v894
      %v972 = vpack.c.b16 %v897, %v896
      %v973 = vpack.c.b16 %v899, %v898
      %v974 = vpack.c.b16 %v901, %v900
      %v975 = vpack.c.b16 %v903, %v902
      %v976 = vpack.c.b16 %v905, %v904
      %v977 = vpack.c.b16 %v907, %v906
      %v978 = vpack.c.b16 %v909, %v908
      %v979 = vpack.c.b16 %v911, %v910
      %v980 = vpack.c.b16 %v913, %v912
      %v981 = vpack.c.b16 %v915, %v914
      %v982 = vpack.c.b16 %v917, %v916
      %v983 = vpack.c.b16 %v919, %v918
      %v984 = vpack.c.b16 %v921, %v920
      %v985 = vpack.c.b16 %v923, %v922
      %v986 = vpack.c.b16 %v925, %v924
      %v987 = vpack.c.b16 %v927, %v926
      %v988 = vpack.c.b16 %v929, %v928
      %v989 = vpack.c.b16 %v931, %v930
      %v990 = vpack.c.b16 %v933, %v932
      %v991 = vpack.c.b16 %v935, %v934
      %v992 = vpack.c.b16 %v937, %v936
      %v993 = vpack.c.b16 %v939, %v938
      %v994 = vpack.c.b16 %v941, %v940
      %v995 = vpack.c.b16 %v943, %v942
      %v996 = vpack.c.b16 %v945, %v944
      %v997 = vpack.c.b16 %v947, %v946
      %v998 = vpack.c.b16 %v949, %v948
      %v999 = vpack.c.b16 %v951, %v950
      %v1000 = vpack.c.b16 %v953, %v952
      %v1001 = vpack.c.b16 %v955, %v954
      %v1002 = vpack.c.b16 %v957, %v956
      %v1003 = vpack.c.b16 %v959, %v958
      %v1004 = vpack.c.b16 %v961, %v960
      %v1005 = vpack.c.b16 %v963, %v962
      %v1006 = vpack.c.b16 %v965, %v964
      %v1007 = vpack.c.b16 %v967, %v966
      %v1012 = vunpack.c.l.b16 %v797
      %v1013 = vunpack.c.l.b16 %v798
      %v1014 = vunpack.c.l.b16 %v799
      %v1015 = vunpack.c.l.b16 %v800
      %v1016 = vpack.c.b16 %v1013, %v1012
      %v1017 = vpack.c.b16 %v1015, %v1014
      %vm1020 = vcmask 261120
      %v1022 = vsel %vm1020, %v968, 0
      %v1025 = vsel %vm1020, %v969, 0
      %v1028 = vsel %vm1020, %v970, 0
      %v1031 = vsel %vm1020, %v971, 0
      %v1034 = vsel %vm1020, %v972, 0
      %v1037 = vsel %vm1020, %v973, 0
      %v1040 = vsel %vm1020, %v974, 0
      %v1043 = vsel %vm1020, %v975, 0
      %v1046 = vsel %vm1020, %v976, 0
      %v1049 = vsel %vm1020, %v977, 0
      %v1052 = vsel %vm1020, %v978, 0
      %v1055 = vsel %vm1020, %v979, 0
      %v1058 = vsel %vm1020, %v980, 0
      %v1061 = vsel %vm1020, %v981, 0
      %v1064 = vsel %vm1020, %v982, 0
      %v1067 = vsel %vm1020, %v983, 0
      %v1070 = vsel %vm1020, %v984, 0
      %v1073 = vsel %vm1020, %v985, 0
      %v1076 = vsel %vm1020, %v986, 0
      %v1079 = vsel %vm1020, %v987, 0
      %v1082 = vsel %vm1020, %v988, 0
      %v1085 = vsel %vm1020, %v989, 0
      %v1088 = vsel %vm1020, %v990, 0
      %v1091 = vsel %vm1020, %v991, 0
      %v1094 = vsel %vm1020, %v992, 0
      %v1097 = vsel %vm1020, %v993, 0
      %v1100 = vsel %vm1020, %v994, 0
      %v1103 = vsel %vm1020, %v995, 0
      %v1106 = vsel %vm1020, %v996, 0
      %v1109 = vsel %vm1020, %v997, 0
      %v1112 = vsel %vm1020, %v998, 0
      %v1115 = vsel %vm1020, %v999, 0
      %v1118 = vsel %vm1020, %v1000, 0
      %v1121 = vsel %vm1020, %v1001, 0
      %v1124 = vsel %vm1020, %v1002, 0
      %v1127 = vsel %vm1020, %v1003, 0
      %v1130 = vsel %vm1020, %v1004, 0
      %v1133 = vsel %vm1020, %v1005, 0
      %v1136 = vsel %vm1020, %v1006, 0
      %v1139 = vsel %vm1020, %v1007, 0
      %1141 = vmatprep.subr.bf16.mxu0 0
      %1142 = vmatpush1.bf16.msra.mxu0 %v1016
      %1143 = vmatprep.subr.bf16.mxu0 0
      %1144 = vmatpush1.bf16.msra.mxu0 %v1017
      %1145 = vmatprep.subr.bf16.mxu0 0
      %1146 = vmatpush1.bf16.msra.mxu0 0
      %1147 = vmatprep.subr.bf16.mxu0 0
      %1148 = vmatpush1.bf16.msra.mxu0 0
      %1149 = vmatprep.subr.bf16.mxu0 0
      %1150 = vmatpush1.bf16.msra.mxu0 0
      %1151 = vmatprep.subr.bf16.mxu0 0
      %1152 = vmatpush1.bf16.msra.mxu0 0
      %1153 = vmatprep.subr.bf16.mxu0 0
      %1154 = vmatpush1.bf16.msra.mxu0 0
      %1155 = vmatprep.subr.bf16.mxu0 0
      %1156 = vmatpush1.bf16.msra.mxu0 0
      %1157 = vmatprep.subr.bf16.mxu0 0
      %1158 = vmatpush1.bf16.msra.mxu0 0
      %1159 = vmatprep.subr.bf16.mxu0 0
      %1160 = vmatpush1.bf16.msra.mxu0 0
      %1161 = vmatprep.subr.bf16.mxu0 0
      %1162 = vmatpush1.bf16.msra.mxu0 0
      %1163 = vmatprep.subr.bf16.mxu0 0
      %1164 = vmatpush1.bf16.msra.mxu0 0
      %1165 = vmatprep.subr.bf16.mxu0 0
      %1166 = vmatpush1.bf16.msra.mxu0 0
      %1167 = vmatprep.subr.bf16.mxu0 0
      %1168 = vmatpush1.bf16.msra.mxu0 0
      %1169 = vmatprep.subr.bf16.mxu0 0
      %1170 = vmatpush1.bf16.msra.mxu0 0
      %1171 = vmatprep.subr.bf16.mxu0 0
      %1172 = vmatpush1.bf16.msra.mxu0 0
      %1173 = vmatprep.mubr.bf16.mxu0 0
      %1174 = vmatmul.mubr.bf16.gmra.mrb[0].mxu0 %v1022
      %v1175 = vpop.f32.mrb[0].mxu0
      %v1176 = vadd.f32 %v806, %v1175
      %v1177 = vpop.f32.mrb[0].mxu0
      %v1178 = vpop.f32.mrb[0].mxu0
      %v1179 = vadd.f32 %v806, %v1178
      %v1180 = vpop.f32.mrb[0].mxu0
      %1181 = vmatprep.mubr.bf16.mxu0 0
      %1182 = vmatmul.mubr.bf16.gmra.mrb[0].mxu0 %v1025
      %v1183 = vpop.f32.mrb[0].mxu0
      %v1184 = vadd.f32 %v806, %v1183
      %v1185 = vpop.f32.mrb[0].mxu0
      %v1186 = vpop.f32.mrb[0].mxu0
      %v1187 = vadd.f32 %v806, %v1186
      %v1188 = vpop.f32.mrb[0].mxu0
      %1189 = vmatprep.mubr.bf16.mxu0 0
      %1190 = vmatmul.mubr.bf16.gmra.mrb[0].mxu0 %v1028
      %v1191 = vpop.f32.mrb[0].mxu0
      %v1192 = vadd.f32 %v806, %v1191
      %v1193 = vpop.f32.mrb[0].mxu0
      %v1194 = vpop.f32.mrb[0].mxu0
      %v1195 = vadd.f32 %v806, %v1194
      %v1196 = vpop.f32.mrb[0].mxu0
      %1197 = vmatprep.mubr.bf16.mxu0 0
      %1198 = vmatmul.mubr.bf16.gmra.mrb[0].mxu0 %v1031
      %v1199 = vpop.f32.mrb[0].mxu0
      %v1200 = vadd.f32 %v806, %v1199
      %v1201 = vpop.f32.mrb[0].mxu0
      %v1202 = vpop.f32.mrb[0].mxu0
      %v1203 = vadd.f32 %v806, %v1202
      %v1204 = vpop.f32.mrb[0].mxu0
      %1205 = vmatprep.mubr.bf16.mxu0 0
      %1206 = vmatmul.mubr.bf16.gmra.mrb[0].mxu0 %v1034
      %v1207 = vpop.f32.mrb[0].mxu0
      %v1208 = vadd.f32 %v806, %v1207
      %v1209 = vpop.f32.mrb[0].mxu0
      %v1210 = vpop.f32.mrb[0].mxu0
      %v1211 = vadd.f32 %v806, %v1210
      %v1212 = vpop.f32.mrb[0].mxu0
      %1213 = vmatprep.mubr.bf16.mxu0 0
      %1214 = vmatmul.mubr.bf16.gmra.mrb[0].mxu0 %v1037
      %v1215 = vpop.f32.mrb[0].mxu0
      %v1216 = vadd.f32 %v806, %v1215
      %v1217 = vpop.f32.mrb[0].mxu0
      %v1218 = vpop.f32.mrb[0].mxu0
      %v1219 = vadd.f32 %v806, %v1218
      %v1220 = vpop.f32.mrb[0].mxu0
      %1221 = vmatprep.mubr.bf16.mxu0 0
      %1222 = vmatmul.mubr.bf16.gmra.mrb[0].mxu0 %v1040
      %v1223 = vpop.f32.mrb[0].mxu0
      %v1224 = vadd.f32 %v806, %v1223
      %v1225 = vpop.f32.mrb[0].mxu0
      %v1226 = vpop.f32.mrb[0].mxu0
      %v1227 = vadd.f32 %v806, %v1226
      %v1228 = vpop.f32.mrb[0].mxu0
      %1229 = vmatprep.mubr.bf16.mxu0 0
      %1230 = vmatmul.mubr.bf16.gmra.mrb[0].mxu0 %v1043
      %v1231 = vpop.f32.mrb[0].mxu0
      %v1232 = vadd.f32 %v806, %v1231
      %v1233 = vpop.f32.mrb[0].mxu0
      %v1234 = vpop.f32.mrb[0].mxu0
      %v1235 = vadd.f32 %v806, %v1234
      %v1236 = vpop.f32.mrb[0].mxu0
      %1237 = vmatprep.mubr.bf16.mxu0 0
      %1238 = vmatmul.mubr.bf16.gmra.mrb[0].mxu0 %v1046
      %v1239 = vpop.f32.mrb[0].mxu0
      %v1240 = vadd.f32 %v806, %v1239
      %v1241 = vpop.f32.mrb[0].mxu0
      %v1242 = vpop.f32.mrb[0].mxu0
      %v1243 = vadd.f32 %v806, %v1242
      %v1244 = vpop.f32.mrb[0].mxu0
      %1245 = vmatprep.mubr.bf16.mxu0 0
      %1246 = vmatmul.mubr.bf16.gmra.mrb[0].mxu0 %v1049
      %v1247 = vpop.f32.mrb[0].mxu0
      %v1248 = vadd.f32 %v806, %v1247
      %v1249 = vpop.f32.mrb[0].mxu0
      %v1250 = vpop.f32.mrb[0].mxu0
      %v1251 = vadd.f32 %v806, %v1250
      %v1252 = vpop.f32.mrb[0].mxu0
      %1253 = vmatprep.mubr.bf16.mxu0 0
      %1254 = vmatmul.mubr.bf16.gmra.mrb[0].mxu0 %v1052
      %v1255 = vpop.f32.mrb[0].mxu0
      %v1256 = vadd.f32 %v806, %v1255
      %v1257 = vpop.f32.mrb[0].mxu0
      %v1258 = vpop.f32.mrb[0].mxu0
      %v1259 = vadd.f32 %v806, %v1258
      %v1260 = vpop.f32.mrb[0].mxu0
      %1261 = vmatprep.mubr.bf16.mxu0 0
      %1262 = vmatmul.mubr.bf16.gmra.mrb[0].mxu0 %v1055
      %v1263 = vpop.f32.mrb[0].mxu0
      %v1264 = vadd.f32 %v806, %v1263
      %v1265 = vpop.f32.mrb[0].mxu0
      %v1266 = vpop.f32.mrb[0].mxu0
      %v1267 = vadd.f32 %v806, %v1266
      %v1268 = vpop.f32.mrb[0].mxu0
      %1269 = vmatprep.mubr.bf16.mxu0 0
      %1270 = vmatmul.mubr.bf16.gmra.mrb[0].mxu0 %v1058
      %v1271 = vpop.f32.mrb[0].mxu0
      %v1272 = vadd.f32 %v806, %v1271
      %v1273 = vpop.f32.mrb[0].mxu0
      %v1274 = vpop.f32.mrb[0].mxu0
      %v1275 = vadd.f32 %v806, %v1274
      %v1276 = vpop.f32.mrb[0].mxu0
      %1277 = vmatprep.mubr.bf16.mxu0 0
      %1278 = vmatmul.mubr.bf16.gmra.mrb[0].mxu0 %v1061
      %v1279 = vpop.f32.mrb[0].mxu0
      %v1280 = vadd.f32 %v806, %v1279
      %v1281 = vpop.f32.mrb[0].mxu0
      %v1282 = vpop.f32.mrb[0].mxu0
      %v1283 = vadd.f32 %v806, %v1282
      %v1284 = vpop.f32.mrb[0].mxu0
      %1285 = vmatprep.mubr.bf16.mxu0 0
      %1286 = vmatmul.mubr.bf16.gmra.mrb[0].mxu0 %v1064
      %v1287 = vpop.f32.mrb[0].mxu0
      %v1288 = vadd.f32 %v806, %v1287
      %v1289 = vpop.f32.mrb[0].mxu0
      %v1290 = vpop.f32.mrb[0].mxu0
      %v1291 = vadd.f32 %v806, %v1290
      %v1292 = vpop.f32.mrb[0].mxu0
      %1293 = vmatprep.mubr.bf16.mxu0 0
      %1294 = vmatmul.mubr.bf16.gmra.mrb[0].mxu0 %v1067
      %v1295 = vpop.f32.mrb[0].mxu0
      %v1296 = vadd.f32 %v806, %v1295
      %v1297 = vpop.f32.mrb[0].mxu0
      %v1298 = vpop.f32.mrb[0].mxu0
      %v1299 = vadd.f32 %v806, %v1298
      %v1300 = vpop.f32.mrb[0].mxu0
      %1301 = vmatprep.mubr.bf16.mxu0 0
      %1302 = vmatmul.mubr.bf16.gmra.mrb[0].mxu0 %v1070
      %v1303 = vpop.f32.mrb[0].mxu0
      %v1304 = vadd.f32 %v806, %v1303
      %v1305 = vpop.f32.mrb[0].mxu0
      %v1306 = vpop.f32.mrb[0].mxu0
      %v1307 = vadd.f32 %v806, %v1306
      %v1308 = vpop.f32.mrb[0].mxu0
      %1309 = vmatprep.mubr.bf16.mxu0 0
      %1310 = vmatmul.mubr.bf16.gmra.mrb[0].mxu0 %v1073
      %v1311 = vpop.f32.mrb[0].mxu0
      %v1312 = vadd.f32 %v806, %v1311
      %v1313 = vpop.f32.mrb[0].mxu0
      %v1314 = vpop.f32.mrb[0].mxu0
      %v1315 = vadd.f32 %v806, %v1314
      %v1316 = vpop.f32.mrb[0].mxu0
      %1317 = vmatprep.mubr.bf16.mxu0 0
      %1318 = vmatmul.mubr.bf16.gmra.mrb[0].mxu0 %v1076
      %v1319 = vpop.f32.mrb[0].mxu0
      %v1320 = vadd.f32 %v806, %v1319
      %v1321 = vpop.f32.mrb[0].mxu0
      %v1322 = vpop.f32.mrb[0].mxu0
      %v1323 = vadd.f32 %v806, %v1322
      %v1324 = vpop.f32.mrb[0].mxu0
      %1325 = vmatprep.mubr.bf16.mxu0 0
      %1326 = vmatmul.mubr.bf16.gmra.mrb[0].mxu0 %v1079
      %v1327 = vpop.f32.mrb[0].mxu0
      %v1328 = vadd.f32 %v806, %v1327
      %v1329 = vpop.f32.mrb[0].mxu0
      %v1330 = vpop.f32.mrb[0].mxu0
      %v1331 = vadd.f32 %v806, %v1330
      %v1332 = vpop.f32.mrb[0].mxu0
      %1333 = vmatprep.mubr.bf16.mxu0 0
      %1334 = vmatmul.mubr.bf16.gmra.mrb[0].mxu0 %v1082
      %v1335 = vpop.f32.mrb[0].mxu0
      %v1336 = vadd.f32 %v806, %v1335
      %v1337 = vpop.f32.mrb[0].mxu0
      %v1338 = vpop.f32.mrb[0].mxu0
      %v1339 = vadd.f32 %v806, %v1338
      %v1340 = vpop.f32.mrb[0].mxu0
      %1341 = vmatprep.mubr.bf16.mxu0 0
      %1342 = vmatmul.mubr.bf16.gmra.mrb[0].mxu0 %v1085
      %v1343 = vpop.f32.mrb[0].mxu0
      %v1344 = vadd.f32 %v806, %v1343
      %v1345 = vpop.f32.mrb[0].mxu0
      %v1346 = vpop.f32.mrb[0].mxu0
      %v1347 = vadd.f32 %v806, %v1346
      %v1348 = vpop.f32.mrb[0].mxu0
      %1349 = vmatprep.mubr.bf16.mxu0 0
      %1350 = vmatmul.mubr.bf16.gmra.mrb[0].mxu0 %v1088
      %v1351 = vpop.f32.mrb[0].mxu0
      %v1352 = vadd.f32 %v806, %v1351
      %v1353 = vpop.f32.mrb[0].mxu0
      %v1354 = vpop.f32.mrb[0].mxu0
      %v1355 = vadd.f32 %v806, %v1354
      %v1356 = vpop.f32.mrb[0].mxu0
      %1357 = vmatprep.mubr.bf16.mxu0 0
      %1358 = vmatmul.mubr.bf16.gmra.mrb[0].mxu0 %v1091
      %v1359 = vpop.f32.mrb[0].mxu0
      %v1360 = vadd.f32 %v806, %v1359
      %v1361 = vpop.f32.mrb[0].mxu0
      %v1362 = vpop.f32.mrb[0].mxu0
      %v1363 = vadd.f32 %v806, %v1362
      %v1364 = vpop.f32.mrb[0].mxu0
      %1365 = vmatprep.mubr.bf16.mxu0 0
      %1366 = vmatmul.mubr.bf16.gmra.mrb[0].mxu0 %v1094
      %v1367 = vpop.f32.mrb[0].mxu0
      %v1368 = vadd.f32 %v806, %v1367
      %v1369 = vpop.f32.mrb[0].mxu0
      %v1370 = vpop.f32.mrb[0].mxu0
      %v1371 = vadd.f32 %v806, %v1370
      %v1372 = vpop.f32.mrb[0].mxu0
      %1373 = vmatprep.mubr.bf16.mxu0 0
      %1374 = vmatmul.mubr.bf16.gmra.mrb[0].mxu0 %v1097
      %v1375 = vpop.f32.mrb[0].mxu0
      %v1376 = vadd.f32 %v806, %v1375
      %v1377 = vpop.f32.mrb[0].mxu0
      %v1378 = vpop.f32.mrb[0].mxu0
      %v1379 = vadd.f32 %v806, %v1378
      %v1380 = vpop.f32.mrb[0].mxu0
      %1381 = vmatprep.mubr.bf16.mxu0 0
      %1382 = vmatmul.mubr.bf16.gmra.mrb[0].mxu0 %v1100
      %v1383 = vpop.f32.mrb[0].mxu0
      %v1384 = vadd.f32 %v806, %v1383
      %v1385 = vpop.f32.mrb[0].mxu0
      %v1386 = vpop.f32.mrb[0].mxu0
      %v1387 = vadd.f32 %v806, %v1386
      %v1388 = vpop.f32.mrb[0].mxu0
      %1389 = vmatprep.mubr.bf16.mxu0 0
      %1390 = vmatmul.mubr.bf16.gmra.mrb[0].mxu0 %v1103
      %v1391 = vpop.f32.mrb[0].mxu0
      %v1392 = vadd.f32 %v806, %v1391
      %v1393 = vpop.f32.mrb[0].mxu0
      %v1394 = vpop.f32.mrb[0].mxu0
      %v1395 = vadd.f32 %v806, %v1394
      %v1396 = vpop.f32.mrb[0].mxu0
      %1397 = vmatprep.mubr.bf16.mxu0 0
      %1398 = vmatmul.mubr.bf16.gmra.mrb[0].mxu0 %v1106
      %v1399 = vpop.f32.mrb[0].mxu0
      %v1400 = vadd.f32 %v806, %v1399
      %v1401 = vpop.f32.mrb[0].mxu0
      %v1402 = vpop.f32.mrb[0].mxu0
      %v1403 = vadd.f32 %v806, %v1402
      %v1404 = vpop.f32.mrb[0].mxu0
      %1405 = vmatprep.mubr.bf16.mxu0 0
      %1406 = vmatmul.mubr.bf16.gmra.mrb[0].mxu0 %v1109
      %v1407 = vpop.f32.mrb[0].mxu0
      %v1408 = vadd.f32 %v806, %v1407
      %v1409 = vpop.f32.mrb[0].mxu0
      %v1410 = vpop.f32.mrb[0].mxu0
      %v1411 = vadd.f32 %v806, %v1410
      %v1412 = vpop.f32.mrb[0].mxu0
      %1413 = vmatprep.mubr.bf16.mxu0 0
      %1414 = vmatmul.mubr.bf16.gmra.mrb[0].mxu0 %v1112
      %v1415 = vpop.f32.mrb[0].mxu0
      %v1416 = vadd.f32 %v806, %v1415
      %v1417 = vpop.f32.mrb[0].mxu0
      %v1418 = vpop.f32.mrb[0].mxu0
      %v1419 = vadd.f32 %v806, %v1418
      %v1420 = vpop.f32.mrb[0].mxu0
      %1421 = vmatprep.mubr.bf16.mxu0 0
      %1422 = vmatmul.mubr.bf16.gmra.mrb[0].mxu0 %v1115
      %v1423 = vpop.f32.mrb[0].mxu0
      %v1424 = vadd.f32 %v806, %v1423
      %v1425 = vpop.f32.mrb[0].mxu0
      %v1426 = vpop.f32.mrb[0].mxu0
      %v1427 = vadd.f32 %v806, %v1426
      %v1428 = vpop.f32.mrb[0].mxu0
      %1429 = vmatprep.mubr.bf16.mxu0 0
      %1430 = vmatmul.mubr.bf16.gmra.mrb[0].mxu0 %v1118
      %v1431 = vpop.f32.mrb[0].mxu0
      %v1432 = vadd.f32 %v806, %v1431
      %v1433 = vpop.f32.mrb[0].mxu0
      %v1434 = vpop.f32.mrb[0].mxu0
      %v1435 = vadd.f32 %v806, %v1434
      %v1436 = vpop.f32.mrb[0].mxu0
      %1437 = vmatprep.mubr.bf16.mxu0 0
      %1438 = vmatmul.mubr.bf16.gmra.mrb[0].mxu0 %v1121
      %v1439 = vpop.f32.mrb[0].mxu0
      %v1440 = vadd.f32 %v806, %v1439
      %v1441 = vpop.f32.mrb[0].mxu0
      %v1442 = vpop.f32.mrb[0].mxu0
      %v1443 = vadd.f32 %v806, %v1442
      %v1444 = vpop.f32.mrb[0].mxu0
      %1445 = vmatprep.mubr.bf16.mxu0 0
      %1446 = vmatmul.mubr.bf16.gmra.mrb[0].mxu0 %v1124
      %v1447 = vpop.f32.mrb[0].mxu0
      %v1448 = vadd.f32 %v806, %v1447
      %v1449 = vpop.f32.mrb[0].mxu0
      %v1450 = vpop.f32.mrb[0].mxu0
      %v1451 = vadd.f32 %v806, %v1450
      %v1452 = vpop.f32.mrb[0].mxu0
      %1453 = vmatprep.mubr.bf16.mxu0 0
      %1454 = vmatmul.mubr.bf16.gmra.mrb[0].mxu0 %v1127
      %v1455 = vpop.f32.mrb[0].mxu0
      %v1456 = vadd.f32 %v806, %v1455
      %v1457 = vpop.f32.mrb[0].mxu0
      %v1458 = vpop.f32.mrb[0].mxu0
      %v1459 = vadd.f32 %v806, %v1458
      %v1460 = vpop.f32.mrb[0].mxu0
      %1461 = vmatprep.mubr.bf16.mxu0 0
      %1462 = vmatmul.mubr.bf16.gmra.mrb[0].mxu0 %v1130
      %v1463 = vpop.f32.mrb[0].mxu0
      %v1464 = vadd.f32 %v806, %v1463
      %v1465 = vpop.f32.mrb[0].mxu0
      %v1466 = vpop.f32.mrb[0].mxu0
      %v1467 = vadd.f32 %v806, %v1466
      %v1468 = vpop.f32.mrb[0].mxu0
      %1469 = vmatprep.mubr.bf16.mxu0 0
      %1470 = vmatmul.mubr.bf16.gmra.mrb[0].mxu0 %v1133
      %v1471 = vpop.f32.mrb[0].mxu0
      %v1472 = vadd.f32 %v806, %v1471
      %v1473 = vpop.f32.mrb[0].mxu0
      %v1474 = vpop.f32.mrb[0].mxu0
      %v1475 = vadd.f32 %v806, %v1474
      %v1476 = vpop.f32.mrb[0].mxu0
      %1477 = vmatprep.mubr.bf16.mxu0 0
      %1478 = vmatmul.mubr.bf16.gmra.mrb[0].mxu0 %v1136
      %v1479 = vpop.f32.mrb[0].mxu0
      %v1480 = vadd.f32 %v806, %v1479
      %v1481 = vpop.f32.mrb[0].mxu0
      %v1482 = vpop.f32.mrb[0].mxu0
      %v1483 = vadd.f32 %v806, %v1482
      %v1484 = vpop.f32.mrb[0].mxu0
      %1485 = vmatprep.mubr.bf16.mxu0 0
      %1486 = vmatmul.mubr.bf16.gmra.mrb[0].mxu0 %v1139
      %v1487 = vpop.f32.mrb[0].mxu0
      %v1488 = vadd.f32 %v806, %v1487
      %v1489 = vpop.f32.mrb[0].mxu0
      %v1490 = vpop.f32.mrb[0].mxu0
      %v1491 = vadd.f32 %v806, %v1490
      %v1492 = vpop.f32.mrb[0].mxu0
      %1493 = vdwg.mxu0
      %v1494 = vmax.f32 %v1176, 0.0
      %v1495 = vmax.f32 %v1179, 0.0
      %v1496 = vmax.f32 %v1184, 0.0
      %v1497 = vmax.f32 %v1187, 0.0
      %v1498 = vmax.f32 %v1192, 0.0
      %v1499 = vmax.f32 %v1195, 0.0
      %v1500 = vmax.f32 %v1200, 0.0
      %v1501 = vmax.f32 %v1203, 0.0
      %v1502 = vmax.f32 %v1208, 0.0
      %v1503 = vmax.f32 %v1211, 0.0
      %v1504 = vmax.f32 %v1216, 0.0
      %v1505 = vmax.f32 %v1219, 0.0
      %v1506 = vmax.f32 %v1224, 0.0
      %v1507 = vmax.f32 %v1227, 0.0
      %v1508 = vmax.f32 %v1232, 0.0
      %v1509 = vmax.f32 %v1235, 0.0
      %v1510 = vmax.f32 %v1240, 0.0
      %v1511 = vmax.f32 %v1243, 0.0
      %v1512 = vmax.f32 %v1248, 0.0
      %v1513 = vmax.f32 %v1251, 0.0
      %v1514 = vmax.f32 %v1256, 0.0
      %v1515 = vmax.f32 %v1259, 0.0
      %v1516 = vmax.f32 %v1264, 0.0
      %v1517 = vmax.f32 %v1267, 0.0
      %v1518 = vmax.f32 %v1272, 0.0
      %v1519 = vmax.f32 %v1275, 0.0
      %v1520 = vmax.f32 %v1280, 0.0
      %v1521 = vmax.f32 %v1283, 0.0
      %v1522 = vmax.f32 %v1288, 0.0
      %v1523 = vmax.f32 %v1291, 0.0
      %v1524 = vmax.f32 %v1296, 0.0
      %v1525 = vmax.f32 %v1299, 0.0
      %v1526 = vmax.f32 %v1304, 0.0
      %v1527 = vmax.f32 %v1307, 0.0
      %v1528 = vmax.f32 %v1312, 0.0
      %v1529 = vmax.f32 %v1315, 0.0
      %v1530 = vmax.f32 %v1320, 0.0
      %v1531 = vmax.f32 %v1323, 0.0
      %v1532 = vmax.f32 %v1328, 0.0
      %v1533 = vmax.f32 %v1331, 0.0
      %v1534 = vmax.f32 %v1336, 0.0
      %v1535 = vmax.f32 %v1339, 0.0
      %v1536 = vmax.f32 %v1344, 0.0
      %v1537 = vmax.f32 %v1347, 0.0
      %v1538 = vmax.f32 %v1352, 0.0
      %v1539 = vmax.f32 %v1355, 0.0
      %v1540 = vmax.f32 %v1360, 0.0
      %v1541 = vmax.f32 %v1363, 0.0
      %v1542 = vmax.f32 %v1368, 0.0
      %v1543 = vmax.f32 %v1371, 0.0
      %v1544 = vmax.f32 %v1376, 0.0
      %v1545 = vmax.f32 %v1379, 0.0
      %v1546 = vmax.f32 %v1384, 0.0
      %v1547 = vmax.f32 %v1387, 0.0
      %v1548 = vmax.f32 %v1392, 0.0
      %v1549 = vmax.f32 %v1395, 0.0
      %v1550 = vmax.f32 %v1400, 0.0
      %v1551 = vmax.f32 %v1403, 0.0
      %v1552 = vmax.f32 %v1408, 0.0
      %v1553 = vmax.f32 %v1411, 0.0
      %v1554 = vmax.f32 %v1416, 0.0
      %v1555 = vmax.f32 %v1419, 0.0
      %v1556 = vmax.f32 %v1424, 0.0
      %v1557 = vmax.f32 %v1427, 0.0
      %v1558 = vmax.f32 %v1432, 0.0
      %v1559 = vmax.f32 %v1435, 0.0
      %v1560 = vmax.f32 %v1440, 0.0
      %v1561 = vmax.f32 %v1443, 0.0
      %v1562 = vmax.f32 %v1448, 0.0
      %v1563 = vmax.f32 %v1451, 0.0
      %v1564 = vmax.f32 %v1456, 0.0
      %v1565 = vmax.f32 %v1459, 0.0
      %v1566 = vmax.f32 %v1464, 0.0
      %v1567 = vmax.f32 %v1467, 0.0
      %v1568 = vmax.f32 %v1472, 0.0
      %v1569 = vmax.f32 %v1475, 0.0
      %v1570 = vmax.f32 %v1480, 0.0
      %v1571 = vmax.f32 %v1483, 0.0
      %v1572 = vmax.f32 %v1488, 0.0
      %v1573 = vmax.f32 %v1491, 0.0
      %v1574 = vmul.f32 %v1494, %v621
      %v1575 = vmul.f32 %v1495, %v622
      %v1576 = vmul.f32 %v1496, %v623
      %v1577 = vmul.f32 %v1497, %v624
      %v1578 = vmul.f32 %v1498, %v625
      %v1579 = vmul.f32 %v1499, %v626
      %v1580 = vmul.f32 %v1500, %v627
      %v1581 = vmul.f32 %v1501, %v628
      %v1582 = vmul.f32 %v1502, %v629
      %v1583 = vmul.f32 %v1503, %v630
      %v1584 = vmul.f32 %v1504, %v631
      %v1585 = vmul.f32 %v1505, %v632
      %v1586 = vmul.f32 %v1506, %v633
      %v1587 = vmul.f32 %v1507, %v634
      %v1588 = vmul.f32 %v1508, %v635
      %v1589 = vmul.f32 %v1509, %v636
      %v1590 = vmul.f32 %v1510, %v637
      %v1591 = vmul.f32 %v1511, %v638
      %v1592 = vmul.f32 %v1512, %v639
      %v1593 = vmul.f32 %v1513, %v640
      %v1594 = vmul.f32 %v1514, %v641
      %v1595 = vmul.f32 %v1515, %v642
      %v1596 = vmul.f32 %v1516, %v643
      %v1597 = vmul.f32 %v1517, %v644
      %v1598 = vmul.f32 %v1518, %v645
      %v1599 = vmul.f32 %v1519, %v646
      %v1600 = vmul.f32 %v1520, %v647
      %v1601 = vmul.f32 %v1521, %v648
      %v1602 = vmul.f32 %v1522, %v649
      %v1603 = vmul.f32 %v1523, %v650
      %v1604 = vmul.f32 %v1524, %v651
      %v1605 = vmul.f32 %v1525, %v652
      %v1606 = vmul.f32 %v1526, %v653
      %v1607 = vmul.f32 %v1527, %v654
      %v1608 = vmul.f32 %v1528, %v655
      %v1609 = vmul.f32 %v1529, %v656
      %v1610 = vmul.f32 %v1530, %v657
      %v1611 = vmul.f32 %v1531, %v658
      %v1612 = vmul.f32 %v1532, %v659
      %v1613 = vmul.f32 %v1533, %v660
      %v1614 = vmul.f32 %v1534, %v661
      %v1615 = vmul.f32 %v1535, %v662
      %v1616 = vmul.f32 %v1536, %v663
      %v1617 = vmul.f32 %v1537, %v664
      %v1618 = vmul.f32 %v1538, %v665
      %v1619 = vmul.f32 %v1539, %v666
      %v1620 = vmul.f32 %v1540, %v667
      %v1621 = vmul.f32 %v1541, %v668
      %v1622 = vmul.f32 %v1542, %v669
      %v1623 = vmul.f32 %v1543, %v670
      %v1624 = vmul.f32 %v1544, %v671
      %v1625 = vmul.f32 %v1545, %v672
      %v1626 = vmul.f32 %v1546, %v673
      %v1627 = vmul.f32 %v1547, %v674
      %v1628 = vmul.f32 %v1548, %v675
      %v1629 = vmul.f32 %v1549, %v676
      %v1630 = vmul.f32 %v1550, %v677
      %v1631 = vmul.f32 %v1551, %v678
      %v1632 = vmul.f32 %v1552, %v679
      %v1633 = vmul.f32 %v1553, %v680
      %v1634 = vmul.f32 %v1554, %v681
      %v1635 = vmul.f32 %v1555, %v682
      %v1636 = vmul.f32 %v1556, %v683
      %v1637 = vmul.f32 %v1557, %v684
      %v1638 = vmul.f32 %v1558, %v685
      %v1639 = vmul.f32 %v1559, %v686
      %v1640 = vmul.f32 %v1560, %v687
      %v1641 = vmul.f32 %v1561, %v688
      %v1642 = vmul.f32 %v1562, %v689
      %v1643 = vmul.f32 %v1563, %v690
      %v1644 = vmul.f32 %v1564, %v691
      %v1645 = vmul.f32 %v1565, %v692
      %v1646 = vmul.f32 %v1566, %v693
      %v1647 = vmul.f32 %v1567, %v694
      %v1648 = vmul.f32 %v1568, %v695
      %v1649 = vmul.f32 %v1569, %v696
      %v1650 = vmul.f32 %v1570, %v697
      %v1651 = vmul.f32 %v1571, %v698
      %v1652 = vmul.f32 %v1572, %v699
      %v1653 = vmul.f32 %v1573, %v700
      %v1654 = vrot.slane %v1574, 7
      %v1655 = vrot.slane %v1575, 7
      %v1656 = vrot.slane %v1576, 7
      %v1657 = vrot.slane %v1577, 7
      %v1658 = vrot.slane %v1578, 7
      %v1659 = vrot.slane %v1579, 7
      %v1660 = vrot.slane %v1580, 7
      %v1661 = vrot.slane %v1581, 7
      %v1662 = vrot.slane %v1582, 7
      %v1663 = vrot.slane %v1583, 7
      %v1664 = vrot.slane %v1584, 7
      %v1665 = vrot.slane %v1585, 7
      %v1666 = vrot.slane %v1586, 7
      %v1667 = vrot.slane %v1587, 7
      %v1668 = vrot.slane %v1588, 7
      %v1669 = vrot.slane %v1589, 7
      %v1670 = vrot.slane %v1590, 7
      %v1671 = vrot.slane %v1591, 7
      %v1672 = vrot.slane %v1592, 7
      %v1673 = vrot.slane %v1593, 7
      %v1674 = vrot.slane %v1594, 7
      %v1675 = vrot.slane %v1595, 7
      %v1676 = vrot.slane %v1596, 7
      %v1677 = vrot.slane %v1597, 7
      %v1678 = vrot.slane %v1598, 7
      %v1679 = vrot.slane %v1599, 7
      %v1680 = vrot.slane %v1600, 7
      %v1681 = vrot.slane %v1601, 7
      %v1682 = vrot.slane %v1602, 7
      %v1683 = vrot.slane %v1603, 7
      %v1684 = vrot.slane %v1604, 7
      %v1685 = vrot.slane %v1605, 7
      %v1686 = vrot.slane %v1606, 7
      %v1687 = vrot.slane %v1607, 7
      %v1688 = vrot.slane %v1608, 7
      %v1689 = vrot.slane %v1609, 7
      %v1690 = vrot.slane %v1610, 7
      %v1691 = vrot.slane %v1611, 7
      %v1692 = vrot.slane %v1612, 7
      %v1693 = vrot.slane %v1613, 7
      %v1694 = vrot.slane %v1614, 7
      %v1695 = vrot.slane %v1615, 7
      %v1696 = vrot.slane %v1616, 7
      %v1697 = vrot.slane %v1617, 7
      %v1698 = vrot.slane %v1618, 7
      %v1699 = vrot.slane %v1619, 7
      %v1700 = vrot.slane %v1620, 7
      %v1701 = vrot.slane %v1621, 7
      %v1702 = vrot.slane %v1622, 7
      %v1703 = vrot.slane %v1623, 7
      %v1704 = vrot.slane %v1624, 7
      %v1705 = vrot.slane %v1625, 7
      %v1706 = vrot.slane %v1626, 7
      %v1707 = vrot.slane %v1627, 7
      %v1708 = vrot.slane %v1628, 7
      %v1709 = vrot.slane %v1629, 7
      %v1710 = vrot.slane %v1630, 7
      %v1711 = vrot.slane %v1631, 7
      %v1712 = vrot.slane %v1632, 7
      %v1713 = vrot.slane %v1633, 7
      %v1714 = vrot.slane %v1634, 7
      %v1715 = vrot.slane %v1635, 7
      %v1716 = vrot.slane %v1636, 7
      %v1717 = vrot.slane %v1637, 7
      %v1718 = vrot.slane %v1638, 7
      %v1719 = vrot.slane %v1639, 7
      %v1720 = vrot.slane %v1640, 7
      %v1721 = vrot.slane %v1641, 7
      %v1722 = vrot.slane %v1642, 7
      %v1723 = vrot.slane %v1643, 7
      %v1724 = vrot.slane %v1644, 7
      %v1725 = vrot.slane %v1645, 7
      %v1726 = vrot.slane %v1646, 7
      %v1727 = vrot.slane %v1647, 7
      %v1728 = vrot.slane %v1648, 7
      %v1729 = vrot.slane %v1649, 7
      %v1730 = vrot.slane %v1650, 7
      %v1731 = vrot.slane %v1651, 7
      %v1732 = vrot.slane %v1652, 7
      %v1733 = vrot.slane %v1653, 7
      %vm1734 = vcmp.lt.s32.totalorder %v309, 1
      %v1735 = vsel %vm1734, %v1732, %v1733
      %v1736 = vsel %vm1734, %v1731, %v1732
      %v1737 = vsel %vm1734, %v1730, %v1731
      %v1738 = vsel %vm1734, %v1729, %v1730
      %v1739 = vsel %vm1734, %v1728, %v1729
      %v1740 = vsel %vm1734, %v1727, %v1728
      %v1741 = vsel %vm1734, %v1726, %v1727
      %v1742 = vsel %vm1734, %v1725, %v1726
      %v1743 = vsel %vm1734, %v1724, %v1725
      %v1744 = vsel %vm1734, %v1723, %v1724
      %v1745 = vsel %vm1734, %v1722, %v1723
      %v1746 = vsel %vm1734, %v1721, %v1722
      %v1747 = vsel %vm1734, %v1720, %v1721
      %v1748 = vsel %vm1734, %v1719, %v1720
      %v1749 = vsel %vm1734, %v1718, %v1719
      %v1750 = vsel %vm1734, %v1717, %v1718
      %v1751 = vsel %vm1734, %v1716, %v1717
      %v1752 = vsel %vm1734, %v1715, %v1716
      %v1753 = vsel %vm1734, %v1714, %v1715
      %v1754 = vsel %vm1734, %v1713, %v1714
      %v1755 = vsel %vm1734, %v1712, %v1713
      %v1756 = vsel %vm1734, %v1711, %v1712
      %v1757 = vsel %vm1734, %v1710, %v1711
      %v1758 = vsel %vm1734, %v1709, %v1710
      %v1759 = vsel %vm1734, %v1708, %v1709
      %v1760 = vsel %vm1734, %v1707, %v1708
      %v1761 = vsel %vm1734, %v1706, %v1707
      %v1762 = vsel %vm1734, %v1705, %v1706
      %v1763 = vsel %vm1734, %v1704, %v1705
      %v1764 = vsel %vm1734, %v1703, %v1704
      %v1765 = vsel %vm1734, %v1702, %v1703
      %v1766 = vsel %vm1734, %v1701, %v1702
      %v1767 = vsel %vm1734, %v1700, %v1701
      %v1768 = vsel %vm1734, %v1699, %v1700
      %v1769 = vsel %vm1734, %v1698, %v1699
      %v1770 = vsel %vm1734, %v1697, %v1698
      %v1771 = vsel %vm1734, %v1696, %v1697
      %v1772 = vsel %vm1734, %v1695, %v1696
      %v1773 = vsel %vm1734, %v1694, %v1695
      %v1774 = vsel %vm1734, %v1693, %v1694
      %v1775 = vsel %vm1734, %v1692, %v1693
      %v1776 = vsel %vm1734, %v1691, %v1692
      %v1777 = vsel %vm1734, %v1690, %v1691
      %v1778 = vsel %vm1734, %v1689, %v1690
      %v1779 = vsel %vm1734, %v1688, %v1689
      %v1780 = vsel %vm1734, %v1687, %v1688
      %v1781 = vsel %vm1734, %v1686, %v1687
      %v1782 = vsel %vm1734, %v1685, %v1686
      %v1783 = vsel %vm1734, %v1684, %v1685
      %v1784 = vsel %vm1734, %v1683, %v1684
      %v1785 = vsel %vm1734, %v1682, %v1683
      %v1786 = vsel %vm1734, %v1681, %v1682
      %v1787 = vsel %vm1734, %v1680, %v1681
      %v1788 = vsel %vm1734, %v1679, %v1680
      %v1789 = vsel %vm1734, %v1678, %v1679
      %v1790 = vsel %vm1734, %v1677, %v1678
      %v1791 = vsel %vm1734, %v1676, %v1677
      %v1792 = vsel %vm1734, %v1675, %v1676
      %v1793 = vsel %vm1734, %v1674, %v1675
      %v1794 = vsel %vm1734, %v1673, %v1674
      %v1795 = vsel %vm1734, %v1672, %v1673
      %v1796 = vsel %vm1734, %v1671, %v1672
      %v1797 = vsel %vm1734, %v1670, %v1671
      %v1798 = vsel %vm1734, %v1669, %v1670
      %v1799 = vsel %vm1734, %v1668, %v1669
      %v1800 = vsel %vm1734, %v1667, %v1668
      %v1801 = vsel %vm1734, %v1666, %v1667
      %v1802 = vsel %vm1734, %v1665, %v1666
      %v1803 = vsel %vm1734, %v1664, %v1665
      %v1804 = vsel %vm1734, %v1663, %v1664
      %v1805 = vsel %vm1734, %v1662, %v1663
      %v1806 = vsel %vm1734, %v1661, %v1662
      %v1807 = vsel %vm1734, %v1660, %v1661
      %v1808 = vsel %vm1734, %v1659, %v1660
      %v1809 = vsel %vm1734, %v1658, %v1659
      %v1810 = vsel %vm1734, %v1657, %v1658
      %v1811 = vsel %vm1734, %v1656, %v1657
      %v1812 = vsel %vm1734, %v1655, %v1656
      %v1813 = vsel %vm1734, %v1654, %v1655
      %v1814 = vsel %vm1734, %v1733, %v1654
      %v1815 = vpack.c.bf16 %v1813, %v1814
      %v1816 = vpack.c.bf16 %v1811, %v1812
      %v1817 = vpack.c.bf16 %v1809, %v1810
      %v1818 = vpack.c.bf16 %v1807, %v1808
      %v1819 = vpack.c.bf16 %v1805, %v1806
      %v1820 = vpack.c.bf16 %v1803, %v1804
      %v1821 = vpack.c.bf16 %v1801, %v1802
      %v1822 = vpack.c.bf16 %v1799, %v1800
      %v1823 = vpack.c.bf16 %v1797, %v1798
      %v1824 = vpack.c.bf16 %v1795, %v1796
      %v1825 = vpack.c.bf16 %v1793, %v1794
      %v1826 = vpack.c.bf16 %v1791, %v1792
      %v1827 = vpack.c.bf16 %v1789, %v1790
      %v1828 = vpack.c.bf16 %v1787, %v1788
      %v1829 = vpack.c.bf16 %v1785, %v1786
      %v1830 = vpack.c.bf16 %v1783, %v1784
      %v1831 = vpack.c.bf16 %v1781, %v1782
      %v1832 = vpack.c.bf16 %v1779, %v1780
      %v1833 = vpack.c.bf16 %v1777, %v1778
      %v1834 = vpack.c.bf16 %v1775, %v1776
      %v1835 = vpack.c.bf16 %v1773, %v1774
      %v1836 = vpack.c.bf16 %v1771, %v1772
      %v1837 = vpack.c.bf16 %v1769, %v1770
      %v1838 = vpack.c.bf16 %v1767, %v1768
      %v1839 = vpack.c.bf16 %v1765, %v1766
      %v1840 = vpack.c.bf16 %v1763, %v1764
      %v1841 = vpack.c.bf16 %v1761, %v1762
      %v1842 = vpack.c.bf16 %v1759, %v1760
      %v1843 = vpack.c.bf16 %v1757, %v1758
      %v1844 = vpack.c.bf16 %v1755, %v1756
      %v1845 = vpack.c.bf16 %v1753, %v1754
      %v1846 = vpack.c.bf16 %v1751, %v1752
      %v1847 = vpack.c.bf16 %v1749, %v1750
      %v1848 = vpack.c.bf16 %v1747, %v1748
      %v1849 = vpack.c.bf16 %v1745, %v1746
      %v1850 = vpack.c.bf16 %v1743, %v1744
      %v1851 = vpack.c.bf16 %v1741, %v1742
      %v1852 = vpack.c.bf16 %v1739, %v1740
      %v1853 = vpack.c.bf16 %v1737, %v1738
      %v1854 = vpack.c.bf16 %v1735, %v1736
      %1855 = vst [vmem:[#allocation2] sm:$0xff] %v1815
      %1856 = vst [vmem:[#allocation2 + $0x18] sm:$0xff] %v1816
      %1857 = vst [vmem:[#allocation2 + $0x30] sm:$0xff] %v1817
      %1858 = vst [vmem:[#allocation2 + $0x48] sm:$0xff] %v1818
      %1859 = vst [vmem:[#allocation2 + $0x60] sm:$0xff] %v1819
      %1860 = vst [vmem:[#allocation2 + $0x78] sm:$0xff] %v1820
      %1861 = vst [vmem:[#allocation2 + $0x90] sm:$0xff] %v1821
      %1862 = vst [vmem:[#allocation2 + $0xa8] sm:$0xff] %v1822
      %1863 = vst [vmem:[#allocation2 + $0xc0] sm:$0xff] %v1823
      %1864 = vst [vmem:[#allocation2 + $0xd8] sm:$0xff] %v1824
      %1865 = vst [vmem:[#allocation2 + $0xf0] sm:$0xff] %v1825
      %1866 = vst [vmem:[#allocation2 + $0x108] sm:$0xff] %v1826
      %1867 = vst [vmem:[#allocation2 + $0x120] sm:$0xff] %v1827
      %1868 = vst [vmem:[#allocation2 + $0x138] sm:$0xff] %v1828
      %1869 = vst [vmem:[#allocation2 + $0x150] sm:$0xff] %v1829
      %1870 = vst [vmem:[#allocation2 + $0x168] sm:$0xff] %v1830
      %1871 = vst [vmem:[#allocation2 + $0x180] sm:$0xff] %v1831
      %1872 = vst [vmem:[#allocation2 + $0x198] sm:$0xff] %v1832
      %1873 = vst [vmem:[#allocation2 + $0x1b0] sm:$0xff] %v1833
      %1874 = vst [vmem:[#allocation2 + $0x1c8] sm:$0xff] %v1834
      %1875 = vst [vmem:[#allocation2 + $0x1e0] sm:$0xff] %v1835
      %1876 = vst [vmem:[#allocation2 + $0x1f8] sm:$0xff] %v1836
      %1877 = vst [vmem:[#allocation2 + $0x210] sm:$0xff] %v1837
      %1878 = vst [vmem:[#allocation2 + $0x228] sm:$0xff] %v1838
      %1879 = vst [vmem:[#allocation2 + $0x240] sm:$0xff] %v1839
      %1880 = vst [vmem:[#allocation2 + $0x258] sm:$0xff] %v1840
      %1881 = vst [vmem:[#allocation2 + $0x270] sm:$0xff] %v1841
      %1882 = vst [vmem:[#allocation2 + $0x288] sm:$0xff] %v1842
      %1883 = vst [vmem:[#allocation2 + $0x2a0] sm:$0xff] %v1843
      %1884 = vst [vmem:[#allocation2 + $0x2b8] sm:$0xff] %v1844
      %1885 = vst [vmem:[#allocation2 + $0x2d0] sm:$0xff] %v1845
      %1886 = vst [vmem:[#allocation2 + $0x2e8] sm:$0xff] %v1846
      %1887 = vst [vmem:[#allocation2 + $0x300] sm:$0xff] %v1847
      %1888 = vst [vmem:[#allocation2 + $0x318] sm:$0xff] %v1848
      %1889 = vst [vmem:[#allocation2 + $0x330] sm:$0xff] %v1849
      %1890 = vst [vmem:[#allocation2 + $0x348] sm:$0xff] %v1850
      %1891 = vst [vmem:[#allocation2 + $0x360] sm:$0xff] %v1851
      %1892 = vst [vmem:[#allocation2 + $0x378] sm:$0xff] %v1852
      %1893 = vst [vmem:[#allocation2 + $0x390] sm:$0xff] %v1853
      %1894 = vst [vmem:[#allocation2 + $0x3a8] sm:$0xff] %v1854
      %v1895 = vpack.c.bf16 %v1575, %v1574
      %v1896 = vpack.c.bf16 %v1577, %v1576
      %v1897 = vpack.c.bf16 %v1579, %v1578
      %v1898 = vpack.c.bf16 %v1581, %v1580
      %v1899 = vpack.c.bf16 %v1583, %v1582
      %v1900 = vpack.c.bf16 %v1585, %v1584
      %v1901 = vpack.c.bf16 %v1587, %v1586
      %v1902 = vpack.c.bf16 %v1589, %v1588
      %v1903 = vpack.c.bf16 %v1591, %v1590
      %v1904 = vpack.c.bf16 %v1593, %v1592
      %v1905 = vpack.c.bf16 %v1595, %v1594
      %v1906 = vpack.c.bf16 %v1597, %v1596
      %v1907 = vpack.c.bf16 %v1599, %v1598
      %v1908 = vpack.c.bf16 %v1601, %v1600
      %v1909 = vpack.c.bf16 %v1603, %v1602
      %v1910 = vpack.c.bf16 %v1605, %v1604
      %v1911 = vpack.c.bf16 %v1607, %v1606
      %v1912 = vpack.c.bf16 %v1609, %v1608
      %v1913 = vpack.c.bf16 %v1611, %v1610
      %v1914 = vpack.c.bf16 %v1613, %v1612
      %v1915 = vpack.c.bf16 %v1615, %v1614
      %v1916 = vpack.c.bf16 %v1617, %v1616
      %v1917 = vpack.c.bf16 %v1619, %v1618
      %v1918 = vpack.c.bf16 %v1621, %v1620
      %v1919 = vpack.c.bf16 %v1623, %v1622
      %v1920 = vpack.c.bf16 %v1625, %v1624
      %v1921 = vpack.c.bf16 %v1627, %v1626
      %v1922 = vpack.c.bf16 %v1629, %v1628
      %v1923 = vpack.c.bf16 %v1631, %v1630
      %v1924 = vpack.c.bf16 %v1633, %v1632
      %v1925 = vpack.c.bf16 %v1635, %v1634
      %v1926 = vpack.c.bf16 %v1637, %v1636
      %v1927 = vpack.c.bf16 %v1639, %v1638
      %v1928 = vpack.c.bf16 %v1641, %v1640
      %v1929 = vpack.c.bf16 %v1643, %v1642
      %v1930 = vpack.c.bf16 %v1645, %v1644
      %v1931 = vpack.c.bf16 %v1647, %v1646
      %v1932 = vpack.c.bf16 %v1649, %v1648
      %v1933 = vpack.c.bf16 %v1651, %v1650
      %v1934 = vpack.c.bf16 %v1653, %v1652
      %1935 = vst [vmem:[#allocation2 + $0x8] sm:$0xff] %v1895
      %1936 = vst [vmem:[#allocation2 + $0x20] sm:$0xff] %v1896
      %1937 = vst [vmem:[#allocation2 + $0x38] sm:$0xff] %v1897
      %1938 = vst [vmem:[#allocation2 + $0x50] sm:$0xff] %v1898
      %1939 = vst [vmem:[#allocation2 + $0x68] sm:$0xff] %v1899
      %1940 = vst [vmem:[#allocation2 + $0x80] sm:$0xff] %v1900
      %1941 = vst [vmem:[#allocation2 + $0x98] sm:$0xff] %v1901
      %1942 = vst [vmem:[#allocation2 + $0xb0] sm:$0xff] %v1902
      %1943 = vst [vmem:[#allocation2 + $0xc8] sm:$0xff] %v1903
      %1944 = vst [vmem:[#allocation2 + $0xe0] sm:$0xff] %v1904
      %1945 = vst [vmem:[#allocation2 + $0xf8] sm:$0xff] %v1905
      %1946 = vst [vmem:[#allocation2 + $0x110] sm:$0xff] %v1906
      %1947 = vst [vmem:[#allocation2 + $0x128] sm:$0xff] %v1907
      %1948 = vst [vmem:[#allocation2 + $0x140] sm:$0xff] %v1908
      %1949 = vst [vmem:[#allocation2 + $0x158] sm:$0xff] %v1909
      %1950 = vst [vmem:[#allocation2 + $0x170] sm:$0xff] %v1910
      %1951 = vst [vmem:[#allocation2 + $0x188] sm:$0xff] %v1911
      %1952 = vst [vmem:[#allocation2 + $0x1a0] sm:$0xff] %v1912
      %1953 = vst [vmem:[#allocation2 + $0x1b8] sm:$0xff] %v1913
      %1954 = vst [vmem:[#allocation2 + $0x1d0] sm:$0xff] %v1914
      %1955 = vst [vmem:[#allocation2 + $0x1e8] sm:$0xff] %v1915
      %1956 = vst [vmem:[#allocation2 + $0x200] sm:$0xff] %v1916
      %1957 = vst [vmem:[#allocation2 + $0x218] sm:$0xff] %v1917
      %1958 = vst [vmem:[#allocation2 + $0x230] sm:$0xff] %v1918
      %1959 = vst [vmem:[#allocation2 + $0x248] sm:$0xff] %v1919
      %1960 = vst [vmem:[#allocation2 + $0x260] sm:$0xff] %v1920
      %1961 = vst [vmem:[#allocation2 + $0x278] sm:$0xff] %v1921
      %1962 = vst [vmem:[#allocation2 + $0x290] sm:$0xff] %v1922
      %1963 = vst [vmem:[#allocation2 + $0x2a8] sm:$0xff] %v1923
      %1964 = vst [vmem:[#allocation2 + $0x2c0] sm:$0xff] %v1924
      %1965 = vst [vmem:[#allocation2 + $0x2d8] sm:$0xff] %v1925
      %1966 = vst [vmem:[#allocation2 + $0x2f0] sm:$0xff] %v1926
      %1967 = vst [vmem:[#allocation2 + $0x308] sm:$0xff] %v1927
      %1968 = vst [vmem:[#allocation2 + $0x320] sm:$0xff] %v1928
      %1969 = vst [vmem:[#allocation2 + $0x338] sm:$0xff] %v1929
      %1970 = vst [vmem:[#allocation2 + $0x350] sm:$0xff] %v1930
      %1971 = vst [vmem:[#allocation2 + $0x368] sm:$0xff] %v1931
      %1972 = vst [vmem:[#allocation2 + $0x380] sm:$0xff] %v1932
      %1973 = vst [vmem:[#allocation2 + $0x398] sm:$0xff] %v1933
      %1974 = vst [vmem:[#allocation2 + $0x3b0] sm:$0xff] %v1934
      %v1975 = vrot.slane %v1574, 1
      %v1976 = vrot.slane %v1575, 1
      %v1977 = vrot.slane %v1576, 1
      %v1978 = vrot.slane %v1577, 1
      %v1979 = vrot.slane %v1578, 1
      %v1980 = vrot.slane %v1579, 1
      %v1981 = vrot.slane %v1580, 1
      %v1982 = vrot.slane %v1581, 1
      %v1983 = vrot.slane %v1582, 1
      %v1984 = vrot.slane %v1583, 1
      %v1985 = vrot.slane %v1584, 1
      %v1986 = vrot.slane %v1585, 1
      %v1987 = vrot.slane %v1586, 1
      %v1988 = vrot.slane %v1587, 1
      %v1989 = vrot.slane %v1588, 1
      %v1990 = vrot.slane %v1589, 1
      %v1991 = vrot.slane %v1590, 1
      %v1992 = vrot.slane %v1591, 1
      %v1993 = vrot.slane %v1592, 1
      %v1994 = vrot.slane %v1593, 1
      %v1995 = vrot.slane %v1594, 1
      %v1996 = vrot.slane %v1595, 1
      %v1997 = vrot.slane %v1596, 1
      %v1998 = vrot.slane %v1597, 1
      %v1999 = vrot.slane %v1598, 1
      %v2000 = vrot.slane %v1599, 1
      %v2001 = vrot.slane %v1600, 1
      %v2002 = vrot.slane %v1601, 1
      %v2003 = vrot.slane %v1602, 1
      %v2004 = vrot.slane %v1603, 1
      %v2005 = vrot.slane %v1604, 1
      %v2006 = vrot.slane %v1605, 1
      %v2007 = vrot.slane %v1606, 1
      %v2008 = vrot.slane %v1607, 1
      %v2009 = vrot.slane %v1608, 1
      %v2010 = vrot.slane %v1609, 1
      %v2011 = vrot.slane %v1610, 1
      %v2012 = vrot.slane %v1611, 1
      %v2013 = vrot.slane %v1612, 1
      %v2014 = vrot.slane %v1613, 1
      %v2015 = vrot.slane %v1614, 1
      %v2016 = vrot.slane %v1615, 1
      %v2017 = vrot.slane %v1616, 1
      %v2018 = vrot.slane %v1617, 1
      %v2019 = vrot.slane %v1618, 1
      %v2020 = vrot.slane %v1619, 1
      %v2021 = vrot.slane %v1620, 1
      %v2022 = vrot.slane %v1621, 1
      %v2023 = vrot.slane %v1622, 1
      %v2024 = vrot.slane %v1623, 1
      %v2025 = vrot.slane %v1624, 1
      %v2026 = vrot.slane %v1625, 1
      %v2027 = vrot.slane %v1626, 1
      %v2028 = vrot.slane %v1627, 1
      %v2029 = vrot.slane %v1628, 1
      %v2030 = vrot.slane %v1629, 1
      %v2031 = vrot.slane %v1630, 1
      %v2032 = vrot.slane %v1631, 1
      %v2033 = vrot.slane %v1632, 1
      %v2034 = vrot.slane %v1633, 1
      %v2035 = vrot.slane %v1634, 1
      %v2036 = vrot.slane %v1635, 1
      %v2037 = vrot.slane %v1636, 1
      %v2038 = vrot.slane %v1637, 1
      %v2039 = vrot.slane %v1638, 1
      %v2040 = vrot.slane %v1639, 1
      %v2041 = vrot.slane %v1640, 1
      %v2042 = vrot.slane %v1641, 1
      %v2043 = vrot.slane %v1642, 1
      %v2044 = vrot.slane %v1643, 1
      %v2045 = vrot.slane %v1644, 1
      %v2046 = vrot.slane %v1645, 1
      %v2047 = vrot.slane %v1646, 1
      %v2048 = vrot.slane %v1647, 1
      %v2049 = vrot.slane %v1648, 1
      %v2050 = vrot.slane %v1649, 1
      %v2051 = vrot.slane %v1650, 1
      %v2052 = vrot.slane %v1651, 1
      %v2053 = vrot.slane %v1652, 1
      %v2054 = vrot.slane %v1653, 1
      %vm2055 = vcmp.lt.s32.totalorder %v309, 7
      %v2056 = vsel %vm2055, %v2053, %v2054
      %v2057 = vsel %vm2055, %v2052, %v2053
      %v2058 = vsel %vm2055, %v2051, %v2052
      %v2059 = vsel %vm2055, %v2050, %v2051
      %v2060 = vsel %vm2055, %v2049, %v2050
      %v2061 = vsel %vm2055, %v2048, %v2049
      %v2062 = vsel %vm2055, %v2047, %v2048
      %v2063 = vsel %vm2055, %v2046, %v2047
      %v2064 = vsel %vm2055, %v2045, %v2046
      %v2065 = vsel %vm2055, %v2044, %v2045
      %v2066 = vsel %vm2055, %v2043, %v2044
      %v2067 = vsel %vm2055, %v2042, %v2043
      %v2068 = vsel %vm2055, %v2041, %v2042
      %v2069 = vsel %vm2055, %v2040, %v2041
      %v2070 = vsel %vm2055, %v2039, %v2040
      %v2071 = vsel %vm2055, %v2038, %v2039
      %v2072 = vsel %vm2055, %v2037, %v2038
      %v2073 = vsel %vm2055, %v2036, %v2037
      %v2074 = vsel %vm2055, %v2035, %v2036
      %v2075 = vsel %vm2055, %v2034, %v2035
      %v2076 = vsel %vm2055, %v2033, %v2034
      %v2077 = vsel %vm2055, %v2032, %v2033
      %v2078 = vsel %vm2055, %v2031, %v2032
      %v2079 = vsel %vm2055, %v2030, %v2031
      %v2080 = vsel %vm2055, %v2029, %v2030
      %v2081 = vsel %vm2055, %v2028, %v2029
      %v2082 = vsel %vm2055, %v2027, %v2028
      %v2083 = vsel %vm2055, %v2026, %v2027
      %v2084 = vsel %vm2055, %v2025, %v2026
      %v2085 = vsel %vm2055, %v2024, %v2025
      %v2086 = vsel %vm2055, %v2023, %v2024
      %v2087 = vsel %vm2055, %v2022, %v2023
      %v2088 = vsel %vm2055, %v2021, %v2022
      %v2089 = vsel %vm2055, %v2020, %v2021
      %v2090 = vsel %vm2055, %v2019, %v2020
      %v2091 = vsel %vm2055, %v2018, %v2019
      %v2092 = vsel %vm2055, %v2017, %v2018
      %v2093 = vsel %vm2055, %v2016, %v2017
      %v2094 = vsel %vm2055, %v2015, %v2016
      %v2095 = vsel %vm2055, %v2014, %v2015
      %v2096 = vsel %vm2055, %v2013, %v2014
      %v2097 = vsel %vm2055, %v2012, %v2013
      %v2098 = vsel %vm2055, %v2011, %v2012
      %v2099 = vsel %vm2055, %v2010, %v2011
      %v2100 = vsel %vm2055, %v2009, %v2010
      %v2101 = vsel %vm2055, %v2008, %v2009
      %v2102 = vsel %vm2055, %v2007, %v2008
      %v2103 = vsel %vm2055, %v2006, %v2007
      %v2104 = vsel %vm2055, %v2005, %v2006
      %v2105 = vsel %vm2055, %v2004, %v2005
      %v2106 = vsel %vm2055, %v2003, %v2004
      %v2107 = vsel %vm2055, %v2002, %v2003
      %v2108 = vsel %vm2055, %v2001, %v2002
      %v2109 = vsel %vm2055, %v2000, %v2001
      %v2110 = vsel %vm2055, %v1999, %v2000
      %v2111 = vsel %vm2055, %v1998, %v1999
      %v2112 = vsel %vm2055, %v1997, %v1998
      %v2113 = vsel %vm2055, %v1996, %v1997
      %v2114 = vsel %vm2055, %v1995, %v1996
      %v2115 = vsel %vm2055, %v1994, %v1995
      %v2116 = vsel %vm2055, %v1993, %v1994
      %v2117 = vsel %vm2055, %v1992, %v1993
      %v2118 = vsel %vm2055, %v1991, %v1992
      %v2119 = vsel %vm2055, %v1990, %v1991
      %v2120 = vsel %vm2055, %v1989, %v1990
      %v2121 = vsel %vm2055, %v1988, %v1989
      %v2122 = vsel %vm2055, %v1987, %v1988
      %v2123 = vsel %vm2055, %v1986, %v1987
      %v2124 = vsel %vm2055, %v1985, %v1986
      %v2125 = vsel %vm2055, %v1984, %v1985
      %v2126 = vsel %vm2055, %v1983, %v1984
      %v2127 = vsel %vm2055, %v1982, %v1983
      %v2128 = vsel %vm2055, %v1981, %v1982
      %v2129 = vsel %vm2055, %v1980, %v1981
      %v2130 = vsel %vm2055, %v1979, %v1980
      %v2131 = vsel %vm2055, %v1978, %v1979
      %v2132 = vsel %vm2055, %v1977, %v1978
      %v2133 = vsel %vm2055, %v1976, %v1977
      %v2134 = vsel %vm2055, %v1975, %v1976
      %v2135 = vsel %vm2055, %v2054, %v1975
      %v2136 = vpack.c.bf16 %v2133, %v2134
      %v2137 = vpack.c.bf16 %v2131, %v2132
      %v2138 = vpack.c.bf16 %v2129, %v2130
      %v2139 = vpack.c.bf16 %v2127, %v2128
      %v2140 = vpack.c.bf16 %v2125, %v2126
      %v2141 = vpack.c.bf16 %v2123, %v2124
      %v2142 = vpack.c.bf16 %v2121, %v2122
      %v2143 = vpack.c.bf16 %v2119, %v2120
      %v2144 = vpack.c.bf16 %v2117, %v2118
      %v2145 = vpack.c.bf16 %v2115, %v2116
      %v2146 = vpack.c.bf16 %v2113, %v2114
      %v2147 = vpack.c.bf16 %v2111, %v2112
      %v2148 = vpack.c.bf16 %v2109, %v2110
      %v2149 = vpack.c.bf16 %v2107, %v2108
      %v2150 = vpack.c.bf16 %v2105, %v2106
      %v2151 = vpack.c.bf16 %v2103, %v2104
      %v2152 = vpack.c.bf16 %v2101, %v2102
      %v2153 = vpack.c.bf16 %v2099, %v2100
      %v2154 = vpack.c.bf16 %v2097, %v2098
      %v2155 = vpack.c.bf16 %v2095, %v2096
      %v2156 = vpack.c.bf16 %v2093, %v2094
      %v2157 = vpack.c.bf16 %v2091, %v2092
      %v2158 = vpack.c.bf16 %v2089, %v2090
      %v2159 = vpack.c.bf16 %v2087, %v2088
      %v2160 = vpack.c.bf16 %v2085, %v2086
      %v2161 = vpack.c.bf16 %v2083, %v2084
      %v2162 = vpack.c.bf16 %v2081, %v2082
      %v2163 = vpack.c.bf16 %v2079, %v2080
      %v2164 = vpack.c.bf16 %v2077, %v2078
      %v2165 = vpack.c.bf16 %v2075, %v2076
      %v2166 = vpack.c.bf16 %v2073, %v2074
      %v2167 = vpack.c.bf16 %v2071, %v2072
      %v2168 = vpack.c.bf16 %v2069, %v2070
      %v2169 = vpack.c.bf16 %v2067, %v2068
      %v2170 = vpack.c.bf16 %v2065, %v2066
      %v2171 = vpack.c.bf16 %v2063, %v2064
      %v2172 = vpack.c.bf16 %v2061, %v2062
      %v2173 = vpack.c.bf16 %v2059, %v2060
      %v2174 = vpack.c.bf16 %v2057, %v2058
      %v2175 = vpack.c.bf16 %v2135, %v2056
      %2176 = vst [vmem:[#allocation2 + $0x10] sm:$0xff] %v2136
      %2177 = vst [vmem:[#allocation2 + $0x28] sm:$0xff] %v2137
      %2178 = vst [vmem:[#allocation2 + $0x40] sm:$0xff] %v2138
      %2179 = vst [vmem:[#allocation2 + $0x58] sm:$0xff] %v2139
      %2180 = vst [vmem:[#allocation2 + $0x70] sm:$0xff] %v2140
      %2181 = vst [vmem:[#allocation2 + $0x88] sm:$0xff] %v2141
      %2182 = vst [vmem:[#allocation2 + $0xa0] sm:$0xff] %v2142
      %2183 = vst [vmem:[#allocation2 + $0xb8] sm:$0xff] %v2143
      %2184 = vst [vmem:[#allocation2 + $0xd0] sm:$0xff] %v2144
      %2185 = vst [vmem:[#allocation2 + $0xe8] sm:$0xff] %v2145
      %2186 = vst [vmem:[#allocation2 + $0x100] sm:$0xff] %v2146
      %2187 = vst [vmem:[#allocation2 + $0x118] sm:$0xff] %v2147
      %2188 = vst [vmem:[#allocation2 + $0x130] sm:$0xff] %v2148
      %2189 = vst [vmem:[#allocation2 + $0x148] sm:$0xff] %v2149
      %2190 = vst [vmem:[#allocation2 + $0x160] sm:$0xff] %v2150
      %2191 = vst [vmem:[#allocation2 + $0x178] sm:$0xff] %v2151
      %2192 = vst [vmem:[#allocation2 + $0x190] sm:$0xff] %v2152
      %2193 = vst [vmem:[#allocation2 + $0x1a8] sm:$0xff] %v2153
      %2194 = vst [vmem:[#allocation2 + $0x1c0] sm:$0xff] %v2154
      %2195 = vst [vmem:[#allocation2 + $0x1d8] sm:$0xff] %v2155
      %2196 = vst [vmem:[#allocation2 + $0x1f0] sm:$0xff] %v2156
      %2197 = vst [vmem:[#allocation2 + $0x208] sm:$0xff] %v2157
      %2198 = vst [vmem:[#allocation2 + $0x220] sm:$0xff] %v2158
      %2199 = vst [vmem:[#allocation2 + $0x238] sm:$0xff] %v2159
      %2200 = vst [vmem:[#allocation2 + $0x250] sm:$0xff] %v2160
      %2201 = vst [vmem:[#allocation2 + $0x268] sm:$0xff] %v2161
      %2202 = vst [vmem:[#allocation2 + $0x280] sm:$0xff] %v2162
      %2203 = vst [vmem:[#allocation2 + $0x298] sm:$0xff] %v2163
      %2204 = vst [vmem:[#allocation2 + $0x2b0] sm:$0xff] %v2164
      %2205 = vst [vmem:[#allocation2 + $0x2c8] sm:$0xff] %v2165
      %2206 = vst [vmem:[#allocation2 + $0x2e0] sm:$0xff] %v2166
      %2207 = vst [vmem:[#allocation2 + $0x2f8] sm:$0xff] %v2167
      %2208 = vst [vmem:[#allocation2 + $0x310] sm:$0xff] %v2168
      %2209 = vst [vmem:[#allocation2 + $0x328] sm:$0xff] %v2169
      %2210 = vst [vmem:[#allocation2 + $0x340] sm:$0xff] %v2170
      %2211 = vst [vmem:[#allocation2 + $0x358] sm:$0xff] %v2171
      %2212 = vst [vmem:[#allocation2 + $0x370] sm:$0xff] %v2172
      %2213 = vst [vmem:[#allocation2 + $0x388] sm:$0xff] %v2173
      %2214 = vst [vmem:[#allocation2 + $0x3a0] sm:$0xff] %v2174
      %2215 = vst [vmem:[#allocation2 + $0x3b8] sm:$0xff] %v2175
      %v2216 = vld [vmem:[#allocation2 + $0x30] sm:$0xff]
      %v2217 = vld [vmem:[#allocation2 + $0x38] sm:$0xff]
      %v2218 = vld [vmem:[#allocation2 + $0x40] sm:$0xff]
      %v2219 = vld [vmem:[#allocation2 + $0x48] sm:$0xff]
      %v2220 = vld [vmem:[#allocation2 + $0x50] sm:$0xff]
      %v2221 = vld [vmem:[#allocation2 + $0x58] sm:$0xff]
      %v2222 = vld [vmem:[#allocation2 + $0x60] sm:$0xff]
      %v2223 = vld [vmem:[#allocation2 + $0x68] sm:$0xff]
      %v2224 = vld [vmem:[#allocation2 + $0x70] sm:$0xff]
      %v2225 = vld [vmem:[#allocation2 + $0x78] sm:$0xff]
      %v2226 = vld [vmem:[#allocation2 + $0x80] sm:$0xff]
      %v2227 = vld [vmem:[#allocation2 + $0x88] sm:$0xff]
      %v2228 = vld [vmem:[#allocation2 + $0x90] sm:$0xff]
      %v2229 = vld [vmem:[#allocation2 + $0x98] sm:$0xff]
      %v2230 = vld [vmem:[#allocation2 + $0xa0] sm:$0xff]
      %v2231 = vld [vmem:[#allocation2 + $0xa8] sm:$0xff]
      %v2232 = vld [vmem:[#allocation2 + $0xb0] sm:$0xff]
      %v2233 = vld [vmem:[#allocation2 + $0xb8] sm:$0xff]
      %v2234 = vld [vmem:[#allocation2 + $0xc0] sm:$0xff]
      %v2235 = vld [vmem:[#allocation2 + $0xc8] sm:$0xff]
      %v2236 = vld [vmem:[#allocation2 + $0xd0] sm:$0xff]
      %v2237 = vld [vmem:[#allocation2 + $0xd8] sm:$0xff]
      %v2238 = vld [vmem:[#allocation2 + $0xe0] sm:$0xff]
      %v2239 = vld [vmem:[#allocation2 + $0xe8] sm:$0xff]
      %v2240 = vld [vmem:[#allocation2 + $0xf0] sm:$0xff]
      %v2241 = vld [vmem:[#allocation2 + $0xf8] sm:$0xff]
      %v2242 = vld [vmem:[#allocation2 + $0x100] sm:$0xff]
      %v2243 = vld [vmem:[#allocation2 + $0x108] sm:$0xff]
      %v2244 = vld [vmem:[#allocation2 + $0x110] sm:$0xff]
      %v2245 = vld [vmem:[#allocation2 + $0x118] sm:$0xff]
      %v2246 = vld [vmem:[#allocation2 + $0x120] sm:$0xff]
      %v2247 = vld [vmem:[#allocation2 + $0x128] sm:$0xff]
      %v2248 = vld [vmem:[#allocation2 + $0x130] sm:$0xff]
      %v2249 = vld [vmem:[#allocation2 + $0x138] sm:$0xff]
      %v2250 = vld [vmem:[#allocation2 + $0x140] sm:$0xff]
      %v2251 = vld [vmem:[#allocation2 + $0x148] sm:$0xff]
      %v2252 = vld [vmem:[#allocation2 + $0x150] sm:$0xff]
      %v2253 = vld [vmem:[#allocation2 + $0x158] sm:$0xff]
      %v2254 = vld [vmem:[#allocation2 + $0x160] sm:$0xff]
      %v2255 = vld [vmem:[#allocation2 + $0x168] sm:$0xff]
      %v2256 = vld [vmem:[#allocation2 + $0x170] sm:$0xff]
      %v2257 = vld [vmem:[#allocation2 + $0x178] sm:$0xff]
      %v2258 = vld [vmem:[#allocation2 + $0x180] sm:$0xff]
      %v2259 = vld [vmem:[#allocation2 + $0x188] sm:$0xff]
      %v2260 = vld [vmem:[#allocation2 + $0x190] sm:$0xff]
      %v2261 = vld [vmem:[#allocation2 + $0x198] sm:$0xff]
      %v2262 = vld [vmem:[#allocation2 + $0x1a0] sm:$0xff]
      %v2263 = vld [vmem:[#allocation2 + $0x1a8] sm:$0xff]
      %v2264 = vld [vmem:[#allocation2 + $0x1b0] sm:$0xff]
      %v2265 = vld [vmem:[#allocation2 + $0x1b8] sm:$0xff]
      %v2266 = vld [vmem:[#allocation2 + $0x1c0] sm:$0xff]
      %v2267 = vld [vmem:[#allocation2 + $0x1c8] sm:$0xff]
      %v2268 = vld [vmem:[#allocation2 + $0x1d0] sm:$0xff]
      %v2269 = vld [vmem:[#allocation2 + $0x1d8] sm:$0xff]
      %v2270 = vld [vmem:[#allocation2 + $0x1e0] sm:$0xff]
      %v2271 = vld [vmem:[#allocation2 + $0x1e8] sm:$0xff]
      %v2272 = vld [vmem:[#allocation2 + $0x1f0] sm:$0xff]
      %v2273 = vld [vmem:[#allocation2 + $0x1f8] sm:$0xff]
      %v2274 = vld [vmem:[#allocation2 + $0x200] sm:$0xff]
      %v2275 = vld [vmem:[#allocation2 + $0x208] sm:$0xff]
      %v2276 = vld [vmem:[#allocation2 + $0x210] sm:$0xff]
      %v2277 = vld [vmem:[#allocation2 + $0x218] sm:$0xff]
      %v2278 = vld [vmem:[#allocation2 + $0x220] sm:$0xff]
      %v2279 = vld [vmem:[#allocation2 + $0x228] sm:$0xff]
      %v2280 = vld [vmem:[#allocation2 + $0x230] sm:$0xff]
      %v2281 = vld [vmem:[#allocation2 + $0x238] sm:$0xff]
      %v2282 = vld [vmem:[#allocation2 + $0x240] sm:$0xff]
      %v2283 = vld [vmem:[#allocation2 + $0x248] sm:$0xff]
      %v2284 = vld [vmem:[#allocation2 + $0x250] sm:$0xff]
      %v2285 = vld [vmem:[#allocation2 + $0x258] sm:$0xff]
      %v2286 = vld [vmem:[#allocation2 + $0x260] sm:$0xff]
      %v2287 = vld [vmem:[#allocation2 + $0x268] sm:$0xff]
      %v2288 = vld [vmem:[#allocation2 + $0x270] sm:$0xff]
      %v2289 = vld [vmem:[#allocation2 + $0x278] sm:$0xff]
      %v2290 = vld [vmem:[#allocation2 + $0x280] sm:$0xff]
      %v2291 = vld [vmem:[#allocation2 + $0x288] sm:$0xff]
      %v2292 = vld [vmem:[#allocation2 + $0x290] sm:$0xff]
      %v2293 = vld [vmem:[#allocation2 + $0x298] sm:$0xff]
      %v2294 = vld [vmem:[#allocation2 + $0x2a0] sm:$0xff]
      %v2295 = vld [vmem:[#allocation2 + $0x2a8] sm:$0xff]
      %v2296 = vld [vmem:[#allocation2 + $0x2b0] sm:$0xff]
      %v2297 = vld [vmem:[#allocation2 + $0x2b8] sm:$0xff]
      %v2298 = vld [vmem:[#allocation2 + $0x2c0] sm:$0xff]
      %v2299 = vld [vmem:[#allocation2 + $0x2c8] sm:$0xff]
      %v2300 = vld [vmem:[#allocation2 + $0x2d0] sm:$0xff]
      %v2301 = vld [vmem:[#allocation2 + $0x2d8] sm:$0xff]
      %v2302 = vld [vmem:[#allocation2 + $0x2e0] sm:$0xff]
      %v2303 = vld [vmem:[#allocation2 + $0x2e8] sm:$0xff]
      %v2304 = vld [vmem:[#allocation2 + $0x2f0] sm:$0xff]
      %v2305 = vld [vmem:[#allocation2 + $0x2f8] sm:$0xff]
      %v2306 = vld [vmem:[#allocation2 + $0x300] sm:$0xff]
      %v2307 = vld [vmem:[#allocation2 + $0x308] sm:$0xff]
      %v2308 = vld [vmem:[#allocation2 + $0x310] sm:$0xff]
      %v2309 = vld [vmem:[#allocation2 + $0x318] sm:$0xff]
      %v2310 = vld [vmem:[#allocation2 + $0x320] sm:$0xff]
      %v2311 = vld [vmem:[#allocation2 + $0x328] sm:$0xff]
      %v2312 = vld [vmem:[%s4] sm:$0xf]
      %v2313 = vld [vmem:[%s4 + $0x4] sm:$0xf]
      %v2314 = vld [vmem:[%s4 + $0x8] sm:$0xf]
      %v2315 = vld [vmem:[%s4 + $0xc] sm:$0xf]
      %v2316 = vld [vmem:[%s4 + $0x10] sm:$0xf]
      %v2317 = vld [vmem:[%s4 + $0x14] sm:$0xf]
      %v2318 = vld [vmem:[%s4 + $0x18] sm:$0xf]
      %v2319 = vld [vmem:[%s4 + $0x1c] sm:$0xf]
      %v2320 = vld [vmem:[%s4 + $0x20] sm:$0xf]
      %v2321 = vld [vmem:[%s4 + $0x24] sm:$0xf]
      %v2322 = vld [vmem:[%s4 + $0x28] sm:$0xf]
      %v2323 = vld [vmem:[%s4 + $0x2c] sm:$0xf]
      %v2324 = vld [vmem:[%s4 + $0x30] sm:$0xf]
      %v2325 = vld [vmem:[%s4 + $0x34] sm:$0xf]
      %v2326 = vld [vmem:[%s4 + $0x38] sm:$0xf]
      %v2327 = vld [vmem:[%s4 + $0x3c] sm:$0xf]
      %v2328 = vld [vmem:[%s4 + $0x40] sm:$0xf]
      %v2329 = vld [vmem:[%s4 + $0x44] sm:$0xf]
      %v2330 = vld [vmem:[%s4 + $0x48] sm:$0xf]
      %v2331 = vld [vmem:[%s4 + $0x4c] sm:$0xf]
      %v2332 = vld [vmem:[%s4 + $0x50] sm:$0xf]
      %v2333 = vld [vmem:[%s4 + $0x54] sm:$0xf]
      %v2334 = vld [vmem:[%s4 + $0x58] sm:$0xf]
      %v2335 = vld [vmem:[%s4 + $0x5c] sm:$0xf]
      %v2336 = vld [vmem:[%s4 + $0x60] sm:$0xf]
      %v2337 = vld [vmem:[%s4 + $0x64] sm:$0xf]
      %v2338 = vld [vmem:[%s4 + $0x68] sm:$0xf]
      %v2339 = vld [vmem:[%s4 + $0x6c] sm:$0xf]
      %v2340 = vld [vmem:[%s4 + $0x70] sm:$0xf]
      %v2341 = vld [vmem:[%s4 + $0x74] sm:$0xf]
      %v2342 = vld [vmem:[%s4 + $0x78] sm:$0xf]
      %v2343 = vld [vmem:[%s4 + $0x7c] sm:$0xf]
      %v2344 = vld [vmem:[%s4 + $0x80] sm:$0xf]
      %v2345 = vld [vmem:[%s4 + $0x84] sm:$0xf]
      %v2346 = vld [vmem:[%s4 + $0x88] sm:$0xf]
      %v2347 = vld [vmem:[%s4 + $0x8c] sm:$0xf]
      %v2348 = vld [vmem:[%s4 + $0x90] sm:$0xf]
      %v2349 = vld [vmem:[%s4 + $0x94] sm:$0xf]
      %v2350 = vld [vmem:[%s4 + $0x98] sm:$0xf]
      %v2351 = vld [vmem:[%s4 + $0x9c] sm:$0xf]
      %v2352 = vld [vmem:[%s4 + $0xa0] sm:$0xf]
      %v2353 = vld [vmem:[%s4 + $0xa4] sm:$0xf]
      %v2354 = vld [vmem:[%s4 + $0xa8] sm:$0xf]
      %v2355 = vld [vmem:[%s4 + $0xac] sm:$0xf]
      %v2356 = vld [vmem:[%s4 + $0xb0] sm:$0xf]
      %v2357 = vld [vmem:[%s4 + $0xb4] sm:$0xf]
      %v2358 = vld [vmem:[%s4 + $0xb8] sm:$0xf]
      %v2359 = vld [vmem:[%s4 + $0xbc] sm:$0xf]
      %v2360 = vld [vmem:[#allocation2 + $0x330] sm:$0xff]
      %v2361 = vld [vmem:[#allocation2 + $0x338] sm:$0xff]
      %v2362 = vld [vmem:[#allocation2 + $0x340] sm:$0xff]
      %v2363 = vld [vmem:[#allocation2 + $0x348] sm:$0xff]
      %v2364 = vld [vmem:[#allocation2 + $0x350] sm:$0xff]
      %v2365 = vld [vmem:[#allocation2 + $0x358] sm:$0xff]
      %s2366 = scalar_lea.vmem %s4, 192
      %v2367 = vld [vmem:[%s2366] sm:$0xf]
      %v2368 = vld [vmem:[%s2366 + $0x4] sm:$0xf]
      %v2369 = vld [vmem:[%s2366 + $0x8] sm:$0xf]
      %v2370 = vld [vmem:[%s2366 + $0xc] sm:$0xf]
      %v2371 = vld [vmem:[%s2366 + $0x10] sm:$0xf]
      %v2372 = vld [vmem:[%s2366 + $0x14] sm:$0xf]
      %v2373 = vld [vmem:[%s2366 + $0x18] sm:$0xf]
      %v2374 = vld [vmem:[%s2366 + $0x1c] sm:$0xf]
      %v2375 = vld [vmem:[%s2366 + $0x20] sm:$0xf]
      %v2376 = vld [vmem:[%s2366 + $0x24] sm:$0xf]
      %v2377 = vld [vmem:[%s2366 + $0x28] sm:$0xf]
      %v2378 = vld [vmem:[%s2366 + $0x2c] sm:$0xf]
      %v2379 = vld [vmem:[%s2366 + $0x30] sm:$0xf]
      %v2380 = vld [vmem:[%s2366 + $0x34] sm:$0xf]
      %v2381 = vld [vmem:[%s2366 + $0x38] sm:$0xf]
      %v2382 = vld [vmem:[%s2366 + $0x3c] sm:$0xf]
      %v2383 = vld [vmem:[%s2366 + $0x40] sm:$0xf]
      %v2384 = vld [vmem:[%s2366 + $0x44] sm:$0xf]
      %v2385 = vld [vmem:[%s2366 + $0x48] sm:$0xf]
      %v2386 = vld [vmem:[%s2366 + $0x4c] sm:$0xf]
      %v2387 = vld [vmem:[%s2366 + $0x50] sm:$0xf]
      %v2388 = vld [vmem:[%s2366 + $0x54] sm:$0xf]
      %v2389 = vld [vmem:[%s2366 + $0x58] sm:$0xf]
      %v2390 = vld [vmem:[%s2366 + $0x5c] sm:$0xf]
      %v2391 = vld [vmem:[%s2366 + $0x60] sm:$0xf]
      %v2392 = vld [vmem:[%s2366 + $0x64] sm:$0xf]
      %v2393 = vld [vmem:[%s2366 + $0x68] sm:$0xf]
      %v2394 = vld [vmem:[%s2366 + $0x6c] sm:$0xf]
      %v2395 = vld [vmem:[%s2366 + $0x70] sm:$0xf]
      %v2396 = vld [vmem:[%s2366 + $0x74] sm:$0xf]
      %v2397 = vld [vmem:[%s2366 + $0x78] sm:$0xf]
      %v2398 = vld [vmem:[%s2366 + $0x7c] sm:$0xf]
      %v2399 = vld [vmem:[%s2366 + $0x80] sm:$0xf]
      %v2400 = vld [vmem:[%s2366 + $0x84] sm:$0xf]
      %v2401 = vld [vmem:[%s2366 + $0x88] sm:$0xf]
      %v2402 = vld [vmem:[%s2366 + $0x8c] sm:$0xf]
      %v2403 = vld [vmem:[%s2366 + $0x90] sm:$0xf]
      %v2404 = vld [vmem:[%s2366 + $0x94] sm:$0xf]
      %v2405 = vld [vmem:[%s2366 + $0x98] sm:$0xf]
      %v2406 = vld [vmem:[%s2366 + $0x9c] sm:$0xf]
      %v2407 = vld [vmem:[%s2366 + $0xa0] sm:$0xf]
      %v2408 = vld [vmem:[%s2366 + $0xa4] sm:$0xf]
      %v2409 = vld [vmem:[%s2366 + $0xa8] sm:$0xf]
      %v2410 = vld [vmem:[%s2366 + $0xac] sm:$0xf]
      %v2411 = vld [vmem:[%s2366 + $0xb0] sm:$0xf]
      %v2412 = vld [vmem:[%s2366 + $0xb4] sm:$0xf]
      %v2413 = vld [vmem:[%s2366 + $0xb8] sm:$0xf]
      %v2414 = vld [vmem:[%s2366 + $0xbc] sm:$0xf]
      %v2463 = vunpack.c.l.b16 %v2367
      %v2464 = vunpack.c.l.b16 %v2368
      %v2465 = vunpack.c.l.b16 %v2369
      %v2466 = vunpack.c.l.b16 %v2370
      %v2467 = vunpack.c.l.b16 %v2371
      %v2468 = vunpack.c.l.b16 %v2372
      %v2469 = vunpack.c.l.b16 %v2373
      %v2470 = vunpack.c.l.b16 %v2374
      %v2471 = vunpack.c.l.b16 %v2375
      %v2472 = vunpack.c.l.b16 %v2376
      %v2473 = vunpack.c.l.b16 %v2377
      %v2474 = vunpack.c.l.b16 %v2378
      %v2475 = vunpack.c.l.b16 %v2379
      %v2476 = vunpack.c.l.b16 %v2380
      %v2477 = vunpack.c.l.b16 %v2381
      %v2478 = vunpack.c.l.b16 %v2382
      %v2479 = vunpack.c.l.b16 %v2383
      %v2480 = vunpack.c.l.b16 %v2384
      %v2481 = vunpack.c.l.b16 %v2385
      %v2482 = vunpack.c.l.b16 %v2386
      %v2483 = vunpack.c.l.b16 %v2387
      %v2484 = vunpack.c.l.b16 %v2388
      %v2485 = vunpack.c.l.b16 %v2389
      %v2486 = vunpack.c.l.b16 %v2390
      %v2487 = vunpack.c.l.b16 %v2391
      %v2488 = vunpack.c.l.b16 %v2392
      %v2489 = vunpack.c.l.b16 %v2393
      %v2490 = vunpack.c.l.b16 %v2394
      %v2491 = vunpack.c.l.b16 %v2395
      %v2492 = vunpack.c.l.b16 %v2396
      %v2493 = vunpack.c.l.b16 %v2397
      %v2494 = vunpack.c.l.b16 %v2398
      %v2495 = vunpack.c.l.b16 %v2399
      %v2496 = vunpack.c.l.b16 %v2400
      %v2497 = vunpack.c.l.b16 %v2401
      %v2498 = vunpack.c.l.b16 %v2402
      %v2499 = vunpack.c.l.b16 %v2403
      %v2500 = vunpack.c.l.b16 %v2404
      %v2501 = vunpack.c.l.b16 %v2405
      %v2502 = vunpack.c.l.b16 %v2406
      %v2503 = vunpack.c.l.b16 %v2407
      %v2504 = vunpack.c.l.b16 %v2408
      %v2505 = vunpack.c.l.b16 %v2409
      %v2506 = vunpack.c.l.b16 %v2410
      %v2507 = vunpack.c.l.b16 %v2411
      %v2508 = vunpack.c.l.b16 %v2412
      %v2509 = vunpack.c.l.b16 %v2413
      %v2510 = vunpack.c.l.b16 %v2414
      %v2511 = vpack.c.b16 %v2464, %v2463
      %v2512 = vpack.c.b16 %v2466, %v2465
      %v2513 = vpack.c.b16 %v2468, %v2467
      %v2514 = vpack.c.b16 %v2470, %v2469
      %v2515 = vpack.c.b16 %v2472, %v2471
      %v2516 = vpack.c.b16 %v2474, %v2473
      %v2517 = vpack.c.b16 %v2476, %v2475
      %v2518 = vpack.c.b16 %v2478, %v2477
      %v2519 = vpack.c.b16 %v2480, %v2479
      %v2520 = vpack.c.b16 %v2482, %v2481
      %v2521 = vpack.c.b16 %v2484, %v2483
      %v2522 = vpack.c.b16 %v2486, %v2485
      %v2523 = vpack.c.b16 %v2488, %v2487
      %v2524 = vpack.c.b16 %v2490, %v2489
      %v2525 = vpack.c.b16 %v2492, %v2491
      %v2526 = vpack.c.b16 %v2494, %v2493
      %v2527 = vpack.c.b16 %v2496, %v2495
      %v2528 = vpack.c.b16 %v2498, %v2497
      %v2529 = vpack.c.b16 %v2500, %v2499
      %v2530 = vpack.c.b16 %v2502, %v2501
      %v2531 = vpack.c.b16 %v2504, %v2503
      %v2532 = vpack.c.b16 %v2506, %v2505
      %v2533 = vpack.c.b16 %v2508, %v2507
      %v2534 = vpack.c.b16 %v2510, %v2509
      %2559 = vmatprep.subr.bf16.mxu0 0
      %2560 = vmatpush1.bf16.msra.mxu0 %v2511
      %2561 = vmatprep.subr.bf16.mxu0 0
      %2562 = vmatpush1.bf16.msra.mxu0 %v2512
      %2563 = vmatprep.subr.bf16.mxu0 0
      %2564 = vmatpush1.bf16.msra.mxu0 %v2513
      %2565 = vmatprep.subr.bf16.mxu0 0
      %2566 = vmatpush1.bf16.msra.mxu0 %v2514
      %2567 = vmatprep.subr.bf16.mxu0 0
      %2568 = vmatpush1.bf16.msra.mxu0 %v2515
      %2569 = vmatprep.subr.bf16.mxu0 0
      %2570 = vmatpush1.bf16.msra.mxu0 %v2516
      %2571 = vmatprep.subr.bf16.mxu0 0
      %2572 = vmatpush1.bf16.msra.mxu0 %v2517
      %2573 = vmatprep.subr.bf16.mxu0 0
      %2574 = vmatpush1.bf16.msra.mxu0 %v2518
      %2575 = vmatprep.subr.bf16.mxu0 0
      %2576 = vmatpush1.bf16.msra.mxu0 %v2519
      %2577 = vmatprep.subr.bf16.mxu0 0
      %2578 = vmatpush1.bf16.msra.mxu0 %v2520
      %2579 = vmatprep.subr.bf16.mxu0 0
      %2580 = vmatpush1.bf16.msra.mxu0 %v2521
      %2581 = vmatprep.subr.bf16.mxu0 0
      %2582 = vmatpush1.bf16.msra.mxu0 %v2522
      %2583 = vmatprep.subr.bf16.mxu0 0
      %2584 = vmatpush1.bf16.msra.mxu0 %v2523
      %2585 = vmatprep.subr.bf16.mxu0 0
      %2586 = vmatpush1.bf16.msra.mxu0 %v2524
      %2587 = vmatprep.subr.bf16.mxu0 0
      %2588 = vmatpush1.bf16.msra.mxu0 %v2525
      %2589 = vmatprep.subr.bf16.mxu0 0
      %2590 = vmatpush1.bf16.msra.mxu0 %v2526
      %2591 = vmatprep.mubr.bf16.mxu0 %v2223
      %2592 = vmatmul.mubr.bf16.gmra.mrb[0].mxu0 %v2222
      %v2593 = vpop.f32.mrb[0].mxu0
      %v2594 = vadd.f32 0.0, %v2593
      %v2595 = vpop.f32.mrb[0].mxu0
      %v2596 = vpop.f32.mrb[0].mxu0
      %v2597 = vadd.f32 0.0, %v2596
      %v2598 = vpop.f32.mrb[0].mxu0
      %2599 = vmatprep.mubr.bf16.mxu0 %v2226
      %2600 = vmatmul.mubr.bf16.gmra.mrb[0].mxu0 %v2225
      %v2601 = vpop.f32.mrb[0].mxu0
      %v2602 = vadd.f32 0.0, %v2601
      %v2603 = vpop.f32.mrb[0].mxu0
      %v2604 = vpop.f32.mrb[0].mxu0
      %v2605 = vadd.f32 0.0, %v2604
      %v2606 = vpop.f32.mrb[0].mxu0
      %2607 = vmatprep.mubr.bf16.mxu0 %v2229
      %2608 = vmatmul.mubr.bf16.gmra.mrb[0].mxu0 %v2228
      %v2609 = vpop.f32.mrb[0].mxu0
      %v2610 = vadd.f32 0.0, %v2609
      %v2611 = vpop.f32.mrb[0].mxu0
      %v2612 = vpop.f32.mrb[0].mxu0
      %v2613 = vadd.f32 0.0, %v2612
      %v2614 = vpop.f32.mrb[0].mxu0
      %2615 = vmatprep.mubr.bf16.mxu0 %v2232
      %2616 = vmatmul.mubr.bf16.gmra.mrb[0].mxu0 %v2231
      %v2617 = vpop.f32.mrb[0].mxu0
      %v2618 = vadd.f32 0.0, %v2617
      %v2619 = vpop.f32.mrb[0].mxu0
      %v2620 = vpop.f32.mrb[0].mxu0
      %v2621 = vadd.f32 0.0, %v2620
      %v2622 = vpop.f32.mrb[0].mxu0
      %2623 = vmatprep.mubr.bf16.mxu0 %v2235
      %2624 = vmatmul.mubr.bf16.gmra.mrb[0].mxu0 %v2234
      %v2625 = vpop.f32.mrb[0].mxu0
      %v2626 = vadd.f32 0.0, %v2625
      %v2627 = vpop.f32.mrb[0].mxu0
      %v2628 = vpop.f32.mrb[0].mxu0
      %v2629 = vadd.f32 0.0, %v2628
      %v2630 = vpop.f32.mrb[0].mxu0
      %2631 = vmatprep.mubr.bf16.mxu0 %v2238
      %2632 = vmatmul.mubr.bf16.gmra.mrb[0].mxu0 %v2237
      %v2633 = vpop.f32.mrb[0].mxu0
      %v2634 = vadd.f32 0.0, %v2633
      %v2635 = vpop.f32.mrb[0].mxu0
      %v2636 = vpop.f32.mrb[0].mxu0
      %v2637 = vadd.f32 0.0, %v2636
      %v2638 = vpop.f32.mrb[0].mxu0
      %2639 = vmatprep.mubr.bf16.mxu0 %v2241
      %2640 = vmatmul.mubr.bf16.gmra.mrb[0].mxu0 %v2240
      %v2641 = vpop.f32.mrb[0].mxu0
      %v2642 = vadd.f32 0.0, %v2641
      %v2643 = vpop.f32.mrb[0].mxu0
      %v2644 = vpop.f32.mrb[0].mxu0
      %v2645 = vadd.f32 0.0, %v2644
      %v2646 = vpop.f32.mrb[0].mxu0
      %2647 = vmatprep.mubr.bf16.mxu0 %v2244
      %2648 = vmatmul.mubr.bf16.gmra.mrb[0].mxu0 %v2243
      %v2649 = vpop.f32.mrb[0].mxu0
      %v2650 = vadd.f32 0.0, %v2649
      %v2651 = vpop.f32.mrb[0].mxu0
      %v2652 = vpop.f32.mrb[0].mxu0
      %v2653 = vadd.f32 0.0, %v2652
      %v2654 = vpop.f32.mrb[0].mxu0
      %2655 = vmatprep.mubr.bf16.mxu0 %v2247
      %2656 = vmatmul.mubr.bf16.gmra.mrb[0].mxu0 %v2246
      %v2657 = vpop.f32.mrb[0].mxu0
      %v2658 = vadd.f32 0.0, %v2657
      %v2659 = vpop.f32.mrb[0].mxu0
      %v2660 = vpop.f32.mrb[0].mxu0
      %v2661 = vadd.f32 0.0, %v2660
      %v2662 = vpop.f32.mrb[0].mxu0
      %2663 = vmatprep.mubr.bf16.mxu0 %v2250
      %2664 = vmatmul.mubr.bf16.gmra.mrb[0].mxu0 %v2249
      %v2665 = vpop.f32.mrb[0].mxu0
      %v2666 = vadd.f32 0.0, %v2665
      %v2667 = vpop.f32.mrb[0].mxu0
      %v2668 = vpop.f32.mrb[0].mxu0
      %v2669 = vadd.f32 0.0, %v2668
      %v2670 = vpop.f32.mrb[0].mxu0
      %2671 = vmatprep.mubr.bf16.mxu0 %v2253
      %2672 = vmatmul.mubr.bf16.gmra.mrb[0].mxu0 %v2252
      %v2673 = vpop.f32.mrb[0].mxu0
      %v2674 = vadd.f32 0.0, %v2673
      %v2675 = vpop.f32.mrb[0].mxu0
      %v2676 = vpop.f32.mrb[0].mxu0
      %v2677 = vadd.f32 0.0, %v2676
      %v2678 = vpop.f32.mrb[0].mxu0
      %2679 = vmatprep.mubr.bf16.mxu0 %v2256
      %2680 = vmatmul.mubr.bf16.gmra.mrb[0].mxu0 %v2255
      %v2681 = vpop.f32.mrb[0].mxu0
      %v2682 = vadd.f32 0.0, %v2681
      %v2683 = vpop.f32.mrb[0].mxu0
      %v2684 = vpop.f32.mrb[0].mxu0
      %v2685 = vadd.f32 0.0, %v2684
      %v2686 = vpop.f32.mrb[0].mxu0
      %2687 = vmatprep.mubr.bf16.mxu0 %v2259
      %2688 = vmatmul.mubr.bf16.gmra.mrb[0].mxu0 %v2258
      %v2689 = vpop.f32.mrb[0].mxu0
      %v2690 = vadd.f32 0.0, %v2689
      %v2691 = vpop.f32.mrb[0].mxu0
      %v2692 = vpop.f32.mrb[0].mxu0
      %v2693 = vadd.f32 0.0, %v2692
      %v2694 = vpop.f32.mrb[0].mxu0
      %2695 = vmatprep.mubr.bf16.mxu0 %v2262
      %2696 = vmatmul.mubr.bf16.gmra.mrb[0].mxu0 %v2261
      %v2697 = vpop.f32.mrb[0].mxu0
      %v2698 = vadd.f32 0.0, %v2697
      %v2699 = vpop.f32.mrb[0].mxu0
      %v2700 = vpop.f32.mrb[0].mxu0
      %v2701 = vadd.f32 0.0, %v2700
      %v2702 = vpop.f32.mrb[0].mxu0
      %2703 = vmatprep.mubr.bf16.mxu0 %v2265
      %2704 = vmatmul.mubr.bf16.gmra.mrb[0].mxu0 %v2264
      %v2705 = vpop.f32.mrb[0].mxu0
      %v2706 = vadd.f32 0.0, %v2705
      %v2707 = vpop.f32.mrb[0].mxu0
      %v2708 = vpop.f32.mrb[0].mxu0
      %v2709 = vadd.f32 0.0, %v2708
      %v2710 = vpop.f32.mrb[0].mxu0
      %2711 = vmatprep.mubr.bf16.mxu0 %v2268
      %2712 = vmatmul.mubr.bf16.gmra.mrb[0].mxu0 %v2267
      %v2713 = vpop.f32.mrb[0].mxu0
      %v2714 = vadd.f32 0.0, %v2713
      %v2715 = vpop.f32.mrb[0].mxu0
      %v2716 = vpop.f32.mrb[0].mxu0
      %v2717 = vadd.f32 0.0, %v2716
      %v2718 = vpop.f32.mrb[0].mxu0
      %2719 = vmatprep.mubr.bf16.mxu0 %v2271
      %2720 = vmatmul.mubr.bf16.gmra.mrb[0].mxu0 %v2270
      %v2721 = vpop.f32.mrb[0].mxu0
      %v2722 = vadd.f32 0.0, %v2721
      %v2723 = vpop.f32.mrb[0].mxu0
      %v2724 = vpop.f32.mrb[0].mxu0
      %v2725 = vadd.f32 0.0, %v2724
      %v2726 = vpop.f32.mrb[0].mxu0
      %2727 = vmatprep.mubr.bf16.mxu0 %v2274
      %2728 = vmatmul.mubr.bf16.gmra.mrb[0].mxu0 %v2273
      %v2729 = vpop.f32.mrb[0].mxu0
      %v2730 = vadd.f32 0.0, %v2729
      %v2731 = vpop.f32.mrb[0].mxu0
      %v2732 = vpop.f32.mrb[0].mxu0
      %v2733 = vadd.f32 0.0, %v2732
      %v2734 = vpop.f32.mrb[0].mxu0
      %2735 = vmatprep.mubr.bf16.mxu0 %v2277
      %2736 = vmatmul.mubr.bf16.gmra.mrb[0].mxu0 %v2276
      %v2737 = vpop.f32.mrb[0].mxu0
      %v2738 = vadd.f32 0.0, %v2737
      %v2739 = vpop.f32.mrb[0].mxu0
      %v2740 = vpop.f32.mrb[0].mxu0
      %v2741 = vadd.f32 0.0, %v2740
      %v2742 = vpop.f32.mrb[0].mxu0
      %2743 = vmatprep.mubr.bf16.mxu0 %v2280
      %2744 = vmatmul.mubr.bf16.gmra.mrb[0].mxu0 %v2279
      %v2745 = vpop.f32.mrb[0].mxu0
      %v2746 = vadd.f32 0.0, %v2745
      %v2747 = vpop.f32.mrb[0].mxu0
      %v2748 = vpop.f32.mrb[0].mxu0
      %v2749 = vadd.f32 0.0, %v2748
      %v2750 = vpop.f32.mrb[0].mxu0
      %2751 = vmatprep.mubr.bf16.mxu0 %v2283
      %2752 = vmatmul.mubr.bf16.gmra.mrb[0].mxu0 %v2282
      %v2753 = vpop.f32.mrb[0].mxu0
      %v2754 = vadd.f32 0.0, %v2753
      %v2755 = vpop.f32.mrb[0].mxu0
      %v2756 = vpop.f32.mrb[0].mxu0
      %v2757 = vadd.f32 0.0, %v2756
      %v2758 = vpop.f32.mrb[0].mxu0
      %2759 = vmatprep.mubr.bf16.mxu0 %v2286
      %2760 = vmatmul.mubr.bf16.gmra.mrb[0].mxu0 %v2285
      %v2761 = vpop.f32.mrb[0].mxu0
      %v2762 = vadd.f32 0.0, %v2761
      %v2763 = vpop.f32.mrb[0].mxu0
      %v2764 = vpop.f32.mrb[0].mxu0
      %v2765 = vadd.f32 0.0, %v2764
      %v2766 = vpop.f32.mrb[0].mxu0
      %2767 = vmatprep.mubr.bf16.mxu0 %v2289
      %2768 = vmatmul.mubr.bf16.gmra.mrb[0].mxu0 %v2288
      %v2769 = vpop.f32.mrb[0].mxu0
      %v2770 = vadd.f32 0.0, %v2769
      %v2771 = vpop.f32.mrb[0].mxu0
      %v2772 = vpop.f32.mrb[0].mxu0
      %v2773 = vadd.f32 0.0, %v2772
      %v2774 = vpop.f32.mrb[0].mxu0
      %2775 = vmatprep.mubr.bf16.mxu0 %v2292
      %2776 = vmatmul.mubr.bf16.gmra.mrb[0].mxu0 %v2291
      %v2777 = vpop.f32.mrb[0].mxu0
      %v2778 = vadd.f32 0.0, %v2777
      %v2779 = vpop.f32.mrb[0].mxu0
      %v2780 = vpop.f32.mrb[0].mxu0
      %v2781 = vadd.f32 0.0, %v2780
      %v2782 = vpop.f32.mrb[0].mxu0
      %2783 = vmatprep.mubr.bf16.mxu0 %v2295
      %2784 = vmatmul.mubr.bf16.gmra.mrb[0].mxu0 %v2294
      %v2785 = vpop.f32.mrb[0].mxu0
      %v2786 = vadd.f32 0.0, %v2785
      %v2787 = vpop.f32.mrb[0].mxu0
      %v2788 = vpop.f32.mrb[0].mxu0
      %v2789 = vadd.f32 0.0, %v2788
      %v2790 = vpop.f32.mrb[0].mxu0
      %2791 = vmatprep.mubr.bf16.mxu0 %v2298
      %2792 = vmatmul.mubr.bf16.gmra.mrb[0].mxu0 %v2297
      %v2793 = vpop.f32.mrb[0].mxu0
      %v2794 = vadd.f32 0.0, %v2793
      %v2795 = vpop.f32.mrb[0].mxu0
      %v2796 = vpop.f32.mrb[0].mxu0
      %v2797 = vadd.f32 0.0, %v2796
      %v2798 = vpop.f32.mrb[0].mxu0
      %2799 = vmatprep.mubr.bf16.mxu0 %v2301
      %2800 = vmatmul.mubr.bf16.gmra.mrb[0].mxu0 %v2300
      %v2801 = vpop.f32.mrb[0].mxu0
      %v2802 = vadd.f32 0.0, %v2801
      %v2803 = vpop.f32.mrb[0].mxu0
      %v2804 = vpop.f32.mrb[0].mxu0
      %v2805 = vadd.f32 0.0, %v2804
      %v2806 = vpop.f32.mrb[0].mxu0
      %2807 = vmatprep.mubr.bf16.mxu0 %v2304
      %2808 = vmatmul.mubr.bf16.gmra.mrb[0].mxu0 %v2303
      %v2809 = vpop.f32.mrb[0].mxu0
      %v2810 = vadd.f32 0.0, %v2809
      %v2811 = vpop.f32.mrb[0].mxu0
      %v2812 = vpop.f32.mrb[0].mxu0
      %v2813 = vadd.f32 0.0, %v2812
      %v2814 = vpop.f32.mrb[0].mxu0
      %2815 = vmatprep.mubr.bf16.mxu0 %v2307
      %2816 = vmatmul.mubr.bf16.gmra.mrb[0].mxu0 %v2306
      %v2817 = vpop.f32.mrb[0].mxu0
      %v2818 = vadd.f32 0.0, %v2817
      %v2819 = vpop.f32.mrb[0].mxu0
      %v2820 = vpop.f32.mrb[0].mxu0
      %v2821 = vadd.f32 0.0, %v2820
      %v2822 = vpop.f32.mrb[0].mxu0
      %2823 = vmatprep.mubr.bf16.mxu0 %v2310
      %2824 = vmatmul.mubr.bf16.gmra.mrb[0].mxu0 %v2309
      %v2825 = vpop.f32.mrb[0].mxu0
      %v2826 = vadd.f32 0.0, %v2825
      %v2827 = vpop.f32.mrb[0].mxu0
      %v2828 = vpop.f32.mrb[0].mxu0
      %v2829 = vadd.f32 0.0, %v2828
      %v2830 = vpop.f32.mrb[0].mxu0
      %2831 = vmatprep.mubr.bf16.mxu0 %v2361
      %2832 = vmatmul.mubr.bf16.gmra.mrb[0].mxu0 %v2360
      %v2833 = vpop.f32.mrb[0].mxu0
      %v2834 = vadd.f32 0.0, %v2833
      %v2835 = vpop.f32.mrb[0].mxu0
      %v2836 = vpop.f32.mrb[0].mxu0
      %v2837 = vadd.f32 0.0, %v2836
      %v2838 = vpop.f32.mrb[0].mxu0
      %2839 = vmatprep.mubr.bf16.mxu0 %v2364
      %2840 = vmatmul.mubr.bf16.gmra.mrb[0].mxu0 %v2363
      %v2841 = vpop.f32.mrb[0].mxu0
      %v2842 = vadd.f32 0.0, %v2841
      %v2843 = vpop.f32.mrb[0].mxu0
      %v2844 = vpop.f32.mrb[0].mxu0
      %v2845 = vadd.f32 0.0, %v2844
      %v2846 = vpop.f32.mrb[0].mxu0
      %2847 = vdwg.mxu0
      %2848 = vmatprep.subr.bf16.mxu0 0
      %2849 = vmatpush1.bf16.msra.mxu0 %v2527
      %2850 = vmatprep.subr.bf16.mxu0 0
      %2851 = vmatpush1.bf16.msra.mxu0 %v2528
      %2852 = vmatprep.subr.bf16.mxu0 0
      %2853 = vmatpush1.bf16.msra.mxu0 %v2529
      %2854 = vmatprep.subr.bf16.mxu0 0
      %2855 = vmatpush1.bf16.msra.mxu0 %v2530
      %2856 = vmatprep.subr.bf16.mxu0 0
      %2857 = vmatpush1.bf16.msra.mxu0 %v2531
      %2858 = vmatprep.subr.bf16.mxu0 0
      %2859 = vmatpush1.bf16.msra.mxu0 %v2532
      %2860 = vmatprep.subr.bf16.mxu0 0
      %2861 = vmatpush1.bf16.msra.mxu0 %v2533
      %2862 = vmatprep.subr.bf16.mxu0 0
      %2863 = vmatpush1.bf16.msra.mxu0 %v2534
      %2864 = vmatprep.subr.bf16.mxu0 0
      %2865 = vmatpush1.bf16.msra.mxu0 0
      %2866 = vmatprep.subr.bf16.mxu0 0
      %2867 = vmatpush1.bf16.msra.mxu0 0
      %2868 = vmatprep.subr.bf16.mxu0 0
      %2869 = vmatpush1.bf16.msra.mxu0 0
      %2870 = vmatprep.subr.bf16.mxu0 0
      %2871 = vmatpush1.bf16.msra.mxu0 0
      %2872 = vmatprep.subr.bf16.mxu0 0
      %2873 = vmatpush1.bf16.msra.mxu0 0
      %2874 = vmatprep.subr.bf16.mxu0 0
      %2875 = vmatpush1.bf16.msra.mxu0 0
      %2876 = vmatprep.subr.bf16.mxu0 0
      %2877 = vmatpush1.bf16.msra.mxu0 0
      %2878 = vmatprep.subr.bf16.mxu0 0
      %2879 = vmatpush1.bf16.msra.mxu0 0
      %2880 = vmatprep.mubr.bf16.mxu0 0
      %2881 = vmatmul.mubr.bf16.gmra.mrb[0].mxu0 %v2224
      %v2882 = vpop.f32.mrb[0].mxu0
      %v2883 = vadd.f32 %v2594, %v2882
      %v2884 = vpop.f32.mrb[0].mxu0
      %v2885 = vpop.f32.mrb[0].mxu0
      %v2886 = vadd.f32 %v2597, %v2885
      %v2887 = vpop.f32.mrb[0].mxu0
      %2888 = vmatprep.mubr.bf16.mxu0 0
      %2889 = vmatmul.mubr.bf16.gmra.mrb[0].mxu0 %v2227
      %v2890 = vpop.f32.mrb[0].mxu0
      %v2891 = vadd.f32 %v2602, %v2890
      %v2892 = vpop.f32.mrb[0].mxu0
      %v2893 = vpop.f32.mrb[0].mxu0
      %v2894 = vadd.f32 %v2605, %v2893
      %v2895 = vpop.f32.mrb[0].mxu0
      %2896 = vmatprep.mubr.bf16.mxu0 0
      %2897 = vmatmul.mubr.bf16.gmra.mrb[0].mxu0 %v2230
      %v2898 = vpop.f32.mrb[0].mxu0
      %v2899 = vadd.f32 %v2610, %v2898
      %v2900 = vpop.f32.mrb[0].mxu0
      %v2901 = vpop.f32.mrb[0].mxu0
      %v2902 = vadd.f32 %v2613, %v2901
      %v2903 = vpop.f32.mrb[0].mxu0
      %2904 = vmatprep.mubr.bf16.mxu0 0
      %2905 = vmatmul.mubr.bf16.gmra.mrb[0].mxu0 %v2233
      %v2906 = vpop.f32.mrb[0].mxu0
      %v2907 = vadd.f32 %v2618, %v2906
      %v2908 = vpop.f32.mrb[0].mxu0
      %v2909 = vpop.f32.mrb[0].mxu0
      %v2910 = vadd.f32 %v2621, %v2909
      %v2911 = vpop.f32.mrb[0].mxu0
      %2912 = vmatprep.mubr.bf16.mxu0 0
      %2913 = vmatmul.mubr.bf16.gmra.mrb[0].mxu0 %v2236
      %v2914 = vpop.f32.mrb[0].mxu0
      %v2915 = vadd.f32 %v2626, %v2914
      %v2916 = vpop.f32.mrb[0].mxu0
      %v2917 = vpop.f32.mrb[0].mxu0
      %v2918 = vadd.f32 %v2629, %v2917
      %v2919 = vpop.f32.mrb[0].mxu0
      %2920 = vmatprep.mubr.bf16.mxu0 0
      %2921 = vmatmul.mubr.bf16.gmra.mrb[0].mxu0 %v2239
      %v2922 = vpop.f32.mrb[0].mxu0
      %v2923 = vadd.f32 %v2634, %v2922
      %v2924 = vpop.f32.mrb[0].mxu0
      %v2925 = vpop.f32.mrb[0].mxu0
      %v2926 = vadd.f32 %v2637, %v2925
      %v2927 = vpop.f32.mrb[0].mxu0
      %2928 = vmatprep.mubr.bf16.mxu0 0
      %2929 = vmatmul.mubr.bf16.gmra.mrb[0].mxu0 %v2242
      %v2930 = vpop.f32.mrb[0].mxu0
      %v2931 = vadd.f32 %v2642, %v2930
      %v2932 = vpop.f32.mrb[0].mxu0
      %v2933 = vpop.f32.mrb[0].mxu0
      %v2934 = vadd.f32 %v2645, %v2933
      %v2935 = vpop.f32.mrb[0].mxu0
      %2936 = vmatprep.mubr.bf16.mxu0 0
      %2937 = vmatmul.mubr.bf16.gmra.mrb[0].mxu0 %v2245
      %v2938 = vpop.f32.mrb[0].mxu0
      %v2939 = vadd.f32 %v2650, %v2938
      %v2940 = vpop.f32.mrb[0].mxu0
      %v2941 = vpop.f32.mrb[0].mxu0
      %v2942 = vadd.f32 %v2653, %v2941
      %v2943 = vpop.f32.mrb[0].mxu0
      %2944 = vmatprep.mubr.bf16.mxu0 0
      %2945 = vmatmul.mubr.bf16.gmra.mrb[0].mxu0 %v2248
      %v2946 = vpop.f32.mrb[0].mxu0
      %v2947 = vadd.f32 %v2658, %v2946
      %v2948 = vpop.f32.mrb[0].mxu0
      %v2949 = vpop.f32.mrb[0].mxu0
      %v2950 = vadd.f32 %v2661, %v2949
      %v2951 = vpop.f32.mrb[0].mxu0
      %2952 = vmatprep.mubr.bf16.mxu0 0
      %2953 = vmatmul.mubr.bf16.gmra.mrb[0].mxu0 %v2251
      %v2954 = vpop.f32.mrb[0].mxu0
      %v2955 = vadd.f32 %v2666, %v2954
      %v2956 = vpop.f32.mrb[0].mxu0
      %v2957 = vpop.f32.mrb[0].mxu0
      %v2958 = vadd.f32 %v2669, %v2957
      %v2959 = vpop.f32.mrb[0].mxu0
      %2960 = vmatprep.mubr.bf16.mxu0 0
      %2961 = vmatmul.mubr.bf16.gmra.mrb[0].mxu0 %v2254
      %v2962 = vpop.f32.mrb[0].mxu0
      %v2963 = vadd.f32 %v2674, %v2962
      %v2964 = vpop.f32.mrb[0].mxu0
      %v2965 = vpop.f32.mrb[0].mxu0
      %v2966 = vadd.f32 %v2677, %v2965
      %v2967 = vpop.f32.mrb[0].mxu0
      %2968 = vmatprep.mubr.bf16.mxu0 0
      %2969 = vmatmul.mubr.bf16.gmra.mrb[0].mxu0 %v2257
      %v2970 = vpop.f32.mrb[0].mxu0
      %v2971 = vadd.f32 %v2682, %v2970
      %v2972 = vpop.f32.mrb[0].mxu0
      %v2973 = vpop.f32.mrb[0].mxu0
      %v2974 = vadd.f32 %v2685, %v2973
      %v2975 = vpop.f32.mrb[0].mxu0
      %2976 = vmatprep.mubr.bf16.mxu0 0
      %2977 = vmatmul.mubr.bf16.gmra.mrb[0].mxu0 %v2260
      %v2978 = vpop.f32.mrb[0].mxu0
      %v2979 = vadd.f32 %v2690, %v2978
      %v2980 = vpop.f32.mrb[0].mxu0
      %v2981 = vpop.f32.mrb[0].mxu0
      %v2982 = vadd.f32 %v2693, %v2981
      %v2983 = vpop.f32.mrb[0].mxu0
      %2984 = vmatprep.mubr.bf16.mxu0 0
      %2985 = vmatmul.mubr.bf16.gmra.mrb[0].mxu0 %v2263
      %v2986 = vpop.f32.mrb[0].mxu0
      %v2987 = vadd.f32 %v2698, %v2986
      %v2988 = vpop.f32.mrb[0].mxu0
      %v2989 = vpop.f32.mrb[0].mxu0
      %v2990 = vadd.f32 %v2701, %v2989
      %v2991 = vpop.f32.mrb[0].mxu0
      %2992 = vmatprep.mubr.bf16.mxu0 0
      %2993 = vmatmul.mubr.bf16.gmra.mrb[0].mxu0 %v2266
      %v2994 = vpop.f32.mrb[0].mxu0
      %v2995 = vadd.f32 %v2706, %v2994
      %v2996 = vpop.f32.mrb[0].mxu0
      %v2997 = vpop.f32.mrb[0].mxu0
      %v2998 = vadd.f32 %v2709, %v2997
      %v2999 = vpop.f32.mrb[0].mxu0
      %3000 = vmatprep.mubr.bf16.mxu0 0
      %3001 = vmatmul.mubr.bf16.gmra.mrb[0].mxu0 %v2269
      %v3002 = vpop.f32.mrb[0].mxu0
      %v3003 = vadd.f32 %v2714, %v3002
      %v3004 = vpop.f32.mrb[0].mxu0
      %v3005 = vpop.f32.mrb[0].mxu0
      %v3006 = vadd.f32 %v2717, %v3005
      %v3007 = vpop.f32.mrb[0].mxu0
      %3008 = vmatprep.mubr.bf16.mxu0 0
      %3009 = vmatmul.mubr.bf16.gmra.mrb[0].mxu0 %v2272
      %v3010 = vpop.f32.mrb[0].mxu0
      %v3011 = vadd.f32 %v2722, %v3010
      %v3012 = vpop.f32.mrb[0].mxu0
      %v3013 = vpop.f32.mrb[0].mxu0
      %v3014 = vadd.f32 %v2725, %v3013
      %v3015 = vpop.f32.mrb[0].mxu0
      %3016 = vmatprep.mubr.bf16.mxu0 0
      %3017 = vmatmul.mubr.bf16.gmra.mrb[0].mxu0 %v2275
      %v3018 = vpop.f32.mrb[0].mxu0
      %v3019 = vadd.f32 %v2730, %v3018
      %v3020 = vpop.f32.mrb[0].mxu0
      %v3021 = vpop.f32.mrb[0].mxu0
      %v3022 = vadd.f32 %v2733, %v3021
      %v3023 = vpop.f32.mrb[0].mxu0
      %3024 = vmatprep.mubr.bf16.mxu0 0
      %3025 = vmatmul.mubr.bf16.gmra.mrb[0].mxu0 %v2278
      %v3026 = vpop.f32.mrb[0].mxu0
      %v3027 = vadd.f32 %v2738, %v3026
      %v3028 = vpop.f32.mrb[0].mxu0
      %v3029 = vpop.f32.mrb[0].mxu0
      %v3030 = vadd.f32 %v2741, %v3029
      %v3031 = vpop.f32.mrb[0].mxu0
      %3032 = vmatprep.mubr.bf16.mxu0 0
      %3033 = vmatmul.mubr.bf16.gmra.mrb[0].mxu0 %v2281
      %v3034 = vpop.f32.mrb[0].mxu0
      %v3035 = vadd.f32 %v2746, %v3034
      %v3036 = vpop.f32.mrb[0].mxu0
      %v3037 = vpop.f32.mrb[0].mxu0
      %v3038 = vadd.f32 %v2749, %v3037
      %v3039 = vpop.f32.mrb[0].mxu0
      %3040 = vmatprep.mubr.bf16.mxu0 0
      %3041 = vmatmul.mubr.bf16.gmra.mrb[0].mxu0 %v2284
      %v3042 = vpop.f32.mrb[0].mxu0
      %v3043 = vadd.f32 %v2754, %v3042
      %v3044 = vpop.f32.mrb[0].mxu0
      %v3045 = vpop.f32.mrb[0].mxu0
      %v3046 = vadd.f32 %v2757, %v3045
      %v3047 = vpop.f32.mrb[0].mxu0
      %3048 = vmatprep.mubr.bf16.mxu0 0
      %3049 = vmatmul.mubr.bf16.gmra.mrb[0].mxu0 %v2287
      %v3050 = vpop.f32.mrb[0].mxu0
      %v3051 = vadd.f32 %v2762, %v3050
      %v3052 = vpop.f32.mrb[0].mxu0
      %v3053 = vpop.f32.mrb[0].mxu0
      %v3054 = vadd.f32 %v2765, %v3053
      %v3055 = vpop.f32.mrb[0].mxu0
      %3056 = vmatprep.mubr.bf16.mxu0 0
      %3057 = vmatmul.mubr.bf16.gmra.mrb[0].mxu0 %v2290
      %v3058 = vpop.f32.mrb[0].mxu0
      %v3059 = vadd.f32 %v2770, %v3058
      %v3060 = vpop.f32.mrb[0].mxu0
      %v3061 = vpop.f32.mrb[0].mxu0
      %v3062 = vadd.f32 %v2773, %v3061
      %v3063 = vpop.f32.mrb[0].mxu0
      %3064 = vmatprep.mubr.bf16.mxu0 0
      %3065 = vmatmul.mubr.bf16.gmra.mrb[0].mxu0 %v2293
      %v3066 = vpop.f32.mrb[0].mxu0
      %v3067 = vadd.f32 %v2778, %v3066
      %v3068 = vpop.f32.mrb[0].mxu0
      %v3069 = vpop.f32.mrb[0].mxu0
      %v3070 = vadd.f32 %v2781, %v3069
      %v3071 = vpop.f32.mrb[0].mxu0
      %3072 = vmatprep.mubr.bf16.mxu0 0
      %3073 = vmatmul.mubr.bf16.gmra.mrb[0].mxu0 %v2296
      %v3074 = vpop.f32.mrb[0].mxu0
      %v3075 = vadd.f32 %v2786, %v3074
      %v3076 = vpop.f32.mrb[0].mxu0
      %v3077 = vpop.f32.mrb[0].mxu0
      %v3078 = vadd.f32 %v2789, %v3077
      %v3079 = vpop.f32.mrb[0].mxu0
      %3080 = vmatprep.mubr.bf16.mxu0 0
      %3081 = vmatmul.mubr.bf16.gmra.mrb[0].mxu0 %v2299
      %v3082 = vpop.f32.mrb[0].mxu0
      %v3083 = vadd.f32 %v2794, %v3082
      %v3084 = vpop.f32.mrb[0].mxu0
      %v3085 = vpop.f32.mrb[0].mxu0
      %v3086 = vadd.f32 %v2797, %v3085
      %v3087 = vpop.f32.mrb[0].mxu0
      %3088 = vmatprep.mubr.bf16.mxu0 0
      %3089 = vmatmul.mubr.bf16.gmra.mrb[0].mxu0 %v2302
      %v3090 = vpop.f32.mrb[0].mxu0
      %v3091 = vadd.f32 %v2802, %v3090
      %v3092 = vpop.f32.mrb[0].mxu0
      %v3093 = vpop.f32.mrb[0].mxu0
      %v3094 = vadd.f32 %v2805, %v3093
      %v3095 = vpop.f32.mrb[0].mxu0
      %3096 = vmatprep.mubr.bf16.mxu0 0
      %3097 = vmatmul.mubr.bf16.gmra.mrb[0].mxu0 %v2305
      %v3098 = vpop.f32.mrb[0].mxu0
      %v3099 = vadd.f32 %v2810, %v3098
      %v3100 = vpop.f32.mrb[0].mxu0
      %v3101 = vpop.f32.mrb[0].mxu0
      %v3102 = vadd.f32 %v2813, %v3101
      %v3103 = vpop.f32.mrb[0].mxu0
      %3104 = vmatprep.mubr.bf16.mxu0 0
      %3105 = vmatmul.mubr.bf16.gmra.mrb[0].mxu0 %v2308
      %v3106 = vpop.f32.mrb[0].mxu0
      %v3107 = vadd.f32 %v2818, %v3106
      %v3108 = vpop.f32.mrb[0].mxu0
      %v3109 = vpop.f32.mrb[0].mxu0
      %v3110 = vadd.f32 %v2821, %v3109
      %v3111 = vpop.f32.mrb[0].mxu0
      %3112 = vmatprep.mubr.bf16.mxu0 0
      %3113 = vmatmul.mubr.bf16.gmra.mrb[0].mxu0 %v2311
      %v3114 = vpop.f32.mrb[0].mxu0
      %v3115 = vadd.f32 %v2826, %v3114
      %v3116 = vpop.f32.mrb[0].mxu0
      %v3117 = vpop.f32.mrb[0].mxu0
      %v3118 = vadd.f32 %v2829, %v3117
      %v3119 = vpop.f32.mrb[0].mxu0
      %3120 = vmatprep.mubr.bf16.mxu0 0
      %3121 = vmatmul.mubr.bf16.gmra.mrb[0].mxu0 %v2362
      %v3122 = vpop.f32.mrb[0].mxu0
      %v3123 = vadd.f32 %v2834, %v3122
      %v3124 = vpop.f32.mrb[0].mxu0
      %v3125 = vpop.f32.mrb[0].mxu0
      %v3126 = vadd.f32 %v2837, %v3125
      %v3127 = vpop.f32.mrb[0].mxu0
      %3128 = vmatprep.mubr.bf16.mxu0 0
      %3129 = vmatmul.mubr.bf16.gmra.mrb[0].mxu0 %v2365
      %v3130 = vpop.f32.mrb[0].mxu0
      %v3131 = vadd.f32 %v2842, %v3130
      %v3132 = vpop.f32.mrb[0].mxu0
      %v3133 = vpop.f32.mrb[0].mxu0
      %v3134 = vadd.f32 %v2845, %v3133
      %v3135 = vpop.f32.mrb[0].mxu0
      %3136 = vdwg.mxu0
      %v3185 = vunpack.c.l.b16 %v2312
      %v3186 = vunpack.c.l.b16 %v2313
      %v3187 = vunpack.c.l.b16 %v2314
      %v3188 = vunpack.c.l.b16 %v2315
      %v3189 = vunpack.c.l.b16 %v2316
      %v3190 = vunpack.c.l.b16 %v2317
      %v3191 = vunpack.c.l.b16 %v2318
      %v3192 = vunpack.c.l.b16 %v2319
      %v3193 = vunpack.c.l.b16 %v2320
      %v3194 = vunpack.c.l.b16 %v2321
      %v3195 = vunpack.c.l.b16 %v2322
      %v3196 = vunpack.c.l.b16 %v2323
      %v3197 = vunpack.c.l.b16 %v2324
      %v3198 = vunpack.c.l.b16 %v2325
      %v3199 = vunpack.c.l.b16 %v2326
      %v3200 = vunpack.c.l.b16 %v2327
      %v3201 = vunpack.c.l.b16 %v2328
      %v3202 = vunpack.c.l.b16 %v2329
      %v3203 = vunpack.c.l.b16 %v2330
      %v3204 = vunpack.c.l.b16 %v2331
      %v3205 = vunpack.c.l.b16 %v2332
      %v3206 = vunpack.c.l.b16 %v2333
      %v3207 = vunpack.c.l.b16 %v2334
      %v3208 = vunpack.c.l.b16 %v2335
      %v3209 = vunpack.c.l.b16 %v2336
      %v3210 = vunpack.c.l.b16 %v2337
      %v3211 = vunpack.c.l.b16 %v2338
      %v3212 = vunpack.c.l.b16 %v2339
      %v3213 = vunpack.c.l.b16 %v2340
      %v3214 = vunpack.c.l.b16 %v2341
      %v3215 = vunpack.c.l.b16 %v2342
      %v3216 = vunpack.c.l.b16 %v2343
      %v3217 = vunpack.c.l.b16 %v2344
      %v3218 = vunpack.c.l.b16 %v2345
      %v3219 = vunpack.c.l.b16 %v2346
      %v3220 = vunpack.c.l.b16 %v2347
      %v3221 = vunpack.c.l.b16 %v2348
      %v3222 = vunpack.c.l.b16 %v2349
      %v3223 = vunpack.c.l.b16 %v2350
      %v3224 = vunpack.c.l.b16 %v2351
      %v3225 = vunpack.c.l.b16 %v2352
      %v3226 = vunpack.c.l.b16 %v2353
      %v3227 = vunpack.c.l.b16 %v2354
      %v3228 = vunpack.c.l.b16 %v2355
      %v3229 = vunpack.c.l.b16 %v2356
      %v3230 = vunpack.c.l.b16 %v2357
      %v3231 = vunpack.c.l.b16 %v2358
      %v3232 = vunpack.c.l.b16 %v2359
      %v3233 = vpack.c.b16 %v3186, %v3185
      %v3234 = vpack.c.b16 %v3188, %v3187
      %v3235 = vpack.c.b16 %v3190, %v3189
      %v3236 = vpack.c.b16 %v3192, %v3191
      %v3237 = vpack.c.b16 %v3194, %v3193
      %v3238 = vpack.c.b16 %v3196, %v3195
      %v3239 = vpack.c.b16 %v3198, %v3197
      %v3240 = vpack.c.b16 %v3200, %v3199
      %v3241 = vpack.c.b16 %v3202, %v3201
      %v3242 = vpack.c.b16 %v3204, %v3203
      %v3243 = vpack.c.b16 %v3206, %v3205
      %v3244 = vpack.c.b16 %v3208, %v3207
      %v3245 = vpack.c.b16 %v3210, %v3209
      %v3246 = vpack.c.b16 %v3212, %v3211
      %v3247 = vpack.c.b16 %v3214, %v3213
      %v3248 = vpack.c.b16 %v3216, %v3215
      %v3249 = vpack.c.b16 %v3218, %v3217
      %v3250 = vpack.c.b16 %v3220, %v3219
      %v3251 = vpack.c.b16 %v3222, %v3221
      %v3252 = vpack.c.b16 %v3224, %v3223
      %v3253 = vpack.c.b16 %v3226, %v3225
      %v3254 = vpack.c.b16 %v3228, %v3227
      %v3255 = vpack.c.b16 %v3230, %v3229
      %v3256 = vpack.c.b16 %v3232, %v3231
      %3281 = vmatprep.subr.bf16.mxu0 0
      %3282 = vmatpush1.bf16.msra.mxu0 %v3233
      %3283 = vmatprep.subr.bf16.mxu0 0
      %3284 = vmatpush1.bf16.msra.mxu0 %v3234
      %3285 = vmatprep.subr.bf16.mxu0 0
      %3286 = vmatpush1.bf16.msra.mxu0 %v3235
      %3287 = vmatprep.subr.bf16.mxu0 0
      %3288 = vmatpush1.bf16.msra.mxu0 %v3236
      %3289 = vmatprep.subr.bf16.mxu0 0
      %3290 = vmatpush1.bf16.msra.mxu0 %v3237
      %3291 = vmatprep.subr.bf16.mxu0 0
      %3292 = vmatpush1.bf16.msra.mxu0 %v3238
      %3293 = vmatprep.subr.bf16.mxu0 0
      %3294 = vmatpush1.bf16.msra.mxu0 %v3239
      %3295 = vmatprep.subr.bf16.mxu0 0
      %3296 = vmatpush1.bf16.msra.mxu0 %v3240
      %3297 = vmatprep.subr.bf16.mxu0 0
      %3298 = vmatpush1.bf16.msra.mxu0 %v3241
      %3299 = vmatprep.subr.bf16.mxu0 0
      %3300 = vmatpush1.bf16.msra.mxu0 %v3242
      %3301 = vmatprep.subr.bf16.mxu0 0
      %3302 = vmatpush1.bf16.msra.mxu0 %v3243
      %3303 = vmatprep.subr.bf16.mxu0 0
      %3304 = vmatpush1.bf16.msra.mxu0 %v3244
      %3305 = vmatprep.subr.bf16.mxu0 0
      %3306 = vmatpush1.bf16.msra.mxu0 %v3245
      %3307 = vmatprep.subr.bf16.mxu0 0
      %3308 = vmatpush1.bf16.msra.mxu0 %v3246
      %3309 = vmatprep.subr.bf16.mxu0 0
      %3310 = vmatpush1.bf16.msra.mxu0 %v3247
      %3311 = vmatprep.subr.bf16.mxu0 0
      %3312 = vmatpush1.bf16.msra.mxu0 %v3248
      %3313 = vmatprep.mubr.bf16.mxu0 %v2217
      %3314 = vmatmul.mubr.bf16.gmra.mrb[0].mxu0 %v2216
      %v3315 = vpop.f32.mrb[0].mxu0
      %v3316 = vadd.f32 %v2883, %v3315
      %v3317 = vpop.f32.mrb[0].mxu0
      %v3318 = vpop.f32.mrb[0].mxu0
      %v3319 = vadd.f32 %v2886, %v3318
      %v3320 = vpop.f32.mrb[0].mxu0
      %3321 = vmatprep.mubr.bf16.mxu0 %v2220
      %3322 = vmatmul.mubr.bf16.gmra.mrb[0].mxu0 %v2219
      %v3323 = vpop.f32.mrb[0].mxu0
      %v3324 = vadd.f32 %v2891, %v3323
      %v3325 = vpop.f32.mrb[0].mxu0
      %v3326 = vpop.f32.mrb[0].mxu0
      %v3327 = vadd.f32 %v2894, %v3326
      %v3328 = vpop.f32.mrb[0].mxu0
      %3329 = vmatprep.mubr.bf16.mxu0 %v2223
      %3330 = vmatmul.mubr.bf16.gmra.mrb[0].mxu0 %v2222
      %v3331 = vpop.f32.mrb[0].mxu0
      %v3332 = vadd.f32 %v2899, %v3331
      %v3333 = vpop.f32.mrb[0].mxu0
      %v3334 = vpop.f32.mrb[0].mxu0
      %v3335 = vadd.f32 %v2902, %v3334
      %v3336 = vpop.f32.mrb[0].mxu0
      %3337 = vmatprep.mubr.bf16.mxu0 %v2226
      %3338 = vmatmul.mubr.bf16.gmra.mrb[0].mxu0 %v2225
      %v3339 = vpop.f32.mrb[0].mxu0
      %v3340 = vadd.f32 %v2907, %v3339
      %v3341 = vpop.f32.mrb[0].mxu0
      %v3342 = vpop.f32.mrb[0].mxu0
      %v3343 = vadd.f32 %v2910, %v3342
      %v3344 = vpop.f32.mrb[0].mxu0
      %3345 = vmatprep.mubr.bf16.mxu0 %v2229
      %3346 = vmatmul.mubr.bf16.gmra.mrb[0].mxu0 %v2228
      %v3347 = vpop.f32.mrb[0].mxu0
      %v3348 = vadd.f32 %v2915, %v3347
      %v3349 = vpop.f32.mrb[0].mxu0
      %v3350 = vpop.f32.mrb[0].mxu0
      %v3351 = vadd.f32 %v2918, %v3350
      %v3352 = vpop.f32.mrb[0].mxu0
      %3353 = vmatprep.mubr.bf16.mxu0 %v2232
      %3354 = vmatmul.mubr.bf16.gmra.mrb[0].mxu0 %v2231
      %v3355 = vpop.f32.mrb[0].mxu0
      %v3356 = vadd.f32 %v2923, %v3355
      %v3357 = vpop.f32.mrb[0].mxu0
      %v3358 = vpop.f32.mrb[0].mxu0
      %v3359 = vadd.f32 %v2926, %v3358
      %v3360 = vpop.f32.mrb[0].mxu0
      %3361 = vmatprep.mubr.bf16.mxu0 %v2235
      %3362 = vmatmul.mubr.bf16.gmra.mrb[0].mxu0 %v2234
      %v3363 = vpop.f32.mrb[0].mxu0
      %v3364 = vadd.f32 %v2931, %v3363
      %v3365 = vpop.f32.mrb[0].mxu0
      %v3366 = vpop.f32.mrb[0].mxu0
      %v3367 = vadd.f32 %v2934, %v3366
      %v3368 = vpop.f32.mrb[0].mxu0
      %3369 = vmatprep.mubr.bf16.mxu0 %v2238
      %3370 = vmatmul.mubr.bf16.gmra.mrb[0].mxu0 %v2237
      %v3371 = vpop.f32.mrb[0].mxu0
      %v3372 = vadd.f32 %v2939, %v3371
      %v3373 = vpop.f32.mrb[0].mxu0
      %v3374 = vpop.f32.mrb[0].mxu0
      %v3375 = vadd.f32 %v2942, %v3374
      %v3376 = vpop.f32.mrb[0].mxu0
      %3377 = vmatprep.mubr.bf16.mxu0 %v2241
      %3378 = vmatmul.mubr.bf16.gmra.mrb[0].mxu0 %v2240
      %v3379 = vpop.f32.mrb[0].mxu0
      %v3380 = vadd.f32 %v2947, %v3379
      %v3381 = vpop.f32.mrb[0].mxu0
      %v3382 = vpop.f32.mrb[0].mxu0
      %v3383 = vadd.f32 %v2950, %v3382
      %v3384 = vpop.f32.mrb[0].mxu0
      %3385 = vmatprep.mubr.bf16.mxu0 %v2244
      %3386 = vmatmul.mubr.bf16.gmra.mrb[0].mxu0 %v2243
      %v3387 = vpop.f32.mrb[0].mxu0
      %v3388 = vadd.f32 %v2955, %v3387
      %v3389 = vpop.f32.mrb[0].mxu0
      %v3390 = vpop.f32.mrb[0].mxu0
      %v3391 = vadd.f32 %v2958, %v3390
      %v3392 = vpop.f32.mrb[0].mxu0
      %3393 = vmatprep.mubr.bf16.mxu0 %v2247
      %3394 = vmatmul.mubr.bf16.gmra.mrb[0].mxu0 %v2246
      %v3395 = vpop.f32.mrb[0].mxu0
      %v3396 = vadd.f32 %v2963, %v3395
      %v3397 = vpop.f32.mrb[0].mxu0
      %v3398 = vpop.f32.mrb[0].mxu0
      %v3399 = vadd.f32 %v2966, %v3398
      %v3400 = vpop.f32.mrb[0].mxu0
      %3401 = vmatprep.mubr.bf16.mxu0 %v2250
      %3402 = vmatmul.mubr.bf16.gmra.mrb[0].mxu0 %v2249
      %v3403 = vpop.f32.mrb[0].mxu0
      %v3404 = vadd.f32 %v2971, %v3403
      %v3405 = vpop.f32.mrb[0].mxu0
      %v3406 = vpop.f32.mrb[0].mxu0
      %v3407 = vadd.f32 %v2974, %v3406
      %v3408 = vpop.f32.mrb[0].mxu0
      %3409 = vmatprep.mubr.bf16.mxu0 %v2253
      %3410 = vmatmul.mubr.bf16.gmra.mrb[0].mxu0 %v2252
      %v3411 = vpop.f32.mrb[0].mxu0
      %v3412 = vadd.f32 %v2979, %v3411
      %v3413 = vpop.f32.mrb[0].mxu0
      %v3414 = vpop.f32.mrb[0].mxu0
      %v3415 = vadd.f32 %v2982, %v3414
      %v3416 = vpop.f32.mrb[0].mxu0
      %3417 = vmatprep.mubr.bf16.mxu0 %v2256
      %3418 = vmatmul.mubr.bf16.gmra.mrb[0].mxu0 %v2255
      %v3419 = vpop.f32.mrb[0].mxu0
      %v3420 = vadd.f32 %v2987, %v3419
      %v3421 = vpop.f32.mrb[0].mxu0
      %v3422 = vpop.f32.mrb[0].mxu0
      %v3423 = vadd.f32 %v2990, %v3422
      %v3424 = vpop.f32.mrb[0].mxu0
      %3425 = vmatprep.mubr.bf16.mxu0 %v2259
      %3426 = vmatmul.mubr.bf16.gmra.mrb[0].mxu0 %v2258
      %v3427 = vpop.f32.mrb[0].mxu0
      %v3428 = vadd.f32 %v2995, %v3427
      %v3429 = vpop.f32.mrb[0].mxu0
      %v3430 = vpop.f32.mrb[0].mxu0
      %v3431 = vadd.f32 %v2998, %v3430
      %v3432 = vpop.f32.mrb[0].mxu0
      %3433 = vmatprep.mubr.bf16.mxu0 %v2262
      %3434 = vmatmul.mubr.bf16.gmra.mrb[0].mxu0 %v2261
      %v3435 = vpop.f32.mrb[0].mxu0
      %v3436 = vadd.f32 %v3003, %v3435
      %v3437 = vpop.f32.mrb[0].mxu0
      %v3438 = vpop.f32.mrb[0].mxu0
      %v3439 = vadd.f32 %v3006, %v3438
      %v3440 = vpop.f32.mrb[0].mxu0
      %3441 = vmatprep.mubr.bf16.mxu0 %v2265
      %3442 = vmatmul.mubr.bf16.gmra.mrb[0].mxu0 %v2264
      %v3443 = vpop.f32.mrb[0].mxu0
      %v3444 = vadd.f32 %v3011, %v3443
      %v3445 = vpop.f32.mrb[0].mxu0
      %v3446 = vpop.f32.mrb[0].mxu0
      %v3447 = vadd.f32 %v3014, %v3446
      %v3448 = vpop.f32.mrb[0].mxu0
      %3449 = vmatprep.mubr.bf16.mxu0 %v2268
      %3450 = vmatmul.mubr.bf16.gmra.mrb[0].mxu0 %v2267
      %v3451 = vpop.f32.mrb[0].mxu0
      %v3452 = vadd.f32 %v3019, %v3451
      %v3453 = vpop.f32.mrb[0].mxu0
      %v3454 = vpop.f32.mrb[0].mxu0
      %v3455 = vadd.f32 %v3022, %v3454
      %v3456 = vpop.f32.mrb[0].mxu0
      %3457 = vmatprep.mubr.bf16.mxu0 %v2271
      %3458 = vmatmul.mubr.bf16.gmra.mrb[0].mxu0 %v2270
      %v3459 = vpop.f32.mrb[0].mxu0
      %v3460 = vadd.f32 %v3027, %v3459
      %v3461 = vpop.f32.mrb[0].mxu0
      %v3462 = vpop.f32.mrb[0].mxu0
      %v3463 = vadd.f32 %v3030, %v3462
      %v3464 = vpop.f32.mrb[0].mxu0
      %3465 = vmatprep.mubr.bf16.mxu0 %v2274
      %3466 = vmatmul.mubr.bf16.gmra.mrb[0].mxu0 %v2273
      %v3467 = vpop.f32.mrb[0].mxu0
      %v3468 = vadd.f32 %v3035, %v3467
      %v3469 = vpop.f32.mrb[0].mxu0
      %v3470 = vpop.f32.mrb[0].mxu0
      %v3471 = vadd.f32 %v3038, %v3470
      %v3472 = vpop.f32.mrb[0].mxu0
      %3473 = vmatprep.mubr.bf16.mxu0 %v2277
      %3474 = vmatmul.mubr.bf16.gmra.mrb[0].mxu0 %v2276
      %v3475 = vpop.f32.mrb[0].mxu0
      %v3476 = vadd.f32 %v3043, %v3475
      %v3477 = vpop.f32.mrb[0].mxu0
      %v3478 = vpop.f32.mrb[0].mxu0
      %v3479 = vadd.f32 %v3046, %v3478
      %v3480 = vpop.f32.mrb[0].mxu0
      %3481 = vmatprep.mubr.bf16.mxu0 %v2280
      %3482 = vmatmul.mubr.bf16.gmra.mrb[0].mxu0 %v2279
      %v3483 = vpop.f32.mrb[0].mxu0
      %v3484 = vadd.f32 %v3051, %v3483
      %v3485 = vpop.f32.mrb[0].mxu0
      %v3486 = vpop.f32.mrb[0].mxu0
      %v3487 = vadd.f32 %v3054, %v3486
      %v3488 = vpop.f32.mrb[0].mxu0
      %3489 = vmatprep.mubr.bf16.mxu0 %v2283
      %3490 = vmatmul.mubr.bf16.gmra.mrb[0].mxu0 %v2282
      %v3491 = vpop.f32.mrb[0].mxu0
      %v3492 = vadd.f32 %v3059, %v3491
      %v3493 = vpop.f32.mrb[0].mxu0
      %v3494 = vpop.f32.mrb[0].mxu0
      %v3495 = vadd.f32 %v3062, %v3494
      %v3496 = vpop.f32.mrb[0].mxu0
      %3497 = vmatprep.mubr.bf16.mxu0 %v2286
      %3498 = vmatmul.mubr.bf16.gmra.mrb[0].mxu0 %v2285
      %v3499 = vpop.f32.mrb[0].mxu0
      %v3500 = vadd.f32 %v3067, %v3499
      %v3501 = vpop.f32.mrb[0].mxu0
      %v3502 = vpop.f32.mrb[0].mxu0
      %v3503 = vadd.f32 %v3070, %v3502
      %v3504 = vpop.f32.mrb[0].mxu0
      %3505 = vmatprep.mubr.bf16.mxu0 %v2289
      %3506 = vmatmul.mubr.bf16.gmra.mrb[0].mxu0 %v2288
      %v3507 = vpop.f32.mrb[0].mxu0
      %v3508 = vadd.f32 %v3075, %v3507
      %v3509 = vpop.f32.mrb[0].mxu0
      %v3510 = vpop.f32.mrb[0].mxu0
      %v3511 = vadd.f32 %v3078, %v3510
      %v3512 = vpop.f32.mrb[0].mxu0
      %3513 = vmatprep.mubr.bf16.mxu0 %v2292
      %3514 = vmatmul.mubr.bf16.gmra.mrb[0].mxu0 %v2291
      %v3515 = vpop.f32.mrb[0].mxu0
      %v3516 = vadd.f32 %v3083, %v3515
      %v3517 = vpop.f32.mrb[0].mxu0
      %v3518 = vpop.f32.mrb[0].mxu0
      %v3519 = vadd.f32 %v3086, %v3518
      %v3520 = vpop.f32.mrb[0].mxu0
      %3521 = vmatprep.mubr.bf16.mxu0 %v2295
      %3522 = vmatmul.mubr.bf16.gmra.mrb[0].mxu0 %v2294
      %v3523 = vpop.f32.mrb[0].mxu0
      %v3524 = vadd.f32 %v3091, %v3523
      %v3525 = vpop.f32.mrb[0].mxu0
      %v3526 = vpop.f32.mrb[0].mxu0
      %v3527 = vadd.f32 %v3094, %v3526
      %v3528 = vpop.f32.mrb[0].mxu0
      %3529 = vmatprep.mubr.bf16.mxu0 %v2298
      %3530 = vmatmul.mubr.bf16.gmra.mrb[0].mxu0 %v2297
      %v3531 = vpop.f32.mrb[0].mxu0
      %v3532 = vadd.f32 %v3099, %v3531
      %v3533 = vpop.f32.mrb[0].mxu0
      %v3534 = vpop.f32.mrb[0].mxu0
      %v3535 = vadd.f32 %v3102, %v3534
      %v3536 = vpop.f32.mrb[0].mxu0
      %3537 = vmatprep.mubr.bf16.mxu0 %v2301
      %3538 = vmatmul.mubr.bf16.gmra.mrb[0].mxu0 %v2300
      %v3539 = vpop.f32.mrb[0].mxu0
      %v3540 = vadd.f32 %v3107, %v3539
      %v3541 = vpop.f32.mrb[0].mxu0
      %v3542 = vpop.f32.mrb[0].mxu0
      %v3543 = vadd.f32 %v3110, %v3542
      %v3544 = vpop.f32.mrb[0].mxu0
      %3545 = vmatprep.mubr.bf16.mxu0 %v2304
      %3546 = vmatmul.mubr.bf16.gmra.mrb[0].mxu0 %v2303
      %v3547 = vpop.f32.mrb[0].mxu0
      %v3548 = vadd.f32 %v3115, %v3547
      %v3549 = vpop.f32.mrb[0].mxu0
      %v3550 = vpop.f32.mrb[0].mxu0
      %v3551 = vadd.f32 %v3118, %v3550
      %v3552 = vpop.f32.mrb[0].mxu0
      %3553 = vmatprep.mubr.bf16.mxu0 %v2307
      %3554 = vmatmul.mubr.bf16.gmra.mrb[0].mxu0 %v2306
      %v3555 = vpop.f32.mrb[0].mxu0
      %v3556 = vadd.f32 %v3123, %v3555
      %v3557 = vpop.f32.mrb[0].mxu0
      %v3558 = vpop.f32.mrb[0].mxu0
      %v3559 = vadd.f32 %v3126, %v3558
      %v3560 = vpop.f32.mrb[0].mxu0
      %3561 = vmatprep.mubr.bf16.mxu0 %v2310
      %3562 = vmatmul.mubr.bf16.gmra.mrb[0].mxu0 %v2309
      %v3563 = vpop.f32.mrb[0].mxu0
      %v3564 = vadd.f32 %v3131, %v3563
      %v3565 = vpop.f32.mrb[0].mxu0
      %v3566 = vpop.f32.mrb[0].mxu0
      %v3567 = vadd.f32 %v3134, %v3566
      %v3568 = vpop.f32.mrb[0].mxu0
      %3569 = vdwg.mxu0
      %3570 = vmatprep.subr.bf16.mxu0 0
      %3571 = vmatpush1.bf16.msra.mxu0 %v3249
      %3572 = vmatprep.subr.bf16.mxu0 0
      %3573 = vmatpush1.bf16.msra.mxu0 %v3250
      %3574 = vmatprep.subr.bf16.mxu0 0
      %3575 = vmatpush1.bf16.msra.mxu0 %v3251
      %3576 = vmatprep.subr.bf16.mxu0 0
      %3577 = vmatpush1.bf16.msra.mxu0 %v3252
      %3578 = vmatprep.subr.bf16.mxu0 0
      %3579 = vmatpush1.bf16.msra.mxu0 %v3253
      %3580 = vmatprep.subr.bf16.mxu0 0
      %3581 = vmatpush1.bf16.msra.mxu0 %v3254
      %3582 = vmatprep.subr.bf16.mxu0 0
      %3583 = vmatpush1.bf16.msra.mxu0 %v3255
      %3584 = vmatprep.subr.bf16.mxu0 0
      %3585 = vmatpush1.bf16.msra.mxu0 %v3256
      %3586 = vmatprep.subr.bf16.mxu0 0
      %3587 = vmatpush1.bf16.msra.mxu0 0
      %3588 = vmatprep.subr.bf16.mxu0 0
      %3589 = vmatpush1.bf16.msra.mxu0 0
      %3590 = vmatprep.subr.bf16.mxu0 0
      %3591 = vmatpush1.bf16.msra.mxu0 0
      %3592 = vmatprep.subr.bf16.mxu0 0
      %3593 = vmatpush1.bf16.msra.mxu0 0
      %3594 = vmatprep.subr.bf16.mxu0 0
      %3595 = vmatpush1.bf16.msra.mxu0 0
      %3596 = vmatprep.subr.bf16.mxu0 0
      %3597 = vmatpush1.bf16.msra.mxu0 0
      %3598 = vmatprep.subr.bf16.mxu0 0
      %3599 = vmatpush1.bf16.msra.mxu0 0
      %3600 = vmatprep.subr.bf16.mxu0 0
      %3601 = vmatpush1.bf16.msra.mxu0 0
      %3602 = vmatprep.mubr.bf16.mxu0 0
      %3603 = vmatmul.mubr.bf16.gmra.mrb[0].mxu0 %v2218
      %v3604 = vpop.f32.mrb[0].mxu0
      %v3605 = vadd.f32 %v3316, %v3604
      %v3606 = vpop.f32.mrb[0].mxu0
      %v3607 = vpop.f32.mrb[0].mxu0
      %v3608 = vadd.f32 %v3319, %v3607
      %v3609 = vpop.f32.mrb[0].mxu0
      %3610 = vmatprep.mubr.bf16.mxu0 0
      %3611 = vmatmul.mubr.bf16.gmra.mrb[0].mxu0 %v2221
      %v3612 = vpop.f32.mrb[0].mxu0
      %v3613 = vadd.f32 %v3324, %v3612
      %v3614 = vpop.f32.mrb[0].mxu0
      %v3615 = vpop.f32.mrb[0].mxu0
      %v3616 = vadd.f32 %v3327, %v3615
      %v3617 = vpop.f32.mrb[0].mxu0
      %3618 = vmatprep.mubr.bf16.mxu0 0
      %3619 = vmatmul.mubr.bf16.gmra.mrb[0].mxu0 %v2224
      %v3620 = vpop.f32.mrb[0].mxu0
      %v3621 = vadd.f32 %v3332, %v3620
      %v3622 = vpop.f32.mrb[0].mxu0
      %v3623 = vpop.f32.mrb[0].mxu0
      %v3624 = vadd.f32 %v3335, %v3623
      %v3625 = vpop.f32.mrb[0].mxu0
      %3626 = vmatprep.mubr.bf16.mxu0 0
      %3627 = vmatmul.mubr.bf16.gmra.mrb[0].mxu0 %v2227
      %v3628 = vpop.f32.mrb[0].mxu0
      %v3629 = vadd.f32 %v3340, %v3628
      %v3630 = vpop.f32.mrb[0].mxu0
      %v3631 = vpop.f32.mrb[0].mxu0
      %v3632 = vadd.f32 %v3343, %v3631
      %v3633 = vpop.f32.mrb[0].mxu0
      %3634 = vmatprep.mubr.bf16.mxu0 0
      %3635 = vmatmul.mubr.bf16.gmra.mrb[0].mxu0 %v2230
      %v3636 = vpop.f32.mrb[0].mxu0
      %v3637 = vadd.f32 %v3348, %v3636
      %v3638 = vpop.f32.mrb[0].mxu0
      %v3639 = vpop.f32.mrb[0].mxu0
      %v3640 = vadd.f32 %v3351, %v3639
      %v3641 = vpop.f32.mrb[0].mxu0
      %3642 = vmatprep.mubr.bf16.mxu0 0
      %3643 = vmatmul.mubr.bf16.gmra.mrb[0].mxu0 %v2233
      %v3644 = vpop.f32.mrb[0].mxu0
      %v3645 = vadd.f32 %v3356, %v3644
      %v3646 = vpop.f32.mrb[0].mxu0
      %v3647 = vpop.f32.mrb[0].mxu0
      %v3648 = vadd.f32 %v3359, %v3647
      %v3649 = vpop.f32.mrb[0].mxu0
      %3650 = vmatprep.mubr.bf16.mxu0 0
      %3651 = vmatmul.mubr.bf16.gmra.mrb[0].mxu0 %v2236
      %v3652 = vpop.f32.mrb[0].mxu0
      %v3653 = vadd.f32 %v3364, %v3652
      %v3654 = vpop.f32.mrb[0].mxu0
      %v3655 = vpop.f32.mrb[0].mxu0
      %v3656 = vadd.f32 %v3367, %v3655
      %v3657 = vpop.f32.mrb[0].mxu0
      %3658 = vmatprep.mubr.bf16.mxu0 0
      %3659 = vmatmul.mubr.bf16.gmra.mrb[0].mxu0 %v2239
      %v3660 = vpop.f32.mrb[0].mxu0
      %v3661 = vadd.f32 %v3372, %v3660
      %v3662 = vpop.f32.mrb[0].mxu0
      %v3663 = vpop.f32.mrb[0].mxu0
      %v3664 = vadd.f32 %v3375, %v3663
      %v3665 = vpop.f32.mrb[0].mxu0
      %3666 = vmatprep.mubr.bf16.mxu0 0
      %3667 = vmatmul.mubr.bf16.gmra.mrb[0].mxu0 %v2242
      %v3668 = vpop.f32.mrb[0].mxu0
      %v3669 = vadd.f32 %v3380, %v3668
      %v3670 = vpop.f32.mrb[0].mxu0
      %v3671 = vpop.f32.mrb[0].mxu0
      %v3672 = vadd.f32 %v3383, %v3671
      %v3673 = vpop.f32.mrb[0].mxu0
      %3674 = vmatprep.mubr.bf16.mxu0 0
      %3675 = vmatmul.mubr.bf16.gmra.mrb[0].mxu0 %v2245
      %v3676 = vpop.f32.mrb[0].mxu0
      %v3677 = vadd.f32 %v3388, %v3676
      %v3678 = vpop.f32.mrb[0].mxu0
      %v3679 = vpop.f32.mrb[0].mxu0
      %v3680 = vadd.f32 %v3391, %v3679
      %v3681 = vpop.f32.mrb[0].mxu0
      %3682 = vmatprep.mubr.bf16.mxu0 0
      %3683 = vmatmul.mubr.bf16.gmra.mrb[0].mxu0 %v2248
      %v3684 = vpop.f32.mrb[0].mxu0
      %v3685 = vadd.f32 %v3396, %v3684
      %v3686 = vpop.f32.mrb[0].mxu0
      %v3687 = vpop.f32.mrb[0].mxu0
      %v3688 = vadd.f32 %v3399, %v3687
      %v3689 = vpop.f32.mrb[0].mxu0
      %3690 = vmatprep.mubr.bf16.mxu0 0
      %3691 = vmatmul.mubr.bf16.gmra.mrb[0].mxu0 %v2251
      %v3692 = vpop.f32.mrb[0].mxu0
      %v3693 = vadd.f32 %v3404, %v3692
      %v3694 = vpop.f32.mrb[0].mxu0
      %v3695 = vpop.f32.mrb[0].mxu0
      %v3696 = vadd.f32 %v3407, %v3695
      %v3697 = vpop.f32.mrb[0].mxu0
      %3698 = vmatprep.mubr.bf16.mxu0 0
      %3699 = vmatmul.mubr.bf16.gmra.mrb[0].mxu0 %v2254
      %v3700 = vpop.f32.mrb[0].mxu0
      %v3701 = vadd.f32 %v3412, %v3700
      %v3702 = vpop.f32.mrb[0].mxu0
      %v3703 = vpop.f32.mrb[0].mxu0
      %v3704 = vadd.f32 %v3415, %v3703
      %v3705 = vpop.f32.mrb[0].mxu0
      %3706 = vmatprep.mubr.bf16.mxu0 0
      %3707 = vmatmul.mubr.bf16.gmra.mrb[0].mxu0 %v2257
      %v3708 = vpop.f32.mrb[0].mxu0
      %v3709 = vadd.f32 %v3420, %v3708
      %v3710 = vpop.f32.mrb[0].mxu0
      %v3711 = vpop.f32.mrb[0].mxu0
      %v3712 = vadd.f32 %v3423, %v3711
      %v3713 = vpop.f32.mrb[0].mxu0
      %3714 = vmatprep.mubr.bf16.mxu0 0
      %3715 = vmatmul.mubr.bf16.gmra.mrb[0].mxu0 %v2260
      %v3716 = vpop.f32.mrb[0].mxu0
      %v3717 = vadd.f32 %v3428, %v3716
      %v3718 = vpop.f32.mrb[0].mxu0
      %v3719 = vpop.f32.mrb[0].mxu0
      %v3720 = vadd.f32 %v3431, %v3719
      %v3721 = vpop.f32.mrb[0].mxu0
      %3722 = vmatprep.mubr.bf16.mxu0 0
      %3723 = vmatmul.mubr.bf16.gmra.mrb[0].mxu0 %v2263
      %v3724 = vpop.f32.mrb[0].mxu0
      %v3725 = vadd.f32 %v3436, %v3724
      %v3726 = vpop.f32.mrb[0].mxu0
      %v3727 = vpop.f32.mrb[0].mxu0
      %v3728 = vadd.f32 %v3439, %v3727
      %v3729 = vpop.f32.mrb[0].mxu0
      %3730 = vmatprep.mubr.bf16.mxu0 0
      %3731 = vmatmul.mubr.bf16.gmra.mrb[0].mxu0 %v2266
      %v3732 = vpop.f32.mrb[0].mxu0
      %v3733 = vadd.f32 %v3444, %v3732
      %v3734 = vpop.f32.mrb[0].mxu0
      %v3735 = vpop.f32.mrb[0].mxu0
      %v3736 = vadd.f32 %v3447, %v3735
      %v3737 = vpop.f32.mrb[0].mxu0
      %3738 = vmatprep.mubr.bf16.mxu0 0
      %3739 = vmatmul.mubr.bf16.gmra.mrb[0].mxu0 %v2269
      %v3740 = vpop.f32.mrb[0].mxu0
      %v3741 = vadd.f32 %v3452, %v3740
      %v3742 = vpop.f32.mrb[0].mxu0
      %v3743 = vpop.f32.mrb[0].mxu0
      %v3744 = vadd.f32 %v3455, %v3743
      %v3745 = vpop.f32.mrb[0].mxu0
      %3746 = vmatprep.mubr.bf16.mxu0 0
      %3747 = vmatmul.mubr.bf16.gmra.mrb[0].mxu0 %v2272
      %v3748 = vpop.f32.mrb[0].mxu0
      %v3749 = vadd.f32 %v3460, %v3748
      %v3750 = vpop.f32.mrb[0].mxu0
      %v3751 = vpop.f32.mrb[0].mxu0
      %v3752 = vadd.f32 %v3463, %v3751
      %v3753 = vpop.f32.mrb[0].mxu0
      %3754 = vmatprep.mubr.bf16.mxu0 0
      %3755 = vmatmul.mubr.bf16.gmra.mrb[0].mxu0 %v2275
      %v3756 = vpop.f32.mrb[0].mxu0
      %v3757 = vadd.f32 %v3468, %v3756
      %v3758 = vpop.f32.mrb[0].mxu0
      %v3759 = vpop.f32.mrb[0].mxu0
      %v3760 = vadd.f32 %v3471, %v3759
      %v3761 = vpop.f32.mrb[0].mxu0
      %3762 = vmatprep.mubr.bf16.mxu0 0
      %3763 = vmatmul.mubr.bf16.gmra.mrb[0].mxu0 %v2278
      %v3764 = vpop.f32.mrb[0].mxu0
      %v3765 = vadd.f32 %v3476, %v3764
      %v3766 = vpop.f32.mrb[0].mxu0
      %v3767 = vpop.f32.mrb[0].mxu0
      %v3768 = vadd.f32 %v3479, %v3767
      %v3769 = vpop.f32.mrb[0].mxu0
      %3770 = vmatprep.mubr.bf16.mxu0 0
      %3771 = vmatmul.mubr.bf16.gmra.mrb[0].mxu0 %v2281
      %v3772 = vpop.f32.mrb[0].mxu0
      %v3773 = vadd.f32 %v3484, %v3772
      %v3774 = vpop.f32.mrb[0].mxu0
      %v3775 = vpop.f32.mrb[0].mxu0
      %v3776 = vadd.f32 %v3487, %v3775
      %v3777 = vpop.f32.mrb[0].mxu0
      %3778 = vmatprep.mubr.bf16.mxu0 0
      %3779 = vmatmul.mubr.bf16.gmra.mrb[0].mxu0 %v2284
      %v3780 = vpop.f32.mrb[0].mxu0
      %v3781 = vadd.f32 %v3492, %v3780
      %v3782 = vpop.f32.mrb[0].mxu0
      %v3783 = vpop.f32.mrb[0].mxu0
      %v3784 = vadd.f32 %v3495, %v3783
      %v3785 = vpop.f32.mrb[0].mxu0
      %3786 = vmatprep.mubr.bf16.mxu0 0
      %3787 = vmatmul.mubr.bf16.gmra.mrb[0].mxu0 %v2287
      %v3788 = vpop.f32.mrb[0].mxu0
      %v3789 = vadd.f32 %v3500, %v3788
      %v3790 = vpop.f32.mrb[0].mxu0
      %v3791 = vpop.f32.mrb[0].mxu0
      %v3792 = vadd.f32 %v3503, %v3791
      %v3793 = vpop.f32.mrb[0].mxu0
      %3794 = vmatprep.mubr.bf16.mxu0 0
      %3795 = vmatmul.mubr.bf16.gmra.mrb[0].mxu0 %v2290
      %v3796 = vpop.f32.mrb[0].mxu0
      %v3797 = vadd.f32 %v3508, %v3796
      %v3798 = vpop.f32.mrb[0].mxu0
      %v3799 = vpop.f32.mrb[0].mxu0
      %v3800 = vadd.f32 %v3511, %v3799
      %v3801 = vpop.f32.mrb[0].mxu0
      %3802 = vmatprep.mubr.bf16.mxu0 0
      %3803 = vmatmul.mubr.bf16.gmra.mrb[0].mxu0 %v2293
      %v3804 = vpop.f32.mrb[0].mxu0
      %v3805 = vadd.f32 %v3516, %v3804
      %v3806 = vpop.f32.mrb[0].mxu0
      %v3807 = vpop.f32.mrb[0].mxu0
      %v3808 = vadd.f32 %v3519, %v3807
      %v3809 = vpop.f32.mrb[0].mxu0
      %3810 = vmatprep.mubr.bf16.mxu0 0
      %3811 = vmatmul.mubr.bf16.gmra.mrb[0].mxu0 %v2296
      %v3812 = vpop.f32.mrb[0].mxu0
      %v3813 = vadd.f32 %v3524, %v3812
      %v3814 = vpop.f32.mrb[0].mxu0
      %v3815 = vpop.f32.mrb[0].mxu0
      %v3816 = vadd.f32 %v3527, %v3815
      %v3817 = vpop.f32.mrb[0].mxu0
      %3818 = vmatprep.mubr.bf16.mxu0 0
      %3819 = vmatmul.mubr.bf16.gmra.mrb[0].mxu0 %v2299
      %v3820 = vpop.f32.mrb[0].mxu0
      %v3821 = vadd.f32 %v3532, %v3820
      %v3822 = vpop.f32.mrb[0].mxu0
      %v3823 = vpop.f32.mrb[0].mxu0
      %v3824 = vadd.f32 %v3535, %v3823
      %v3825 = vpop.f32.mrb[0].mxu0
      %3826 = vmatprep.mubr.bf16.mxu0 0
      %3827 = vmatmul.mubr.bf16.gmra.mrb[0].mxu0 %v2302
      %v3828 = vpop.f32.mrb[0].mxu0
      %v3829 = vadd.f32 %v3540, %v3828
      %v3830 = vpop.f32.mrb[0].mxu0
      %v3831 = vpop.f32.mrb[0].mxu0
      %v3832 = vadd.f32 %v3543, %v3831
      %v3833 = vpop.f32.mrb[0].mxu0
      %3834 = vmatprep.mubr.bf16.mxu0 0
      %3835 = vmatmul.mubr.bf16.gmra.mrb[0].mxu0 %v2305
      %v3836 = vpop.f32.mrb[0].mxu0
      %v3837 = vadd.f32 %v3548, %v3836
      %v3838 = vpop.f32.mrb[0].mxu0
      %v3839 = vpop.f32.mrb[0].mxu0
      %v3840 = vadd.f32 %v3551, %v3839
      %v3841 = vpop.f32.mrb[0].mxu0
      %3842 = vmatprep.mubr.bf16.mxu0 0
      %3843 = vmatmul.mubr.bf16.gmra.mrb[0].mxu0 %v2308
      %v3844 = vpop.f32.mrb[0].mxu0
      %v3845 = vadd.f32 %v3556, %v3844
      %v3846 = vpop.f32.mrb[0].mxu0
      %v3847 = vpop.f32.mrb[0].mxu0
      %v3848 = vadd.f32 %v3559, %v3847
      %v3849 = vpop.f32.mrb[0].mxu0
      %3850 = vmatprep.mubr.bf16.mxu0 0
      %3851 = vmatmul.mubr.bf16.gmra.mrb[0].mxu0 %v2311
      %v3852 = vpop.f32.mrb[0].mxu0
      %v3853 = vadd.f32 %v3564, %v3852
      %v3854 = vpop.f32.mrb[0].mxu0
      %v3855 = vpop.f32.mrb[0].mxu0
      %v3856 = vadd.f32 %v3567, %v3855
      %v3857 = vpop.f32.mrb[0].mxu0
      %3858 = vdwg.mxu0
      %v3859 = vld [vmem:[#allocation2 + $0x90] sm:$0xff]
      %v3860 = vld [vmem:[#allocation2 + $0x98] sm:$0xff]
      %v3861 = vld [vmem:[#allocation2 + $0xa0] sm:$0xff]
      %v3862 = vld [vmem:[#allocation2 + $0xa8] sm:$0xff]
      %v3863 = vld [vmem:[#allocation2 + $0xb0] sm:$0xff]
      %v3864 = vld [vmem:[#allocation2 + $0xb8] sm:$0xff]
      %v3865 = vld [vmem:[#allocation2 + $0xc0] sm:$0xff]
      %v3866 = vld [vmem:[#allocation2 + $0xc8] sm:$0xff]
      %v3867 = vld [vmem:[#allocation2 + $0xd0] sm:$0xff]
      %v3868 = vld [vmem:[#allocation2 + $0xd8] sm:$0xff]
      %v3869 = vld [vmem:[#allocation2 + $0xe0] sm:$0xff]
      %v3870 = vld [vmem:[#allocation2 + $0xe8] sm:$0xff]
      %v3871 = vld [vmem:[#allocation2 + $0xf0] sm:$0xff]
      %v3872 = vld [vmem:[#allocation2 + $0xf8] sm:$0xff]
      %v3873 = vld [vmem:[#allocation2 + $0x100] sm:$0xff]
      %v3874 = vld [vmem:[#allocation2 + $0x108] sm:$0xff]
      %v3875 = vld [vmem:[#allocation2 + $0x110] sm:$0xff]
      %v3876 = vld [vmem:[#allocation2 + $0x118] sm:$0xff]
      %v3877 = vld [vmem:[#allocation2 + $0x120] sm:$0xff]
      %v3878 = vld [vmem:[#allocation2 + $0x128] sm:$0xff]
      %v3879 = vld [vmem:[#allocation2 + $0x130] sm:$0xff]
      %v3880 = vld [vmem:[#allocation2 + $0x138] sm:$0xff]
      %v3881 = vld [vmem:[#allocation2 + $0x140] sm:$0xff]
      %v3882 = vld [vmem:[#allocation2 + $0x148] sm:$0xff]
      %v3883 = vld [vmem:[#allocation2 + $0x150] sm:$0xff]
      %v3884 = vld [vmem:[#allocation2 + $0x158] sm:$0xff]
      %v3885 = vld [vmem:[#allocation2 + $0x160] sm:$0xff]
      %v3886 = vld [vmem:[#allocation2 + $0x168] sm:$0xff]
      %v3887 = vld [vmem:[#allocation2 + $0x170] sm:$0xff]
      %v3888 = vld [vmem:[#allocation2 + $0x178] sm:$0xff]
      %v3889 = vld [vmem:[#allocation2 + $0x180] sm:$0xff]
      %v3890 = vld [vmem:[#allocation2 + $0x188] sm:$0xff]
      %v3891 = vld [vmem:[#allocation2 + $0x190] sm:$0xff]
      %v3892 = vld [vmem:[#allocation2 + $0x198] sm:$0xff]
      %v3893 = vld [vmem:[#allocation2 + $0x1a0] sm:$0xff]
      %v3894 = vld [vmem:[#allocation2 + $0x1a8] sm:$0xff]
      %v3895 = vld [vmem:[#allocation2 + $0x1b0] sm:$0xff]
      %v3896 = vld [vmem:[#allocation2 + $0x1b8] sm:$0xff]
      %v3897 = vld [vmem:[#allocation2 + $0x1c0] sm:$0xff]
      %v3898 = vld [vmem:[#allocation2 + $0x1c8] sm:$0xff]
      %v3899 = vld [vmem:[#allocation2 + $0x1d0] sm:$0xff]
      %v3900 = vld [vmem:[#allocation2 + $0x1d8] sm:$0xff]
      %v3901 = vld [vmem:[#allocation2 + $0x1e0] sm:$0xff]
      %v3902 = vld [vmem:[#allocation2 + $0x1e8] sm:$0xff]
      %v3903 = vld [vmem:[#allocation2 + $0x1f0] sm:$0xff]
      %v3904 = vld [vmem:[#allocation2 + $0x1f8] sm:$0xff]
      %v3905 = vld [vmem:[#allocation2 + $0x200] sm:$0xff]
      %v3906 = vld [vmem:[#allocation2 + $0x208] sm:$0xff]
      %v3907 = vld [vmem:[#allocation2 + $0x210] sm:$0xff]
      %v3908 = vld [vmem:[#allocation2 + $0x218] sm:$0xff]
      %v3909 = vld [vmem:[#allocation2 + $0x220] sm:$0xff]
      %v3910 = vld [vmem:[#allocation2 + $0x228] sm:$0xff]
      %v3911 = vld [vmem:[#allocation2 + $0x230] sm:$0xff]
      %v3912 = vld [vmem:[#allocation2 + $0x238] sm:$0xff]
      %v3913 = vld [vmem:[#allocation2 + $0x240] sm:$0xff]
      %v3914 = vld [vmem:[#allocation2 + $0x248] sm:$0xff]
      %v3915 = vld [vmem:[#allocation2 + $0x250] sm:$0xff]
      %v3916 = vld [vmem:[#allocation2 + $0x258] sm:$0xff]
      %v3917 = vld [vmem:[#allocation2 + $0x260] sm:$0xff]
      %v3918 = vld [vmem:[#allocation2 + $0x268] sm:$0xff]
      %v3919 = vld [vmem:[#allocation2 + $0x270] sm:$0xff]
      %v3920 = vld [vmem:[#allocation2 + $0x278] sm:$0xff]
      %v3921 = vld [vmem:[#allocation2 + $0x280] sm:$0xff]
      %v3922 = vld [vmem:[#allocation2 + $0x288] sm:$0xff]
      %v3923 = vld [vmem:[#allocation2 + $0x290] sm:$0xff]
      %v3924 = vld [vmem:[#allocation2 + $0x298] sm:$0xff]
      %v3925 = vld [vmem:[#allocation2 + $0x2a0] sm:$0xff]
      %v3926 = vld [vmem:[#allocation2 + $0x2a8] sm:$0xff]
      %v3927 = vld [vmem:[#allocation2 + $0x2b0] sm:$0xff]
      %v3928 = vld [vmem:[#allocation2 + $0x2b8] sm:$0xff]
      %v3929 = vld [vmem:[#allocation2 + $0x2c0] sm:$0xff]
      %v3930 = vld [vmem:[#allocation2 + $0x2c8] sm:$0xff]
      %v3931 = vld [vmem:[#allocation2 + $0x2d0] sm:$0xff]
      %v3932 = vld [vmem:[#allocation2 + $0x2d8] sm:$0xff]
      %v3933 = vld [vmem:[#allocation2 + $0x2e0] sm:$0xff]
      %v3934 = vld [vmem:[#allocation2 + $0x2e8] sm:$0xff]
      %v3935 = vld [vmem:[#allocation2 + $0x2f0] sm:$0xff]
      %v3936 = vld [vmem:[#allocation2 + $0x2f8] sm:$0xff]
      %v3937 = vld [vmem:[#allocation2 + $0x300] sm:$0xff]
      %v3938 = vld [vmem:[#allocation2 + $0x308] sm:$0xff]
      %v3939 = vld [vmem:[#allocation2 + $0x310] sm:$0xff]
      %v3940 = vld [vmem:[#allocation2 + $0x318] sm:$0xff]
      %v3941 = vld [vmem:[#allocation2 + $0x320] sm:$0xff]
      %v3942 = vld [vmem:[#allocation2 + $0x328] sm:$0xff]
      %v3943 = vld [vmem:[#allocation2 + $0x330] sm:$0xff]
      %v3944 = vld [vmem:[#allocation2 + $0x338] sm:$0xff]
      %v3945 = vld [vmem:[#allocation2 + $0x340] sm:$0xff]
      %v3946 = vld [vmem:[#allocation2 + $0x348] sm:$0xff]
      %v3947 = vld [vmem:[#allocation2 + $0x350] sm:$0xff]
      %v3948 = vld [vmem:[#allocation2 + $0x358] sm:$0xff]
      %v3949 = vld [vmem:[#allocation2 + $0x360] sm:$0xff]
      %v3950 = vld [vmem:[#allocation2 + $0x368] sm:$0xff]
      %v3951 = vld [vmem:[#allocation2 + $0x370] sm:$0xff]
      %v3952 = vld [vmem:[#allocation2 + $0x378] sm:$0xff]
      %v3953 = vld [vmem:[#allocation2 + $0x380] sm:$0xff]
      %v3954 = vld [vmem:[#allocation2 + $0x388] sm:$0xff]
      %s3955 = scalar_lea.vmem %s4, 384
      %v3956 = vld [vmem:[%s3955] sm:$0xf]
      %v3957 = vld [vmem:[%s3955 + $0x4] sm:$0xf]
      %v3958 = vld [vmem:[%s3955 + $0x8] sm:$0xf]
      %v3959 = vld [vmem:[%s3955 + $0xc] sm:$0xf]
      %v3960 = vld [vmem:[%s3955 + $0x10] sm:$0xf]
      %v3961 = vld [vmem:[%s3955 + $0x14] sm:$0xf]
      %v3962 = vld [vmem:[%s3955 + $0x18] sm:$0xf]
      %v3963 = vld [vmem:[%s3955 + $0x1c] sm:$0xf]
      %v3964 = vld [vmem:[%s3955 + $0x20] sm:$0xf]
      %v3965 = vld [vmem:[%s3955 + $0x24] sm:$0xf]
      %v3966 = vld [vmem:[%s3955 + $0x28] sm:$0xf]
      %v3967 = vld [vmem:[%s3955 + $0x2c] sm:$0xf]
      %v3968 = vld [vmem:[%s3955 + $0x30] sm:$0xf]
      %v3969 = vld [vmem:[%s3955 + $0x34] sm:$0xf]
      %v3970 = vld [vmem:[%s3955 + $0x38] sm:$0xf]
      %v3971 = vld [vmem:[%s3955 + $0x3c] sm:$0xf]
      %v3972 = vld [vmem:[%s3955 + $0x40] sm:$0xf]
      %v3973 = vld [vmem:[%s3955 + $0x44] sm:$0xf]
      %v3974 = vld [vmem:[%s3955 + $0x48] sm:$0xf]
      %v3975 = vld [vmem:[%s3955 + $0x4c] sm:$0xf]
      %v3976 = vld [vmem:[%s3955 + $0x50] sm:$0xf]
      %v3977 = vld [vmem:[%s3955 + $0x54] sm:$0xf]
      %v3978 = vld [vmem:[%s3955 + $0x58] sm:$0xf]
      %v3979 = vld [vmem:[%s3955 + $0x5c] sm:$0xf]
      %v3980 = vld [vmem:[%s3955 + $0x60] sm:$0xf]
      %v3981 = vld [vmem:[%s3955 + $0x64] sm:$0xf]
      %v3982 = vld [vmem:[%s3955 + $0x68] sm:$0xf]
      %v3983 = vld [vmem:[%s3955 + $0x6c] sm:$0xf]
      %v3984 = vld [vmem:[%s3955 + $0x70] sm:$0xf]
      %v3985 = vld [vmem:[%s3955 + $0x74] sm:$0xf]
      %v3986 = vld [vmem:[%s3955 + $0x78] sm:$0xf]
      %v3987 = vld [vmem:[%s3955 + $0x7c] sm:$0xf]
      %v3988 = vld [vmem:[%s3955 + $0x80] sm:$0xf]
      %v3989 = vld [vmem:[%s3955 + $0x84] sm:$0xf]
      %v3990 = vld [vmem:[%s3955 + $0x88] sm:$0xf]
      %v3991 = vld [vmem:[%s3955 + $0x8c] sm:$0xf]
      %v3992 = vld [vmem:[%s3955 + $0x90] sm:$0xf]
      %v3993 = vld [vmem:[%s3955 + $0x94] sm:$0xf]
      %v3994 = vld [vmem:[%s3955 + $0x98] sm:$0xf]
      %v3995 = vld [vmem:[%s3955 + $0x9c] sm:$0xf]
      %v3996 = vld [vmem:[%s3955 + $0xa0] sm:$0xf]
      %v3997 = vld [vmem:[%s3955 + $0xa4] sm:$0xf]
      %v3998 = vld [vmem:[%s3955 + $0xa8] sm:$0xf]
      %v3999 = vld [vmem:[%s3955 + $0xac] sm:$0xf]
      %v4000 = vld [vmem:[%s3955 + $0xb0] sm:$0xf]
      %v4001 = vld [vmem:[%s3955 + $0xb4] sm:$0xf]
      %v4002 = vld [vmem:[%s3955 + $0xb8] sm:$0xf]
      %v4003 = vld [vmem:[%s3955 + $0xbc] sm:$0xf]
      %v4052 = vunpack.c.l.b16 %v3956
      %v4053 = vunpack.c.l.b16 %v3957
      %v4054 = vunpack.c.l.b16 %v3958
      %v4055 = vunpack.c.l.b16 %v3959
      %v4056 = vunpack.c.l.b16 %v3960
      %v4057 = vunpack.c.l.b16 %v3961
      %v4058 = vunpack.c.l.b16 %v3962
      %v4059 = vunpack.c.l.b16 %v3963
      %v4060 = vunpack.c.l.b16 %v3964
      %v4061 = vunpack.c.l.b16 %v3965
      %v4062 = vunpack.c.l.b16 %v3966
      %v4063 = vunpack.c.l.b16 %v3967
      %v4064 = vunpack.c.l.b16 %v3968
      %v4065 = vunpack.c.l.b16 %v3969
      %v4066 = vunpack.c.l.b16 %v3970
      %v4067 = vunpack.c.l.b16 %v3971
      %v4068 = vunpack.c.l.b16 %v3972
      %v4069 = vunpack.c.l.b16 %v3973
      %v4070 = vunpack.c.l.b16 %v3974
      %v4071 = vunpack.c.l.b16 %v3975
      %v4072 = vunpack.c.l.b16 %v3976
      %v4073 = vunpack.c.l.b16 %v3977
      %v4074 = vunpack.c.l.b16 %v3978
      %v4075 = vunpack.c.l.b16 %v3979
      %v4076 = vunpack.c.l.b16 %v3980
      %v4077 = vunpack.c.l.b16 %v3981
      %v4078 = vunpack.c.l.b16 %v3982
      %v4079 = vunpack.c.l.b16 %v3983
      %v4080 = vunpack.c.l.b16 %v3984
      %v4081 = vunpack.c.l.b16 %v3985
      %v4082 = vunpack.c.l.b16 %v3986
      %v4083 = vunpack.c.l.b16 %v3987
      %v4084 = vunpack.c.l.b16 %v3988
      %v4085 = vunpack.c.l.b16 %v3989
      %v4086 = vunpack.c.l.b16 %v3990
      %v4087 = vunpack.c.l.b16 %v3991
      %v4088 = vunpack.c.l.b16 %v3992
      %v4089 = vunpack.c.l.b16 %v3993
      %v4090 = vunpack.c.l.b16 %v3994
      %v4091 = vunpack.c.l.b16 %v3995
      %v4092 = vunpack.c.l.b16 %v3996
      %v4093 = vunpack.c.l.b16 %v3997
      %v4094 = vunpack.c.l.b16 %v3998
      %v4095 = vunpack.c.l.b16 %v3999
      %v4096 = vunpack.c.l.b16 %v4000
      %v4097 = vunpack.c.l.b16 %v4001
      %v4098 = vunpack.c.l.b16 %v4002
      %v4099 = vunpack.c.l.b16 %v4003
      %v4100 = vpack.c.b16 %v4053, %v4052
      %v4101 = vpack.c.b16 %v4055, %v4054
      %v4102 = vpack.c.b16 %v4057, %v4056
      %v4103 = vpack.c.b16 %v4059, %v4058
      %v4104 = vpack.c.b16 %v4061, %v4060
      %v4105 = vpack.c.b16 %v4063, %v4062
      %v4106 = vpack.c.b16 %v4065, %v4064
      %v4107 = vpack.c.b16 %v4067, %v4066
      %v4108 = vpack.c.b16 %v4069, %v4068
      %v4109 = vpack.c.b16 %v4071, %v4070
      %v4110 = vpack.c.b16 %v4073, %v4072
      %v4111 = vpack.c.b16 %v4075, %v4074
      %v4112 = vpack.c.b16 %v4077, %v4076
      %v4113 = vpack.c.b16 %v4079, %v4078
      %v4114 = vpack.c.b16 %v4081, %v4080
      %v4115 = vpack.c.b16 %v4083, %v4082
      %v4116 = vpack.c.b16 %v4085, %v4084
      %v4117 = vpack.c.b16 %v4087, %v4086
      %v4118 = vpack.c.b16 %v4089, %v4088
      %v4119 = vpack.c.b16 %v4091, %v4090
      %v4120 = vpack.c.b16 %v4093, %v4092
      %v4121 = vpack.c.b16 %v4095, %v4094
      %v4122 = vpack.c.b16 %v4097, %v4096
      %v4123 = vpack.c.b16 %v4099, %v4098
      %4148 = vmatprep.subr.bf16.mxu0 0
      %4149 = vmatpush1.bf16.msra.mxu0 %v4100
      %4150 = vmatprep.subr.bf16.mxu0 0
      %4151 = vmatpush1.bf16.msra.mxu0 %v4101
      %4152 = vmatprep.subr.bf16.mxu0 0
      %4153 = vmatpush1.bf16.msra.mxu0 %v4102
      %4154 = vmatprep.subr.bf16.mxu0 0
      %4155 = vmatpush1.bf16.msra.mxu0 %v4103
      %4156 = vmatprep.subr.bf16.mxu0 0
      %4157 = vmatpush1.bf16.msra.mxu0 %v4104
      %4158 = vmatprep.subr.bf16.mxu0 0
      %4159 = vmatpush1.bf16.msra.mxu0 %v4105
      %4160 = vmatprep.subr.bf16.mxu0 0
      %4161 = vmatpush1.bf16.msra.mxu0 %v4106
      %4162 = vmatprep.subr.bf16.mxu0 0
      %4163 = vmatpush1.bf16.msra.mxu0 %v4107
      %4164 = vmatprep.subr.bf16.mxu0 0
      %4165 = vmatpush1.bf16.msra.mxu0 %v4108
      %4166 = vmatprep.subr.bf16.mxu0 0
      %4167 = vmatpush1.bf16.msra.mxu0 %v4109
      %4168 = vmatprep.subr.bf16.mxu0 0
      %4169 = vmatpush1.bf16.msra.mxu0 %v4110
      %4170 = vmatprep.subr.bf16.mxu0 0
      %4171 = vmatpush1.bf16.msra.mxu0 %v4111
      %4172 = vmatprep.subr.bf16.mxu0 0
      %4173 = vmatpush1.bf16.msra.mxu0 %v4112
      %4174 = vmatprep.subr.bf16.mxu0 0
      %4175 = vmatpush1.bf16.msra.mxu0 %v4113
      %4176 = vmatprep.subr.bf16.mxu0 0
      %4177 = vmatpush1.bf16.msra.mxu0 %v4114
      %4178 = vmatprep.subr.bf16.mxu0 0
      %4179 = vmatpush1.bf16.msra.mxu0 %v4115
      %4180 = vmatprep.mubr.bf16.mxu0 %v3860
      %4181 = vmatmul.mubr.bf16.gmra.mrb[0].mxu0 %v3859
      %v4182 = vpop.f32.mrb[0].mxu0
      %v4183 = vadd.f32 0.0, %v4182
      %v4184 = vpop.f32.mrb[0].mxu0
      %v4185 = vpop.f32.mrb[0].mxu0
      %v4186 = vadd.f32 0.0, %v4185
      %v4187 = vpop.f32.mrb[0].mxu0
      %4188 = vmatprep.mubr.bf16.mxu0 %v3863
      %4189 = vmatmul.mubr.bf16.gmra.mrb[0].mxu0 %v3862
      %v4190 = vpop.f32.mrb[0].mxu0
      %v4191 = vadd.f32 0.0, %v4190
      %v4192 = vpop.f32.mrb[0].mxu0
      %v4193 = vpop.f32.mrb[0].mxu0
      %v4194 = vadd.f32 0.0, %v4193
      %v4195 = vpop.f32.mrb[0].mxu0
      %4196 = vmatprep.mubr.bf16.mxu0 %v3866
      %4197 = vmatmul.mubr.bf16.gmra.mrb[0].mxu0 %v3865
      %v4198 = vpop.f32.mrb[0].mxu0
      %v4199 = vadd.f32 0.0, %v4198
      %v4200 = vpop.f32.mrb[0].mxu0
      %v4201 = vpop.f32.mrb[0].mxu0
      %v4202 = vadd.f32 0.0, %v4201
      %v4203 = vpop.f32.mrb[0].mxu0
      %4204 = vmatprep.mubr.bf16.mxu0 %v3869
      %4205 = vmatmul.mubr.bf16.gmra.mrb[0].mxu0 %v3868
      %v4206 = vpop.f32.mrb[0].mxu0
      %v4207 = vadd.f32 0.0, %v4206
      %v4208 = vpop.f32.mrb[0].mxu0
      %v4209 = vpop.f32.mrb[0].mxu0
      %v4210 = vadd.f32 0.0, %v4209
      %v4211 = vpop.f32.mrb[0].mxu0
      %4212 = vmatprep.mubr.bf16.mxu0 %v3872
      %4213 = vmatmul.mubr.bf16.gmra.mrb[0].mxu0 %v3871
      %v4214 = vpop.f32.mrb[0].mxu0
      %v4215 = vadd.f32 0.0, %v4214
      %v4216 = vpop.f32.mrb[0].mxu0
      %v4217 = vpop.f32.mrb[0].mxu0
      %v4218 = vadd.f32 0.0, %v4217
      %v4219 = vpop.f32.mrb[0].mxu0
      %4220 = vmatprep.mubr.bf16.mxu0 %v3875
      %4221 = vmatmul.mubr.bf16.gmra.mrb[0].mxu0 %v3874
      %v4222 = vpop.f32.mrb[0].mxu0
      %v4223 = vadd.f32 0.0, %v4222
      %v4224 = vpop.f32.mrb[0].mxu0
      %v4225 = vpop.f32.mrb[0].mxu0
      %v4226 = vadd.f32 0.0, %v4225
      %v4227 = vpop.f32.mrb[0].mxu0
      %4228 = vmatprep.mubr.bf16.mxu0 %v3878
      %4229 = vmatmul.mubr.bf16.gmra.mrb[0].mxu0 %v3877
      %v4230 = vpop.f32.mrb[0].mxu0
      %v4231 = vadd.f32 0.0, %v4230
      %v4232 = vpop.f32.mrb[0].mxu0
      %v4233 = vpop.f32.mrb[0].mxu0
      %v4234 = vadd.f32 0.0, %v4233
      %v4235 = vpop.f32.mrb[0].mxu0
      %4236 = vmatprep.mubr.bf16.mxu0 %v3881
      %4237 = vmatmul.mubr.bf16.gmra.mrb[0].mxu0 %v3880
      %v4238 = vpop.f32.mrb[0].mxu0
      %v4239 = vadd.f32 0.0, %v4238
      %v4240 = vpop.f32.mrb[0].mxu0
      %v4241 = vpop.f32.mrb[0].mxu0
      %v4242 = vadd.f32 0.0, %v4241
      %v4243 = vpop.f32.mrb[0].mxu0
      %4244 = vmatprep.mubr.bf16.mxu0 %v3884
      %4245 = vmatmul.mubr.bf16.gmra.mrb[0].mxu0 %v3883
      %v4246 = vpop.f32.mrb[0].mxu0
      %v4247 = vadd.f32 0.0, %v4246
      %v4248 = vpop.f32.mrb[0].mxu0
      %v4249 = vpop.f32.mrb[0].mxu0
      %v4250 = vadd.f32 0.0, %v4249
      %v4251 = vpop.f32.mrb[0].mxu0
      %4252 = vmatprep.mubr.bf16.mxu0 %v3887
      %4253 = vmatmul.mubr.bf16.gmra.mrb[0].mxu0 %v3886
      %v4254 = vpop.f32.mrb[0].mxu0
      %v4255 = vadd.f32 0.0, %v4254
      %v4256 = vpop.f32.mrb[0].mxu0
      %v4257 = vpop.f32.mrb[0].mxu0
      %v4258 = vadd.f32 0.0, %v4257
      %v4259 = vpop.f32.mrb[0].mxu0
      %4260 = vmatprep.mubr.bf16.mxu0 %v3890
      %4261 = vmatmul.mubr.bf16.gmra.mrb[0].mxu0 %v3889
      %v4262 = vpop.f32.mrb[0].mxu0
      %v4263 = vadd.f32 0.0, %v4262
      %v4264 = vpop.f32.mrb[0].mxu0
      %v4265 = vpop.f32.mrb[0].mxu0
      %v4266 = vadd.f32 0.0, %v4265
      %v4267 = vpop.f32.mrb[0].mxu0
      %4268 = vmatprep.mubr.bf16.mxu0 %v3893
      %4269 = vmatmul.mubr.bf16.gmra.mrb[0].mxu0 %v3892
      %v4270 = vpop.f32.mrb[0].mxu0
      %v4271 = vadd.f32 0.0, %v4270
      %v4272 = vpop.f32.mrb[0].mxu0
      %v4273 = vpop.f32.mrb[0].mxu0
      %v4274 = vadd.f32 0.0, %v4273
      %v4275 = vpop.f32.mrb[0].mxu0
      %4276 = vmatprep.mubr.bf16.mxu0 %v3896
      %4277 = vmatmul.mubr.bf16.gmra.mrb[0].mxu0 %v3895
      %v4278 = vpop.f32.mrb[0].mxu0
      %v4279 = vadd.f32 0.0, %v4278
      %v4280 = vpop.f32.mrb[0].mxu0
      %v4281 = vpop.f32.mrb[0].mxu0
      %v4282 = vadd.f32 0.0, %v4281
      %v4283 = vpop.f32.mrb[0].mxu0
      %4284 = vmatprep.mubr.bf16.mxu0 %v3899
      %4285 = vmatmul.mubr.bf16.gmra.mrb[0].mxu0 %v3898
      %v4286 = vpop.f32.mrb[0].mxu0
      %v4287 = vadd.f32 0.0, %v4286
      %v4288 = vpop.f32.mrb[0].mxu0
      %v4289 = vpop.f32.mrb[0].mxu0
      %v4290 = vadd.f32 0.0, %v4289
      %v4291 = vpop.f32.mrb[0].mxu0
      %4292 = vmatprep.mubr.bf16.mxu0 %v3902
      %4293 = vmatmul.mubr.bf16.gmra.mrb[0].mxu0 %v3901
      %v4294 = vpop.f32.mrb[0].mxu0
      %v4295 = vadd.f32 0.0, %v4294
      %v4296 = vpop.f32.mrb[0].mxu0
      %v4297 = vpop.f32.mrb[0].mxu0
      %v4298 = vadd.f32 0.0, %v4297
      %v4299 = vpop.f32.mrb[0].mxu0
      %4300 = vmatprep.mubr.bf16.mxu0 %v3905
      %4301 = vmatmul.mubr.bf16.gmra.mrb[0].mxu0 %v3904
      %v4302 = vpop.f32.mrb[0].mxu0
      %v4303 = vadd.f32 0.0, %v4302
      %v4304 = vpop.f32.mrb[0].mxu0
      %v4305 = vpop.f32.mrb[0].mxu0
      %v4306 = vadd.f32 0.0, %v4305
      %v4307 = vpop.f32.mrb[0].mxu0
      %4308 = vmatprep.mubr.bf16.mxu0 %v3908
      %4309 = vmatmul.mubr.bf16.gmra.mrb[0].mxu0 %v3907
      %v4310 = vpop.f32.mrb[0].mxu0
      %v4311 = vadd.f32 0.0, %v4310
      %v4312 = vpop.f32.mrb[0].mxu0
      %v4313 = vpop.f32.mrb[0].mxu0
      %v4314 = vadd.f32 0.0, %v4313
      %v4315 = vpop.f32.mrb[0].mxu0
      %4316 = vmatprep.mubr.bf16.mxu0 %v3911
      %4317 = vmatmul.mubr.bf16.gmra.mrb[0].mxu0 %v3910
      %v4318 = vpop.f32.mrb[0].mxu0
      %v4319 = vadd.f32 0.0, %v4318
      %v4320 = vpop.f32.mrb[0].mxu0
      %v4321 = vpop.f32.mrb[0].mxu0
      %v4322 = vadd.f32 0.0, %v4321
      %v4323 = vpop.f32.mrb[0].mxu0
      %4324 = vmatprep.mubr.bf16.mxu0 %v3914
      %4325 = vmatmul.mubr.bf16.gmra.mrb[0].mxu0 %v3913
      %v4326 = vpop.f32.mrb[0].mxu0
      %v4327 = vadd.f32 0.0, %v4326
      %v4328 = vpop.f32.mrb[0].mxu0
      %v4329 = vpop.f32.mrb[0].mxu0
      %v4330 = vadd.f32 0.0, %v4329
      %v4331 = vpop.f32.mrb[0].mxu0
      %4332 = vmatprep.mubr.bf16.mxu0 %v3917
      %4333 = vmatmul.mubr.bf16.gmra.mrb[0].mxu0 %v3916
      %v4334 = vpop.f32.mrb[0].mxu0
      %v4335 = vadd.f32 0.0, %v4334
      %v4336 = vpop.f32.mrb[0].mxu0
      %v4337 = vpop.f32.mrb[0].mxu0
      %v4338 = vadd.f32 0.0, %v4337
      %v4339 = vpop.f32.mrb[0].mxu0
      %4340 = vmatprep.mubr.bf16.mxu0 %v3920
      %4341 = vmatmul.mubr.bf16.gmra.mrb[0].mxu0 %v3919
      %v4342 = vpop.f32.mrb[0].mxu0
      %v4343 = vadd.f32 0.0, %v4342
      %v4344 = vpop.f32.mrb[0].mxu0
      %v4345 = vpop.f32.mrb[0].mxu0
      %v4346 = vadd.f32 0.0, %v4345
      %v4347 = vpop.f32.mrb[0].mxu0
      %4348 = vmatprep.mubr.bf16.mxu0 %v3923
      %4349 = vmatmul.mubr.bf16.gmra.mrb[0].mxu0 %v3922
      %v4350 = vpop.f32.mrb[0].mxu0
      %v4351 = vadd.f32 0.0, %v4350
      %v4352 = vpop.f32.mrb[0].mxu0
      %v4353 = vpop.f32.mrb[0].mxu0
      %v4354 = vadd.f32 0.0, %v4353
      %v4355 = vpop.f32.mrb[0].mxu0
      %4356 = vmatprep.mubr.bf16.mxu0 %v3926
      %4357 = vmatmul.mubr.bf16.gmra.mrb[0].mxu0 %v3925
      %v4358 = vpop.f32.mrb[0].mxu0
      %v4359 = vadd.f32 0.0, %v4358
      %v4360 = vpop.f32.mrb[0].mxu0
      %v4361 = vpop.f32.mrb[0].mxu0
      %v4362 = vadd.f32 0.0, %v4361
      %v4363 = vpop.f32.mrb[0].mxu0
      %4364 = vmatprep.mubr.bf16.mxu0 %v3929
      %4365 = vmatmul.mubr.bf16.gmra.mrb[0].mxu0 %v3928
      %v4366 = vpop.f32.mrb[0].mxu0
      %v4367 = vadd.f32 0.0, %v4366
      %v4368 = vpop.f32.mrb[0].mxu0
      %v4369 = vpop.f32.mrb[0].mxu0
      %v4370 = vadd.f32 0.0, %v4369
      %v4371 = vpop.f32.mrb[0].mxu0
      %4372 = vmatprep.mubr.bf16.mxu0 %v3932
      %4373 = vmatmul.mubr.bf16.gmra.mrb[0].mxu0 %v3931
      %v4374 = vpop.f32.mrb[0].mxu0
      %v4375 = vadd.f32 0.0, %v4374
      %v4376 = vpop.f32.mrb[0].mxu0
      %v4377 = vpop.f32.mrb[0].mxu0
      %v4378 = vadd.f32 0.0, %v4377
      %v4379 = vpop.f32.mrb[0].mxu0
      %4380 = vmatprep.mubr.bf16.mxu0 %v3935
      %4381 = vmatmul.mubr.bf16.gmra.mrb[0].mxu0 %v3934
      %v4382 = vpop.f32.mrb[0].mxu0
      %v4383 = vadd.f32 0.0, %v4382
      %v4384 = vpop.f32.mrb[0].mxu0
      %v4385 = vpop.f32.mrb[0].mxu0
      %v4386 = vadd.f32 0.0, %v4385
      %v4387 = vpop.f32.mrb[0].mxu0
      %4388 = vmatprep.mubr.bf16.mxu0 %v3938
      %4389 = vmatmul.mubr.bf16.gmra.mrb[0].mxu0 %v3937
      %v4390 = vpop.f32.mrb[0].mxu0
      %v4391 = vadd.f32 0.0, %v4390
      %v4392 = vpop.f32.mrb[0].mxu0
      %v4393 = vpop.f32.mrb[0].mxu0
      %v4394 = vadd.f32 0.0, %v4393
      %v4395 = vpop.f32.mrb[0].mxu0
      %4396 = vmatprep.mubr.bf16.mxu0 %v3941
      %4397 = vmatmul.mubr.bf16.gmra.mrb[0].mxu0 %v3940
      %v4398 = vpop.f32.mrb[0].mxu0
      %v4399 = vadd.f32 0.0, %v4398
      %v4400 = vpop.f32.mrb[0].mxu0
      %v4401 = vpop.f32.mrb[0].mxu0
      %v4402 = vadd.f32 0.0, %v4401
      %v4403 = vpop.f32.mrb[0].mxu0
      %4404 = vmatprep.mubr.bf16.mxu0 %v3944
      %4405 = vmatmul.mubr.bf16.gmra.mrb[0].mxu0 %v3943
      %v4406 = vpop.f32.mrb[0].mxu0
      %v4407 = vadd.f32 0.0, %v4406
      %v4408 = vpop.f32.mrb[0].mxu0
      %v4409 = vpop.f32.mrb[0].mxu0
      %v4410 = vadd.f32 0.0, %v4409
      %v4411 = vpop.f32.mrb[0].mxu0
      %4412 = vmatprep.mubr.bf16.mxu0 %v3947
      %4413 = vmatmul.mubr.bf16.gmra.mrb[0].mxu0 %v3946
      %v4414 = vpop.f32.mrb[0].mxu0
      %v4415 = vadd.f32 0.0, %v4414
      %v4416 = vpop.f32.mrb[0].mxu0
      %v4417 = vpop.f32.mrb[0].mxu0
      %v4418 = vadd.f32 0.0, %v4417
      %v4419 = vpop.f32.mrb[0].mxu0
      %4420 = vmatprep.mubr.bf16.mxu0 %v3950
      %4421 = vmatmul.mubr.bf16.gmra.mrb[0].mxu0 %v3949
      %v4422 = vpop.f32.mrb[0].mxu0
      %v4423 = vadd.f32 0.0, %v4422
      %v4424 = vpop.f32.mrb[0].mxu0
      %v4425 = vpop.f32.mrb[0].mxu0
      %v4426 = vadd.f32 0.0, %v4425
      %v4427 = vpop.f32.mrb[0].mxu0
      %4428 = vmatprep.mubr.bf16.mxu0 %v3953
      %4429 = vmatmul.mubr.bf16.gmra.mrb[0].mxu0 %v3952
      %v4430 = vpop.f32.mrb[0].mxu0
      %v4431 = vadd.f32 0.0, %v4430
      %v4432 = vpop.f32.mrb[0].mxu0
      %v4433 = vpop.f32.mrb[0].mxu0
      %v4434 = vadd.f32 0.0, %v4433
      %v4435 = vpop.f32.mrb[0].mxu0
      %4436 = vdwg.mxu0
      %4437 = vmatprep.subr.bf16.mxu0 0
      %4438 = vmatpush1.bf16.msra.mxu0 %v4116
      %4439 = vmatprep.subr.bf16.mxu0 0
      %4440 = vmatpush1.bf16.msra.mxu0 %v4117
      %4441 = vmatprep.subr.bf16.mxu0 0
      %4442 = vmatpush1.bf16.msra.mxu0 %v4118
      %4443 = vmatprep.subr.bf16.mxu0 0
      %4444 = vmatpush1.bf16.msra.mxu0 %v4119
      %4445 = vmatprep.subr.bf16.mxu0 0
      %4446 = vmatpush1.bf16.msra.mxu0 %v4120
      %4447 = vmatprep.subr.bf16.mxu0 0
      %4448 = vmatpush1.bf16.msra.mxu0 %v4121
      %4449 = vmatprep.subr.bf16.mxu0 0
      %4450 = vmatpush1.bf16.msra.mxu0 %v4122
      %4451 = vmatprep.subr.bf16.mxu0 0
      %4452 = vmatpush1.bf16.msra.mxu0 %v4123
      %4453 = vmatprep.subr.bf16.mxu0 0
      %4454 = vmatpush1.bf16.msra.mxu0 0
      %4455 = vmatprep.subr.bf16.mxu0 0
      %4456 = vmatpush1.bf16.msra.mxu0 0
      %4457 = vmatprep.subr.bf16.mxu0 0
      %4458 = vmatpush1.bf16.msra.mxu0 0
      %4459 = vmatprep.subr.bf16.mxu0 0
      %4460 = vmatpush1.bf16.msra.mxu0 0
      %4461 = vmatprep.subr.bf16.mxu0 0
      %4462 = vmatpush1.bf16.msra.mxu0 0
      %4463 = vmatprep.subr.bf16.mxu0 0
      %4464 = vmatpush1.bf16.msra.mxu0 0
      %4465 = vmatprep.subr.bf16.mxu0 0
      %4466 = vmatpush1.bf16.msra.mxu0 0
      %4467 = vmatprep.subr.bf16.mxu0 0
      %4468 = vmatpush1.bf16.msra.mxu0 0
      %4469 = vmatprep.mubr.bf16.mxu0 0
      %4470 = vmatmul.mubr.bf16.gmra.mrb[0].mxu0 %v3861
      %v4471 = vpop.f32.mrb[0].mxu0
      %v4472 = vadd.f32 %v4183, %v4471
      %v4473 = vpop.f32.mrb[0].mxu0
      %v4474 = vpop.f32.mrb[0].mxu0
      %v4475 = vadd.f32 %v4186, %v4474
      %v4476 = vpop.f32.mrb[0].mxu0
      %4477 = vmatprep.mubr.bf16.mxu0 0
      %4478 = vmatmul.mubr.bf16.gmra.mrb[0].mxu0 %v3864
      %v4479 = vpop.f32.mrb[0].mxu0
      %v4480 = vadd.f32 %v4191, %v4479
      %v4481 = vpop.f32.mrb[0].mxu0
      %v4482 = vpop.f32.mrb[0].mxu0
      %v4483 = vadd.f32 %v4194, %v4482
      %v4484 = vpop.f32.mrb[0].mxu0
      %4485 = vmatprep.mubr.bf16.mxu0 0
      %4486 = vmatmul.mubr.bf16.gmra.mrb[0].mxu0 %v3867
      %v4487 = vpop.f32.mrb[0].mxu0
      %v4488 = vadd.f32 %v4199, %v4487
      %v4489 = vpop.f32.mrb[0].mxu0
      %v4490 = vpop.f32.mrb[0].mxu0
      %v4491 = vadd.f32 %v4202, %v4490
      %v4492 = vpop.f32.mrb[0].mxu0
      %4493 = vmatprep.mubr.bf16.mxu0 0
      %4494 = vmatmul.mubr.bf16.gmra.mrb[0].mxu0 %v3870
      %v4495 = vpop.f32.mrb[0].mxu0
      %v4496 = vadd.f32 %v4207, %v4495
      %v4497 = vpop.f32.mrb[0].mxu0
      %v4498 = vpop.f32.mrb[0].mxu0
      %v4499 = vadd.f32 %v4210, %v4498
      %v4500 = vpop.f32.mrb[0].mxu0
      %4501 = vmatprep.mubr.bf16.mxu0 0
      %4502 = vmatmul.mubr.bf16.gmra.mrb[0].mxu0 %v3873
      %v4503 = vpop.f32.mrb[0].mxu0
      %v4504 = vadd.f32 %v4215, %v4503
      %v4505 = vpop.f32.mrb[0].mxu0
      %v4506 = vpop.f32.mrb[0].mxu0
      %v4507 = vadd.f32 %v4218, %v4506
      %v4508 = vpop.f32.mrb[0].mxu0
      %4509 = vmatprep.mubr.bf16.mxu0 0
      %4510 = vmatmul.mubr.bf16.gmra.mrb[0].mxu0 %v3876
      %v4511 = vpop.f32.mrb[0].mxu0
      %v4512 = vadd.f32 %v4223, %v4511
      %v4513 = vpop.f32.mrb[0].mxu0
      %v4514 = vpop.f32.mrb[0].mxu0
      %v4515 = vadd.f32 %v4226, %v4514
      %v4516 = vpop.f32.mrb[0].mxu0
      %4517 = vmatprep.mubr.bf16.mxu0 0
      %4518 = vmatmul.mubr.bf16.gmra.mrb[0].mxu0 %v3879
      %v4519 = vpop.f32.mrb[0].mxu0
      %v4520 = vadd.f32 %v4231, %v4519
      %v4521 = vpop.f32.mrb[0].mxu0
      %v4522 = vpop.f32.mrb[0].mxu0
      %v4523 = vadd.f32 %v4234, %v4522
      %v4524 = vpop.f32.mrb[0].mxu0
      %4525 = vmatprep.mubr.bf16.mxu0 0
      %4526 = vmatmul.mubr.bf16.gmra.mrb[0].mxu0 %v3882
      %v4527 = vpop.f32.mrb[0].mxu0
      %v4528 = vadd.f32 %v4239, %v4527
      %v4529 = vpop.f32.mrb[0].mxu0
      %v4530 = vpop.f32.mrb[0].mxu0
      %v4531 = vadd.f32 %v4242, %v4530
      %v4532 = vpop.f32.mrb[0].mxu0
      %4533 = vmatprep.mubr.bf16.mxu0 0
      %4534 = vmatmul.mubr.bf16.gmra.mrb[0].mxu0 %v3885
      %v4535 = vpop.f32.mrb[0].mxu0
      %v4536 = vadd.f32 %v4247, %v4535
      %v4537 = vpop.f32.mrb[0].mxu0
      %v4538 = vpop.f32.mrb[0].mxu0
      %v4539 = vadd.f32 %v4250, %v4538
      %v4540 = vpop.f32.mrb[0].mxu0
      %4541 = vmatprep.mubr.bf16.mxu0 0
      %4542 = vmatmul.mubr.bf16.gmra.mrb[0].mxu0 %v3888
      %v4543 = vpop.f32.mrb[0].mxu0
      %v4544 = vadd.f32 %v4255, %v4543
      %v4545 = vpop.f32.mrb[0].mxu0
      %v4546 = vpop.f32.mrb[0].mxu0
      %v4547 = vadd.f32 %v4258, %v4546
      %v4548 = vpop.f32.mrb[0].mxu0
      %4549 = vmatprep.mubr.bf16.mxu0 0
      %4550 = vmatmul.mubr.bf16.gmra.mrb[0].mxu0 %v3891
      %v4551 = vpop.f32.mrb[0].mxu0
      %v4552 = vadd.f32 %v4263, %v4551
      %v4553 = vpop.f32.mrb[0].mxu0
      %v4554 = vpop.f32.mrb[0].mxu0
      %v4555 = vadd.f32 %v4266, %v4554
      %v4556 = vpop.f32.mrb[0].mxu0
      %4557 = vmatprep.mubr.bf16.mxu0 0
      %4558 = vmatmul.mubr.bf16.gmra.mrb[0].mxu0 %v3894
      %v4559 = vpop.f32.mrb[0].mxu0
      %v4560 = vadd.f32 %v4271, %v4559
      %v4561 = vpop.f32.mrb[0].mxu0
      %v4562 = vpop.f32.mrb[0].mxu0
      %v4563 = vadd.f32 %v4274, %v4562
      %v4564 = vpop.f32.mrb[0].mxu0
      %4565 = vmatprep.mubr.bf16.mxu0 0
      %4566 = vmatmul.mubr.bf16.gmra.mrb[0].mxu0 %v3897
      %v4567 = vpop.f32.mrb[0].mxu0
      %v4568 = vadd.f32 %v4279, %v4567
      %v4569 = vpop.f32.mrb[0].mxu0
      %v4570 = vpop.f32.mrb[0].mxu0
      %v4571 = vadd.f32 %v4282, %v4570
      %v4572 = vpop.f32.mrb[0].mxu0
      %4573 = vmatprep.mubr.bf16.mxu0 0
      %4574 = vmatmul.mubr.bf16.gmra.mrb[0].mxu0 %v3900
      %v4575 = vpop.f32.mrb[0].mxu0
      %v4576 = vadd.f32 %v4287, %v4575
      %v4577 = vpop.f32.mrb[0].mxu0
      %v4578 = vpop.f32.mrb[0].mxu0
      %v4579 = vadd.f32 %v4290, %v4578
      %v4580 = vpop.f32.mrb[0].mxu0
      %4581 = vmatprep.mubr.bf16.mxu0 0
      %4582 = vmatmul.mubr.bf16.gmra.mrb[0].mxu0 %v3903
      %v4583 = vpop.f32.mrb[0].mxu0
      %v4584 = vadd.f32 %v4295, %v4583
      %v4585 = vpop.f32.mrb[0].mxu0
      %v4586 = vpop.f32.mrb[0].mxu0
      %v4587 = vadd.f32 %v4298, %v4586
      %v4588 = vpop.f32.mrb[0].mxu0
      %4589 = vmatprep.mubr.bf16.mxu0 0
      %4590 = vmatmul.mubr.bf16.gmra.mrb[0].mxu0 %v3906
      %v4591 = vpop.f32.mrb[0].mxu0
      %v4592 = vadd.f32 %v4303, %v4591
      %v4593 = vpop.f32.mrb[0].mxu0
      %v4594 = vpop.f32.mrb[0].mxu0
      %v4595 = vadd.f32 %v4306, %v4594
      %v4596 = vpop.f32.mrb[0].mxu0
      %4597 = vmatprep.mubr.bf16.mxu0 0
      %4598 = vmatmul.mubr.bf16.gmra.mrb[0].mxu0 %v3909
      %v4599 = vpop.f32.mrb[0].mxu0
      %v4600 = vadd.f32 %v4311, %v4599
      %v4601 = vpop.f32.mrb[0].mxu0
      %v4602 = vpop.f32.mrb[0].mxu0
      %v4603 = vadd.f32 %v4314, %v4602
      %v4604 = vpop.f32.mrb[0].mxu0
      %4605 = vmatprep.mubr.bf16.mxu0 0
      %4606 = vmatmul.mubr.bf16.gmra.mrb[0].mxu0 %v3912
      %v4607 = vpop.f32.mrb[0].mxu0
      %v4608 = vadd.f32 %v4319, %v4607
      %v4609 = vpop.f32.mrb[0].mxu0
      %v4610 = vpop.f32.mrb[0].mxu0
      %v4611 = vadd.f32 %v4322, %v4610
      %v4612 = vpop.f32.mrb[0].mxu0
      %4613 = vmatprep.mubr.bf16.mxu0 0
      %4614 = vmatmul.mubr.bf16.gmra.mrb[0].mxu0 %v3915
      %v4615 = vpop.f32.mrb[0].mxu0
      %v4616 = vadd.f32 %v4327, %v4615
      %v4617 = vpop.f32.mrb[0].mxu0
      %v4618 = vpop.f32.mrb[0].mxu0
      %v4619 = vadd.f32 %v4330, %v4618
      %v4620 = vpop.f32.mrb[0].mxu0
      %4621 = vmatprep.mubr.bf16.mxu0 0
      %4622 = vmatmul.mubr.bf16.gmra.mrb[0].mxu0 %v3918
      %v4623 = vpop.f32.mrb[0].mxu0
      %v4624 = vadd.f32 %v4335, %v4623
      %v4625 = vpop.f32.mrb[0].mxu0
      %v4626 = vpop.f32.mrb[0].mxu0
      %v4627 = vadd.f32 %v4338, %v4626
      %v4628 = vpop.f32.mrb[0].mxu0
      %4629 = vmatprep.mubr.bf16.mxu0 0
      %4630 = vmatmul.mubr.bf16.gmra.mrb[0].mxu0 %v3921
      %v4631 = vpop.f32.mrb[0].mxu0
      %v4632 = vadd.f32 %v4343, %v4631
      %v4633 = vpop.f32.mrb[0].mxu0
      %v4634 = vpop.f32.mrb[0].mxu0
      %v4635 = vadd.f32 %v4346, %v4634
      %v4636 = vpop.f32.mrb[0].mxu0
      %4637 = vmatprep.mubr.bf16.mxu0 0
      %4638 = vmatmul.mubr.bf16.gmra.mrb[0].mxu0 %v3924
      %v4639 = vpop.f32.mrb[0].mxu0
      %v4640 = vadd.f32 %v4351, %v4639
      %v4641 = vpop.f32.mrb[0].mxu0
      %v4642 = vpop.f32.mrb[0].mxu0
      %v4643 = vadd.f32 %v4354, %v4642
      %v4644 = vpop.f32.mrb[0].mxu0
      %4645 = vmatprep.mubr.bf16.mxu0 0
      %4646 = vmatmul.mubr.bf16.gmra.mrb[0].mxu0 %v3927
      %v4647 = vpop.f32.mrb[0].mxu0
      %v4648 = vadd.f32 %v4359, %v4647
      %v4649 = vpop.f32.mrb[0].mxu0
      %v4650 = vpop.f32.mrb[0].mxu0
      %v4651 = vadd.f32 %v4362, %v4650
      %v4652 = vpop.f32.mrb[0].mxu0
      %4653 = vmatprep.mubr.bf16.mxu0 0
      %4654 = vmatmul.mubr.bf16.gmra.mrb[0].mxu0 %v3930
      %v4655 = vpop.f32.mrb[0].mxu0
      %v4656 = vadd.f32 %v4367, %v4655
      %v4657 = vpop.f32.mrb[0].mxu0
      %v4658 = vpop.f32.mrb[0].mxu0
      %v4659 = vadd.f32 %v4370, %v4658
      %v4660 = vpop.f32.mrb[0].mxu0
      %4661 = vmatprep.mubr.bf16.mxu0 0
      %4662 = vmatmul.mubr.bf16.gmra.mrb[0].mxu0 %v3933
      %v4663 = vpop.f32.mrb[0].mxu0
      %v4664 = vadd.f32 %v4375, %v4663
      %v4665 = vpop.f32.mrb[0].mxu0
      %v4666 = vpop.f32.mrb[0].mxu0
      %v4667 = vadd.f32 %v4378, %v4666
      %v4668 = vpop.f32.mrb[0].mxu0
      %4669 = vmatprep.mubr.bf16.mxu0 0
      %4670 = vmatmul.mubr.bf16.gmra.mrb[0].mxu0 %v3936
      %v4671 = vpop.f32.mrb[0].mxu0
      %v4672 = vadd.f32 %v4383, %v4671
      %v4673 = vpop.f32.mrb[0].mxu0
      %v4674 = vpop.f32.mrb[0].mxu0
      %v4675 = vadd.f32 %v4386, %v4674
      %v4676 = vpop.f32.mrb[0].mxu0
      %4677 = vmatprep.mubr.bf16.mxu0 0
      %4678 = vmatmul.mubr.bf16.gmra.mrb[0].mxu0 %v3939
      %v4679 = vpop.f32.mrb[0].mxu0
      %v4680 = vadd.f32 %v4391, %v4679
      %v4681 = vpop.f32.mrb[0].mxu0
      %v4682 = vpop.f32.mrb[0].mxu0
      %v4683 = vadd.f32 %v4394, %v4682
      %v4684 = vpop.f32.mrb[0].mxu0
      %4685 = vmatprep.mubr.bf16.mxu0 0
      %4686 = vmatmul.mubr.bf16.gmra.mrb[0].mxu0 %v3942
      %v4687 = vpop.f32.mrb[0].mxu0
      %v4688 = vadd.f32 %v4399, %v4687
      %v4689 = vpop.f32.mrb[0].mxu0
      %v4690 = vpop.f32.mrb[0].mxu0
      %v4691 = vadd.f32 %v4402, %v4690
      %v4692 = vpop.f32.mrb[0].mxu0
      %4693 = vmatprep.mubr.bf16.mxu0 0
      %4694 = vmatmul.mubr.bf16.gmra.mrb[0].mxu0 %v3945
      %v4695 = vpop.f32.mrb[0].mxu0
      %v4696 = vadd.f32 %v4407, %v4695
      %v4697 = vpop.f32.mrb[0].mxu0
      %v4698 = vpop.f32.mrb[0].mxu0
      %v4699 = vadd.f32 %v4410, %v4698
      %v4700 = vpop.f32.mrb[0].mxu0
      %4701 = vmatprep.mubr.bf16.mxu0 0
      %4702 = vmatmul.mubr.bf16.gmra.mrb[0].mxu0 %v3948
      %v4703 = vpop.f32.mrb[0].mxu0
      %v4704 = vadd.f32 %v4415, %v4703
      %v4705 = vpop.f32.mrb[0].mxu0
      %v4706 = vpop.f32.mrb[0].mxu0
      %v4707 = vadd.f32 %v4418, %v4706
      %v4708 = vpop.f32.mrb[0].mxu0
      %4709 = vmatprep.mubr.bf16.mxu0 0
      %4710 = vmatmul.mubr.bf16.gmra.mrb[0].mxu0 %v3951
      %v4711 = vpop.f32.mrb[0].mxu0
      %v4712 = vadd.f32 %v4423, %v4711
      %v4713 = vpop.f32.mrb[0].mxu0
      %v4714 = vpop.f32.mrb[0].mxu0
      %v4715 = vadd.f32 %v4426, %v4714
      %v4716 = vpop.f32.mrb[0].mxu0
      %4717 = vmatprep.mubr.bf16.mxu0 0
      %4718 = vmatmul.mubr.bf16.gmra.mrb[0].mxu0 %v3954
      %v4719 = vpop.f32.mrb[0].mxu0
      %v4720 = vadd.f32 %v4431, %v4719
      %v4721 = vpop.f32.mrb[0].mxu0
      %v4722 = vpop.f32.mrb[0].mxu0
      %v4723 = vadd.f32 %v4434, %v4722
      %v4724 = vpop.f32.mrb[0].mxu0
      %4725 = vdwg.mxu0
      %v4726 = vadd.f32 %v3605, %v4472
      %v4727 = vadd.f32 %v3608, %v4475
      %v4728 = vadd.f32 %v3613, %v4480
      %v4729 = vadd.f32 %v3616, %v4483
      %v4730 = vadd.f32 %v3621, %v4488
      %v4731 = vadd.f32 %v3624, %v4491
      %v4732 = vadd.f32 %v3629, %v4496
      %v4733 = vadd.f32 %v3632, %v4499
      %v4734 = vadd.f32 %v3637, %v4504
      %v4735 = vadd.f32 %v3640, %v4507
      %v4736 = vadd.f32 %v3645, %v4512
      %v4737 = vadd.f32 %v3648, %v4515
      %v4738 = vadd.f32 %v3653, %v4520
      %v4739 = vadd.f32 %v3656, %v4523
      %v4740 = vadd.f32 %v3661, %v4528
      %v4741 = vadd.f32 %v3664, %v4531
      %v4742 = vadd.f32 %v3669, %v4536
      %v4743 = vadd.f32 %v3672, %v4539
      %v4744 = vadd.f32 %v3677, %v4544
      %v4745 = vadd.f32 %v3680, %v4547
      %v4746 = vadd.f32 %v3685, %v4552
      %v4747 = vadd.f32 %v3688, %v4555
      %v4748 = vadd.f32 %v3693, %v4560
      %v4749 = vadd.f32 %v3696, %v4563
      %v4750 = vadd.f32 %v3701, %v4568
      %v4751 = vadd.f32 %v3704, %v4571
      %v4752 = vadd.f32 %v3709, %v4576
      %v4753 = vadd.f32 %v3712, %v4579
      %v4754 = vadd.f32 %v3717, %v4584
      %v4755 = vadd.f32 %v3720, %v4587
      %v4756 = vadd.f32 %v3725, %v4592
      %v4757 = vadd.f32 %v3728, %v4595
      %v4758 = vadd.f32 %v3733, %v4600
      %v4759 = vadd.f32 %v3736, %v4603
      %v4760 = vadd.f32 %v3741, %v4608
      %v4761 = vadd.f32 %v3744, %v4611
      %v4762 = vadd.f32 %v3749, %v4616
      %v4763 = vadd.f32 %v3752, %v4619
      %v4764 = vadd.f32 %v3757, %v4624
      %v4765 = vadd.f32 %v3760, %v4627
      %v4766 = vadd.f32 %v3765, %v4632
      %v4767 = vadd.f32 %v3768, %v4635
      %v4768 = vadd.f32 %v3773, %v4640
      %v4769 = vadd.f32 %v3776, %v4643
      %v4770 = vadd.f32 %v3781, %v4648
      %v4771 = vadd.f32 %v3784, %v4651
      %v4772 = vadd.f32 %v3789, %v4656
      %v4773 = vadd.f32 %v3792, %v4659
      %v4774 = vadd.f32 %v3797, %v4664
      %v4775 = vadd.f32 %v3800, %v4667
      %v4776 = vadd.f32 %v3805, %v4672
      %v4777 = vadd.f32 %v3808, %v4675
      %v4778 = vadd.f32 %v3813, %v4680
      %v4779 = vadd.f32 %v3816, %v4683
      %v4780 = vadd.f32 %v3821, %v4688
      %v4781 = vadd.f32 %v3824, %v4691
      %v4782 = vadd.f32 %v3829, %v4696
      %v4783 = vadd.f32 %v3832, %v4699
      %v4784 = vadd.f32 %v3837, %v4704
      %v4785 = vadd.f32 %v3840, %v4707
      %v4786 = vadd.f32 %v3845, %v4712
      %v4787 = vadd.f32 %v3848, %v4715
      %v4788 = vadd.f32 %v3853, %v4720
      %v4789 = vadd.f32 %v3856, %v4723
      %v4790 = vld [vmem:[%s5] sm:$0x1]
      %v4792 = vlaneseq
      %v4793 = vshrl.u32 %v4792, 7
      %v4794 = vsub.s32 0, %v4793
      %v4795 = vrot.slane %v4790, %v4794
      %v4797 = vadd.f32 %v4726, %v4795
      %v4798 = vadd.f32 %v4727, %v4795
      %v4799 = vadd.f32 %v4728, %v4795
      %v4800 = vadd.f32 %v4729, %v4795
      %v4801 = vadd.f32 %v4730, %v4795
      %v4802 = vadd.f32 %v4731, %v4795
      %v4803 = vadd.f32 %v4732, %v4795
      %v4804 = vadd.f32 %v4733, %v4795
      %v4805 = vadd.f32 %v4734, %v4795
      %v4806 = vadd.f32 %v4735, %v4795
      %v4807 = vadd.f32 %v4736, %v4795
      %v4808 = vadd.f32 %v4737, %v4795
      %v4809 = vadd.f32 %v4738, %v4795
      %v4810 = vadd.f32 %v4739, %v4795
      %v4811 = vadd.f32 %v4740, %v4795
      %v4812 = vadd.f32 %v4741, %v4795
      %v4813 = vadd.f32 %v4742, %v4795
      %v4814 = vadd.f32 %v4743, %v4795
      %v4815 = vadd.f32 %v4744, %v4795
      %v4816 = vadd.f32 %v4745, %v4795
      %v4817 = vadd.f32 %v4746, %v4795
      %v4818 = vadd.f32 %v4747, %v4795
      %v4819 = vadd.f32 %v4748, %v4795
      %v4820 = vadd.f32 %v4749, %v4795
      %v4821 = vadd.f32 %v4750, %v4795
      %v4822 = vadd.f32 %v4751, %v4795
      %v4823 = vadd.f32 %v4752, %v4795
      %v4824 = vadd.f32 %v4753, %v4795
      %v4825 = vadd.f32 %v4754, %v4795
      %v4826 = vadd.f32 %v4755, %v4795
      %v4827 = vadd.f32 %v4756, %v4795
      %v4828 = vadd.f32 %v4757, %v4795
      %v4829 = vadd.f32 %v4758, %v4795
      %v4830 = vadd.f32 %v4759, %v4795
      %v4831 = vadd.f32 %v4760, %v4795
      %v4832 = vadd.f32 %v4761, %v4795
      %v4833 = vadd.f32 %v4762, %v4795
      %v4834 = vadd.f32 %v4763, %v4795
      %v4835 = vadd.f32 %v4764, %v4795
      %v4836 = vadd.f32 %v4765, %v4795
      %v4837 = vadd.f32 %v4766, %v4795
      %v4838 = vadd.f32 %v4767, %v4795
      %v4839 = vadd.f32 %v4768, %v4795
      %v4840 = vadd.f32 %v4769, %v4795
      %v4841 = vadd.f32 %v4770, %v4795
      %v4842 = vadd.f32 %v4771, %v4795
      %v4843 = vadd.f32 %v4772, %v4795
      %v4844 = vadd.f32 %v4773, %v4795
      %v4845 = vadd.f32 %v4774, %v4795
      %v4846 = vadd.f32 %v4775, %v4795
      %v4847 = vadd.f32 %v4776, %v4795
      %v4848 = vadd.f32 %v4777, %v4795
      %v4849 = vadd.f32 %v4778, %v4795
      %v4850 = vadd.f32 %v4779, %v4795
      %v4851 = vadd.f32 %v4780, %v4795
      %v4852 = vadd.f32 %v4781, %v4795
      %v4853 = vadd.f32 %v4782, %v4795
      %v4854 = vadd.f32 %v4783, %v4795
      %v4855 = vadd.f32 %v4784, %v4795
      %v4856 = vadd.f32 %v4785, %v4795
      %v4857 = vadd.f32 %v4786, %v4795
      %v4858 = vadd.f32 %v4787, %v4795
      %v4859 = vadd.f32 %v4788, %v4795
      %v4860 = vadd.f32 %v4789, %v4795
      %v4861 = vmax.f32 %v4797, 0.0
      %v4862 = vmax.f32 %v4798, 0.0
      %v4863 = vmax.f32 %v4799, 0.0
      %v4864 = vmax.f32 %v4800, 0.0
      %v4865 = vmax.f32 %v4801, 0.0
      %v4866 = vmax.f32 %v4802, 0.0
      %v4867 = vmax.f32 %v4803, 0.0
      %v4868 = vmax.f32 %v4804, 0.0
      %v4869 = vmax.f32 %v4805, 0.0
      %v4870 = vmax.f32 %v4806, 0.0
      %v4871 = vmax.f32 %v4807, 0.0
      %v4872 = vmax.f32 %v4808, 0.0
      %v4873 = vmax.f32 %v4809, 0.0
      %v4874 = vmax.f32 %v4810, 0.0
      %v4875 = vmax.f32 %v4811, 0.0
      %v4876 = vmax.f32 %v4812, 0.0
      %v4877 = vmax.f32 %v4813, 0.0
      %v4878 = vmax.f32 %v4814, 0.0
      %v4879 = vmax.f32 %v4815, 0.0
      %v4880 = vmax.f32 %v4816, 0.0
      %v4881 = vmax.f32 %v4817, 0.0
      %v4882 = vmax.f32 %v4818, 0.0
      %v4883 = vmax.f32 %v4819, 0.0
      %v4884 = vmax.f32 %v4820, 0.0
      %v4885 = vmax.f32 %v4821, 0.0
      %v4886 = vmax.f32 %v4822, 0.0
      %v4887 = vmax.f32 %v4823, 0.0
      %v4888 = vmax.f32 %v4824, 0.0
      %v4889 = vmax.f32 %v4825, 0.0
      %v4890 = vmax.f32 %v4826, 0.0
      %v4891 = vmax.f32 %v4827, 0.0
      %v4892 = vmax.f32 %v4828, 0.0
      %v4893 = vmax.f32 %v4829, 0.0
      %v4894 = vmax.f32 %v4830, 0.0
      %v4895 = vmax.f32 %v4831, 0.0
      %v4896 = vmax.f32 %v4832, 0.0
      %v4897 = vmax.f32 %v4833, 0.0
      %v4898 = vmax.f32 %v4834, 0.0
      %v4899 = vmax.f32 %v4835, 0.0
      %v4900 = vmax.f32 %v4836, 0.0
      %v4901 = vmax.f32 %v4837, 0.0
      %v4902 = vmax.f32 %v4838, 0.0
      %v4903 = vmax.f32 %v4839, 0.0
      %v4904 = vmax.f32 %v4840, 0.0
      %v4905 = vmax.f32 %v4841, 0.0
      %v4906 = vmax.f32 %v4842, 0.0
      %v4907 = vmax.f32 %v4843, 0.0
      %v4908 = vmax.f32 %v4844, 0.0
      %v4909 = vmax.f32 %v4845, 0.0
      %v4910 = vmax.f32 %v4846, 0.0
      %v4911 = vmax.f32 %v4847, 0.0
      %v4912 = vmax.f32 %v4848, 0.0
      %v4913 = vmax.f32 %v4849, 0.0
      %v4914 = vmax.f32 %v4850, 0.0
      %v4915 = vmax.f32 %v4851, 0.0
      %v4916 = vmax.f32 %v4852, 0.0
      %v4917 = vmax.f32 %v4853, 0.0
      %v4918 = vmax.f32 %v4854, 0.0
      %v4919 = vmax.f32 %v4855, 0.0
      %v4920 = vmax.f32 %v4856, 0.0
      %v4921 = vmax.f32 %v4857, 0.0
      %v4922 = vmax.f32 %v4858, 0.0
      %v4923 = vmax.f32 %v4859, 0.0
      %v4924 = vmax.f32 %v4860, 0.0
      %s4925 = smul.addr %s713, 4
      %s4926 = scalar_lea.vmem %s279, %s4925
      %v4927 = vld [vmem:[%s4926] sm:$0xf]
      %v4928 = vld [vmem:[%s4926 + $0x4] sm:$0xf]
      %v4929 = vld [vmem:[%s4926 + $0x8] sm:$0xf]
      %v4930 = vld [vmem:[%s4926 + $0xc] sm:$0xf]
      %v4931 = vld [vmem:[%s4926 + $0x10] sm:$0xf]
      %v4932 = vld [vmem:[%s4926 + $0x14] sm:$0xf]
      %v4933 = vld [vmem:[%s4926 + $0x18] sm:$0xf]
      %v4934 = vld [vmem:[%s4926 + $0x1c] sm:$0xf]
      %v4935 = vld [vmem:[%s4926 + $0x20] sm:$0xf]
      %v4936 = vld [vmem:[%s4926 + $0x24] sm:$0xf]
      %v4937 = vld [vmem:[%s4926 + $0x28] sm:$0xf]
      %v4938 = vld [vmem:[%s4926 + $0x2c] sm:$0xf]
      %v4939 = vld [vmem:[%s4926 + $0x30] sm:$0xf]
      %v4940 = vld [vmem:[%s4926 + $0x34] sm:$0xf]
      %v4941 = vld [vmem:[%s4926 + $0x38] sm:$0xf]
      %v4942 = vld [vmem:[%s4926 + $0x3c] sm:$0xf]
      %v4943 = vld [vmem:[%s4926 + $0x40] sm:$0xf]
      %v4944 = vld [vmem:[%s4926 + $0x44] sm:$0xf]
      %v4945 = vld [vmem:[%s4926 + $0x48] sm:$0xf]
      %v4946 = vld [vmem:[%s4926 + $0x4c] sm:$0xf]
      %v4947 = vld [vmem:[%s4926 + $0x50] sm:$0xf]
      %v4948 = vld [vmem:[%s4926 + $0x54] sm:$0xf]
      %v4949 = vld [vmem:[%s4926 + $0x58] sm:$0xf]
      %v4950 = vld [vmem:[%s4926 + $0x5c] sm:$0xf]
      %v4951 = vld [vmem:[%s4926 + $0x60] sm:$0xf]
      %v4952 = vld [vmem:[%s4926 + $0x64] sm:$0xf]
      %v4953 = vld [vmem:[%s4926 + $0x68] sm:$0xf]
      %v4954 = vld [vmem:[%s4926 + $0x6c] sm:$0xf]
      %v4955 = vld [vmem:[%s4926 + $0x70] sm:$0xf]
      %v4956 = vld [vmem:[%s4926 + $0x74] sm:$0xf]
      %v4957 = vld [vmem:[%s4926 + $0x78] sm:$0xf]
      %v4958 = vld [vmem:[%s4926 + $0x7c] sm:$0xf]
      %v4959 = vld [vmem:[%s4926 + $0x80] sm:$0xf]
      %v4960 = vld [vmem:[%s4926 + $0x84] sm:$0xf]
      %v4961 = vld [vmem:[%s4926 + $0x88] sm:$0xf]
      %v4962 = vld [vmem:[%s4926 + $0x8c] sm:$0xf]
      %v4963 = vld [vmem:[%s4926 + $0x90] sm:$0xf]
      %v4964 = vld [vmem:[%s4926 + $0x94] sm:$0xf]
      %v4965 = vld [vmem:[%s4926 + $0x98] sm:$0xf]
      %v4966 = vld [vmem:[%s4926 + $0x9c] sm:$0xf]
      %v4967 = vld [vmem:[%s4926 + $0xa0] sm:$0xf]
      %v4968 = vld [vmem:[%s4926 + $0xa4] sm:$0xf]
      %v4969 = vld [vmem:[%s4926 + $0xa8] sm:$0xf]
      %v4970 = vld [vmem:[%s4926 + $0xac] sm:$0xf]
      %v4971 = vld [vmem:[%s4926 + $0xb0] sm:$0xf]
      %v4972 = vld [vmem:[%s4926 + $0xb4] sm:$0xf]
      %v4973 = vld [vmem:[%s4926 + $0xb8] sm:$0xf]
      %v4974 = vld [vmem:[%s4926 + $0xbc] sm:$0xf]
      %v4975 = vld [vmem:[%s4926 + $0xc0] sm:$0xf]
      %v4976 = vld [vmem:[%s4926 + $0xc4] sm:$0xf]
      %v4977 = vld [vmem:[%s4926 + $0xc8] sm:$0xf]
      %v4978 = vld [vmem:[%s4926 + $0xcc] sm:$0xf]
      %v4979 = vld [vmem:[%s4926 + $0xd0] sm:$0xf]
      %v4980 = vld [vmem:[%s4926 + $0xd4] sm:$0xf]
      %v4981 = vld [vmem:[%s4926 + $0xd8] sm:$0xf]
      %v4982 = vld [vmem:[%s4926 + $0xdc] sm:$0xf]
      %v4983 = vld [vmem:[%s4926 + $0xe0] sm:$0xf]
      %v4984 = vld [vmem:[%s4926 + $0xe4] sm:$0xf]
      %v4985 = vld [vmem:[%s4926 + $0xe8] sm:$0xf]
      %v4986 = vld [vmem:[%s4926 + $0xec] sm:$0xf]
      %v4987 = vld [vmem:[%s4926 + $0xf0] sm:$0xf]
      %v4988 = vld [vmem:[%s4926 + $0xf4] sm:$0xf]
      %v4989 = vld [vmem:[%s4926 + $0xf8] sm:$0xf]
      %v4990 = vld [vmem:[%s4926 + $0xfc] sm:$0xf]
      %v4991 = vld [vmem:[%s4926 + $0x100] sm:$0xf]
      %v4992 = vld [vmem:[%s4926 + $0x104] sm:$0xf]
      %v4993 = vld [vmem:[%s4926 + $0x108] sm:$0xf]
      %v4994 = vld [vmem:[%s4926 + $0x10c] sm:$0xf]
      %v4995 = vld [vmem:[%s4926 + $0x110] sm:$0xf]
      %v4996 = vld [vmem:[%s4926 + $0x114] sm:$0xf]
      %v4997 = vld [vmem:[%s4926 + $0x118] sm:$0xf]
      %v4998 = vld [vmem:[%s4926 + $0x11c] sm:$0xf]
      %v4999 = vld [vmem:[%s4926 + $0x120] sm:$0xf]
      %v5000 = vld [vmem:[%s4926 + $0x124] sm:$0xf]
      %v5001 = vld [vmem:[%s4926 + $0x128] sm:$0xf]
      %v5002 = vld [vmem:[%s4926 + $0x12c] sm:$0xf]
      %v5003 = vld [vmem:[%s4926 + $0x130] sm:$0xf]
      %v5004 = vld [vmem:[%s4926 + $0x134] sm:$0xf]
      %v5005 = vld [vmem:[%s4926 + $0x138] sm:$0xf]
      %v5006 = vld [vmem:[%s4926 + $0x13c] sm:$0xf]
      %v5007 = vld [vmem:[%s2] sm:$0xf]
      %v5008 = vld [vmem:[%s2 + $0x4] sm:$0xf]
      %v5009 = vld [vmem:[%s2 + $0x8] sm:$0xf]
      %v5010 = vld [vmem:[%s2 + $0xc] sm:$0xf]
      %v5011 = vld [vmem:[%s3] sm:$0x1]
      %v5013 = vlaneseq
      %v5014 = vshrl.u32 %v5013, 7
      %v5015 = vsub.s32 0, %v5014
      %v5016 = vrot.slane %v5011, %v5015
      %v5098 = vunpack.c.l.b16 %v4927
      %v5099 = vunpack.c.l.b16 %v4928
      %v5100 = vunpack.c.l.b16 %v4929
      %v5101 = vunpack.c.l.b16 %v4930
      %v5102 = vunpack.c.l.b16 %v4931
      %v5103 = vunpack.c.l.b16 %v4932
      %v5104 = vunpack.c.l.b16 %v4933
      %v5105 = vunpack.c.l.b16 %v4934
      %v5106 = vunpack.c.l.b16 %v4935
      %v5107 = vunpack.c.l.b16 %v4936
      %v5108 = vunpack.c.l.b16 %v4937
      %v5109 = vunpack.c.l.b16 %v4938
      %v5110 = vunpack.c.l.b16 %v4939
      %v5111 = vunpack.c.l.b16 %v4940
      %v5112 = vunpack.c.l.b16 %v4941
      %v5113 = vunpack.c.l.b16 %v4942
      %v5114 = vunpack.c.l.b16 %v4943
      %v5115 = vunpack.c.l.b16 %v4944
      %v5116 = vunpack.c.l.b16 %v4945
      %v5117 = vunpack.c.l.b16 %v4946
      %v5118 = vunpack.c.l.b16 %v4947
      %v5119 = vunpack.c.l.b16 %v4948
      %v5120 = vunpack.c.l.b16 %v4949
      %v5121 = vunpack.c.l.b16 %v4950
      %v5122 = vunpack.c.l.b16 %v4951
      %v5123 = vunpack.c.l.b16 %v4952
      %v5124 = vunpack.c.l.b16 %v4953
      %v5125 = vunpack.c.l.b16 %v4954
      %v5126 = vunpack.c.l.b16 %v4955
      %v5127 = vunpack.c.l.b16 %v4956
      %v5128 = vunpack.c.l.b16 %v4957
      %v5129 = vunpack.c.l.b16 %v4958
      %v5130 = vunpack.c.l.b16 %v4959
      %v5131 = vunpack.c.l.b16 %v4960
      %v5132 = vunpack.c.l.b16 %v4961
      %v5133 = vunpack.c.l.b16 %v4962
      %v5134 = vunpack.c.l.b16 %v4963
      %v5135 = vunpack.c.l.b16 %v4964
      %v5136 = vunpack.c.l.b16 %v4965
      %v5137 = vunpack.c.l.b16 %v4966
      %v5138 = vunpack.c.l.b16 %v4967
      %v5139 = vunpack.c.l.b16 %v4968
      %v5140 = vunpack.c.l.b16 %v4969
      %v5141 = vunpack.c.l.b16 %v4970
      %v5142 = vunpack.c.l.b16 %v4971
      %v5143 = vunpack.c.l.b16 %v4972
      %v5144 = vunpack.c.l.b16 %v4973
      %v5145 = vunpack.c.l.b16 %v4974
      %v5146 = vunpack.c.l.b16 %v4975
      %v5147 = vunpack.c.l.b16 %v4976
      %v5148 = vunpack.c.l.b16 %v4977
      %v5149 = vunpack.c.l.b16 %v4978
      %v5150 = vunpack.c.l.b16 %v4979
      %v5151 = vunpack.c.l.b16 %v4980
      %v5152 = vunpack.c.l.b16 %v4981
      %v5153 = vunpack.c.l.b16 %v4982
      %v5154 = vunpack.c.l.b16 %v4983
      %v5155 = vunpack.c.l.b16 %v4984
      %v5156 = vunpack.c.l.b16 %v4985
      %v5157 = vunpack.c.l.b16 %v4986
      %v5158 = vunpack.c.l.b16 %v4987
      %v5159 = vunpack.c.l.b16 %v4988
      %v5160 = vunpack.c.l.b16 %v4989
      %v5161 = vunpack.c.l.b16 %v4990
      %v5162 = vunpack.c.l.b16 %v4991
      %v5163 = vunpack.c.l.b16 %v4992
      %v5164 = vunpack.c.l.b16 %v4993
      %v5165 = vunpack.c.l.b16 %v4994
      %v5166 = vunpack.c.l.b16 %v4995
      %v5167 = vunpack.c.l.b16 %v4996
      %v5168 = vunpack.c.l.b16 %v4997
      %v5169 = vunpack.c.l.b16 %v4998
      %v5170 = vunpack.c.l.b16 %v4999
      %v5171 = vunpack.c.l.b16 %v5000
      %v5172 = vunpack.c.l.b16 %v5001
      %v5173 = vunpack.c.l.b16 %v5002
      %v5174 = vunpack.c.l.b16 %v5003
      %v5175 = vunpack.c.l.b16 %v5004
      %v5176 = vunpack.c.l.b16 %v5005
      %v5177 = vunpack.c.l.b16 %v5006
      %v5178 = vpack.c.b16 %v5099, %v5098
      %v5179 = vpack.c.b16 %v5101, %v5100
      %v5180 = vpack.c.b16 %v5103, %v5102
      %v5181 = vpack.c.b16 %v5105, %v5104
      %v5182 = vpack.c.b16 %v5107, %v5106
      %v5183 = vpack.c.b16 %v5109, %v5108
      %v5184 = vpack.c.b16 %v5111, %v5110
      %v5185 = vpack.c.b16 %v5113, %v5112
      %v5186 = vpack.c.b16 %v5115, %v5114
      %v5187 = vpack.c.b16 %v5117, %v5116
      %v5188 = vpack.c.b16 %v5119, %v5118
      %v5189 = vpack.c.b16 %v5121, %v5120
      %v5190 = vpack.c.b16 %v5123, %v5122
      %v5191 = vpack.c.b16 %v5125, %v5124
      %v5192 = vpack.c.b16 %v5127, %v5126
      %v5193 = vpack.c.b16 %v5129, %v5128
      %v5194 = vpack.c.b16 %v5131, %v5130
      %v5195 = vpack.c.b16 %v5133, %v5132
      %v5196 = vpack.c.b16 %v5135, %v5134
      %v5197 = vpack.c.b16 %v5137, %v5136
      %v5198 = vpack.c.b16 %v5139, %v5138
      %v5199 = vpack.c.b16 %v5141, %v5140
      %v5200 = vpack.c.b16 %v5143, %v5142
      %v5201 = vpack.c.b16 %v5145, %v5144
      %v5202 = vpack.c.b16 %v5147, %v5146
      %v5203 = vpack.c.b16 %v5149, %v5148
      %v5204 = vpack.c.b16 %v5151, %v5150
      %v5205 = vpack.c.b16 %v5153, %v5152
      %v5206 = vpack.c.b16 %v5155, %v5154
      %v5207 = vpack.c.b16 %v5157, %v5156
      %v5208 = vpack.c.b16 %v5159, %v5158
      %v5209 = vpack.c.b16 %v5161, %v5160
      %v5210 = vpack.c.b16 %v5163, %v5162
      %v5211 = vpack.c.b16 %v5165, %v5164
      %v5212 = vpack.c.b16 %v5167, %v5166
      %v5213 = vpack.c.b16 %v5169, %v5168
      %v5214 = vpack.c.b16 %v5171, %v5170
      %v5215 = vpack.c.b16 %v5173, %v5172
      %v5216 = vpack.c.b16 %v5175, %v5174
      %v5217 = vpack.c.b16 %v5177, %v5176
      %v5222 = vunpack.c.l.b16 %v5007
      %v5223 = vunpack.c.l.b16 %v5008
      %v5224 = vunpack.c.l.b16 %v5009
      %v5225 = vunpack.c.l.b16 %v5010
      %v5226 = vpack.c.b16 %v5223, %v5222
      %v5227 = vpack.c.b16 %v5225, %v5224
      %v5231 = vsel %vm1020, %v5178, 0
      %v5234 = vsel %vm1020, %v5179, 0
      %v5237 = vsel %vm1020, %v5180, 0
      %v5240 = vsel %vm1020, %v5181, 0
      %v5243 = vsel %vm1020, %v5182, 0
      %v5246 = vsel %vm1020, %v5183, 0
      %v5249 = vsel %vm1020, %v5184, 0
      %v5252 = vsel %vm1020, %v5185, 0
      %v5255 = vsel %vm1020, %v5186, 0
      %v5258 = vsel %vm1020, %v5187, 0
      %v5261 = vsel %vm1020, %v5188, 0
      %v5264 = vsel %vm1020, %v5189, 0
      %v5267 = vsel %vm1020, %v5190, 0
      %v5270 = vsel %vm1020, %v5191, 0
      %v5273 = vsel %vm1020, %v5192, 0
      %v5276 = vsel %vm1020, %v5193, 0
      %v5279 = vsel %vm1020, %v5194, 0
      %v5282 = vsel %vm1020, %v5195, 0
      %v5285 = vsel %vm1020, %v5196, 0
      %v5288 = vsel %vm1020, %v5197, 0
      %v5291 = vsel %vm1020, %v5198, 0
      %v5294 = vsel %vm1020, %v5199, 0
      %v5297 = vsel %vm1020, %v5200, 0
      %v5300 = vsel %vm1020, %v5201, 0
      %v5303 = vsel %vm1020, %v5202, 0
      %v5306 = vsel %vm1020, %v5203, 0
      %v5309 = vsel %vm1020, %v5204, 0
      %v5312 = vsel %vm1020, %v5205, 0
      %v5315 = vsel %vm1020, %v5206, 0
      %v5318 = vsel %vm1020, %v5207, 0
      %v5321 = vsel %vm1020, %v5208, 0
      %v5324 = vsel %vm1020, %v5209, 0
      %v5327 = vsel %vm1020, %v5210, 0
      %v5330 = vsel %vm1020, %v5211, 0
      %v5333 = vsel %vm1020, %v5212, 0
      %v5336 = vsel %vm1020, %v5213, 0
      %v5339 = vsel %vm1020, %v5214, 0
      %v5342 = vsel %vm1020, %v5215, 0
      %v5345 = vsel %vm1020, %v5216, 0
      %v5348 = vsel %vm1020, %v5217, 0
      %5350 = vmatprep.subr.bf16.mxu0 0
      %5351 = vmatpush1.bf16.msra.mxu0 %v5226
      %5352 = vmatprep.subr.bf16.mxu0 0
      %5353 = vmatpush1.bf16.msra.mxu0 %v5227
      %5354 = vmatprep.subr.bf16.mxu0 0
      %5355 = vmatpush1.bf16.msra.mxu0 0
      %5356 = vmatprep.subr.bf16.mxu0 0
      %5357 = vmatpush1.bf16.msra.mxu0 0
      %5358 = vmatprep.subr.bf16.mxu0 0
      %5359 = vmatpush1.bf16.msra.mxu0 0
      %5360 = vmatprep.subr.bf16.mxu0 0
      %5361 = vmatpush1.bf16.msra.mxu0 0
      %5362 = vmatprep.subr.bf16.mxu0 0
      %5363 = vmatpush1.bf16.msra.mxu0 0
      %5364 = vmatprep.subr.bf16.mxu0 0
      %5365 = vmatpush1.bf16.msra.mxu0 0
      %5366 = vmatprep.subr.bf16.mxu0 0
      %5367 = vmatpush1.bf16.msra.mxu0 0
      %5368 = vmatprep.subr.bf16.mxu0 0
      %5369 = vmatpush1.bf16.msra.mxu0 0
      %5370 = vmatprep.subr.bf16.mxu0 0
      %5371 = vmatpush1.bf16.msra.mxu0 0
      %5372 = vmatprep.subr.bf16.mxu0 0
      %5373 = vmatpush1.bf16.msra.mxu0 0
      %5374 = vmatprep.subr.bf16.mxu0 0
      %5375 = vmatpush1.bf16.msra.mxu0 0
      %5376 = vmatprep.subr.bf16.mxu0 0
      %5377 = vmatpush1.bf16.msra.mxu0 0
      %5378 = vmatprep.subr.bf16.mxu0 0
      %5379 = vmatpush1.bf16.msra.mxu0 0
      %5380 = vmatprep.subr.bf16.mxu0 0
      %5381 = vmatpush1.bf16.msra.mxu0 0
      %5382 = vmatprep.mubr.bf16.mxu0 0
      %5383 = vmatmul.mubr.bf16.gmra.mrb[0].mxu0 %v5231
      %v5384 = vpop.f32.mrb[0].mxu0
      %v5385 = vadd.f32 %v5016, %v5384
      %v5386 = vpop.f32.mrb[0].mxu0
      %v5387 = vpop.f32.mrb[0].mxu0
      %v5388 = vadd.f32 %v5016, %v5387
      %v5389 = vpop.f32.mrb[0].mxu0
      %5390 = vmatprep.mubr.bf16.mxu0 0
      %5391 = vmatmul.mubr.bf16.gmra.mrb[0].mxu0 %v5234
      %v5392 = vpop.f32.mrb[0].mxu0
      %v5393 = vadd.f32 %v5016, %v5392
      %v5394 = vpop.f32.mrb[0].mxu0
      %v5395 = vpop.f32.mrb[0].mxu0
      %v5396 = vadd.f32 %v5016, %v5395
      %v5397 = vpop.f32.mrb[0].mxu0
      %5398 = vmatprep.mubr.bf16.mxu0 0
      %5399 = vmatmul.mubr.bf16.gmra.mrb[0].mxu0 %v5237
      %v5400 = vpop.f32.mrb[0].mxu0
      %v5401 = vadd.f32 %v5016, %v5400
      %v5402 = vpop.f32.mrb[0].mxu0
      %v5403 = vpop.f32.mrb[0].mxu0
      %v5404 = vadd.f32 %v5016, %v5403
      %v5405 = vpop.f32.mrb[0].mxu0
      %5406 = vmatprep.mubr.bf16.mxu0 0
      %5407 = vmatmul.mubr.bf16.gmra.mrb[0].mxu0 %v5240
      %v5408 = vpop.f32.mrb[0].mxu0
      %v5409 = vadd.f32 %v5016, %v5408
      %v5410 = vpop.f32.mrb[0].mxu0
      %v5411 = vpop.f32.mrb[0].mxu0
      %v5412 = vadd.f32 %v5016, %v5411
      %v5413 = vpop.f32.mrb[0].mxu0
      %5414 = vmatprep.mubr.bf16.mxu0 0
      %5415 = vmatmul.mubr.bf16.gmra.mrb[0].mxu0 %v5243
      %v5416 = vpop.f32.mrb[0].mxu0
      %v5417 = vadd.f32 %v5016, %v5416
      %v5418 = vpop.f32.mrb[0].mxu0
      %v5419 = vpop.f32.mrb[0].mxu0
      %v5420 = vadd.f32 %v5016, %v5419
      %v5421 = vpop.f32.mrb[0].mxu0
      %5422 = vmatprep.mubr.bf16.mxu0 0
      %5423 = vmatmul.mubr.bf16.gmra.mrb[0].mxu0 %v5246
      %v5424 = vpop.f32.mrb[0].mxu0
      %v5425 = vadd.f32 %v5016, %v5424
      %v5426 = vpop.f32.mrb[0].mxu0
      %v5427 = vpop.f32.mrb[0].mxu0
      %v5428 = vadd.f32 %v5016, %v5427
      %v5429 = vpop.f32.mrb[0].mxu0
      %5430 = vmatprep.mubr.bf16.mxu0 0
      %5431 = vmatmul.mubr.bf16.gmra.mrb[0].mxu0 %v5249
      %v5432 = vpop.f32.mrb[0].mxu0
      %v5433 = vadd.f32 %v5016, %v5432
      %v5434 = vpop.f32.mrb[0].mxu0
      %v5435 = vpop.f32.mrb[0].mxu0
      %v5436 = vadd.f32 %v5016, %v5435
      %v5437 = vpop.f32.mrb[0].mxu0
      %5438 = vmatprep.mubr.bf16.mxu0 0
      %5439 = vmatmul.mubr.bf16.gmra.mrb[0].mxu0 %v5252
      %v5440 = vpop.f32.mrb[0].mxu0
      %v5441 = vadd.f32 %v5016, %v5440
      %v5442 = vpop.f32.mrb[0].mxu0
      %v5443 = vpop.f32.mrb[0].mxu0
      %v5444 = vadd.f32 %v5016, %v5443
      %v5445 = vpop.f32.mrb[0].mxu0
      %5446 = vmatprep.mubr.bf16.mxu0 0
      %5447 = vmatmul.mubr.bf16.gmra.mrb[0].mxu0 %v5255
      %v5448 = vpop.f32.mrb[0].mxu0
      %v5449 = vadd.f32 %v5016, %v5448
      %v5450 = vpop.f32.mrb[0].mxu0
      %v5451 = vpop.f32.mrb[0].mxu0
      %v5452 = vadd.f32 %v5016, %v5451
      %v5453 = vpop.f32.mrb[0].mxu0
      %5454 = vmatprep.mubr.bf16.mxu0 0
      %5455 = vmatmul.mubr.bf16.gmra.mrb[0].mxu0 %v5258
      %v5456 = vpop.f32.mrb[0].mxu0
      %v5457 = vadd.f32 %v5016, %v5456
      %v5458 = vpop.f32.mrb[0].mxu0
      %v5459 = vpop.f32.mrb[0].mxu0
      %v5460 = vadd.f32 %v5016, %v5459
      %v5461 = vpop.f32.mrb[0].mxu0
      %5462 = vmatprep.mubr.bf16.mxu0 0
      %5463 = vmatmul.mubr.bf16.gmra.mrb[0].mxu0 %v5261
      %v5464 = vpop.f32.mrb[0].mxu0
      %v5465 = vadd.f32 %v5016, %v5464
      %v5466 = vpop.f32.mrb[0].mxu0
      %v5467 = vpop.f32.mrb[0].mxu0
      %v5468 = vadd.f32 %v5016, %v5467
      %v5469 = vpop.f32.mrb[0].mxu0
      %5470 = vmatprep.mubr.bf16.mxu0 0
      %5471 = vmatmul.mubr.bf16.gmra.mrb[0].mxu0 %v5264
      %v5472 = vpop.f32.mrb[0].mxu0
      %v5473 = vadd.f32 %v5016, %v5472
      %v5474 = vpop.f32.mrb[0].mxu0
      %v5475 = vpop.f32.mrb[0].mxu0
      %v5476 = vadd.f32 %v5016, %v5475
      %v5477 = vpop.f32.mrb[0].mxu0
      %5478 = vmatprep.mubr.bf16.mxu0 0
      %5479 = vmatmul.mubr.bf16.gmra.mrb[0].mxu0 %v5267
      %v5480 = vpop.f32.mrb[0].mxu0
      %v5481 = vadd.f32 %v5016, %v5480
      %v5482 = vpop.f32.mrb[0].mxu0
      %v5483 = vpop.f32.mrb[0].mxu0
      %v5484 = vadd.f32 %v5016, %v5483
      %v5485 = vpop.f32.mrb[0].mxu0
      %5486 = vmatprep.mubr.bf16.mxu0 0
      %5487 = vmatmul.mubr.bf16.gmra.mrb[0].mxu0 %v5270
      %v5488 = vpop.f32.mrb[0].mxu0
      %v5489 = vadd.f32 %v5016, %v5488
      %v5490 = vpop.f32.mrb[0].mxu0
      %v5491 = vpop.f32.mrb[0].mxu0
      %v5492 = vadd.f32 %v5016, %v5491
      %v5493 = vpop.f32.mrb[0].mxu0
      %5494 = vmatprep.mubr.bf16.mxu0 0
      %5495 = vmatmul.mubr.bf16.gmra.mrb[0].mxu0 %v5273
      %v5496 = vpop.f32.mrb[0].mxu0
      %v5497 = vadd.f32 %v5016, %v5496
      %v5498 = vpop.f32.mrb[0].mxu0
      %v5499 = vpop.f32.mrb[0].mxu0
      %v5500 = vadd.f32 %v5016, %v5499
      %v5501 = vpop.f32.mrb[0].mxu0
      %5502 = vmatprep.mubr.bf16.mxu0 0
      %5503 = vmatmul.mubr.bf16.gmra.mrb[0].mxu0 %v5276
      %v5504 = vpop.f32.mrb[0].mxu0
      %v5505 = vadd.f32 %v5016, %v5504
      %v5506 = vpop.f32.mrb[0].mxu0
      %v5507 = vpop.f32.mrb[0].mxu0
      %v5508 = vadd.f32 %v5016, %v5507
      %v5509 = vpop.f32.mrb[0].mxu0
      %5510 = vmatprep.mubr.bf16.mxu0 0
      %5511 = vmatmul.mubr.bf16.gmra.mrb[0].mxu0 %v5279
      %v5512 = vpop.f32.mrb[0].mxu0
      %v5513 = vadd.f32 %v5016, %v5512
      %v5514 = vpop.f32.mrb[0].mxu0
      %v5515 = vpop.f32.mrb[0].mxu0
      %v5516 = vadd.f32 %v5016, %v5515
      %v5517 = vpop.f32.mrb[0].mxu0
      %5518 = vmatprep.mubr.bf16.mxu0 0
      %5519 = vmatmul.mubr.bf16.gmra.mrb[0].mxu0 %v5282
      %v5520 = vpop.f32.mrb[0].mxu0
      %v5521 = vadd.f32 %v5016, %v5520
      %v5522 = vpop.f32.mrb[0].mxu0
      %v5523 = vpop.f32.mrb[0].mxu0
      %v5524 = vadd.f32 %v5016, %v5523
      %v5525 = vpop.f32.mrb[0].mxu0
      %5526 = vmatprep.mubr.bf16.mxu0 0
      %5527 = vmatmul.mubr.bf16.gmra.mrb[0].mxu0 %v5285
      %v5528 = vpop.f32.mrb[0].mxu0
      %v5529 = vadd.f32 %v5016, %v5528
      %v5530 = vpop.f32.mrb[0].mxu0
      %v5531 = vpop.f32.mrb[0].mxu0
      %v5532 = vadd.f32 %v5016, %v5531
      %v5533 = vpop.f32.mrb[0].mxu0
      %5534 = vmatprep.mubr.bf16.mxu0 0
      %5535 = vmatmul.mubr.bf16.gmra.mrb[0].mxu0 %v5288
      %v5536 = vpop.f32.mrb[0].mxu0
      %v5537 = vadd.f32 %v5016, %v5536
      %v5538 = vpop.f32.mrb[0].mxu0
      %v5539 = vpop.f32.mrb[0].mxu0
      %v5540 = vadd.f32 %v5016, %v5539
      %v5541 = vpop.f32.mrb[0].mxu0
      %5542 = vmatprep.mubr.bf16.mxu0 0
      %5543 = vmatmul.mubr.bf16.gmra.mrb[0].mxu0 %v5291
      %v5544 = vpop.f32.mrb[0].mxu0
      %v5545 = vadd.f32 %v5016, %v5544
      %v5546 = vpop.f32.mrb[0].mxu0
      %v5547 = vpop.f32.mrb[0].mxu0
      %v5548 = vadd.f32 %v5016, %v5547
      %v5549 = vpop.f32.mrb[0].mxu0
      %5550 = vmatprep.mubr.bf16.mxu0 0
      %5551 = vmatmul.mubr.bf16.gmra.mrb[0].mxu0 %v5294
      %v5552 = vpop.f32.mrb[0].mxu0
      %v5553 = vadd.f32 %v5016, %v5552
      %v5554 = vpop.f32.mrb[0].mxu0
      %v5555 = vpop.f32.mrb[0].mxu0
      %v5556 = vadd.f32 %v5016, %v5555
      %v5557 = vpop.f32.mrb[0].mxu0
      %5558 = vmatprep.mubr.bf16.mxu0 0
      %5559 = vmatmul.mubr.bf16.gmra.mrb[0].mxu0 %v5297
      %v5560 = vpop.f32.mrb[0].mxu0
      %v5561 = vadd.f32 %v5016, %v5560
      %v5562 = vpop.f32.mrb[0].mxu0
      %v5563 = vpop.f32.mrb[0].mxu0
      %v5564 = vadd.f32 %v5016, %v5563
      %v5565 = vpop.f32.mrb[0].mxu0
      %5566 = vmatprep.mubr.bf16.mxu0 0
      %5567 = vmatmul.mubr.bf16.gmra.mrb[0].mxu0 %v5300
      %v5568 = vpop.f32.mrb[0].mxu0
      %v5569 = vadd.f32 %v5016, %v5568
      %v5570 = vpop.f32.mrb[0].mxu0
      %v5571 = vpop.f32.mrb[0].mxu0
      %v5572 = vadd.f32 %v5016, %v5571
      %v5573 = vpop.f32.mrb[0].mxu0
      %5574 = vmatprep.mubr.bf16.mxu0 0
      %5575 = vmatmul.mubr.bf16.gmra.mrb[0].mxu0 %v5303
      %v5576 = vpop.f32.mrb[0].mxu0
      %v5577 = vadd.f32 %v5016, %v5576
      %v5578 = vpop.f32.mrb[0].mxu0
      %v5579 = vpop.f32.mrb[0].mxu0
      %v5580 = vadd.f32 %v5016, %v5579
      %v5581 = vpop.f32.mrb[0].mxu0
      %5582 = vmatprep.mubr.bf16.mxu0 0
      %5583 = vmatmul.mubr.bf16.gmra.mrb[0].mxu0 %v5306
      %v5584 = vpop.f32.mrb[0].mxu0
      %v5585 = vadd.f32 %v5016, %v5584
      %v5586 = vpop.f32.mrb[0].mxu0
      %v5587 = vpop.f32.mrb[0].mxu0
      %v5588 = vadd.f32 %v5016, %v5587
      %v5589 = vpop.f32.mrb[0].mxu0
      %5590 = vmatprep.mubr.bf16.mxu0 0
      %5591 = vmatmul.mubr.bf16.gmra.mrb[0].mxu0 %v5309
      %v5592 = vpop.f32.mrb[0].mxu0
      %v5593 = vadd.f32 %v5016, %v5592
      %v5594 = vpop.f32.mrb[0].mxu0
      %v5595 = vpop.f32.mrb[0].mxu0
      %v5596 = vadd.f32 %v5016, %v5595
      %v5597 = vpop.f32.mrb[0].mxu0
      %5598 = vmatprep.mubr.bf16.mxu0 0
      %5599 = vmatmul.mubr.bf16.gmra.mrb[0].mxu0 %v5312
      %v5600 = vpop.f32.mrb[0].mxu0
      %v5601 = vadd.f32 %v5016, %v5600
      %v5602 = vpop.f32.mrb[0].mxu0
      %v5603 = vpop.f32.mrb[0].mxu0
      %v5604 = vadd.f32 %v5016, %v5603
      %v5605 = vpop.f32.mrb[0].mxu0
      %5606 = vmatprep.mubr.bf16.mxu0 0
      %5607 = vmatmul.mubr.bf16.gmra.mrb[0].mxu0 %v5315
      %v5608 = vpop.f32.mrb[0].mxu0
      %v5609 = vadd.f32 %v5016, %v5608
      %v5610 = vpop.f32.mrb[0].mxu0
      %v5611 = vpop.f32.mrb[0].mxu0
      %v5612 = vadd.f32 %v5016, %v5611
      %v5613 = vpop.f32.mrb[0].mxu0
      %5614 = vmatprep.mubr.bf16.mxu0 0
      %5615 = vmatmul.mubr.bf16.gmra.mrb[0].mxu0 %v5318
      %v5616 = vpop.f32.mrb[0].mxu0
      %v5617 = vadd.f32 %v5016, %v5616
      %v5618 = vpop.f32.mrb[0].mxu0
      %v5619 = vpop.f32.mrb[0].mxu0
      %v5620 = vadd.f32 %v5016, %v5619
      %v5621 = vpop.f32.mrb[0].mxu0
      %5622 = vmatprep.mubr.bf16.mxu0 0
      %5623 = vmatmul.mubr.bf16.gmra.mrb[0].mxu0 %v5321
      %v5624 = vpop.f32.mrb[0].mxu0
      %v5625 = vadd.f32 %v5016, %v5624
      %v5626 = vpop.f32.mrb[0].mxu0
      %v5627 = vpop.f32.mrb[0].mxu0
      %v5628 = vadd.f32 %v5016, %v5627
      %v5629 = vpop.f32.mrb[0].mxu0
      %5630 = vmatprep.mubr.bf16.mxu0 0
      %5631 = vmatmul.mubr.bf16.gmra.mrb[0].mxu0 %v5324
      %v5632 = vpop.f32.mrb[0].mxu0
      %v5633 = vadd.f32 %v5016, %v5632
      %v5634 = vpop.f32.mrb[0].mxu0
      %v5635 = vpop.f32.mrb[0].mxu0
      %v5636 = vadd.f32 %v5016, %v5635
      %v5637 = vpop.f32.mrb[0].mxu0
      %5638 = vmatprep.mubr.bf16.mxu0 0
      %5639 = vmatmul.mubr.bf16.gmra.mrb[0].mxu0 %v5327
      %v5640 = vpop.f32.mrb[0].mxu0
      %v5641 = vadd.f32 %v5016, %v5640
      %v5642 = vpop.f32.mrb[0].mxu0
      %v5643 = vpop.f32.mrb[0].mxu0
      %v5644 = vadd.f32 %v5016, %v5643
      %v5645 = vpop.f32.mrb[0].mxu0
      %5646 = vmatprep.mubr.bf16.mxu0 0
      %5647 = vmatmul.mubr.bf16.gmra.mrb[0].mxu0 %v5330
      %v5648 = vpop.f32.mrb[0].mxu0
      %v5649 = vadd.f32 %v5016, %v5648
      %v5650 = vpop.f32.mrb[0].mxu0
      %v5651 = vpop.f32.mrb[0].mxu0
      %v5652 = vadd.f32 %v5016, %v5651
      %v5653 = vpop.f32.mrb[0].mxu0
      %5654 = vmatprep.mubr.bf16.mxu0 0
      %5655 = vmatmul.mubr.bf16.gmra.mrb[0].mxu0 %v5333
      %v5656 = vpop.f32.mrb[0].mxu0
      %v5657 = vadd.f32 %v5016, %v5656
      %v5658 = vpop.f32.mrb[0].mxu0
      %v5659 = vpop.f32.mrb[0].mxu0
      %v5660 = vadd.f32 %v5016, %v5659
      %v5661 = vpop.f32.mrb[0].mxu0
      %5662 = vmatprep.mubr.bf16.mxu0 0
      %5663 = vmatmul.mubr.bf16.gmra.mrb[0].mxu0 %v5336
      %v5664 = vpop.f32.mrb[0].mxu0
      %v5665 = vadd.f32 %v5016, %v5664
      %v5666 = vpop.f32.mrb[0].mxu0
      %v5667 = vpop.f32.mrb[0].mxu0
      %v5668 = vadd.f32 %v5016, %v5667
      %v5669 = vpop.f32.mrb[0].mxu0
      %5670 = vmatprep.mubr.bf16.mxu0 0
      %5671 = vmatmul.mubr.bf16.gmra.mrb[0].mxu0 %v5339
      %v5672 = vpop.f32.mrb[0].mxu0
      %v5673 = vadd.f32 %v5016, %v5672
      %v5674 = vpop.f32.mrb[0].mxu0
      %v5675 = vpop.f32.mrb[0].mxu0
      %v5676 = vadd.f32 %v5016, %v5675
      %v5677 = vpop.f32.mrb[0].mxu0
      %5678 = vmatprep.mubr.bf16.mxu0 0
      %5679 = vmatmul.mubr.bf16.gmra.mrb[0].mxu0 %v5342
      %v5680 = vpop.f32.mrb[0].mxu0
      %v5681 = vadd.f32 %v5016, %v5680
      %v5682 = vpop.f32.mrb[0].mxu0
      %v5683 = vpop.f32.mrb[0].mxu0
      %v5684 = vadd.f32 %v5016, %v5683
      %v5685 = vpop.f32.mrb[0].mxu0
      %5686 = vmatprep.mubr.bf16.mxu0 0
      %5687 = vmatmul.mubr.bf16.gmra.mrb[0].mxu0 %v5345
      %v5688 = vpop.f32.mrb[0].mxu0
      %v5689 = vadd.f32 %v5016, %v5688
      %v5690 = vpop.f32.mrb[0].mxu0
      %v5691 = vpop.f32.mrb[0].mxu0
      %v5692 = vadd.f32 %v5016, %v5691
      %v5693 = vpop.f32.mrb[0].mxu0
      %5694 = vmatprep.mubr.bf16.mxu0 0
      %5695 = vmatmul.mubr.bf16.gmra.mrb[0].mxu0 %v5348
      %v5696 = vpop.f32.mrb[0].mxu0
      %v5697 = vadd.f32 %v5016, %v5696
      %v5698 = vpop.f32.mrb[0].mxu0
      %v5699 = vpop.f32.mrb[0].mxu0
      %v5700 = vadd.f32 %v5016, %v5699
      %v5701 = vpop.f32.mrb[0].mxu0
      %5702 = vdwg.mxu0
      %v5703 = vmax.f32 %v5385, 0.0
      %v5704 = vmax.f32 %v5388, 0.0
      %v5705 = vmax.f32 %v5393, 0.0
      %v5706 = vmax.f32 %v5396, 0.0
      %v5707 = vmax.f32 %v5401, 0.0
      %v5708 = vmax.f32 %v5404, 0.0
      %v5709 = vmax.f32 %v5409, 0.0
      %v5710 = vmax.f32 %v5412, 0.0
      %v5711 = vmax.f32 %v5417, 0.0
      %v5712 = vmax.f32 %v5420, 0.0
      %v5713 = vmax.f32 %v5425, 0.0
      %v5714 = vmax.f32 %v5428, 0.0
      %v5715 = vmax.f32 %v5433, 0.0
      %v5716 = vmax.f32 %v5436, 0.0
      %v5717 = vmax.f32 %v5441, 0.0
      %v5718 = vmax.f32 %v5444, 0.0
      %v5719 = vmax.f32 %v5449, 0.0
      %v5720 = vmax.f32 %v5452, 0.0
      %v5721 = vmax.f32 %v5457, 0.0
      %v5722 = vmax.f32 %v5460, 0.0
      %v5723 = vmax.f32 %v5465, 0.0
      %v5724 = vmax.f32 %v5468, 0.0
      %v5725 = vmax.f32 %v5473, 0.0
      %v5726 = vmax.f32 %v5476, 0.0
      %v5727 = vmax.f32 %v5481, 0.0
      %v5728 = vmax.f32 %v5484, 0.0
      %v5729 = vmax.f32 %v5489, 0.0
      %v5730 = vmax.f32 %v5492, 0.0
      %v5731 = vmax.f32 %v5497, 0.0
      %v5732 = vmax.f32 %v5500, 0.0
      %v5733 = vmax.f32 %v5505, 0.0
      %v5734 = vmax.f32 %v5508, 0.0
      %v5735 = vmax.f32 %v5513, 0.0
      %v5736 = vmax.f32 %v5516, 0.0
      %v5737 = vmax.f32 %v5521, 0.0
      %v5738 = vmax.f32 %v5524, 0.0
      %v5739 = vmax.f32 %v5529, 0.0
      %v5740 = vmax.f32 %v5532, 0.0
      %v5741 = vmax.f32 %v5537, 0.0
      %v5742 = vmax.f32 %v5540, 0.0
      %v5743 = vmax.f32 %v5545, 0.0
      %v5744 = vmax.f32 %v5548, 0.0
      %v5745 = vmax.f32 %v5553, 0.0
      %v5746 = vmax.f32 %v5556, 0.0
      %v5747 = vmax.f32 %v5561, 0.0
      %v5748 = vmax.f32 %v5564, 0.0
      %v5749 = vmax.f32 %v5569, 0.0
      %v5750 = vmax.f32 %v5572, 0.0
      %v5751 = vmax.f32 %v5577, 0.0
      %v5752 = vmax.f32 %v5580, 0.0
      %v5753 = vmax.f32 %v5585, 0.0
      %v5754 = vmax.f32 %v5588, 0.0
      %v5755 = vmax.f32 %v5593, 0.0
      %v5756 = vmax.f32 %v5596, 0.0
      %v5757 = vmax.f32 %v5601, 0.0
      %v5758 = vmax.f32 %v5604, 0.0
      %v5759 = vmax.f32 %v5609, 0.0
      %v5760 = vmax.f32 %v5612, 0.0
      %v5761 = vmax.f32 %v5617, 0.0
      %v5762 = vmax.f32 %v5620, 0.0
      %v5763 = vmax.f32 %v5625, 0.0
      %v5764 = vmax.f32 %v5628, 0.0
      %v5765 = vmax.f32 %v5633, 0.0
      %v5766 = vmax.f32 %v5636, 0.0
      %v5767 = vmax.f32 %v5641, 0.0
      %v5768 = vmax.f32 %v5644, 0.0
      %v5769 = vmax.f32 %v5649, 0.0
      %v5770 = vmax.f32 %v5652, 0.0
      %v5771 = vmax.f32 %v5657, 0.0
      %v5772 = vmax.f32 %v5660, 0.0
      %v5773 = vmax.f32 %v5665, 0.0
      %v5774 = vmax.f32 %v5668, 0.0
      %v5775 = vmax.f32 %v5673, 0.0
      %v5776 = vmax.f32 %v5676, 0.0
      %v5777 = vmax.f32 %v5681, 0.0
      %v5778 = vmax.f32 %v5684, 0.0
      %v5779 = vmax.f32 %v5689, 0.0
      %v5780 = vmax.f32 %v5692, 0.0
      %v5781 = vmax.f32 %v5697, 0.0
      %v5782 = vmax.f32 %v5700, 0.0
      %v5783 = vmul.f32 %v5703, %v621
      %v5784 = vmul.f32 %v5704, %v622
      %v5785 = vmul.f32 %v5705, %v623
      %v5786 = vmul.f32 %v5706, %v624
      %v5787 = vmul.f32 %v5707, %v625
      %v5788 = vmul.f32 %v5708, %v626
      %v5789 = vmul.f32 %v5709, %v627
      %v5790 = vmul.f32 %v5710, %v628
      %v5791 = vmul.f32 %v5711, %v629
      %v5792 = vmul.f32 %v5712, %v630
      %v5793 = vmul.f32 %v5713, %v631
      %v5794 = vmul.f32 %v5714, %v632
      %v5795 = vmul.f32 %v5715, %v633
      %v5796 = vmul.f32 %v5716, %v634
      %v5797 = vmul.f32 %v5717, %v635
      %v5798 = vmul.f32 %v5718, %v636
      %v5799 = vmul.f32 %v5719, %v637
      %v5800 = vmul.f32 %v5720, %v638
      %v5801 = vmul.f32 %v5721, %v639
      %v5802 = vmul.f32 %v5722, %v640
      %v5803 = vmul.f32 %v5723, %v641
      %v5804 = vmul.f32 %v5724, %v642
      %v5805 = vmul.f32 %v5725, %v643
      %v5806 = vmul.f32 %v5726, %v644
      %v5807 = vmul.f32 %v5727, %v645
      %v5808 = vmul.f32 %v5728, %v646
      %v5809 = vmul.f32 %v5729, %v647
      %v5810 = vmul.f32 %v5730, %v648
      %v5811 = vmul.f32 %v5731, %v649
      %v5812 = vmul.f32 %v5732, %v650
      %v5813 = vmul.f32 %v5733, %v651
      %v5814 = vmul.f32 %v5734, %v652
      %v5815 = vmul.f32 %v5735, %v653
      %v5816 = vmul.f32 %v5736, %v654
      %v5817 = vmul.f32 %v5737, %v655
      %v5818 = vmul.f32 %v5738, %v656
      %v5819 = vmul.f32 %v5739, %v657
      %v5820 = vmul.f32 %v5740, %v658
      %v5821 = vmul.f32 %v5741, %v659
      %v5822 = vmul.f32 %v5742, %v660
      %v5823 = vmul.f32 %v5743, %v661
      %v5824 = vmul.f32 %v5744, %v662
      %v5825 = vmul.f32 %v5745, %v663
      %v5826 = vmul.f32 %v5746, %v664
      %v5827 = vmul.f32 %v5747, %v665
      %v5828 = vmul.f32 %v5748, %v666
      %v5829 = vmul.f32 %v5749, %v667
      %v5830 = vmul.f32 %v5750, %v668
      %v5831 = vmul.f32 %v5751, %v669
      %v5832 = vmul.f32 %v5752, %v670
      %v5833 = vmul.f32 %v5753, %v671
      %v5834 = vmul.f32 %v5754, %v672
      %v5835 = vmul.f32 %v5755, %v673
      %v5836 = vmul.f32 %v5756, %v674
      %v5837 = vmul.f32 %v5757, %v675
      %v5838 = vmul.f32 %v5758, %v676
      %v5839 = vmul.f32 %v5759, %v677
      %v5840 = vmul.f32 %v5760, %v678
      %v5841 = vmul.f32 %v5761, %v679
      %v5842 = vmul.f32 %v5762, %v680
      %v5843 = vmul.f32 %v5763, %v681
      %v5844 = vmul.f32 %v5764, %v682
      %v5845 = vmul.f32 %v5765, %v683
      %v5846 = vmul.f32 %v5766, %v684
      %v5847 = vmul.f32 %v5767, %v685
      %v5848 = vmul.f32 %v5768, %v686
      %v5849 = vmul.f32 %v5769, %v687
      %v5850 = vmul.f32 %v5770, %v688
      %v5851 = vmul.f32 %v5771, %v689
      %v5852 = vmul.f32 %v5772, %v690
      %v5853 = vmul.f32 %v5773, %v691
      %v5854 = vmul.f32 %v5774, %v692
      %v5855 = vmul.f32 %v5775, %v693
      %v5856 = vmul.f32 %v5776, %v694
      %v5857 = vmul.f32 %v5777, %v695
      %v5858 = vmul.f32 %v5778, %v696
      %v5859 = vmul.f32 %v5779, %v697
      %v5860 = vmul.f32 %v5780, %v698
      %v5861 = vmul.f32 %v5781, %v699
      %v5862 = vmul.f32 %v5782, %v700
      %v5863 = vrot.slane %v5783, 7
      %v5864 = vrot.slane %v5784, 7
      %v5865 = vrot.slane %v5785, 7
      %v5866 = vrot.slane %v5786, 7
      %v5867 = vrot.slane %v5787, 7
      %v5868 = vrot.slane %v5788, 7
      %v5869 = vrot.slane %v5789, 7
      %v5870 = vrot.slane %v5790, 7
      %v5871 = vrot.slane %v5791, 7
      %v5872 = vrot.slane %v5792, 7
      %v5873 = vrot.slane %v5793, 7
      %v5874 = vrot.slane %v5794, 7
      %v5875 = vrot.slane %v5795, 7
      %v5876 = vrot.slane %v5796, 7
      %v5877 = vrot.slane %v5797, 7
      %v5878 = vrot.slane %v5798, 7
      %v5879 = vrot.slane %v5799, 7
      %v5880 = vrot.slane %v5800, 7
      %v5881 = vrot.slane %v5801, 7
      %v5882 = vrot.slane %v5802, 7
      %v5883 = vrot.slane %v5803, 7
      %v5884 = vrot.slane %v5804, 7
      %v5885 = vrot.slane %v5805, 7
      %v5886 = vrot.slane %v5806, 7
      %v5887 = vrot.slane %v5807, 7
      %v5888 = vrot.slane %v5808, 7
      %v5889 = vrot.slane %v5809, 7
      %v5890 = vrot.slane %v5810, 7
      %v5891 = vrot.slane %v5811, 7
      %v5892 = vrot.slane %v5812, 7
      %v5893 = vrot.slane %v5813, 7
      %v5894 = vrot.slane %v5814, 7
      %v5895 = vrot.slane %v5815, 7
      %v5896 = vrot.slane %v5816, 7
      %v5897 = vrot.slane %v5817, 7
      %v5898 = vrot.slane %v5818, 7
      %v5899 = vrot.slane %v5819, 7
      %v5900 = vrot.slane %v5820, 7
      %v5901 = vrot.slane %v5821, 7
      %v5902 = vrot.slane %v5822, 7
      %v5903 = vrot.slane %v5823, 7
      %v5904 = vrot.slane %v5824, 7
      %v5905 = vrot.slane %v5825, 7
      %v5906 = vrot.slane %v5826, 7
      %v5907 = vrot.slane %v5827, 7
      %v5908 = vrot.slane %v5828, 7
      %v5909 = vrot.slane %v5829, 7
      %v5910 = vrot.slane %v5830, 7
      %v5911 = vrot.slane %v5831, 7
      %v5912 = vrot.slane %v5832, 7
      %v5913 = vrot.slane %v5833, 7
      %v5914 = vrot.slane %v5834, 7
      %v5915 = vrot.slane %v5835, 7
      %v5916 = vrot.slane %v5836, 7
      %v5917 = vrot.slane %v5837, 7
      %v5918 = vrot.slane %v5838, 7
      %v5919 = vrot.slane %v5839, 7
      %v5920 = vrot.slane %v5840, 7
      %v5921 = vrot.slane %v5841, 7
      %v5922 = vrot.slane %v5842, 7
      %v5923 = vrot.slane %v5843, 7
      %v5924 = vrot.slane %v5844, 7
      %v5925 = vrot.slane %v5845, 7
      %v5926 = vrot.slane %v5846, 7
      %v5927 = vrot.slane %v5847, 7
      %v5928 = vrot.slane %v5848, 7
      %v5929 = vrot.slane %v5849, 7
      %v5930 = vrot.slane %v5850, 7
      %v5931 = vrot.slane %v5851, 7
      %v5932 = vrot.slane %v5852, 7
      %v5933 = vrot.slane %v5853, 7
      %v5934 = vrot.slane %v5854, 7
      %v5935 = vrot.slane %v5855, 7
      %v5936 = vrot.slane %v5856, 7
      %v5937 = vrot.slane %v5857, 7
      %v5938 = vrot.slane %v5858, 7
      %v5939 = vrot.slane %v5859, 7
      %v5940 = vrot.slane %v5860, 7
      %v5941 = vrot.slane %v5861, 7
      %v5942 = vrot.slane %v5862, 7
      %v5943 = vsel %vm1734, %v5941, %v5942
      %v5944 = vsel %vm1734, %v5940, %v5941
      %v5945 = vsel %vm1734, %v5939, %v5940
      %v5946 = vsel %vm1734, %v5938, %v5939
      %v5947 = vsel %vm1734, %v5937, %v5938
      %v5948 = vsel %vm1734, %v5936, %v5937
      %v5949 = vsel %vm1734, %v5935, %v5936
      %v5950 = vsel %vm1734, %v5934, %v5935
      %v5951 = vsel %vm1734, %v5933, %v5934
      %v5952 = vsel %vm1734, %v5932, %v5933
      %v5953 = vsel %vm1734, %v5931, %v5932
      %v5954 = vsel %vm1734, %v5930, %v5931
      %v5955 = vsel %vm1734, %v5929, %v5930
      %v5956 = vsel %vm1734, %v5928, %v5929
      %v5957 = vsel %vm1734, %v5927, %v5928
      %v5958 = vsel %vm1734, %v5926, %v5927
      %v5959 = vsel %vm1734, %v5925, %v5926
      %v5960 = vsel %vm1734, %v5924, %v5925
      %v5961 = vsel %vm1734, %v5923, %v5924
      %v5962 = vsel %vm1734, %v5922, %v5923
      %v5963 = vsel %vm1734, %v5921, %v5922
      %v5964 = vsel %vm1734, %v5920, %v5921
      %v5965 = vsel %vm1734, %v5919, %v5920
      %v5966 = vsel %vm1734, %v5918, %v5919
      %v5967 = vsel %vm1734, %v5917, %v5918
      %v5968 = vsel %vm1734, %v5916, %v5917
      %v5969 = vsel %vm1734, %v5915, %v5916
      %v5970 = vsel %vm1734, %v5914, %v5915
      %v5971 = vsel %vm1734, %v5913, %v5914
      %v5972 = vsel %vm1734, %v5912, %v5913
      %v5973 = vsel %vm1734, %v5911, %v5912
      %v5974 = vsel %vm1734, %v5910, %v5911
      %v5975 = vsel %vm1734, %v5909, %v5910
      %v5976 = vsel %vm1734, %v5908, %v5909
      %v5977 = vsel %vm1734, %v5907, %v5908
      %v5978 = vsel %vm1734, %v5906, %v5907
      %v5979 = vsel %vm1734, %v5905, %v5906
      %v5980 = vsel %vm1734, %v5904, %v5905
      %v5981 = vsel %vm1734, %v5903, %v5904
      %v5982 = vsel %vm1734, %v5902, %v5903
      %v5983 = vsel %vm1734, %v5901, %v5902
      %v5984 = vsel %vm1734, %v5900, %v5901
      %v5985 = vsel %vm1734, %v5899, %v5900
      %v5986 = vsel %vm1734, %v5898, %v5899
      %v5987 = vsel %vm1734, %v5897, %v5898
      %v5988 = vsel %vm1734, %v5896, %v5897
      %v5989 = vsel %vm1734, %v5895, %v5896
      %v5990 = vsel %vm1734, %v5894, %v5895
      %v5991 = vsel %vm1734, %v5893, %v5894
      %v5992 = vsel %vm1734, %v5892, %v5893
      %v5993 = vsel %vm1734, %v5891, %v5892
      %v5994 = vsel %vm1734, %v5890, %v5891
      %v5995 = vsel %vm1734, %v5889, %v5890
      %v5996 = vsel %vm1734, %v5888, %v5889
      %v5997 = vsel %vm1734, %v5887, %v5888
      %v5998 = vsel %vm1734, %v5886, %v5887
      %v5999 = vsel %vm1734, %v5885, %v5886
      %v6000 = vsel %vm1734, %v5884, %v5885
      %v6001 = vsel %vm1734, %v5883, %v5884
      %v6002 = vsel %vm1734, %v5882, %v5883
      %v6003 = vsel %vm1734, %v5881, %v5882
      %v6004 = vsel %vm1734, %v5880, %v5881
      %v6005 = vsel %vm1734, %v5879, %v5880
      %v6006 = vsel %vm1734, %v5878, %v5879
      %v6007 = vsel %vm1734, %v5877, %v5878
      %v6008 = vsel %vm1734, %v5876, %v5877
      %v6009 = vsel %vm1734, %v5875, %v5876
      %v6010 = vsel %vm1734, %v5874, %v5875
      %v6011 = vsel %vm1734, %v5873, %v5874
      %v6012 = vsel %vm1734, %v5872, %v5873
      %v6013 = vsel %vm1734, %v5871, %v5872
      %v6014 = vsel %vm1734, %v5870, %v5871
      %v6015 = vsel %vm1734, %v5869, %v5870
      %v6016 = vsel %vm1734, %v5868, %v5869
      %v6017 = vsel %vm1734, %v5867, %v5868
      %v6018 = vsel %vm1734, %v5866, %v5867
      %v6019 = vsel %vm1734, %v5865, %v5866
      %v6020 = vsel %vm1734, %v5864, %v5865
      %v6021 = vsel %vm1734, %v5863, %v5864
      %v6022 = vsel %vm1734, %v5942, %v5863
      %v6023 = vpack.c.bf16 %v6021, %v6022
      %v6024 = vpack.c.bf16 %v6019, %v6020
      %v6025 = vpack.c.bf16 %v6017, %v6018
      %v6026 = vpack.c.bf16 %v6015, %v6016
      %v6027 = vpack.c.bf16 %v6013, %v6014
      %v6028 = vpack.c.bf16 %v6011, %v6012
      %v6029 = vpack.c.bf16 %v6009, %v6010
      %v6030 = vpack.c.bf16 %v6007, %v6008
      %v6031 = vpack.c.bf16 %v6005, %v6006
      %v6032 = vpack.c.bf16 %v6003, %v6004
      %v6033 = vpack.c.bf16 %v6001, %v6002
      %v6034 = vpack.c.bf16 %v5999, %v6000
      %v6035 = vpack.c.bf16 %v5997, %v5998
      %v6036 = vpack.c.bf16 %v5995, %v5996
      %v6037 = vpack.c.bf16 %v5993, %v5994
      %v6038 = vpack.c.bf16 %v5991, %v5992
      %v6039 = vpack.c.bf16 %v5989, %v5990
      %v6040 = vpack.c.bf16 %v5987, %v5988
      %v6041 = vpack.c.bf16 %v5985, %v5986
      %v6042 = vpack.c.bf16 %v5983, %v5984
      %v6043 = vpack.c.bf16 %v5981, %v5982
      %v6044 = vpack.c.bf16 %v5979, %v5980
      %v6045 = vpack.c.bf16 %v5977, %v5978
      %v6046 = vpack.c.bf16 %v5975, %v5976
      %v6047 = vpack.c.bf16 %v5973, %v5974
      %v6048 = vpack.c.bf16 %v5971, %v5972
      %v6049 = vpack.c.bf16 %v5969, %v5970
      %v6050 = vpack.c.bf16 %v5967, %v5968
      %v6051 = vpack.c.bf16 %v5965, %v5966
      %v6052 = vpack.c.bf16 %v5963, %v5964
      %v6053 = vpack.c.bf16 %v5961, %v5962
      %v6054 = vpack.c.bf16 %v5959, %v5960
      %v6055 = vpack.c.bf16 %v5957, %v5958
      %v6056 = vpack.c.bf16 %v5955, %v5956
      %v6057 = vpack.c.bf16 %v5953, %v5954
      %v6058 = vpack.c.bf16 %v5951, %v5952
      %v6059 = vpack.c.bf16 %v5949, %v5950
      %v6060 = vpack.c.bf16 %v5947, %v5948
      %v6061 = vpack.c.bf16 %v5945, %v5946
      %v6062 = vpack.c.bf16 %v5943, %v5944
      %6063 = vst [vmem:[#allocation2] sm:$0xff] %v6023
      %6064 = vst [vmem:[#allocation2 + $0x18] sm:$0xff] %v6024
      %6065 = vst [vmem:[#allocation2 + $0x30] sm:$0xff] %v6025
      %6066 = vst [vmem:[#allocation2 + $0x48] sm:$0xff] %v6026
      %6067 = vst [vmem:[#allocation2 + $0x60] sm:$0xff] %v6027
      %6068 = vst [vmem:[#allocation2 + $0x78] sm:$0xff] %v6028
      %6069 = vst [vmem:[#allocation2 + $0x90] sm:$0xff] %v6029
      %6070 = vst [vmem:[#allocation2 + $0xa8] sm:$0xff] %v6030
      %6071 = vst [vmem:[#allocation2 + $0xc0] sm:$0xff] %v6031
      %6072 = vst [vmem:[#allocation2 + $0xd8] sm:$0xff] %v6032
      %6073 = vst [vmem:[#allocation2 + $0xf0] sm:$0xff] %v6033
      %6074 = vst [vmem:[#allocation2 + $0x108] sm:$0xff] %v6034
      %6075 = vst [vmem:[#allocation2 + $0x120] sm:$0xff] %v6035
      %6076 = vst [vmem:[#allocation2 + $0x138] sm:$0xff] %v6036
      %6077 = vst [vmem:[#allocation2 + $0x150] sm:$0xff] %v6037
      %6078 = vst [vmem:[#allocation2 + $0x168] sm:$0xff] %v6038
      %6079 = vst [vmem:[#allocation2 + $0x180] sm:$0xff] %v6039
      %6080 = vst [vmem:[#allocation2 + $0x198] sm:$0xff] %v6040
      %6081 = vst [vmem:[#allocation2 + $0x1b0] sm:$0xff] %v6041
      %6082 = vst [vmem:[#allocation2 + $0x1c8] sm:$0xff] %v6042
      %6083 = vst [vmem:[#allocation2 + $0x1e0] sm:$0xff] %v6043
      %6084 = vst [vmem:[#allocation2 + $0x1f8] sm:$0xff] %v6044
      %6085 = vst [vmem:[#allocation2 + $0x210] sm:$0xff] %v6045
      %6086 = vst [vmem:[#allocation2 + $0x228] sm:$0xff] %v6046
      %6087 = vst [vmem:[#allocation2 + $0x240] sm:$0xff] %v6047
      %6088 = vst [vmem:[#allocation2 + $0x258] sm:$0xff] %v6048
      %6089 = vst [vmem:[#allocation2 + $0x270] sm:$0xff] %v6049
      %6090 = vst [vmem:[#allocation2 + $0x288] sm:$0xff] %v6050
      %6091 = vst [vmem:[#allocation2 + $0x2a0] sm:$0xff] %v6051
      %6092 = vst [vmem:[#allocation2 + $0x2b8] sm:$0xff] %v6052
      %6093 = vst [vmem:[#allocation2 + $0x2d0] sm:$0xff] %v6053
      %6094 = vst [vmem:[#allocation2 + $0x2e8] sm:$0xff] %v6054
      %6095 = vst [vmem:[#allocation2 + $0x300] sm:$0xff] %v6055
      %6096 = vst [vmem:[#allocation2 + $0x318] sm:$0xff] %v6056
      %6097 = vst [vmem:[#allocation2 + $0x330] sm:$0xff] %v6057
      %6098 = vst [vmem:[#allocation2 + $0x348] sm:$0xff] %v6058
      %6099 = vst [vmem:[#allocation2 + $0x360] sm:$0xff] %v6059
      %6100 = vst [vmem:[#allocation2 + $0x378] sm:$0xff] %v6060
      %6101 = vst [vmem:[#allocation2 + $0x390] sm:$0xff] %v6061
      %6102 = vst [vmem:[#allocation2 + $0x3a8] sm:$0xff] %v6062
      %v6103 = vpack.c.bf16 %v5784, %v5783
      %v6104 = vpack.c.bf16 %v5786, %v5785
      %v6105 = vpack.c.bf16 %v5788, %v5787
      %v6106 = vpack.c.bf16 %v5790, %v5789
      %v6107 = vpack.c.bf16 %v5792, %v5791
      %v6108 = vpack.c.bf16 %v5794, %v5793
      %v6109 = vpack.c.bf16 %v5796, %v5795
      %v6110 = vpack.c.bf16 %v5798, %v5797
      %v6111 = vpack.c.bf16 %v5800, %v5799
      %v6112 = vpack.c.bf16 %v5802, %v5801
      %v6113 = vpack.c.bf16 %v5804, %v5803
      %v6114 = vpack.c.bf16 %v5806, %v5805
      %v6115 = vpack.c.bf16 %v5808, %v5807
      %v6116 = vpack.c.bf16 %v5810, %v5809
      %v6117 = vpack.c.bf16 %v5812, %v5811
      %v6118 = vpack.c.bf16 %v5814, %v5813
      %v6119 = vpack.c.bf16 %v5816, %v5815
      %v6120 = vpack.c.bf16 %v5818, %v5817
      %v6121 = vpack.c.bf16 %v5820, %v5819
      %v6122 = vpack.c.bf16 %v5822, %v5821
      %v6123 = vpack.c.bf16 %v5824, %v5823
      %v6124 = vpack.c.bf16 %v5826, %v5825
      %v6125 = vpack.c.bf16 %v5828, %v5827
      %v6126 = vpack.c.bf16 %v5830, %v5829
      %v6127 = vpack.c.bf16 %v5832, %v5831
      %v6128 = vpack.c.bf16 %v5834, %v5833
      %v6129 = vpack.c.bf16 %v5836, %v5835
      %v6130 = vpack.c.bf16 %v5838, %v5837
      %v6131 = vpack.c.bf16 %v5840, %v5839
      %v6132 = vpack.c.bf16 %v5842, %v5841
      %v6133 = vpack.c.bf16 %v5844, %v5843
      %v6134 = vpack.c.bf16 %v5846, %v5845
      %v6135 = vpack.c.bf16 %v5848, %v5847
      %v6136 = vpack.c.bf16 %v5850, %v5849
      %v6137 = vpack.c.bf16 %v5852, %v5851
      %v6138 = vpack.c.bf16 %v5854, %v5853
      %v6139 = vpack.c.bf16 %v5856, %v5855
      %v6140 = vpack.c.bf16 %v5858, %v5857
      %v6141 = vpack.c.bf16 %v5860, %v5859
      %v6142 = vpack.c.bf16 %v5862, %v5861
      %6143 = vst [vmem:[#allocation2 + $0x8] sm:$0xff] %v6103
      %6144 = vst [vmem:[#allocation2 + $0x20] sm:$0xff] %v6104
      %6145 = vst [vmem:[#allocation2 + $0x38] sm:$0xff] %v6105
      %6146 = vst [vmem:[#allocation2 + $0x50] sm:$0xff] %v6106
      %6147 = vst [vmem:[#allocation2 + $0x68] sm:$0xff] %v6107
      %6148 = vst [vmem:[#allocation2 + $0x80] sm:$0xff] %v6108
      %6149 = vst [vmem:[#allocation2 + $0x98] sm:$0xff] %v6109
      %6150 = vst [vmem:[#allocation2 + $0xb0] sm:$0xff] %v6110
      %6151 = vst [vmem:[#allocation2 + $0xc8] sm:$0xff] %v6111
      %6152 = vst [vmem:[#allocation2 + $0xe0] sm:$0xff] %v6112
      %6153 = vst [vmem:[#allocation2 + $0xf8] sm:$0xff] %v6113
      %6154 = vst [vmem:[#allocation2 + $0x110] sm:$0xff] %v6114
      %6155 = vst [vmem:[#allocation2 + $0x128] sm:$0xff] %v6115
      %6156 = vst [vmem:[#allocation2 + $0x140] sm:$0xff] %v6116
      %6157 = vst [vmem:[#allocation2 + $0x158] sm:$0xff] %v6117
      %6158 = vst [vmem:[#allocation2 + $0x170] sm:$0xff] %v6118
      %6159 = vst [vmem:[#allocation2 + $0x188] sm:$0xff] %v6119
      %6160 = vst [vmem:[#allocation2 + $0x1a0] sm:$0xff] %v6120
      %6161 = vst [vmem:[#allocation2 + $0x1b8] sm:$0xff] %v6121
      %6162 = vst [vmem:[#allocation2 + $0x1d0] sm:$0xff] %v6122
      %6163 = vst [vmem:[#allocation2 + $0x1e8] sm:$0xff] %v6123
      %6164 = vst [vmem:[#allocation2 + $0x200] sm:$0xff] %v6124
      %6165 = vst [vmem:[#allocation2 + $0x218] sm:$0xff] %v6125
      %6166 = vst [vmem:[#allocation2 + $0x230] sm:$0xff] %v6126
      %6167 = vst [vmem:[#allocation2 + $0x248] sm:$0xff] %v6127
      %6168 = vst [vmem:[#allocation2 + $0x260] sm:$0xff] %v6128
      %6169 = vst [vmem:[#allocation2 + $0x278] sm:$0xff] %v6129
      %6170 = vst [vmem:[#allocation2 + $0x290] sm:$0xff] %v6130
      %6171 = vst [vmem:[#allocation2 + $0x2a8] sm:$0xff] %v6131
      %6172 = vst [vmem:[#allocation2 + $0x2c0] sm:$0xff] %v6132
      %6173 = vst [vmem:[#allocation2 + $0x2d8] sm:$0xff] %v6133
      %6174 = vst [vmem:[#allocation2 + $0x2f0] sm:$0xff] %v6134
      %6175 = vst [vmem:[#allocation2 + $0x308] sm:$0xff] %v6135
      %6176 = vst [vmem:[#allocation2 + $0x320] sm:$0xff] %v6136
      %6177 = vst [vmem:[#allocation2 + $0x338] sm:$0xff] %v6137
      %6178 = vst [vmem:[#allocation2 + $0x350] sm:$0xff] %v6138
      %6179 = vst [vmem:[#allocation2 + $0x368] sm:$0xff] %v6139
      %6180 = vst [vmem:[#allocation2 + $0x380] sm:$0xff] %v6140
      %6181 = vst [vmem:[#allocation2 + $0x398] sm:$0xff] %v6141
      %6182 = vst [vmem:[#allocation2 + $0x3b0] sm:$0xff] %v6142
      %v6183 = vrot.slane %v5783, 1
      %v6184 = vrot.slane %v5784, 1
      %v6185 = vrot.slane %v5785, 1
      %v6186 = vrot.slane %v5786, 1
      %v6187 = vrot.slane %v5787, 1
      %v6188 = vrot.slane %v5788, 1
      %v6189 = vrot.slane %v5789, 1
      %v6190 = vrot.slane %v5790, 1
      %v6191 = vrot.slane %v5791, 1
      %v6192 = vrot.slane %v5792, 1
      %v6193 = vrot.slane %v5793, 1
      %v6194 = vrot.slane %v5794, 1
      %v6195 = vrot.slane %v5795, 1
      %v6196 = vrot.slane %v5796, 1
      %v6197 = vrot.slane %v5797, 1
      %v6198 = vrot.slane %v5798, 1
      %v6199 = vrot.slane %v5799, 1
      %v6200 = vrot.slane %v5800, 1
      %v6201 = vrot.slane %v5801, 1
      %v6202 = vrot.slane %v5802, 1
      %v6203 = vrot.slane %v5803, 1
      %v6204 = vrot.slane %v5804, 1
      %v6205 = vrot.slane %v5805, 1
      %v6206 = vrot.slane %v5806, 1
      %v6207 = vrot.slane %v5807, 1
      %v6208 = vrot.slane %v5808, 1
      %v6209 = vrot.slane %v5809, 1
      %v6210 = vrot.slane %v5810, 1
      %v6211 = vrot.slane %v5811, 1
      %v6212 = vrot.slane %v5812, 1
      %v6213 = vrot.slane %v5813, 1
      %v6214 = vrot.slane %v5814, 1
      %v6215 = vrot.slane %v5815, 1
      %v6216 = vrot.slane %v5816, 1
      %v6217 = vrot.slane %v5817, 1
      %v6218 = vrot.slane %v5818, 1
      %v6219 = vrot.slane %v5819, 1
      %v6220 = vrot.slane %v5820, 1
      %v6221 = vrot.slane %v5821, 1
      %v6222 = vrot.slane %v5822, 1
      %v6223 = vrot.slane %v5823, 1
      %v6224 = vrot.slane %v5824, 1
      %v6225 = vrot.slane %v5825, 1
      %v6226 = vrot.slane %v5826, 1
      %v6227 = vrot.slane %v5827, 1
      %v6228 = vrot.slane %v5828, 1
      %v6229 = vrot.slane %v5829, 1
      %v6230 = vrot.slane %v5830, 1
      %v6231 = vrot.slane %v5831, 1
      %v6232 = vrot.slane %v5832, 1
      %v6233 = vrot.slane %v5833, 1
      %v6234 = vrot.slane %v5834, 1
      %v6235 = vrot.slane %v5835, 1
      %v6236 = vrot.slane %v5836, 1
      %v6237 = vrot.slane %v5837, 1
      %v6238 = vrot.slane %v5838, 1
      %v6239 = vrot.slane %v5839, 1
      %v6240 = vrot.slane %v5840, 1
      %v6241 = vrot.slane %v5841, 1
      %v6242 = vrot.slane %v5842, 1
      %v6243 = vrot.slane %v5843, 1
      %v6244 = vrot.slane %v5844, 1
      %v6245 = vrot.slane %v5845, 1
      %v6246 = vrot.slane %v5846, 1
      %v6247 = vrot.slane %v5847, 1
      %v6248 = vrot.slane %v5848, 1
      %v6249 = vrot.slane %v5849, 1
      %v6250 = vrot.slane %v5850, 1
      %v6251 = vrot.slane %v5851, 1
      %v6252 = vrot.slane %v5852, 1
      %v6253 = vrot.slane %v5853, 1
      %v6254 = vrot.slane %v5854, 1
      %v6255 = vrot.slane %v5855, 1
      %v6256 = vrot.slane %v5856, 1
      %v6257 = vrot.slane %v5857, 1
      %v6258 = vrot.slane %v5858, 1
      %v6259 = vrot.slane %v5859, 1
      %v6260 = vrot.slane %v5860, 1
      %v6261 = vrot.slane %v5861, 1
      %v6262 = vrot.slane %v5862, 1
      %v6263 = vsel %vm2055, %v6261, %v6262
      %v6264 = vsel %vm2055, %v6260, %v6261
      %v6265 = vsel %vm2055, %v6259, %v6260
      %v6266 = vsel %vm2055, %v6258, %v6259
      %v6267 = vsel %vm2055, %v6257, %v6258
      %v6268 = vsel %vm2055, %v6256, %v6257
      %v6269 = vsel %vm2055, %v6255, %v6256
      %v6270 = vsel %vm2055, %v6254, %v6255
      %v6271 = vsel %vm2055, %v6253, %v6254
      %v6272 = vsel %vm2055, %v6252, %v6253
      %v6273 = vsel %vm2055, %v6251, %v6252
      %v6274 = vsel %vm2055, %v6250, %v6251
      %v6275 = vsel %vm2055, %v6249, %v6250
      %v6276 = vsel %vm2055, %v6248, %v6249
      %v6277 = vsel %vm2055, %v6247, %v6248
      %v6278 = vsel %vm2055, %v6246, %v6247
      %v6279 = vsel %vm2055, %v6245, %v6246
      %v6280 = vsel %vm2055, %v6244, %v6245
      %v6281 = vsel %vm2055, %v6243, %v6244
      %v6282 = vsel %vm2055, %v6242, %v6243
      %v6283 = vsel %vm2055, %v6241, %v6242
      %v6284 = vsel %vm2055, %v6240, %v6241
      %v6285 = vsel %vm2055, %v6239, %v6240
      %v6286 = vsel %vm2055, %v6238, %v6239
      %v6287 = vsel %vm2055, %v6237, %v6238
      %v6288 = vsel %vm2055, %v6236, %v6237
      %v6289 = vsel %vm2055, %v6235, %v6236
      %v6290 = vsel %vm2055, %v6234, %v6235
      %v6291 = vsel %vm2055, %v6233, %v6234
      %v6292 = vsel %vm2055, %v6232, %v6233
      %v6293 = vsel %vm2055, %v6231, %v6232
      %v6294 = vsel %vm2055, %v6230, %v6231
      %v6295 = vsel %vm2055, %v6229, %v6230
      %v6296 = vsel %vm2055, %v6228, %v6229
      %v6297 = vsel %vm2055, %v6227, %v6228
      %v6298 = vsel %vm2055, %v6226, %v6227
      %v6299 = vsel %vm2055, %v6225, %v6226
      %v6300 = vsel %vm2055, %v6224, %v6225
      %v6301 = vsel %vm2055, %v6223, %v6224
      %v6302 = vsel %vm2055, %v6222, %v6223
      %v6303 = vsel %vm2055, %v6221, %v6222
      %v6304 = vsel %vm2055, %v6220, %v6221
      %v6305 = vsel %vm2055, %v6219, %v6220
      %v6306 = vsel %vm2055, %v6218, %v6219
      %v6307 = vsel %vm2055, %v6217, %v6218
      %v6308 = vsel %vm2055, %v6216, %v6217
      %v6309 = vsel %vm2055, %v6215, %v6216
      %v6310 = vsel %vm2055, %v6214, %v6215
      %v6311 = vsel %vm2055, %v6213, %v6214
      %v6312 = vsel %vm2055, %v6212, %v6213
      %v6313 = vsel %vm2055, %v6211, %v6212
      %v6314 = vsel %vm2055, %v6210, %v6211
      %v6315 = vsel %vm2055, %v6209, %v6210
      %v6316 = vsel %vm2055, %v6208, %v6209
      %v6317 = vsel %vm2055, %v6207, %v6208
      %v6318 = vsel %vm2055, %v6206, %v6207
      %v6319 = vsel %vm2055, %v6205, %v6206
      %v6320 = vsel %vm2055, %v6204, %v6205
      %v6321 = vsel %vm2055, %v6203, %v6204
      %v6322 = vsel %vm2055, %v6202, %v6203
      %v6323 = vsel %vm2055, %v6201, %v6202
      %v6324 = vsel %vm2055, %v6200, %v6201
      %v6325 = vsel %vm2055, %v6199, %v6200
      %v6326 = vsel %vm2055, %v6198, %v6199
      %v6327 = vsel %vm2055, %v6197, %v6198
      %v6328 = vsel %vm2055, %v6196, %v6197
      %v6329 = vsel %vm2055, %v6195, %v6196
      %v6330 = vsel %vm2055, %v6194, %v6195
      %v6331 = vsel %vm2055, %v6193, %v6194
      %v6332 = vsel %vm2055, %v6192, %v6193
      %v6333 = vsel %vm2055, %v6191, %v6192
      %v6334 = vsel %vm2055, %v6190, %v6191
      %v6335 = vsel %vm2055, %v6189, %v6190
      %v6336 = vsel %vm2055, %v6188, %v6189
      %v6337 = vsel %vm2055, %v6187, %v6188
      %v6338 = vsel %vm2055, %v6186, %v6187
      %v6339 = vsel %vm2055, %v6185, %v6186
      %v6340 = vsel %vm2055, %v6184, %v6185
      %v6341 = vsel %vm2055, %v6183, %v6184
      %v6342 = vsel %vm2055, %v6262, %v6183
      %v6343 = vpack.c.bf16 %v6340, %v6341
      %v6344 = vpack.c.bf16 %v6338, %v6339
      %v6345 = vpack.c.bf16 %v6336, %v6337
      %v6346 = vpack.c.bf16 %v6334, %v6335
      %v6347 = vpack.c.bf16 %v6332, %v6333
      %v6348 = vpack.c.bf16 %v6330, %v6331
      %v6349 = vpack.c.bf16 %v6328, %v6329
      %v6350 = vpack.c.bf16 %v6326, %v6327
      %v6351 = vpack.c.bf16 %v6324, %v6325
      %v6352 = vpack.c.bf16 %v6322, %v6323
      %v6353 = vpack.c.bf16 %v6320, %v6321
      %v6354 = vpack.c.bf16 %v6318, %v6319
      %v6355 = vpack.c.bf16 %v6316, %v6317
      %v6356 = vpack.c.bf16 %v6314, %v6315
      %v6357 = vpack.c.bf16 %v6312, %v6313
      %v6358 = vpack.c.bf16 %v6310, %v6311
      %v6359 = vpack.c.bf16 %v6308, %v6309
      %v6360 = vpack.c.bf16 %v6306, %v6307
      %v6361 = vpack.c.bf16 %v6304, %v6305
      %v6362 = vpack.c.bf16 %v6302, %v6303
      %v6363 = vpack.c.bf16 %v6300, %v6301
      %v6364 = vpack.c.bf16 %v6298, %v6299
      %v6365 = vpack.c.bf16 %v6296, %v6297
      %v6366 = vpack.c.bf16 %v6294, %v6295
      %v6367 = vpack.c.bf16 %v6292, %v6293
      %v6368 = vpack.c.bf16 %v6290, %v6291
      %v6369 = vpack.c.bf16 %v6288, %v6289
      %v6370 = vpack.c.bf16 %v6286, %v6287
      %v6371 = vpack.c.bf16 %v6284, %v6285
      %v6372 = vpack.c.bf16 %v6282, %v6283
      %v6373 = vpack.c.bf16 %v6280, %v6281
      %v6374 = vpack.c.bf16 %v6278, %v6279
      %v6375 = vpack.c.bf16 %v6276, %v6277
      %v6376 = vpack.c.bf16 %v6274, %v6275
      %v6377 = vpack.c.bf16 %v6272, %v6273
      %v6378 = vpack.c.bf16 %v6270, %v6271
      %v6379 = vpack.c.bf16 %v6268, %v6269
      %v6380 = vpack.c.bf16 %v6266, %v6267
      %v6381 = vpack.c.bf16 %v6264, %v6265
      %v6382 = vpack.c.bf16 %v6342, %v6263
      %6383 = vst [vmem:[#allocation2 + $0x10] sm:$0xff] %v6343
      %6384 = vst [vmem:[#allocation2 + $0x28] sm:$0xff] %v6344
      %6385 = vst [vmem:[#allocation2 + $0x40] sm:$0xff] %v6345
      %6386 = vst [vmem:[#allocation2 + $0x58] sm:$0xff] %v6346
      %6387 = vst [vmem:[#allocation2 + $0x70] sm:$0xff] %v6347
      %6388 = vst [vmem:[#allocation2 + $0x88] sm:$0xff] %v6348
      %6389 = vst [vmem:[#allocation2 + $0xa0] sm:$0xff] %v6349
      %6390 = vst [vmem:[#allocation2 + $0xb8] sm:$0xff] %v6350
      %6391 = vst [vmem:[#allocation2 + $0xd0] sm:$0xff] %v6351
      %6392 = vst [vmem:[#allocation2 + $0xe8] sm:$0xff] %v6352
      %6393 = vst [vmem:[#allocation2 + $0x100] sm:$0xff] %v6353
      %6394 = vst [vmem:[#allocation2 + $0x118] sm:$0xff] %v6354
      %6395 = vst [vmem:[#allocation2 + $0x130] sm:$0xff] %v6355
      %6396 = vst [vmem:[#allocation2 + $0x148] sm:$0xff] %v6356
      %6397 = vst [vmem:[#allocation2 + $0x160] sm:$0xff] %v6357
      %6398 = vst [vmem:[#allocation2 + $0x178] sm:$0xff] %v6358
      %6399 = vst [vmem:[#allocation2 + $0x190] sm:$0xff] %v6359
      %6400 = vst [vmem:[#allocation2 + $0x1a8] sm:$0xff] %v6360
      %6401 = vst [vmem:[#allocation2 + $0x1c0] sm:$0xff] %v6361
      %6402 = vst [vmem:[#allocation2 + $0x1d8] sm:$0xff] %v6362
      %6403 = vst [vmem:[#allocation2 + $0x1f0] sm:$0xff] %v6363
      %6404 = vst [vmem:[#allocation2 + $0x208] sm:$0xff] %v6364
      %6405 = vst [vmem:[#allocation2 + $0x220] sm:$0xff] %v6365
      %6406 = vst [vmem:[#allocation2 + $0x238] sm:$0xff] %v6366
      %6407 = vst [vmem:[#allocation2 + $0x250] sm:$0xff] %v6367
      %6408 = vst [vmem:[#allocation2 + $0x268] sm:$0xff] %v6368
      %6409 = vst [vmem:[#allocation2 + $0x280] sm:$0xff] %v6369
      %6410 = vst [vmem:[#allocation2 + $0x298] sm:$0xff] %v6370
      %6411 = vst [vmem:[#allocation2 + $0x2b0] sm:$0xff] %v6371
      %6412 = vst [vmem:[#allocation2 + $0x2c8] sm:$0xff] %v6372
      %6413 = vst [vmem:[#allocation2 + $0x2e0] sm:$0xff] %v6373
      %6414 = vst [vmem:[#allocation2 + $0x2f8] sm:$0xff] %v6374
      %6415 = vst [vmem:[#allocation2 + $0x310] sm:$0xff] %v6375
      %6416 = vst [vmem:[#allocation2 + $0x328] sm:$0xff] %v6376
      %6417 = vst [vmem:[#allocation2 + $0x340] sm:$0xff] %v6377
      %6418 = vst [vmem:[#allocation2 + $0x358] sm:$0xff] %v6378
      %6419 = vst [vmem:[#allocation2 + $0x370] sm:$0xff] %v6379
      %6420 = vst [vmem:[#allocation2 + $0x388] sm:$0xff] %v6380
      %6421 = vst [vmem:[#allocation2 + $0x3a0] sm:$0xff] %v6381
      %6422 = vst [vmem:[#allocation2 + $0x3b8] sm:$0xff] %v6382
      %v6423 = vld [vmem:[#allocation2 + $0x30] sm:$0xff]
      %v6424 = vld [vmem:[#allocation2 + $0x38] sm:$0xff]
      %v6425 = vld [vmem:[#allocation2 + $0x40] sm:$0xff]
      %v6426 = vld [vmem:[#allocation2 + $0x48] sm:$0xff]
      %v6427 = vld [vmem:[#allocation2 + $0x50] sm:$0xff]
      %v6428 = vld [vmem:[#allocation2 + $0x58] sm:$0xff]
      %v6429 = vld [vmem:[#allocation2 + $0x60] sm:$0xff]
      %v6430 = vld [vmem:[#allocation2 + $0x68] sm:$0xff]
      %v6431 = vld [vmem:[#allocation2 + $0x70] sm:$0xff]
      %v6432 = vld [vmem:[#allocation2 + $0x78] sm:$0xff]
      %v6433 = vld [vmem:[#allocation2 + $0x80] sm:$0xff]
      %v6434 = vld [vmem:[#allocation2 + $0x88] sm:$0xff]
      %v6435 = vld [vmem:[#allocation2 + $0x90] sm:$0xff]
      %v6436 = vld [vmem:[#allocation2 + $0x98] sm:$0xff]
      %v6437 = vld [vmem:[#allocation2 + $0xa0] sm:$0xff]
      %v6438 = vld [vmem:[#allocation2 + $0xa8] sm:$0xff]
      %v6439 = vld [vmem:[#allocation2 + $0xb0] sm:$0xff]
      %v6440 = vld [vmem:[#allocation2 + $0xb8] sm:$0xff]
      %v6441 = vld [vmem:[#allocation2 + $0xc0] sm:$0xff]
      %v6442 = vld [vmem:[#allocation2 + $0xc8] sm:$0xff]
      %v6443 = vld [vmem:[#allocation2 + $0xd0] sm:$0xff]
      %v6444 = vld [vmem:[#allocation2 + $0xd8] sm:$0xff]
      %v6445 = vld [vmem:[#allocation2 + $0xe0] sm:$0xff]
      %v6446 = vld [vmem:[#allocation2 + $0xe8] sm:$0xff]
      %v6447 = vld [vmem:[#allocation2 + $0xf0] sm:$0xff]
      %v6448 = vld [vmem:[#allocation2 + $0xf8] sm:$0xff]
      %v6449 = vld [vmem:[#allocation2 + $0x100] sm:$0xff]
      %v6450 = vld [vmem:[#allocation2 + $0x108] sm:$0xff]
      %v6451 = vld [vmem:[#allocation2 + $0x110] sm:$0xff]
      %v6452 = vld [vmem:[#allocation2 + $0x118] sm:$0xff]
      %v6453 = vld [vmem:[#allocation2 + $0x120] sm:$0xff]
      %v6454 = vld [vmem:[#allocation2 + $0x128] sm:$0xff]
      %v6455 = vld [vmem:[#allocation2 + $0x130] sm:$0xff]
      %v6456 = vld [vmem:[#allocation2 + $0x138] sm:$0xff]
      %v6457 = vld [vmem:[#allocation2 + $0x140] sm:$0xff]
      %v6458 = vld [vmem:[#allocation2 + $0x148] sm:$0xff]
      %v6459 = vld [vmem:[#allocation2 + $0x150] sm:$0xff]
      %v6460 = vld [vmem:[#allocation2 + $0x158] sm:$0xff]
      %v6461 = vld [vmem:[#allocation2 + $0x160] sm:$0xff]
      %v6462 = vld [vmem:[#allocation2 + $0x168] sm:$0xff]
      %v6463 = vld [vmem:[#allocation2 + $0x170] sm:$0xff]
      %v6464 = vld [vmem:[#allocation2 + $0x178] sm:$0xff]
      %v6465 = vld [vmem:[#allocation2 + $0x180] sm:$0xff]
      %v6466 = vld [vmem:[#allocation2 + $0x188] sm:$0xff]
      %v6467 = vld [vmem:[#allocation2 + $0x190] sm:$0xff]
      %v6468 = vld [vmem:[#allocation2 + $0x198] sm:$0xff]
      %v6469 = vld [vmem:[#allocation2 + $0x1a0] sm:$0xff]
      %v6470 = vld [vmem:[#allocation2 + $0x1a8] sm:$0xff]
      %v6471 = vld [vmem:[#allocation2 + $0x1b0] sm:$0xff]
      %v6472 = vld [vmem:[#allocation2 + $0x1b8] sm:$0xff]
      %v6473 = vld [vmem:[#allocation2 + $0x1c0] sm:$0xff]
      %v6474 = vld [vmem:[#allocation2 + $0x1c8] sm:$0xff]
      %v6475 = vld [vmem:[#allocation2 + $0x1d0] sm:$0xff]
      %v6476 = vld [vmem:[#allocation2 + $0x1d8] sm:$0xff]
      %v6477 = vld [vmem:[#allocation2 + $0x1e0] sm:$0xff]
      %v6478 = vld [vmem:[#allocation2 + $0x1e8] sm:$0xff]
      %v6479 = vld [vmem:[#allocation2 + $0x1f0] sm:$0xff]
      %v6480 = vld [vmem:[#allocation2 + $0x1f8] sm:$0xff]
      %v6481 = vld [vmem:[#allocation2 + $0x200] sm:$0xff]
      %v6482 = vld [vmem:[#allocation2 + $0x208] sm:$0xff]
      %v6483 = vld [vmem:[#allocation2 + $0x210] sm:$0xff]
      %v6484 = vld [vmem:[#allocation2 + $0x218] sm:$0xff]
      %v6485 = vld [vmem:[#allocation2 + $0x220] sm:$0xff]
      %v6486 = vld [vmem:[#allocation2 + $0x228] sm:$0xff]
      %v6487 = vld [vmem:[#allocation2 + $0x230] sm:$0xff]
      %v6488 = vld [vmem:[#allocation2 + $0x238] sm:$0xff]
      %v6489 = vld [vmem:[#allocation2 + $0x240] sm:$0xff]
      %v6490 = vld [vmem:[#allocation2 + $0x248] sm:$0xff]
      %v6491 = vld [vmem:[#allocation2 + $0x250] sm:$0xff]
      %v6492 = vld [vmem:[#allocation2 + $0x258] sm:$0xff]
      %v6493 = vld [vmem:[#allocation2 + $0x260] sm:$0xff]
      %v6494 = vld [vmem:[#allocation2 + $0x268] sm:$0xff]
      %v6495 = vld [vmem:[#allocation2 + $0x270] sm:$0xff]
      %v6496 = vld [vmem:[#allocation2 + $0x278] sm:$0xff]
      %v6497 = vld [vmem:[#allocation2 + $0x280] sm:$0xff]
      %v6498 = vld [vmem:[#allocation2 + $0x288] sm:$0xff]
      %v6499 = vld [vmem:[#allocation2 + $0x290] sm:$0xff]
      %v6500 = vld [vmem:[#allocation2 + $0x298] sm:$0xff]
      %v6501 = vld [vmem:[#allocation2 + $0x2a0] sm:$0xff]
      %v6502 = vld [vmem:[#allocation2 + $0x2a8] sm:$0xff]
      %v6503 = vld [vmem:[#allocation2 + $0x2b0] sm:$0xff]
      %v6504 = vld [vmem:[#allocation2 + $0x2b8] sm:$0xff]
      %v6505 = vld [vmem:[#allocation2 + $0x2c0] sm:$0xff]
      %v6506 = vld [vmem:[#allocation2 + $0x2c8] sm:$0xff]
      %v6507 = vld [vmem:[#allocation2 + $0x2d0] sm:$0xff]
      %v6508 = vld [vmem:[#allocation2 + $0x2d8] sm:$0xff]
      %v6509 = vld [vmem:[#allocation2 + $0x2e0] sm:$0xff]
      %v6510 = vld [vmem:[#allocation2 + $0x2e8] sm:$0xff]
      %v6511 = vld [vmem:[#allocation2 + $0x2f0] sm:$0xff]
      %v6512 = vld [vmem:[#allocation2 + $0x2f8] sm:$0xff]
      %v6513 = vld [vmem:[#allocation2 + $0x300] sm:$0xff]
      %v6514 = vld [vmem:[#allocation2 + $0x308] sm:$0xff]
      %v6515 = vld [vmem:[#allocation2 + $0x310] sm:$0xff]
      %v6516 = vld [vmem:[#allocation2 + $0x318] sm:$0xff]
      %v6517 = vld [vmem:[#allocation2 + $0x320] sm:$0xff]
      %v6518 = vld [vmem:[#allocation2 + $0x328] sm:$0xff]
      %v6519 = vld [vmem:[%s4] sm:$0xf]
      %v6520 = vld [vmem:[%s4 + $0x4] sm:$0xf]
      %v6521 = vld [vmem:[%s4 + $0x8] sm:$0xf]
      %v6522 = vld [vmem:[%s4 + $0xc] sm:$0xf]
      %v6523 = vld [vmem:[%s4 + $0x10] sm:$0xf]
      %v6524 = vld [vmem:[%s4 + $0x14] sm:$0xf]
      %v6525 = vld [vmem:[%s4 + $0x18] sm:$0xf]
      %v6526 = vld [vmem:[%s4 + $0x1c] sm:$0xf]
      %v6527 = vld [vmem:[%s4 + $0x20] sm:$0xf]
      %v6528 = vld [vmem:[%s4 + $0x24] sm:$0xf]
      %v6529 = vld [vmem:[%s4 + $0x28] sm:$0xf]
      %v6530 = vld [vmem:[%s4 + $0x2c] sm:$0xf]
      %v6531 = vld [vmem:[%s4 + $0x30] sm:$0xf]
      %v6532 = vld [vmem:[%s4 + $0x34] sm:$0xf]
      %v6533 = vld [vmem:[%s4 + $0x38] sm:$0xf]
      %v6534 = vld [vmem:[%s4 + $0x3c] sm:$0xf]
      %v6535 = vld [vmem:[%s4 + $0x40] sm:$0xf]
      %v6536 = vld [vmem:[%s4 + $0x44] sm:$0xf]
      %v6537 = vld [vmem:[%s4 + $0x48] sm:$0xf]
      %v6538 = vld [vmem:[%s4 + $0x4c] sm:$0xf]
      %v6539 = vld [vmem:[%s4 + $0x50] sm:$0xf]
      %v6540 = vld [vmem:[%s4 + $0x54] sm:$0xf]
      %v6541 = vld [vmem:[%s4 + $0x58] sm:$0xf]
      %v6542 = vld [vmem:[%s4 + $0x5c] sm:$0xf]
      %v6543 = vld [vmem:[%s4 + $0x60] sm:$0xf]
      %v6544 = vld [vmem:[%s4 + $0x64] sm:$0xf]
      %v6545 = vld [vmem:[%s4 + $0x68] sm:$0xf]
      %v6546 = vld [vmem:[%s4 + $0x6c] sm:$0xf]
      %v6547 = vld [vmem:[%s4 + $0x70] sm:$0xf]
      %v6548 = vld [vmem:[%s4 + $0x74] sm:$0xf]
      %v6549 = vld [vmem:[%s4 + $0x78] sm:$0xf]
      %v6550 = vld [vmem:[%s4 + $0x7c] sm:$0xf]
      %v6551 = vld [vmem:[%s4 + $0x80] sm:$0xf]
      %v6552 = vld [vmem:[%s4 + $0x84] sm:$0xf]
      %v6553 = vld [vmem:[%s4 + $0x88] sm:$0xf]
      %v6554 = vld [vmem:[%s4 + $0x8c] sm:$0xf]
      %v6555 = vld [vmem:[%s4 + $0x90] sm:$0xf]
      %v6556 = vld [vmem:[%s4 + $0x94] sm:$0xf]
      %v6557 = vld [vmem:[%s4 + $0x98] sm:$0xf]
      %v6558 = vld [vmem:[%s4 + $0x9c] sm:$0xf]
      %v6559 = vld [vmem:[%s4 + $0xa0] sm:$0xf]
      %v6560 = vld [vmem:[%s4 + $0xa4] sm:$0xf]
      %v6561 = vld [vmem:[%s4 + $0xa8] sm:$0xf]
      %v6562 = vld [vmem:[%s4 + $0xac] sm:$0xf]
      %v6563 = vld [vmem:[%s4 + $0xb0] sm:$0xf]
      %v6564 = vld [vmem:[%s4 + $0xb4] sm:$0xf]
      %v6565 = vld [vmem:[%s4 + $0xb8] sm:$0xf]
      %v6566 = vld [vmem:[%s4 + $0xbc] sm:$0xf]
      %v6567 = vld [vmem:[#allocation2 + $0x330] sm:$0xff]
      %v6568 = vld [vmem:[#allocation2 + $0x338] sm:$0xff]
      %v6569 = vld [vmem:[#allocation2 + $0x340] sm:$0xff]
      %v6570 = vld [vmem:[#allocation2 + $0x348] sm:$0xff]
      %v6571 = vld [vmem:[#allocation2 + $0x350] sm:$0xff]
      %v6572 = vld [vmem:[#allocation2 + $0x358] sm:$0xff]
      %v6573 = vld [vmem:[%s2366] sm:$0xf]
      %v6574 = vld [vmem:[%s2366 + $0x4] sm:$0xf]
      %v6575 = vld [vmem:[%s2366 + $0x8] sm:$0xf]
      %v6576 = vld [vmem:[%s2366 + $0xc] sm:$0xf]
      %v6577 = vld [vmem:[%s2366 + $0x10] sm:$0xf]
      %v6578 = vld [vmem:[%s2366 + $0x14] sm:$0xf]
      %v6579 = vld [vmem:[%s2366 + $0x18] sm:$0xf]
      %v6580 = vld [vmem:[%s2366 + $0x1c] sm:$0xf]
      %v6581 = vld [vmem:[%s2366 + $0x20] sm:$0xf]
      %v6582 = vld [vmem:[%s2366 + $0x24] sm:$0xf]
      %v6583 = vld [vmem:[%s2366 + $0x28] sm:$0xf]
      %v6584 = vld [vmem:[%s2366 + $0x2c] sm:$0xf]
      %v6585 = vld [vmem:[%s2366 + $0x30] sm:$0xf]
      %v6586 = vld [vmem:[%s2366 + $0x34] sm:$0xf]
      %v6587 = vld [vmem:[%s2366 + $0x38] sm:$0xf]
      %v6588 = vld [vmem:[%s2366 + $0x3c] sm:$0xf]
      %v6589 = vld [vmem:[%s2366 + $0x40] sm:$0xf]
      %v6590 = vld [vmem:[%s2366 + $0x44] sm:$0xf]
      %v6591 = vld [vmem:[%s2366 + $0x48] sm:$0xf]
      %v6592 = vld [vmem:[%s2366 + $0x4c] sm:$0xf]
      %v6593 = vld [vmem:[%s2366 + $0x50] sm:$0xf]
      %v6594 = vld [vmem:[%s2366 + $0x54] sm:$0xf]
      %v6595 = vld [vmem:[%s2366 + $0x58] sm:$0xf]
      %v6596 = vld [vmem:[%s2366 + $0x5c] sm:$0xf]
      %v6597 = vld [vmem:[%s2366 + $0x60] sm:$0xf]
      %v6598 = vld [vmem:[%s2366 + $0x64] sm:$0xf]
      %v6599 = vld [vmem:[%s2366 + $0x68] sm:$0xf]
      %v6600 = vld [vmem:[%s2366 + $0x6c] sm:$0xf]
      %v6601 = vld [vmem:[%s2366 + $0x70] sm:$0xf]
      %v6602 = vld [vmem:[%s2366 + $0x74] sm:$0xf]
      %v6603 = vld [vmem:[%s2366 + $0x78] sm:$0xf]
      %v6604 = vld [vmem:[%s2366 + $0x7c] sm:$0xf]
      %v6605 = vld [vmem:[%s2366 + $0x80] sm:$0xf]
      %v6606 = vld [vmem:[%s2366 + $0x84] sm:$0xf]
      %v6607 = vld [vmem:[%s2366 + $0x88] sm:$0xf]
      %v6608 = vld [vmem:[%s2366 + $0x8c] sm:$0xf]
      %v6609 = vld [vmem:[%s2366 + $0x90] sm:$0xf]
      %v6610 = vld [vmem:[%s2366 + $0x94] sm:$0xf]
      %v6611 = vld [vmem:[%s2366 + $0x98] sm:$0xf]
      %v6612 = vld [vmem:[%s2366 + $0x9c] sm:$0xf]
      %v6613 = vld [vmem:[%s2366 + $0xa0] sm:$0xf]
      %v6614 = vld [vmem:[%s2366 + $0xa4] sm:$0xf]
      %v6615 = vld [vmem:[%s2366 + $0xa8] sm:$0xf]
      %v6616 = vld [vmem:[%s2366 + $0xac] sm:$0xf]
      %v6617 = vld [vmem:[%s2366 + $0xb0] sm:$0xf]
      %v6618 = vld [vmem:[%s2366 + $0xb4] sm:$0xf]
      %v6619 = vld [vmem:[%s2366 + $0xb8] sm:$0xf]
      %v6620 = vld [vmem:[%s2366 + $0xbc] sm:$0xf]
      %v6669 = vunpack.c.l.b16 %v6573
      %v6670 = vunpack.c.l.b16 %v6574
      %v6671 = vunpack.c.l.b16 %v6575
      %v6672 = vunpack.c.l.b16 %v6576
      %v6673 = vunpack.c.l.b16 %v6577
      %v6674 = vunpack.c.l.b16 %v6578
      %v6675 = vunpack.c.l.b16 %v6579
      %v6676 = vunpack.c.l.b16 %v6580
      %v6677 = vunpack.c.l.b16 %v6581
      %v6678 = vunpack.c.l.b16 %v6582
      %v6679 = vunpack.c.l.b16 %v6583
      %v6680 = vunpack.c.l.b16 %v6584
      %v6681 = vunpack.c.l.b16 %v6585
      %v6682 = vunpack.c.l.b16 %v6586
      %v6683 = vunpack.c.l.b16 %v6587
      %v6684 = vunpack.c.l.b16 %v6588
      %v6685 = vunpack.c.l.b16 %v6589
      %v6686 = vunpack.c.l.b16 %v6590
      %v6687 = vunpack.c.l.b16 %v6591
      %v6688 = vunpack.c.l.b16 %v6592
      %v6689 = vunpack.c.l.b16 %v6593
      %v6690 = vunpack.c.l.b16 %v6594
      %v6691 = vunpack.c.l.b16 %v6595
      %v6692 = vunpack.c.l.b16 %v6596
      %v6693 = vunpack.c.l.b16 %v6597
      %v6694 = vunpack.c.l.b16 %v6598
      %v6695 = vunpack.c.l.b16 %v6599
      %v6696 = vunpack.c.l.b16 %v6600
      %v6697 = vunpack.c.l.b16 %v6601
      %v6698 = vunpack.c.l.b16 %v6602
      %v6699 = vunpack.c.l.b16 %v6603
      %v6700 = vunpack.c.l.b16 %v6604
      %v6701 = vunpack.c.l.b16 %v6605
      %v6702 = vunpack.c.l.b16 %v6606
      %v6703 = vunpack.c.l.b16 %v6607
      %v6704 = vunpack.c.l.b16 %v6608
      %v6705 = vunpack.c.l.b16 %v6609
      %v6706 = vunpack.c.l.b16 %v6610
      %v6707 = vunpack.c.l.b16 %v6611
      %v6708 = vunpack.c.l.b16 %v6612
      %v6709 = vunpack.c.l.b16 %v6613
      %v6710 = vunpack.c.l.b16 %v6614
      %v6711 = vunpack.c.l.b16 %v6615
      %v6712 = vunpack.c.l.b16 %v6616
      %v6713 = vunpack.c.l.b16 %v6617
      %v6714 = vunpack.c.l.b16 %v6618
      %v6715 = vunpack.c.l.b16 %v6619
      %v6716 = vunpack.c.l.b16 %v6620
      %v6717 = vpack.c.b16 %v6670, %v6669
      %v6718 = vpack.c.b16 %v6672, %v6671
      %v6719 = vpack.c.b16 %v6674, %v6673
      %v6720 = vpack.c.b16 %v6676, %v6675
      %v6721 = vpack.c.b16 %v6678, %v6677
      %v6722 = vpack.c.b16 %v6680, %v6679
      %v6723 = vpack.c.b16 %v6682, %v6681
      %v6724 = vpack.c.b16 %v6684, %v6683
      %v6725 = vpack.c.b16 %v6686, %v6685
      %v6726 = vpack.c.b16 %v6688, %v6687
      %v6727 = vpack.c.b16 %v6690, %v6689
      %v6728 = vpack.c.b16 %v6692, %v6691
      %v6729 = vpack.c.b16 %v6694, %v6693
      %v6730 = vpack.c.b16 %v6696, %v6695
      %v6731 = vpack.c.b16 %v6698, %v6697
      %v6732 = vpack.c.b16 %v6700, %v6699
      %v6733 = vpack.c.b16 %v6702, %v6701
      %v6734 = vpack.c.b16 %v6704, %v6703
      %v6735 = vpack.c.b16 %v6706, %v6705
      %v6736 = vpack.c.b16 %v6708, %v6707
      %v6737 = vpack.c.b16 %v6710, %v6709
      %v6738 = vpack.c.b16 %v6712, %v6711
      %v6739 = vpack.c.b16 %v6714, %v6713
      %v6740 = vpack.c.b16 %v6716, %v6715
      %6765 = vmatprep.subr.bf16.mxu0 0
      %6766 = vmatpush1.bf16.msra.mxu0 %v6717
      %6767 = vmatprep.subr.bf16.mxu0 0
      %6768 = vmatpush1.bf16.msra.mxu0 %v6718
      %6769 = vmatprep.subr.bf16.mxu0 0
      %6770 = vmatpush1.bf16.msra.mxu0 %v6719
      %6771 = vmatprep.subr.bf16.mxu0 0
      %6772 = vmatpush1.bf16.msra.mxu0 %v6720
      %6773 = vmatprep.subr.bf16.mxu0 0
      %6774 = vmatpush1.bf16.msra.mxu0 %v6721
      %6775 = vmatprep.subr.bf16.mxu0 0
      %6776 = vmatpush1.bf16.msra.mxu0 %v6722
      %6777 = vmatprep.subr.bf16.mxu0 0
      %6778 = vmatpush1.bf16.msra.mxu0 %v6723
      %6779 = vmatprep.subr.bf16.mxu0 0
      %6780 = vmatpush1.bf16.msra.mxu0 %v6724
      %6781 = vmatprep.subr.bf16.mxu0 0
      %6782 = vmatpush1.bf16.msra.mxu0 %v6725
      %6783 = vmatprep.subr.bf16.mxu0 0
      %6784 = vmatpush1.bf16.msra.mxu0 %v6726
      %6785 = vmatprep.subr.bf16.mxu0 0
      %6786 = vmatpush1.bf16.msra.mxu0 %v6727
      %6787 = vmatprep.subr.bf16.mxu0 0
      %6788 = vmatpush1.bf16.msra.mxu0 %v6728
      %6789 = vmatprep.subr.bf16.mxu0 0
      %6790 = vmatpush1.bf16.msra.mxu0 %v6729
      %6791 = vmatprep.subr.bf16.mxu0 0
      %6792 = vmatpush1.bf16.msra.mxu0 %v6730
      %6793 = vmatprep.subr.bf16.mxu0 0
      %6794 = vmatpush1.bf16.msra.mxu0 %v6731
      %6795 = vmatprep.subr.bf16.mxu0 0
      %6796 = vmatpush1.bf16.msra.mxu0 %v6732
      %6797 = vmatprep.mubr.bf16.mxu0 %v6430
      %6798 = vmatmul.mubr.bf16.gmra.mrb[0].mxu0 %v6429
      %v6799 = vpop.f32.mrb[0].mxu0
      %v6800 = vadd.f32 0.0, %v6799
      %v6801 = vpop.f32.mrb[0].mxu0
      %v6802 = vpop.f32.mrb[0].mxu0
      %v6803 = vadd.f32 0.0, %v6802
      %v6804 = vpop.f32.mrb[0].mxu0
      %6805 = vmatprep.mubr.bf16.mxu0 %v6433
      %6806 = vmatmul.mubr.bf16.gmra.mrb[0].mxu0 %v6432
      %v6807 = vpop.f32.mrb[0].mxu0
      %v6808 = vadd.f32 0.0, %v6807
      %v6809 = vpop.f32.mrb[0].mxu0
      %v6810 = vpop.f32.mrb[0].mxu0
      %v6811 = vadd.f32 0.0, %v6810
      %v6812 = vpop.f32.mrb[0].mxu0
      %6813 = vmatprep.mubr.bf16.mxu0 %v6436
      %6814 = vmatmul.mubr.bf16.gmra.mrb[0].mxu0 %v6435
      %v6815 = vpop.f32.mrb[0].mxu0
      %v6816 = vadd.f32 0.0, %v6815
      %v6817 = vpop.f32.mrb[0].mxu0
      %v6818 = vpop.f32.mrb[0].mxu0
      %v6819 = vadd.f32 0.0, %v6818
      %v6820 = vpop.f32.mrb[0].mxu0
      %6821 = vmatprep.mubr.bf16.mxu0 %v6439
      %6822 = vmatmul.mubr.bf16.gmra.mrb[0].mxu0 %v6438
      %v6823 = vpop.f32.mrb[0].mxu0
      %v6824 = vadd.f32 0.0, %v6823
      %v6825 = vpop.f32.mrb[0].mxu0
      %v6826 = vpop.f32.mrb[0].mxu0
      %v6827 = vadd.f32 0.0, %v6826
      %v6828 = vpop.f32.mrb[0].mxu0
      %6829 = vmatprep.mubr.bf16.mxu0 %v6442
      %6830 = vmatmul.mubr.bf16.gmra.mrb[0].mxu0 %v6441
      %v6831 = vpop.f32.mrb[0].mxu0
      %v6832 = vadd.f32 0.0, %v6831
      %v6833 = vpop.f32.mrb[0].mxu0
      %v6834 = vpop.f32.mrb[0].mxu0
      %v6835 = vadd.f32 0.0, %v6834
      %v6836 = vpop.f32.mrb[0].mxu0
      %6837 = vmatprep.mubr.bf16.mxu0 %v6445
      %6838 = vmatmul.mubr.bf16.gmra.mrb[0].mxu0 %v6444
      %v6839 = vpop.f32.mrb[0].mxu0
      %v6840 = vadd.f32 0.0, %v6839
      %v6841 = vpop.f32.mrb[0].mxu0
      %v6842 = vpop.f32.mrb[0].mxu0
      %v6843 = vadd.f32 0.0, %v6842
      %v6844 = vpop.f32.mrb[0].mxu0
      %6845 = vmatprep.mubr.bf16.mxu0 %v6448
      %6846 = vmatmul.mubr.bf16.gmra.mrb[0].mxu0 %v6447
      %v6847 = vpop.f32.mrb[0].mxu0
      %v6848 = vadd.f32 0.0, %v6847
      %v6849 = vpop.f32.mrb[0].mxu0
      %v6850 = vpop.f32.mrb[0].mxu0
      %v6851 = vadd.f32 0.0, %v6850
      %v6852 = vpop.f32.mrb[0].mxu0
      %6853 = vmatprep.mubr.bf16.mxu0 %v6451
      %6854 = vmatmul.mubr.bf16.gmra.mrb[0].mxu0 %v6450
      %v6855 = vpop.f32.mrb[0].mxu0
      %v6856 = vadd.f32 0.0, %v6855
      %v6857 = vpop.f32.mrb[0].mxu0
      %v6858 = vpop.f32.mrb[0].mxu0
      %v6859 = vadd.f32 0.0, %v6858
      %v6860 = vpop.f32.mrb[0].mxu0
      %6861 = vmatprep.mubr.bf16.mxu0 %v6454
      %6862 = vmatmul.mubr.bf16.gmra.mrb[0].mxu0 %v6453
      %v6863 = vpop.f32.mrb[0].mxu0
      %v6864 = vadd.f32 0.0, %v6863
      %v6865 = vpop.f32.mrb[0].mxu0
      %v6866 = vpop.f32.mrb[0].mxu0
      %v6867 = vadd.f32 0.0, %v6866
      %v6868 = vpop.f32.mrb[0].mxu0
      %6869 = vmatprep.mubr.bf16.mxu0 %v6457
      %6870 = vmatmul.mubr.bf16.gmra.mrb[0].mxu0 %v6456
      %v6871 = vpop.f32.mrb[0].mxu0
      %v6872 = vadd.f32 0.0, %v6871
      %v6873 = vpop.f32.mrb[0].mxu0
      %v6874 = vpop.f32.mrb[0].mxu0
      %v6875 = vadd.f32 0.0, %v6874
      %v6876 = vpop.f32.mrb[0].mxu0
      %6877 = vmatprep.mubr.bf16.mxu0 %v6460
      %6878 = vmatmul.mubr.bf16.gmra.mrb[0].mxu0 %v6459
      %v6879 = vpop.f32.mrb[0].mxu0
      %v6880 = vadd.f32 0.0, %v6879
      %v6881 = vpop.f32.mrb[0].mxu0
      %v6882 = vpop.f32.mrb[0].mxu0
      %v6883 = vadd.f32 0.0, %v6882
      %v6884 = vpop.f32.mrb[0].mxu0
      %6885 = vmatprep.mubr.bf16.mxu0 %v6463
      %6886 = vmatmul.mubr.bf16.gmra.mrb[0].mxu0 %v6462
      %v6887 = vpop.f32.mrb[0].mxu0
      %v6888 = vadd.f32 0.0, %v6887
      %v6889 = vpop.f32.mrb[0].mxu0
      %v6890 = vpop.f32.mrb[0].mxu0
      %v6891 = vadd.f32 0.0, %v6890
      %v6892 = vpop.f32.mrb[0].mxu0
      %6893 = vmatprep.mubr.bf16.mxu0 %v6466
      %6894 = vmatmul.mubr.bf16.gmra.mrb[0].mxu0 %v6465
      %v6895 = vpop.f32.mrb[0].mxu0
      %v6896 = vadd.f32 0.0, %v6895
      %v6897 = vpop.f32.mrb[0].mxu0
      %v6898 = vpop.f32.mrb[0].mxu0
      %v6899 = vadd.f32 0.0, %v6898
      %v6900 = vpop.f32.mrb[0].mxu0
      %6901 = vmatprep.mubr.bf16.mxu0 %v6469
      %6902 = vmatmul.mubr.bf16.gmra.mrb[0].mxu0 %v6468
      %v6903 = vpop.f32.mrb[0].mxu0
      %v6904 = vadd.f32 0.0, %v6903
      %v6905 = vpop.f32.mrb[0].mxu0
      %v6906 = vpop.f32.mrb[0].mxu0
      %v6907 = vadd.f32 0.0, %v6906
      %v6908 = vpop.f32.mrb[0].mxu0
      %6909 = vmatprep.mubr.bf16.mxu0 %v6472
      %6910 = vmatmul.mubr.bf16.gmra.mrb[0].mxu0 %v6471
      %v6911 = vpop.f32.mrb[0].mxu0
      %v6912 = vadd.f32 0.0, %v6911
      %v6913 = vpop.f32.mrb[0].mxu0
      %v6914 = vpop.f32.mrb[0].mxu0
      %v6915 = vadd.f32 0.0, %v6914
      %v6916 = vpop.f32.mrb[0].mxu0
      %6917 = vmatprep.mubr.bf16.mxu0 %v6475
      %6918 = vmatmul.mubr.bf16.gmra.mrb[0].mxu0 %v6474
      %v6919 = vpop.f32.mrb[0].mxu0
      %v6920 = vadd.f32 0.0, %v6919
      %v6921 = vpop.f32.mrb[0].mxu0
      %v6922 = vpop.f32.mrb[0].mxu0
      %v6923 = vadd.f32 0.0, %v6922
      %v6924 = vpop.f32.mrb[0].mxu0
      %6925 = vmatprep.mubr.bf16.mxu0 %v6478
      %6926 = vmatmul.mubr.bf16.gmra.mrb[0].mxu0 %v6477
      %v6927 = vpop.f32.mrb[0].mxu0
      %v6928 = vadd.f32 0.0, %v6927
      %v6929 = vpop.f32.mrb[0].mxu0
      %v6930 = vpop.f32.mrb[0].mxu0
      %v6931 = vadd.f32 0.0, %v6930
      %v6932 = vpop.f32.mrb[0].mxu0
      %6933 = vmatprep.mubr.bf16.mxu0 %v6481
      %6934 = vmatmul.mubr.bf16.gmra.mrb[0].mxu0 %v6480
      %v6935 = vpop.f32.mrb[0].mxu0
      %v6936 = vadd.f32 0.0, %v6935
      %v6937 = vpop.f32.mrb[0].mxu0
      %v6938 = vpop.f32.mrb[0].mxu0
      %v6939 = vadd.f32 0.0, %v6938
      %v6940 = vpop.f32.mrb[0].mxu0
      %6941 = vmatprep.mubr.bf16.mxu0 %v6484
      %6942 = vmatmul.mubr.bf16.gmra.mrb[0].mxu0 %v6483
      %v6943 = vpop.f32.mrb[0].mxu0
      %v6944 = vadd.f32 0.0, %v6943
      %v6945 = vpop.f32.mrb[0].mxu0
      %v6946 = vpop.f32.mrb[0].mxu0
      %v6947 = vadd.f32 0.0, %v6946
      %v6948 = vpop.f32.mrb[0].mxu0
      %6949 = vmatprep.mubr.bf16.mxu0 %v6487
      %6950 = vmatmul.mubr.bf16.gmra.mrb[0].mxu0 %v6486
      %v6951 = vpop.f32.mrb[0].mxu0
      %v6952 = vadd.f32 0.0, %v6951
      %v6953 = vpop.f32.mrb[0].mxu0
      %v6954 = vpop.f32.mrb[0].mxu0
      %v6955 = vadd.f32 0.0, %v6954
      %v6956 = vpop.f32.mrb[0].mxu0
      %6957 = vmatprep.mubr.bf16.mxu0 %v6490
      %6958 = vmatmul.mubr.bf16.gmra.mrb[0].mxu0 %v6489
      %v6959 = vpop.f32.mrb[0].mxu0
      %v6960 = vadd.f32 0.0, %v6959
      %v6961 = vpop.f32.mrb[0].mxu0
      %v6962 = vpop.f32.mrb[0].mxu0
      %v6963 = vadd.f32 0.0, %v6962
      %v6964 = vpop.f32.mrb[0].mxu0
      %6965 = vmatprep.mubr.bf16.mxu0 %v6493
      %6966 = vmatmul.mubr.bf16.gmra.mrb[0].mxu0 %v6492
      %v6967 = vpop.f32.mrb[0].mxu0
      %v6968 = vadd.f32 0.0, %v6967
      %v6969 = vpop.f32.mrb[0].mxu0
      %v6970 = vpop.f32.mrb[0].mxu0
      %v6971 = vadd.f32 0.0, %v6970
      %v6972 = vpop.f32.mrb[0].mxu0
      %6973 = vmatprep.mubr.bf16.mxu0 %v6496
      %6974 = vmatmul.mubr.bf16.gmra.mrb[0].mxu0 %v6495
      %v6975 = vpop.f32.mrb[0].mxu0
      %v6976 = vadd.f32 0.0, %v6975
      %v6977 = vpop.f32.mrb[0].mxu0
      %v6978 = vpop.f32.mrb[0].mxu0
      %v6979 = vadd.f32 0.0, %v6978
      %v6980 = vpop.f32.mrb[0].mxu0
      %6981 = vmatprep.mubr.bf16.mxu0 %v6499
      %6982 = vmatmul.mubr.bf16.gmra.mrb[0].mxu0 %v6498
      %v6983 = vpop.f32.mrb[0].mxu0
      %v6984 = vadd.f32 0.0, %v6983
      %v6985 = vpop.f32.mrb[0].mxu0
      %v6986 = vpop.f32.mrb[0].mxu0
      %v6987 = vadd.f32 0.0, %v6986
      %v6988 = vpop.f32.mrb[0].mxu0
      %6989 = vmatprep.mubr.bf16.mxu0 %v6502
      %6990 = vmatmul.mubr.bf16.gmra.mrb[0].mxu0 %v6501
      %v6991 = vpop.f32.mrb[0].mxu0
      %v6992 = vadd.f32 0.0, %v6991
      %v6993 = vpop.f32.mrb[0].mxu0
      %v6994 = vpop.f32.mrb[0].mxu0
      %v6995 = vadd.f32 0.0, %v6994
      %v6996 = vpop.f32.mrb[0].mxu0
      %6997 = vmatprep.mubr.bf16.mxu0 %v6505
      %6998 = vmatmul.mubr.bf16.gmra.mrb[0].mxu0 %v6504
      %v6999 = vpop.f32.mrb[0].mxu0
      %v7000 = vadd.f32 0.0, %v6999
      %v7001 = vpop.f32.mrb[0].mxu0
      %v7002 = vpop.f32.mrb[0].mxu0
      %v7003 = vadd.f32 0.0, %v7002
      %v7004 = vpop.f32.mrb[0].mxu0
      %7005 = vmatprep.mubr.bf16.mxu0 %v6508
      %7006 = vmatmul.mubr.bf16.gmra.mrb[0].mxu0 %v6507
      %v7007 = vpop.f32.mrb[0].mxu0
      %v7008 = vadd.f32 0.0, %v7007
      %v7009 = vpop.f32.mrb[0].mxu0
      %v7010 = vpop.f32.mrb[0].mxu0
      %v7011 = vadd.f32 0.0, %v7010
      %v7012 = vpop.f32.mrb[0].mxu0
      %7013 = vmatprep.mubr.bf16.mxu0 %v6511
      %7014 = vmatmul.mubr.bf16.gmra.mrb[0].mxu0 %v6510
      %v7015 = vpop.f32.mrb[0].mxu0
      %v7016 = vadd.f32 0.0, %v7015
      %v7017 = vpop.f32.mrb[0].mxu0
      %v7018 = vpop.f32.mrb[0].mxu0
      %v7019 = vadd.f32 0.0, %v7018
      %v7020 = vpop.f32.mrb[0].mxu0
      %7021 = vmatprep.mubr.bf16.mxu0 %v6514
      %7022 = vmatmul.mubr.bf16.gmra.mrb[0].mxu0 %v6513
      %v7023 = vpop.f32.mrb[0].mxu0
      %v7024 = vadd.f32 0.0, %v7023
      %v7025 = vpop.f32.mrb[0].mxu0
      %v7026 = vpop.f32.mrb[0].mxu0
      %v7027 = vadd.f32 0.0, %v7026
      %v7028 = vpop.f32.mrb[0].mxu0
      %7029 = vmatprep.mubr.bf16.mxu0 %v6517
      %7030 = vmatmul.mubr.bf16.gmra.mrb[0].mxu0 %v6516
      %v7031 = vpop.f32.mrb[0].mxu0
      %v7032 = vadd.f32 0.0, %v7031
      %v7033 = vpop.f32.mrb[0].mxu0
      %v7034 = vpop.f32.mrb[0].mxu0
      %v7035 = vadd.f32 0.0, %v7034
      %v7036 = vpop.f32.mrb[0].mxu0
      %7037 = vmatprep.mubr.bf16.mxu0 %v6568
      %7038 = vmatmul.mubr.bf16.gmra.mrb[0].mxu0 %v6567
      %v7039 = vpop.f32.mrb[0].mxu0
      %v7040 = vadd.f32 0.0, %v7039
      %v7041 = vpop.f32.mrb[0].mxu0
      %v7042 = vpop.f32.mrb[0].mxu0
      %v7043 = vadd.f32 0.0, %v7042
      %v7044 = vpop.f32.mrb[0].mxu0
      %7045 = vmatprep.mubr.bf16.mxu0 %v6571
      %7046 = vmatmul.mubr.bf16.gmra.mrb[0].mxu0 %v6570
      %v7047 = vpop.f32.mrb[0].mxu0
      %v7048 = vadd.f32 0.0, %v7047
      %v7049 = vpop.f32.mrb[0].mxu0
      %v7050 = vpop.f32.mrb[0].mxu0
      %v7051 = vadd.f32 0.0, %v7050
      %v7052 = vpop.f32.mrb[0].mxu0
      %7053 = vdwg.mxu0
      %7054 = vmatprep.subr.bf16.mxu0 0
      %7055 = vmatpush1.bf16.msra.mxu0 %v6733
      %7056 = vmatprep.subr.bf16.mxu0 0
      %7057 = vmatpush1.bf16.msra.mxu0 %v6734
      %7058 = vmatprep.subr.bf16.mxu0 0
      %7059 = vmatpush1.bf16.msra.mxu0 %v6735
      %7060 = vmatprep.subr.bf16.mxu0 0
      %7061 = vmatpush1.bf16.msra.mxu0 %v6736
      %7062 = vmatprep.subr.bf16.mxu0 0
      %7063 = vmatpush1.bf16.msra.mxu0 %v6737
      %7064 = vmatprep.subr.bf16.mxu0 0
      %7065 = vmatpush1.bf16.msra.mxu0 %v6738
      %7066 = vmatprep.subr.bf16.mxu0 0
      %7067 = vmatpush1.bf16.msra.mxu0 %v6739
      %7068 = vmatprep.subr.bf16.mxu0 0
      %7069 = vmatpush1.bf16.msra.mxu0 %v6740
      %7070 = vmatprep.subr.bf16.mxu0 0
      %7071 = vmatpush1.bf16.msra.mxu0 0
      %7072 = vmatprep.subr.bf16.mxu0 0
      %7073 = vmatpush1.bf16.msra.mxu0 0
      %7074 = vmatprep.subr.bf16.mxu0 0
      %7075 = vmatpush1.bf16.msra.mxu0 0
      %7076 = vmatprep.subr.bf16.mxu0 0
      %7077 = vmatpush1.bf16.msra.mxu0 0
      %7078 = vmatprep.subr.bf16.mxu0 0
      %7079 = vmatpush1.bf16.msra.mxu0 0
      %7080 = vmatprep.subr.bf16.mxu0 0
      %7081 = vmatpush1.bf16.msra.mxu0 0
      %7082 = vmatprep.subr.bf16.mxu0 0
      %7083 = vmatpush1.bf16.msra.mxu0 0
      %7084 = vmatprep.subr.bf16.mxu0 0
      %7085 = vmatpush1.bf16.msra.mxu0 0
      %7086 = vmatprep.mubr.bf16.mxu0 0
      %7087 = vmatmul.mubr.bf16.gmra.mrb[0].mxu0 %v6431
      %v7088 = vpop.f32.mrb[0].mxu0
      %v7089 = vadd.f32 %v6800, %v7088
      %v7090 = vpop.f32.mrb[0].mxu0
      %v7091 = vpop.f32.mrb[0].mxu0
      %v7092 = vadd.f32 %v6803, %v7091
      %v7093 = vpop.f32.mrb[0].mxu0
      %7094 = vmatprep.mubr.bf16.mxu0 0
      %7095 = vmatmul.mubr.bf16.gmra.mrb[0].mxu0 %v6434
      %v7096 = vpop.f32.mrb[0].mxu0
      %v7097 = vadd.f32 %v6808, %v7096
      %v7098 = vpop.f32.mrb[0].mxu0
      %v7099 = vpop.f32.mrb[0].mxu0
      %v7100 = vadd.f32 %v6811, %v7099
      %v7101 = vpop.f32.mrb[0].mxu0
      %7102 = vmatprep.mubr.bf16.mxu0 0
      %7103 = vmatmul.mubr.bf16.gmra.mrb[0].mxu0 %v6437
      %v7104 = vpop.f32.mrb[0].mxu0
      %v7105 = vadd.f32 %v6816, %v7104
      %v7106 = vpop.f32.mrb[0].mxu0
      %v7107 = vpop.f32.mrb[0].mxu0
      %v7108 = vadd.f32 %v6819, %v7107
      %v7109 = vpop.f32.mrb[0].mxu0
      %7110 = vmatprep.mubr.bf16.mxu0 0
      %7111 = vmatmul.mubr.bf16.gmra.mrb[0].mxu0 %v6440
      %v7112 = vpop.f32.mrb[0].mxu0
      %v7113 = vadd.f32 %v6824, %v7112
      %v7114 = vpop.f32.mrb[0].mxu0
      %v7115 = vpop.f32.mrb[0].mxu0
      %v7116 = vadd.f32 %v6827, %v7115
      %v7117 = vpop.f32.mrb[0].mxu0
      %7118 = vmatprep.mubr.bf16.mxu0 0
      %7119 = vmatmul.mubr.bf16.gmra.mrb[0].mxu0 %v6443
      %v7120 = vpop.f32.mrb[0].mxu0
      %v7121 = vadd.f32 %v6832, %v7120
      %v7122 = vpop.f32.mrb[0].mxu0
      %v7123 = vpop.f32.mrb[0].mxu0
      %v7124 = vadd.f32 %v6835, %v7123
      %v7125 = vpop.f32.mrb[0].mxu0
      %7126 = vmatprep.mubr.bf16.mxu0 0
      %7127 = vmatmul.mubr.bf16.gmra.mrb[0].mxu0 %v6446
      %v7128 = vpop.f32.mrb[0].mxu0
      %v7129 = vadd.f32 %v6840, %v7128
      %v7130 = vpop.f32.mrb[0].mxu0
      %v7131 = vpop.f32.mrb[0].mxu0
      %v7132 = vadd.f32 %v6843, %v7131
      %v7133 = vpop.f32.mrb[0].mxu0
      %7134 = vmatprep.mubr.bf16.mxu0 0
      %7135 = vmatmul.mubr.bf16.gmra.mrb[0].mxu0 %v6449
      %v7136 = vpop.f32.mrb[0].mxu0
      %v7137 = vadd.f32 %v6848, %v7136
      %v7138 = vpop.f32.mrb[0].mxu0
      %v7139 = vpop.f32.mrb[0].mxu0
      %v7140 = vadd.f32 %v6851, %v7139
      %v7141 = vpop.f32.mrb[0].mxu0
      %7142 = vmatprep.mubr.bf16.mxu0 0
      %7143 = vmatmul.mubr.bf16.gmra.mrb[0].mxu0 %v6452
      %v7144 = vpop.f32.mrb[0].mxu0
      %v7145 = vadd.f32 %v6856, %v7144
      %v7146 = vpop.f32.mrb[0].mxu0
      %v7147 = vpop.f32.mrb[0].mxu0
      %v7148 = vadd.f32 %v6859, %v7147
      %v7149 = vpop.f32.mrb[0].mxu0
      %7150 = vmatprep.mubr.bf16.mxu0 0
      %7151 = vmatmul.mubr.bf16.gmra.mrb[0].mxu0 %v6455
      %v7152 = vpop.f32.mrb[0].mxu0
      %v7153 = vadd.f32 %v6864, %v7152
      %v7154 = vpop.f32.mrb[0].mxu0
      %v7155 = vpop.f32.mrb[0].mxu0
      %v7156 = vadd.f32 %v6867, %v7155
      %v7157 = vpop.f32.mrb[0].mxu0
      %7158 = vmatprep.mubr.bf16.mxu0 0
      %7159 = vmatmul.mubr.bf16.gmra.mrb[0].mxu0 %v6458
      %v7160 = vpop.f32.mrb[0].mxu0
      %v7161 = vadd.f32 %v6872, %v7160
      %v7162 = vpop.f32.mrb[0].mxu0
      %v7163 = vpop.f32.mrb[0].mxu0
      %v7164 = vadd.f32 %v6875, %v7163
      %v7165 = vpop.f32.mrb[0].mxu0
      %7166 = vmatprep.mubr.bf16.mxu0 0
      %7167 = vmatmul.mubr.bf16.gmra.mrb[0].mxu0 %v6461
      %v7168 = vpop.f32.mrb[0].mxu0
      %v7169 = vadd.f32 %v6880, %v7168
      %v7170 = vpop.f32.mrb[0].mxu0
      %v7171 = vpop.f32.mrb[0].mxu0
      %v7172 = vadd.f32 %v6883, %v7171
      %v7173 = vpop.f32.mrb[0].mxu0
      %7174 = vmatprep.mubr.bf16.mxu0 0
      %7175 = vmatmul.mubr.bf16.gmra.mrb[0].mxu0 %v6464
      %v7176 = vpop.f32.mrb[0].mxu0
      %v7177 = vadd.f32 %v6888, %v7176
      %v7178 = vpop.f32.mrb[0].mxu0
      %v7179 = vpop.f32.mrb[0].mxu0
      %v7180 = vadd.f32 %v6891, %v7179
      %v7181 = vpop.f32.mrb[0].mxu0
      %7182 = vmatprep.mubr.bf16.mxu0 0
      %7183 = vmatmul.mubr.bf16.gmra.mrb[0].mxu0 %v6467
      %v7184 = vpop.f32.mrb[0].mxu0
      %v7185 = vadd.f32 %v6896, %v7184
      %v7186 = vpop.f32.mrb[0].mxu0
      %v7187 = vpop.f32.mrb[0].mxu0
      %v7188 = vadd.f32 %v6899, %v7187
      %v7189 = vpop.f32.mrb[0].mxu0
      %7190 = vmatprep.mubr.bf16.mxu0 0
      %7191 = vmatmul.mubr.bf16.gmra.mrb[0].mxu0 %v6470
      %v7192 = vpop.f32.mrb[0].mxu0
      %v7193 = vadd.f32 %v6904, %v7192
      %v7194 = vpop.f32.mrb[0].mxu0
      %v7195 = vpop.f32.mrb[0].mxu0
      %v7196 = vadd.f32 %v6907, %v7195
      %v7197 = vpop.f32.mrb[0].mxu0
      %7198 = vmatprep.mubr.bf16.mxu0 0
      %7199 = vmatmul.mubr.bf16.gmra.mrb[0].mxu0 %v6473
      %v7200 = vpop.f32.mrb[0].mxu0
      %v7201 = vadd.f32 %v6912, %v7200
      %v7202 = vpop.f32.mrb[0].mxu0
      %v7203 = vpop.f32.mrb[0].mxu0
      %v7204 = vadd.f32 %v6915, %v7203
      %v7205 = vpop.f32.mrb[0].mxu0
      %7206 = vmatprep.mubr.bf16.mxu0 0
      %7207 = vmatmul.mubr.bf16.gmra.mrb[0].mxu0 %v6476
      %v7208 = vpop.f32.mrb[0].mxu0
      %v7209 = vadd.f32 %v6920, %v7208
      %v7210 = vpop.f32.mrb[0].mxu0
      %v7211 = vpop.f32.mrb[0].mxu0
      %v7212 = vadd.f32 %v6923, %v7211
      %v7213 = vpop.f32.mrb[0].mxu0
      %7214 = vmatprep.mubr.bf16.mxu0 0
      %7215 = vmatmul.mubr.bf16.gmra.mrb[0].mxu0 %v6479
      %v7216 = vpop.f32.mrb[0].mxu0
      %v7217 = vadd.f32 %v6928, %v7216
      %v7218 = vpop.f32.mrb[0].mxu0
      %v7219 = vpop.f32.mrb[0].mxu0
      %v7220 = vadd.f32 %v6931, %v7219
      %v7221 = vpop.f32.mrb[0].mxu0
      %7222 = vmatprep.mubr.bf16.mxu0 0
      %7223 = vmatmul.mubr.bf16.gmra.mrb[0].mxu0 %v6482
      %v7224 = vpop.f32.mrb[0].mxu0
      %v7225 = vadd.f32 %v6936, %v7224
      %v7226 = vpop.f32.mrb[0].mxu0
      %v7227 = vpop.f32.mrb[0].mxu0
      %v7228 = vadd.f32 %v6939, %v7227
      %v7229 = vpop.f32.mrb[0].mxu0
      %7230 = vmatprep.mubr.bf16.mxu0 0
      %7231 = vmatmul.mubr.bf16.gmra.mrb[0].mxu0 %v6485
      %v7232 = vpop.f32.mrb[0].mxu0
      %v7233 = vadd.f32 %v6944, %v7232
      %v7234 = vpop.f32.mrb[0].mxu0
      %v7235 = vpop.f32.mrb[0].mxu0
      %v7236 = vadd.f32 %v6947, %v7235
      %v7237 = vpop.f32.mrb[0].mxu0
      %7238 = vmatprep.mubr.bf16.mxu0 0
      %7239 = vmatmul.mubr.bf16.gmra.mrb[0].mxu0 %v6488
      %v7240 = vpop.f32.mrb[0].mxu0
      %v7241 = vadd.f32 %v6952, %v7240
      %v7242 = vpop.f32.mrb[0].mxu0
      %v7243 = vpop.f32.mrb[0].mxu0
      %v7244 = vadd.f32 %v6955, %v7243
      %v7245 = vpop.f32.mrb[0].mxu0
      %7246 = vmatprep.mubr.bf16.mxu0 0
      %7247 = vmatmul.mubr.bf16.gmra.mrb[0].mxu0 %v6491
      %v7248 = vpop.f32.mrb[0].mxu0
      %v7249 = vadd.f32 %v6960, %v7248
      %v7250 = vpop.f32.mrb[0].mxu0
      %v7251 = vpop.f32.mrb[0].mxu0
      %v7252 = vadd.f32 %v6963, %v7251
      %v7253 = vpop.f32.mrb[0].mxu0
      %7254 = vmatprep.mubr.bf16.mxu0 0
      %7255 = vmatmul.mubr.bf16.gmra.mrb[0].mxu0 %v6494
      %v7256 = vpop.f32.mrb[0].mxu0
      %v7257 = vadd.f32 %v6968, %v7256
      %v7258 = vpop.f32.mrb[0].mxu0
      %v7259 = vpop.f32.mrb[0].mxu0
      %v7260 = vadd.f32 %v6971, %v7259
      %v7261 = vpop.f32.mrb[0].mxu0
      %7262 = vmatprep.mubr.bf16.mxu0 0
      %7263 = vmatmul.mubr.bf16.gmra.mrb[0].mxu0 %v6497
      %v7264 = vpop.f32.mrb[0].mxu0
      %v7265 = vadd.f32 %v6976, %v7264
      %v7266 = vpop.f32.mrb[0].mxu0
      %v7267 = vpop.f32.mrb[0].mxu0
      %v7268 = vadd.f32 %v6979, %v7267
      %v7269 = vpop.f32.mrb[0].mxu0
      %7270 = vmatprep.mubr.bf16.mxu0 0
      %7271 = vmatmul.mubr.bf16.gmra.mrb[0].mxu0 %v6500
      %v7272 = vpop.f32.mrb[0].mxu0
      %v7273 = vadd.f32 %v6984, %v7272
      %v7274 = vpop.f32.mrb[0].mxu0
      %v7275 = vpop.f32.mrb[0].mxu0
      %v7276 = vadd.f32 %v6987, %v7275
      %v7277 = vpop.f32.mrb[0].mxu0
      %7278 = vmatprep.mubr.bf16.mxu0 0
      %7279 = vmatmul.mubr.bf16.gmra.mrb[0].mxu0 %v6503
      %v7280 = vpop.f32.mrb[0].mxu0
      %v7281 = vadd.f32 %v6992, %v7280
      %v7282 = vpop.f32.mrb[0].mxu0
      %v7283 = vpop.f32.mrb[0].mxu0
      %v7284 = vadd.f32 %v6995, %v7283
      %v7285 = vpop.f32.mrb[0].mxu0
      %7286 = vmatprep.mubr.bf16.mxu0 0
      %7287 = vmatmul.mubr.bf16.gmra.mrb[0].mxu0 %v6506
      %v7288 = vpop.f32.mrb[0].mxu0
      %v7289 = vadd.f32 %v7000, %v7288
      %v7290 = vpop.f32.mrb[0].mxu0
      %v7291 = vpop.f32.mrb[0].mxu0
      %v7292 = vadd.f32 %v7003, %v7291
      %v7293 = vpop.f32.mrb[0].mxu0
      %7294 = vmatprep.mubr.bf16.mxu0 0
      %7295 = vmatmul.mubr.bf16.gmra.mrb[0].mxu0 %v6509
      %v7296 = vpop.f32.mrb[0].mxu0
      %v7297 = vadd.f32 %v7008, %v7296
      %v7298 = vpop.f32.mrb[0].mxu0
      %v7299 = vpop.f32.mrb[0].mxu0
      %v7300 = vadd.f32 %v7011, %v7299
      %v7301 = vpop.f32.mrb[0].mxu0
      %7302 = vmatprep.mubr.bf16.mxu0 0
      %7303 = vmatmul.mubr.bf16.gmra.mrb[0].mxu0 %v6512
      %v7304 = vpop.f32.mrb[0].mxu0
      %v7305 = vadd.f32 %v7016, %v7304
      %v7306 = vpop.f32.mrb[0].mxu0
      %v7307 = vpop.f32.mrb[0].mxu0
      %v7308 = vadd.f32 %v7019, %v7307
      %v7309 = vpop.f32.mrb[0].mxu0
      %7310 = vmatprep.mubr.bf16.mxu0 0
      %7311 = vmatmul.mubr.bf16.gmra.mrb[0].mxu0 %v6515
      %v7312 = vpop.f32.mrb[0].mxu0
      %v7313 = vadd.f32 %v7024, %v7312
      %v7314 = vpop.f32.mrb[0].mxu0
      %v7315 = vpop.f32.mrb[0].mxu0
      %v7316 = vadd.f32 %v7027, %v7315
      %v7317 = vpop.f32.mrb[0].mxu0
      %7318 = vmatprep.mubr.bf16.mxu0 0
      %7319 = vmatmul.mubr.bf16.gmra.mrb[0].mxu0 %v6518
      %v7320 = vpop.f32.mrb[0].mxu0
      %v7321 = vadd.f32 %v7032, %v7320
      %v7322 = vpop.f32.mrb[0].mxu0
      %v7323 = vpop.f32.mrb[0].mxu0
      %v7324 = vadd.f32 %v7035, %v7323
      %v7325 = vpop.f32.mrb[0].mxu0
      %7326 = vmatprep.mubr.bf16.mxu0 0
      %7327 = vmatmul.mubr.bf16.gmra.mrb[0].mxu0 %v6569
      %v7328 = vpop.f32.mrb[0].mxu0
      %v7329 = vadd.f32 %v7040, %v7328
      %v7330 = vpop.f32.mrb[0].mxu0
      %v7331 = vpop.f32.mrb[0].mxu0
      %v7332 = vadd.f32 %v7043, %v7331
      %v7333 = vpop.f32.mrb[0].mxu0
      %7334 = vmatprep.mubr.bf16.mxu0 0
      %7335 = vmatmul.mubr.bf16.gmra.mrb[0].mxu0 %v6572
      %v7336 = vpop.f32.mrb[0].mxu0
      %v7337 = vadd.f32 %v7048, %v7336
      %v7338 = vpop.f32.mrb[0].mxu0
      %v7339 = vpop.f32.mrb[0].mxu0
      %v7340 = vadd.f32 %v7051, %v7339
      %v7341 = vpop.f32.mrb[0].mxu0
      %7342 = vdwg.mxu0
      %v7391 = vunpack.c.l.b16 %v6519
      %v7392 = vunpack.c.l.b16 %v6520
      %v7393 = vunpack.c.l.b16 %v6521
      %v7394 = vunpack.c.l.b16 %v6522
      %v7395 = vunpack.c.l.b16 %v6523
      %v7396 = vunpack.c.l.b16 %v6524
      %v7397 = vunpack.c.l.b16 %v6525
      %v7398 = vunpack.c.l.b16 %v6526
      %v7399 = vunpack.c.l.b16 %v6527
      %v7400 = vunpack.c.l.b16 %v6528
      %v7401 = vunpack.c.l.b16 %v6529
      %v7402 = vunpack.c.l.b16 %v6530
      %v7403 = vunpack.c.l.b16 %v6531
      %v7404 = vunpack.c.l.b16 %v6532
      %v7405 = vunpack.c.l.b16 %v6533
      %v7406 = vunpack.c.l.b16 %v6534
      %v7407 = vunpack.c.l.b16 %v6535
      %v7408 = vunpack.c.l.b16 %v6536
      %v7409 = vunpack.c.l.b16 %v6537
      %v7410 = vunpack.c.l.b16 %v6538
      %v7411 = vunpack.c.l.b16 %v6539
      %v7412 = vunpack.c.l.b16 %v6540
      %v7413 = vunpack.c.l.b16 %v6541
      %v7414 = vunpack.c.l.b16 %v6542
      %v7415 = vunpack.c.l.b16 %v6543
      %v7416 = vunpack.c.l.b16 %v6544
      %v7417 = vunpack.c.l.b16 %v6545
      %v7418 = vunpack.c.l.b16 %v6546
      %v7419 = vunpack.c.l.b16 %v6547
      %v7420 = vunpack.c.l.b16 %v6548
      %v7421 = vunpack.c.l.b16 %v6549
      %v7422 = vunpack.c.l.b16 %v6550
      %v7423 = vunpack.c.l.b16 %v6551
      %v7424 = vunpack.c.l.b16 %v6552
      %v7425 = vunpack.c.l.b16 %v6553
      %v7426 = vunpack.c.l.b16 %v6554
      %v7427 = vunpack.c.l.b16 %v6555
      %v7428 = vunpack.c.l.b16 %v6556
      %v7429 = vunpack.c.l.b16 %v6557
      %v7430 = vunpack.c.l.b16 %v6558
      %v7431 = vunpack.c.l.b16 %v6559
      %v7432 = vunpack.c.l.b16 %v6560
      %v7433 = vunpack.c.l.b16 %v6561
      %v7434 = vunpack.c.l.b16 %v6562
      %v7435 = vunpack.c.l.b16 %v6563
      %v7436 = vunpack.c.l.b16 %v6564
      %v7437 = vunpack.c.l.b16 %v6565
      %v7438 = vunpack.c.l.b16 %v6566
      %v7439 = vpack.c.b16 %v7392, %v7391
      %v7440 = vpack.c.b16 %v7394, %v7393
      %v7441 = vpack.c.b16 %v7396, %v7395
      %v7442 = vpack.c.b16 %v7398, %v7397
      %v7443 = vpack.c.b16 %v7400, %v7399
      %v7444 = vpack.c.b16 %v7402, %v7401
      %v7445 = vpack.c.b16 %v7404, %v7403
      %v7446 = vpack.c.b16 %v7406, %v7405
      %v7447 = vpack.c.b16 %v7408, %v7407
      %v7448 = vpack.c.b16 %v7410, %v7409
      %v7449 = vpack.c.b16 %v7412, %v7411
      %v7450 = vpack.c.b16 %v7414, %v7413
      %v7451 = vpack.c.b16 %v7416, %v7415
      %v7452 = vpack.c.b16 %v7418, %v7417
      %v7453 = vpack.c.b16 %v7420, %v7419
      %v7454 = vpack.c.b16 %v7422, %v7421
      %v7455 = vpack.c.b16 %v7424, %v7423
      %v7456 = vpack.c.b16 %v7426, %v7425
      %v7457 = vpack.c.b16 %v7428, %v7427
      %v7458 = vpack.c.b16 %v7430, %v7429
      %v7459 = vpack.c.b16 %v7432, %v7431
      %v7460 = vpack.c.b16 %v7434, %v7433
      %v7461 = vpack.c.b16 %v7436, %v7435
      %v7462 = vpack.c.b16 %v7438, %v7437
      %7487 = vmatprep.subr.bf16.mxu0 0
      %7488 = vmatpush1.bf16.msra.mxu0 %v7439
      %7489 = vmatprep.subr.bf16.mxu0 0
      %7490 = vmatpush1.bf16.msra.mxu0 %v7440
      %7491 = vmatprep.subr.bf16.mxu0 0
      %7492 = vmatpush1.bf16.msra.mxu0 %v7441
      %7493 = vmatprep.subr.bf16.mxu0 0
      %7494 = vmatpush1.bf16.msra.mxu0 %v7442
      %7495 = vmatprep.subr.bf16.mxu0 0
      %7496 = vmatpush1.bf16.msra.mxu0 %v7443
      %7497 = vmatprep.subr.bf16.mxu0 0
      %7498 = vmatpush1.bf16.msra.mxu0 %v7444
      %7499 = vmatprep.subr.bf16.mxu0 0
      %7500 = vmatpush1.bf16.msra.mxu0 %v7445
      %7501 = vmatprep.subr.bf16.mxu0 0
      %7502 = vmatpush1.bf16.msra.mxu0 %v7446
      %7503 = vmatprep.subr.bf16.mxu0 0
      %7504 = vmatpush1.bf16.msra.mxu0 %v7447
      %7505 = vmatprep.subr.bf16.mxu0 0
      %7506 = vmatpush1.bf16.msra.mxu0 %v7448
      %7507 = vmatprep.subr.bf16.mxu0 0
      %7508 = vmatpush1.bf16.msra.mxu0 %v7449
      %7509 = vmatprep.subr.bf16.mxu0 0
      %7510 = vmatpush1.bf16.msra.mxu0 %v7450
      %7511 = vmatprep.subr.bf16.mxu0 0
      %7512 = vmatpush1.bf16.msra.mxu0 %v7451
      %7513 = vmatprep.subr.bf16.mxu0 0
      %7514 = vmatpush1.bf16.msra.mxu0 %v7452
      %7515 = vmatprep.subr.bf16.mxu0 0
      %7516 = vmatpush1.bf16.msra.mxu0 %v7453
      %7517 = vmatprep.subr.bf16.mxu0 0
      %7518 = vmatpush1.bf16.msra.mxu0 %v7454
      %7519 = vmatprep.mubr.bf16.mxu0 %v6424
      %7520 = vmatmul.mubr.bf16.gmra.mrb[0].mxu0 %v6423
      %v7521 = vpop.f32.mrb[0].mxu0
      %v7522 = vadd.f32 %v7089, %v7521
      %v7523 = vpop.f32.mrb[0].mxu0
      %v7524 = vpop.f32.mrb[0].mxu0
      %v7525 = vadd.f32 %v7092, %v7524
      %v7526 = vpop.f32.mrb[0].mxu0
      %7527 = vmatprep.mubr.bf16.mxu0 %v6427
      %7528 = vmatmul.mubr.bf16.gmra.mrb[0].mxu0 %v6426
      %v7529 = vpop.f32.mrb[0].mxu0
      %v7530 = vadd.f32 %v7097, %v7529
      %v7531 = vpop.f32.mrb[0].mxu0
      %v7532 = vpop.f32.mrb[0].mxu0
      %v7533 = vadd.f32 %v7100, %v7532
      %v7534 = vpop.f32.mrb[0].mxu0
      %7535 = vmatprep.mubr.bf16.mxu0 %v6430
      %7536 = vmatmul.mubr.bf16.gmra.mrb[0].mxu0 %v6429
      %v7537 = vpop.f32.mrb[0].mxu0
      %v7538 = vadd.f32 %v7105, %v7537
      %v7539 = vpop.f32.mrb[0].mxu0
      %v7540 = vpop.f32.mrb[0].mxu0
      %v7541 = vadd.f32 %v7108, %v7540
      %v7542 = vpop.f32.mrb[0].mxu0
      %7543 = vmatprep.mubr.bf16.mxu0 %v6433
      %7544 = vmatmul.mubr.bf16.gmra.mrb[0].mxu0 %v6432
      %v7545 = vpop.f32.mrb[0].mxu0
      %v7546 = vadd.f32 %v7113, %v7545
      %v7547 = vpop.f32.mrb[0].mxu0
      %v7548 = vpop.f32.mrb[0].mxu0
      %v7549 = vadd.f32 %v7116, %v7548
      %v7550 = vpop.f32.mrb[0].mxu0
      %7551 = vmatprep.mubr.bf16.mxu0 %v6436
      %7552 = vmatmul.mubr.bf16.gmra.mrb[0].mxu0 %v6435
      %v7553 = vpop.f32.mrb[0].mxu0
      %v7554 = vadd.f32 %v7121, %v7553
      %v7555 = vpop.f32.mrb[0].mxu0
      %v7556 = vpop.f32.mrb[0].mxu0
      %v7557 = vadd.f32 %v7124, %v7556
      %v7558 = vpop.f32.mrb[0].mxu0
      %7559 = vmatprep.mubr.bf16.mxu0 %v6439
      %7560 = vmatmul.mubr.bf16.gmra.mrb[0].mxu0 %v6438
      %v7561 = vpop.f32.mrb[0].mxu0
      %v7562 = vadd.f32 %v7129, %v7561
      %v7563 = vpop.f32.mrb[0].mxu0
      %v7564 = vpop.f32.mrb[0].mxu0
      %v7565 = vadd.f32 %v7132, %v7564
      %v7566 = vpop.f32.mrb[0].mxu0
      %7567 = vmatprep.mubr.bf16.mxu0 %v6442
      %7568 = vmatmul.mubr.bf16.gmra.mrb[0].mxu0 %v6441
      %v7569 = vpop.f32.mrb[0].mxu0
      %v7570 = vadd.f32 %v7137, %v7569
      %v7571 = vpop.f32.mrb[0].mxu0
      %v7572 = vpop.f32.mrb[0].mxu0
      %v7573 = vadd.f32 %v7140, %v7572
      %v7574 = vpop.f32.mrb[0].mxu0
      %7575 = vmatprep.mubr.bf16.mxu0 %v6445
      %7576 = vmatmul.mubr.bf16.gmra.mrb[0].mxu0 %v6444
      %v7577 = vpop.f32.mrb[0].mxu0
      %v7578 = vadd.f32 %v7145, %v7577
      %v7579 = vpop.f32.mrb[0].mxu0
      %v7580 = vpop.f32.mrb[0].mxu0
      %v7581 = vadd.f32 %v7148, %v7580
      %v7582 = vpop.f32.mrb[0].mxu0
      %7583 = vmatprep.mubr.bf16.mxu0 %v6448
      %7584 = vmatmul.mubr.bf16.gmra.mrb[0].mxu0 %v6447
      %v7585 = vpop.f32.mrb[0].mxu0
      %v7586 = vadd.f32 %v7153, %v7585
      %v7587 = vpop.f32.mrb[0].mxu0
      %v7588 = vpop.f32.mrb[0].mxu0
      %v7589 = vadd.f32 %v7156, %v7588
      %v7590 = vpop.f32.mrb[0].mxu0
      %7591 = vmatprep.mubr.bf16.mxu0 %v6451
      %7592 = vmatmul.mubr.bf16.gmra.mrb[0].mxu0 %v6450
      %v7593 = vpop.f32.mrb[0].mxu0
      %v7594 = vadd.f32 %v7161, %v7593
      %v7595 = vpop.f32.mrb[0].mxu0
      %v7596 = vpop.f32.mrb[0].mxu0
      %v7597 = vadd.f32 %v7164, %v7596
      %v7598 = vpop.f32.mrb[0].mxu0
      %7599 = vmatprep.mubr.bf16.mxu0 %v6454
      %7600 = vmatmul.mubr.bf16.gmra.mrb[0].mxu0 %v6453
      %v7601 = vpop.f32.mrb[0].mxu0
      %v7602 = vadd.f32 %v7169, %v7601
      %v7603 = vpop.f32.mrb[0].mxu0
      %v7604 = vpop.f32.mrb[0].mxu0
      %v7605 = vadd.f32 %v7172, %v7604
      %v7606 = vpop.f32.mrb[0].mxu0
      %7607 = vmatprep.mubr.bf16.mxu0 %v6457
      %7608 = vmatmul.mubr.bf16.gmra.mrb[0].mxu0 %v6456
      %v7609 = vpop.f32.mrb[0].mxu0
      %v7610 = vadd.f32 %v7177, %v7609
      %v7611 = vpop.f32.mrb[0].mxu0
      %v7612 = vpop.f32.mrb[0].mxu0
      %v7613 = vadd.f32 %v7180, %v7612
      %v7614 = vpop.f32.mrb[0].mxu0
      %7615 = vmatprep.mubr.bf16.mxu0 %v6460
      %7616 = vmatmul.mubr.bf16.gmra.mrb[0].mxu0 %v6459
      %v7617 = vpop.f32.mrb[0].mxu0
      %v7618 = vadd.f32 %v7185, %v7617
      %v7619 = vpop.f32.mrb[0].mxu0
      %v7620 = vpop.f32.mrb[0].mxu0
      %v7621 = vadd.f32 %v7188, %v7620
      %v7622 = vpop.f32.mrb[0].mxu0
      %7623 = vmatprep.mubr.bf16.mxu0 %v6463
      %7624 = vmatmul.mubr.bf16.gmra.mrb[0].mxu0 %v6462
      %v7625 = vpop.f32.mrb[0].mxu0
      %v7626 = vadd.f32 %v7193, %v7625
      %v7627 = vpop.f32.mrb[0].mxu0
      %v7628 = vpop.f32.mrb[0].mxu0
      %v7629 = vadd.f32 %v7196, %v7628
      %v7630 = vpop.f32.mrb[0].mxu0
      %7631 = vmatprep.mubr.bf16.mxu0 %v6466
      %7632 = vmatmul.mubr.bf16.gmra.mrb[0].mxu0 %v6465
      %v7633 = vpop.f32.mrb[0].mxu0
      %v7634 = vadd.f32 %v7201, %v7633
      %v7635 = vpop.f32.mrb[0].mxu0
      %v7636 = vpop.f32.mrb[0].mxu0
      %v7637 = vadd.f32 %v7204, %v7636
      %v7638 = vpop.f32.mrb[0].mxu0
      %7639 = vmatprep.mubr.bf16.mxu0 %v6469
      %7640 = vmatmul.mubr.bf16.gmra.mrb[0].mxu0 %v6468
      %v7641 = vpop.f32.mrb[0].mxu0
      %v7642 = vadd.f32 %v7209, %v7641
      %v7643 = vpop.f32.mrb[0].mxu0
      %v7644 = vpop.f32.mrb[0].mxu0
      %v7645 = vadd.f32 %v7212, %v7644
      %v7646 = vpop.f32.mrb[0].mxu0
      %7647 = vmatprep.mubr.bf16.mxu0 %v6472
      %7648 = vmatmul.mubr.bf16.gmra.mrb[0].mxu0 %v6471
      %v7649 = vpop.f32.mrb[0].mxu0
      %v7650 = vadd.f32 %v7217, %v7649
      %v7651 = vpop.f32.mrb[0].mxu0
      %v7652 = vpop.f32.mrb[0].mxu0
      %v7653 = vadd.f32 %v7220, %v7652
      %v7654 = vpop.f32.mrb[0].mxu0
      %7655 = vmatprep.mubr.bf16.mxu0 %v6475
      %7656 = vmatmul.mubr.bf16.gmra.mrb[0].mxu0 %v6474
      %v7657 = vpop.f32.mrb[0].mxu0
      %v7658 = vadd.f32 %v7225, %v7657
      %v7659 = vpop.f32.mrb[0].mxu0
      %v7660 = vpop.f32.mrb[0].mxu0
      %v7661 = vadd.f32 %v7228, %v7660
      %v7662 = vpop.f32.mrb[0].mxu0
      %7663 = vmatprep.mubr.bf16.mxu0 %v6478
      %7664 = vmatmul.mubr.bf16.gmra.mrb[0].mxu0 %v6477
      %v7665 = vpop.f32.mrb[0].mxu0
      %v7666 = vadd.f32 %v7233, %v7665
      %v7667 = vpop.f32.mrb[0].mxu0
      %v7668 = vpop.f32.mrb[0].mxu0
      %v7669 = vadd.f32 %v7236, %v7668
      %v7670 = vpop.f32.mrb[0].mxu0
      %7671 = vmatprep.mubr.bf16.mxu0 %v6481
      %7672 = vmatmul.mubr.bf16.gmra.mrb[0].mxu0 %v6480
      %v7673 = vpop.f32.mrb[0].mxu0
      %v7674 = vadd.f32 %v7241, %v7673
      %v7675 = vpop.f32.mrb[0].mxu0
      %v7676 = vpop.f32.mrb[0].mxu0
      %v7677 = vadd.f32 %v7244, %v7676
      %v7678 = vpop.f32.mrb[0].mxu0
      %7679 = vmatprep.mubr.bf16.mxu0 %v6484
      %7680 = vmatmul.mubr.bf16.gmra.mrb[0].mxu0 %v6483
      %v7681 = vpop.f32.mrb[0].mxu0
      %v7682 = vadd.f32 %v7249, %v7681
      %v7683 = vpop.f32.mrb[0].mxu0
      %v7684 = vpop.f32.mrb[0].mxu0
      %v7685 = vadd.f32 %v7252, %v7684
      %v7686 = vpop.f32.mrb[0].mxu0
      %7687 = vmatprep.mubr.bf16.mxu0 %v6487
      %7688 = vmatmul.mubr.bf16.gmra.mrb[0].mxu0 %v6486
      %v7689 = vpop.f32.mrb[0].mxu0
      %v7690 = vadd.f32 %v7257, %v7689
      %v7691 = vpop.f32.mrb[0].mxu0
      %v7692 = vpop.f32.mrb[0].mxu0
      %v7693 = vadd.f32 %v7260, %v7692
      %v7694 = vpop.f32.mrb[0].mxu0
      %7695 = vmatprep.mubr.bf16.mxu0 %v6490
      %7696 = vmatmul.mubr.bf16.gmra.mrb[0].mxu0 %v6489
      %v7697 = vpop.f32.mrb[0].mxu0
      %v7698 = vadd.f32 %v7265, %v7697
      %v7699 = vpop.f32.mrb[0].mxu0
      %v7700 = vpop.f32.mrb[0].mxu0
      %v7701 = vadd.f32 %v7268, %v7700
      %v7702 = vpop.f32.mrb[0].mxu0
      %7703 = vmatprep.mubr.bf16.mxu0 %v6493
      %7704 = vmatmul.mubr.bf16.gmra.mrb[0].mxu0 %v6492
      %v7705 = vpop.f32.mrb[0].mxu0
      %v7706 = vadd.f32 %v7273, %v7705
      %v7707 = vpop.f32.mrb[0].mxu0
      %v7708 = vpop.f32.mrb[0].mxu0
      %v7709 = vadd.f32 %v7276, %v7708
      %v7710 = vpop.f32.mrb[0].mxu0
      %7711 = vmatprep.mubr.bf16.mxu0 %v6496
      %7712 = vmatmul.mubr.bf16.gmra.mrb[0].mxu0 %v6495
      %v7713 = vpop.f32.mrb[0].mxu0
      %v7714 = vadd.f32 %v7281, %v7713
      %v7715 = vpop.f32.mrb[0].mxu0
      %v7716 = vpop.f32.mrb[0].mxu0
      %v7717 = vadd.f32 %v7284, %v7716
      %v7718 = vpop.f32.mrb[0].mxu0
      %7719 = vmatprep.mubr.bf16.mxu0 %v6499
      %7720 = vmatmul.mubr.bf16.gmra.mrb[0].mxu0 %v6498
      %v7721 = vpop.f32.mrb[0].mxu0
      %v7722 = vadd.f32 %v7289, %v7721
      %v7723 = vpop.f32.mrb[0].mxu0
      %v7724 = vpop.f32.mrb[0].mxu0
      %v7725 = vadd.f32 %v7292, %v7724
      %v7726 = vpop.f32.mrb[0].mxu0
      %7727 = vmatprep.mubr.bf16.mxu0 %v6502
      %7728 = vmatmul.mubr.bf16.gmra.mrb[0].mxu0 %v6501
      %v7729 = vpop.f32.mrb[0].mxu0
      %v7730 = vadd.f32 %v7297, %v7729
      %v7731 = vpop.f32.mrb[0].mxu0
      %v7732 = vpop.f32.mrb[0].mxu0
      %v7733 = vadd.f32 %v7300, %v7732
      %v7734 = vpop.f32.mrb[0].mxu0
      %7735 = vmatprep.mubr.bf16.mxu0 %v6505
      %7736 = vmatmul.mubr.bf16.gmra.mrb[0].mxu0 %v6504
      %v7737 = vpop.f32.mrb[0].mxu0
      %v7738 = vadd.f32 %v7305, %v7737
      %v7739 = vpop.f32.mrb[0].mxu0
      %v7740 = vpop.f32.mrb[0].mxu0
      %v7741 = vadd.f32 %v7308, %v7740
      %v7742 = vpop.f32.mrb[0].mxu0
      %7743 = vmatprep.mubr.bf16.mxu0 %v6508
      %7744 = vmatmul.mubr.bf16.gmra.mrb[0].mxu0 %v6507
      %v7745 = vpop.f32.mrb[0].mxu0
      %v7746 = vadd.f32 %v7313, %v7745
      %v7747 = vpop.f32.mrb[0].mxu0
      %v7748 = vpop.f32.mrb[0].mxu0
      %v7749 = vadd.f32 %v7316, %v7748
      %v7750 = vpop.f32.mrb[0].mxu0
      %7751 = vmatprep.mubr.bf16.mxu0 %v6511
      %7752 = vmatmul.mubr.bf16.gmra.mrb[0].mxu0 %v6510
      %v7753 = vpop.f32.mrb[0].mxu0
      %v7754 = vadd.f32 %v7321, %v7753
      %v7755 = vpop.f32.mrb[0].mxu0
      %v7756 = vpop.f32.mrb[0].mxu0
      %v7757 = vadd.f32 %v7324, %v7756
      %v7758 = vpop.f32.mrb[0].mxu0
      %7759 = vmatprep.mubr.bf16.mxu0 %v6514
      %7760 = vmatmul.mubr.bf16.gmra.mrb[0].mxu0 %v6513
      %v7761 = vpop.f32.mrb[0].mxu0
      %v7762 = vadd.f32 %v7329, %v7761
      %v7763 = vpop.f32.mrb[0].mxu0
      %v7764 = vpop.f32.mrb[0].mxu0
      %v7765 = vadd.f32 %v7332, %v7764
      %v7766 = vpop.f32.mrb[0].mxu0
      %7767 = vmatprep.mubr.bf16.mxu0 %v6517
      %7768 = vmatmul.mubr.bf16.gmra.mrb[0].mxu0 %v6516
      %v7769 = vpop.f32.mrb[0].mxu0
      %v7770 = vadd.f32 %v7337, %v7769
      %v7771 = vpop.f32.mrb[0].mxu0
      %v7772 = vpop.f32.mrb[0].mxu0
      %v7773 = vadd.f32 %v7340, %v7772
      %v7774 = vpop.f32.mrb[0].mxu0
      %7775 = vdwg.mxu0
      %7776 = vmatprep.subr.bf16.mxu0 0
      %7777 = vmatpush1.bf16.msra.mxu0 %v7455
      %7778 = vmatprep.subr.bf16.mxu0 0
      %7779 = vmatpush1.bf16.msra.mxu0 %v7456
      %7780 = vmatprep.subr.bf16.mxu0 0
      %7781 = vmatpush1.bf16.msra.mxu0 %v7457
      %7782 = vmatprep.subr.bf16.mxu0 0
      %7783 = vmatpush1.bf16.msra.mxu0 %v7458
      %7784 = vmatprep.subr.bf16.mxu0 0
      %7785 = vmatpush1.bf16.msra.mxu0 %v7459
      %7786 = vmatprep.subr.bf16.mxu0 0
      %7787 = vmatpush1.bf16.msra.mxu0 %v7460
      %7788 = vmatprep.subr.bf16.mxu0 0
      %7789 = vmatpush1.bf16.msra.mxu0 %v7461
      %7790 = vmatprep.subr.bf16.mxu0 0
      %7791 = vmatpush1.bf16.msra.mxu0 %v7462
      %7792 = vmatprep.subr.bf16.mxu0 0
      %7793 = vmatpush1.bf16.msra.mxu0 0
      %7794 = vmatprep.subr.bf16.mxu0 0
      %7795 = vmatpush1.bf16.msra.mxu0 0
      %7796 = vmatprep.subr.bf16.mxu0 0
      %7797 = vmatpush1.bf16.msra.mxu0 0
      %7798 = vmatprep.subr.bf16.mxu0 0
      %7799 = vmatpush1.bf16.msra.mxu0 0
      %7800 = vmatprep.subr.bf16.mxu0 0
      %7801 = vmatpush1.bf16.msra.mxu0 0
      %7802 = vmatprep.subr.bf16.mxu0 0
      %7803 = vmatpush1.bf16.msra.mxu0 0
      %7804 = vmatprep.subr.bf16.mxu0 0
      %7805 = vmatpush1.bf16.msra.mxu0 0
      %7806 = vmatprep.subr.bf16.mxu0 0
      %7807 = vmatpush1.bf16.msra.mxu0 0
      %7808 = vmatprep.mubr.bf16.mxu0 0
      %7809 = vmatmul.mubr.bf16.gmra.mrb[0].mxu0 %v6425
      %v7810 = vpop.f32.mrb[0].mxu0
      %v7811 = vadd.f32 %v7522, %v7810
      %v7812 = vpop.f32.mrb[0].mxu0
      %v7813 = vpop.f32.mrb[0].mxu0
      %v7814 = vadd.f32 %v7525, %v7813
      %v7815 = vpop.f32.mrb[0].mxu0
      %7816 = vmatprep.mubr.bf16.mxu0 0
      %7817 = vmatmul.mubr.bf16.gmra.mrb[0].mxu0 %v6428
      %v7818 = vpop.f32.mrb[0].mxu0
      %v7819 = vadd.f32 %v7530, %v7818
      %v7820 = vpop.f32.mrb[0].mxu0
      %v7821 = vpop.f32.mrb[0].mxu0
      %v7822 = vadd.f32 %v7533, %v7821
      %v7823 = vpop.f32.mrb[0].mxu0
      %7824 = vmatprep.mubr.bf16.mxu0 0
      %7825 = vmatmul.mubr.bf16.gmra.mrb[0].mxu0 %v6431
      %v7826 = vpop.f32.mrb[0].mxu0
      %v7827 = vadd.f32 %v7538, %v7826
      %v7828 = vpop.f32.mrb[0].mxu0
      %v7829 = vpop.f32.mrb[0].mxu0
      %v7830 = vadd.f32 %v7541, %v7829
      %v7831 = vpop.f32.mrb[0].mxu0
      %7832 = vmatprep.mubr.bf16.mxu0 0
      %7833 = vmatmul.mubr.bf16.gmra.mrb[0].mxu0 %v6434
      %v7834 = vpop.f32.mrb[0].mxu0
      %v7835 = vadd.f32 %v7546, %v7834
      %v7836 = vpop.f32.mrb[0].mxu0
      %v7837 = vpop.f32.mrb[0].mxu0
      %v7838 = vadd.f32 %v7549, %v7837
      %v7839 = vpop.f32.mrb[0].mxu0
      %7840 = vmatprep.mubr.bf16.mxu0 0
      %7841 = vmatmul.mubr.bf16.gmra.mrb[0].mxu0 %v6437
      %v7842 = vpop.f32.mrb[0].mxu0
      %v7843 = vadd.f32 %v7554, %v7842
      %v7844 = vpop.f32.mrb[0].mxu0
      %v7845 = vpop.f32.mrb[0].mxu0
      %v7846 = vadd.f32 %v7557, %v7845
      %v7847 = vpop.f32.mrb[0].mxu0
      %7848 = vmatprep.mubr.bf16.mxu0 0
      %7849 = vmatmul.mubr.bf16.gmra.mrb[0].mxu0 %v6440
      %v7850 = vpop.f32.mrb[0].mxu0
      %v7851 = vadd.f32 %v7562, %v7850
      %v7852 = vpop.f32.mrb[0].mxu0
      %v7853 = vpop.f32.mrb[0].mxu0
      %v7854 = vadd.f32 %v7565, %v7853
      %v7855 = vpop.f32.mrb[0].mxu0
      %7856 = vmatprep.mubr.bf16.mxu0 0
      %7857 = vmatmul.mubr.bf16.gmra.mrb[0].mxu0 %v6443
      %v7858 = vpop.f32.mrb[0].mxu0
      %v7859 = vadd.f32 %v7570, %v7858
      %v7860 = vpop.f32.mrb[0].mxu0
      %v7861 = vpop.f32.mrb[0].mxu0
      %v7862 = vadd.f32 %v7573, %v7861
      %v7863 = vpop.f32.mrb[0].mxu0
      %7864 = vmatprep.mubr.bf16.mxu0 0
      %7865 = vmatmul.mubr.bf16.gmra.mrb[0].mxu0 %v6446
      %v7866 = vpop.f32.mrb[0].mxu0
      %v7867 = vadd.f32 %v7578, %v7866
      %v7868 = vpop.f32.mrb[0].mxu0
      %v7869 = vpop.f32.mrb[0].mxu0
      %v7870 = vadd.f32 %v7581, %v7869
      %v7871 = vpop.f32.mrb[0].mxu0
      %7872 = vmatprep.mubr.bf16.mxu0 0
      %7873 = vmatmul.mubr.bf16.gmra.mrb[0].mxu0 %v6449
      %v7874 = vpop.f32.mrb[0].mxu0
      %v7875 = vadd.f32 %v7586, %v7874
      %v7876 = vpop.f32.mrb[0].mxu0
      %v7877 = vpop.f32.mrb[0].mxu0
      %v7878 = vadd.f32 %v7589, %v7877
      %v7879 = vpop.f32.mrb[0].mxu0
      %7880 = vmatprep.mubr.bf16.mxu0 0
      %7881 = vmatmul.mubr.bf16.gmra.mrb[0].mxu0 %v6452
      %v7882 = vpop.f32.mrb[0].mxu0
      %v7883 = vadd.f32 %v7594, %v7882
      %v7884 = vpop.f32.mrb[0].mxu0
      %v7885 = vpop.f32.mrb[0].mxu0
      %v7886 = vadd.f32 %v7597, %v7885
      %v7887 = vpop.f32.mrb[0].mxu0
      %7888 = vmatprep.mubr.bf16.mxu0 0
      %7889 = vmatmul.mubr.bf16.gmra.mrb[0].mxu0 %v6455
      %v7890 = vpop.f32.mrb[0].mxu0
      %v7891 = vadd.f32 %v7602, %v7890
      %v7892 = vpop.f32.mrb[0].mxu0
      %v7893 = vpop.f32.mrb[0].mxu0
      %v7894 = vadd.f32 %v7605, %v7893
      %v7895 = vpop.f32.mrb[0].mxu0
      %7896 = vmatprep.mubr.bf16.mxu0 0
      %7897 = vmatmul.mubr.bf16.gmra.mrb[0].mxu0 %v6458
      %v7898 = vpop.f32.mrb[0].mxu0
      %v7899 = vadd.f32 %v7610, %v7898
      %v7900 = vpop.f32.mrb[0].mxu0
      %v7901 = vpop.f32.mrb[0].mxu0
      %v7902 = vadd.f32 %v7613, %v7901
      %v7903 = vpop.f32.mrb[0].mxu0
      %7904 = vmatprep.mubr.bf16.mxu0 0
      %7905 = vmatmul.mubr.bf16.gmra.mrb[0].mxu0 %v6461
      %v7906 = vpop.f32.mrb[0].mxu0
      %v7907 = vadd.f32 %v7618, %v7906
      %v7908 = vpop.f32.mrb[0].mxu0
      %v7909 = vpop.f32.mrb[0].mxu0
      %v7910 = vadd.f32 %v7621, %v7909
      %v7911 = vpop.f32.mrb[0].mxu0
      %7912 = vmatprep.mubr.bf16.mxu0 0
      %7913 = vmatmul.mubr.bf16.gmra.mrb[0].mxu0 %v6464
      %v7914 = vpop.f32.mrb[0].mxu0
      %v7915 = vadd.f32 %v7626, %v7914
      %v7916 = vpop.f32.mrb[0].mxu0
      %v7917 = vpop.f32.mrb[0].mxu0
      %v7918 = vadd.f32 %v7629, %v7917
      %v7919 = vpop.f32.mrb[0].mxu0
      %7920 = vmatprep.mubr.bf16.mxu0 0
      %7921 = vmatmul.mubr.bf16.gmra.mrb[0].mxu0 %v6467
      %v7922 = vpop.f32.mrb[0].mxu0
      %v7923 = vadd.f32 %v7634, %v7922
      %v7924 = vpop.f32.mrb[0].mxu0
      %v7925 = vpop.f32.mrb[0].mxu0
      %v7926 = vadd.f32 %v7637, %v7925
      %v7927 = vpop.f32.mrb[0].mxu0
      %7928 = vmatprep.mubr.bf16.mxu0 0
      %7929 = vmatmul.mubr.bf16.gmra.mrb[0].mxu0 %v6470
      %v7930 = vpop.f32.mrb[0].mxu0
      %v7931 = vadd.f32 %v7642, %v7930
      %v7932 = vpop.f32.mrb[0].mxu0
      %v7933 = vpop.f32.mrb[0].mxu0
      %v7934 = vadd.f32 %v7645, %v7933
      %v7935 = vpop.f32.mrb[0].mxu0
      %7936 = vmatprep.mubr.bf16.mxu0 0
      %7937 = vmatmul.mubr.bf16.gmra.mrb[0].mxu0 %v6473
      %v7938 = vpop.f32.mrb[0].mxu0
      %v7939 = vadd.f32 %v7650, %v7938
      %v7940 = vpop.f32.mrb[0].mxu0
      %v7941 = vpop.f32.mrb[0].mxu0
      %v7942 = vadd.f32 %v7653, %v7941
      %v7943 = vpop.f32.mrb[0].mxu0
      %7944 = vmatprep.mubr.bf16.mxu0 0
      %7945 = vmatmul.mubr.bf16.gmra.mrb[0].mxu0 %v6476
      %v7946 = vpop.f32.mrb[0].mxu0
      %v7947 = vadd.f32 %v7658, %v7946
      %v7948 = vpop.f32.mrb[0].mxu0
      %v7949 = vpop.f32.mrb[0].mxu0
      %v7950 = vadd.f32 %v7661, %v7949
      %v7951 = vpop.f32.mrb[0].mxu0
      %7952 = vmatprep.mubr.bf16.mxu0 0
      %7953 = vmatmul.mubr.bf16.gmra.mrb[0].mxu0 %v6479
      %v7954 = vpop.f32.mrb[0].mxu0
      %v7955 = vadd.f32 %v7666, %v7954
      %v7956 = vpop.f32.mrb[0].mxu0
      %v7957 = vpop.f32.mrb[0].mxu0
      %v7958 = vadd.f32 %v7669, %v7957
      %v7959 = vpop.f32.mrb[0].mxu0
      %7960 = vmatprep.mubr.bf16.mxu0 0
      %7961 = vmatmul.mubr.bf16.gmra.mrb[0].mxu0 %v6482
      %v7962 = vpop.f32.mrb[0].mxu0
      %v7963 = vadd.f32 %v7674, %v7962
      %v7964 = vpop.f32.mrb[0].mxu0
      %v7965 = vpop.f32.mrb[0].mxu0
      %v7966 = vadd.f32 %v7677, %v7965
      %v7967 = vpop.f32.mrb[0].mxu0
      %7968 = vmatprep.mubr.bf16.mxu0 0
      %7969 = vmatmul.mubr.bf16.gmra.mrb[0].mxu0 %v6485
      %v7970 = vpop.f32.mrb[0].mxu0
      %v7971 = vadd.f32 %v7682, %v7970
      %v7972 = vpop.f32.mrb[0].mxu0
      %v7973 = vpop.f32.mrb[0].mxu0
      %v7974 = vadd.f32 %v7685, %v7973
      %v7975 = vpop.f32.mrb[0].mxu0
      %7976 = vmatprep.mubr.bf16.mxu0 0
      %7977 = vmatmul.mubr.bf16.gmra.mrb[0].mxu0 %v6488
      %v7978 = vpop.f32.mrb[0].mxu0
      %v7979 = vadd.f32 %v7690, %v7978
      %v7980 = vpop.f32.mrb[0].mxu0
      %v7981 = vpop.f32.mrb[0].mxu0
      %v7982 = vadd.f32 %v7693, %v7981
      %v7983 = vpop.f32.mrb[0].mxu0
      %7984 = vmatprep.mubr.bf16.mxu0 0
      %7985 = vmatmul.mubr.bf16.gmra.mrb[0].mxu0 %v6491
      %v7986 = vpop.f32.mrb[0].mxu0
      %v7987 = vadd.f32 %v7698, %v7986
      %v7988 = vpop.f32.mrb[0].mxu0
      %v7989 = vpop.f32.mrb[0].mxu0
      %v7990 = vadd.f32 %v7701, %v7989
      %v7991 = vpop.f32.mrb[0].mxu0
      %7992 = vmatprep.mubr.bf16.mxu0 0
      %7993 = vmatmul.mubr.bf16.gmra.mrb[0].mxu0 %v6494
      %v7994 = vpop.f32.mrb[0].mxu0
      %v7995 = vadd.f32 %v7706, %v7994
      %v7996 = vpop.f32.mrb[0].mxu0
      %v7997 = vpop.f32.mrb[0].mxu0
      %v7998 = vadd.f32 %v7709, %v7997
      %v7999 = vpop.f32.mrb[0].mxu0
      %8000 = vmatprep.mubr.bf16.mxu0 0
      %8001 = vmatmul.mubr.bf16.gmra.mrb[0].mxu0 %v6497
      %v8002 = vpop.f32.mrb[0].mxu0
      %v8003 = vadd.f32 %v7714, %v8002
      %v8004 = vpop.f32.mrb[0].mxu0
      %v8005 = vpop.f32.mrb[0].mxu0
      %v8006 = vadd.f32 %v7717, %v8005
      %v8007 = vpop.f32.mrb[0].mxu0
      %8008 = vmatprep.mubr.bf16.mxu0 0
      %8009 = vmatmul.mubr.bf16.gmra.mrb[0].mxu0 %v6500
      %v8010 = vpop.f32.mrb[0].mxu0
      %v8011 = vadd.f32 %v7722, %v8010
      %v8012 = vpop.f32.mrb[0].mxu0
      %v8013 = vpop.f32.mrb[0].mxu0
      %v8014 = vadd.f32 %v7725, %v8013
      %v8015 = vpop.f32.mrb[0].mxu0
      %8016 = vmatprep.mubr.bf16.mxu0 0
      %8017 = vmatmul.mubr.bf16.gmra.mrb[0].mxu0 %v6503
      %v8018 = vpop.f32.mrb[0].mxu0
      %v8019 = vadd.f32 %v7730, %v8018
      %v8020 = vpop.f32.mrb[0].mxu0
      %v8021 = vpop.f32.mrb[0].mxu0
      %v8022 = vadd.f32 %v7733, %v8021
      %v8023 = vpop.f32.mrb[0].mxu0
      %8024 = vmatprep.mubr.bf16.mxu0 0
      %8025 = vmatmul.mubr.bf16.gmra.mrb[0].mxu0 %v6506
      %v8026 = vpop.f32.mrb[0].mxu0
      %v8027 = vadd.f32 %v7738, %v8026
      %v8028 = vpop.f32.mrb[0].mxu0
      %v8029 = vpop.f32.mrb[0].mxu0
      %v8030 = vadd.f32 %v7741, %v8029
      %v8031 = vpop.f32.mrb[0].mxu0
      %8032 = vmatprep.mubr.bf16.mxu0 0
      %8033 = vmatmul.mubr.bf16.gmra.mrb[0].mxu0 %v6509
      %v8034 = vpop.f32.mrb[0].mxu0
      %v8035 = vadd.f32 %v7746, %v8034
      %v8036 = vpop.f32.mrb[0].mxu0
      %v8037 = vpop.f32.mrb[0].mxu0
      %v8038 = vadd.f32 %v7749, %v8037
      %v8039 = vpop.f32.mrb[0].mxu0
      %8040 = vmatprep.mubr.bf16.mxu0 0
      %8041 = vmatmul.mubr.bf16.gmra.mrb[0].mxu0 %v6512
      %v8042 = vpop.f32.mrb[0].mxu0
      %v8043 = vadd.f32 %v7754, %v8042
      %v8044 = vpop.f32.mrb[0].mxu0
      %v8045 = vpop.f32.mrb[0].mxu0
      %v8046 = vadd.f32 %v7757, %v8045
      %v8047 = vpop.f32.mrb[0].mxu0
      %8048 = vmatprep.mubr.bf16.mxu0 0
      %8049 = vmatmul.mubr.bf16.gmra.mrb[0].mxu0 %v6515
      %v8050 = vpop.f32.mrb[0].mxu0
      %v8051 = vadd.f32 %v7762, %v8050
      %v8052 = vpop.f32.mrb[0].mxu0
      %v8053 = vpop.f32.mrb[0].mxu0
      %v8054 = vadd.f32 %v7765, %v8053
      %v8055 = vpop.f32.mrb[0].mxu0
      %8056 = vmatprep.mubr.bf16.mxu0 0
      %8057 = vmatmul.mubr.bf16.gmra.mrb[0].mxu0 %v6518
      %v8058 = vpop.f32.mrb[0].mxu0
      %v8059 = vadd.f32 %v7770, %v8058
      %v8060 = vpop.f32.mrb[0].mxu0
      %v8061 = vpop.f32.mrb[0].mxu0
      %v8062 = vadd.f32 %v7773, %v8061
      %v8063 = vpop.f32.mrb[0].mxu0
      %8064 = vdwg.mxu0
      %v8065 = vld [vmem:[#allocation2 + $0x90] sm:$0xff]
      %v8066 = vld [vmem:[#allocation2 + $0x98] sm:$0xff]
      %v8067 = vld [vmem:[#allocation2 + $0xa0] sm:$0xff]
      %v8068 = vld [vmem:[#allocation2 + $0xa8] sm:$0xff]
      %v8069 = vld [vmem:[#allocation2 + $0xb0] sm:$0xff]
      %v8070 = vld [vmem:[#allocation2 + $0xb8] sm:$0xff]
      %v8071 = vld [vmem:[#allocation2 + $0xc0] sm:$0xff]
      %v8072 = vld [vmem:[#allocation2 + $0xc8] sm:$0xff]
      %v8073 = vld [vmem:[#allocation2 + $0xd0] sm:$0xff]
      %v8074 = vld [vmem:[#allocation2 + $0xd8] sm:$0xff]
      %v8075 = vld [vmem:[#allocation2 + $0xe0] sm:$0xff]
      %v8076 = vld [vmem:[#allocation2 + $0xe8] sm:$0xff]
      %v8077 = vld [vmem:[#allocation2 + $0xf0] sm:$0xff]
      %v8078 = vld [vmem:[#allocation2 + $0xf8] sm:$0xff]
      %v8079 = vld [vmem:[#allocation2 + $0x100] sm:$0xff]
      %v8080 = vld [vmem:[#allocation2 + $0x108] sm:$0xff]
      %v8081 = vld [vmem:[#allocation2 + $0x110] sm:$0xff]
      %v8082 = vld [vmem:[#allocation2 + $0x118] sm:$0xff]
      %v8083 = vld [vmem:[#allocation2 + $0x120] sm:$0xff]
      %v8084 = vld [vmem:[#allocation2 + $0x128] sm:$0xff]
      %v8085 = vld [vmem:[#allocation2 + $0x130] sm:$0xff]
      %v8086 = vld [vmem:[#allocation2 + $0x138] sm:$0xff]
      %v8087 = vld [vmem:[#allocation2 + $0x140] sm:$0xff]
      %v8088 = vld [vmem:[#allocation2 + $0x148] sm:$0xff]
      %v8089 = vld [vmem:[#allocation2 + $0x150] sm:$0xff]
      %v8090 = vld [vmem:[#allocation2 + $0x158] sm:$0xff]
      %v8091 = vld [vmem:[#allocation2 + $0x160] sm:$0xff]
      %v8092 = vld [vmem:[#allocation2 + $0x168] sm:$0xff]
      %v8093 = vld [vmem:[#allocation2 + $0x170] sm:$0xff]
      %v8094 = vld [vmem:[#allocation2 + $0x178] sm:$0xff]
      %v8095 = vld [vmem:[#allocation2 + $0x180] sm:$0xff]
      %v8096 = vld [vmem:[#allocation2 + $0x188] sm:$0xff]
      %v8097 = vld [vmem:[#allocation2 + $0x190] sm:$0xff]
      %v8098 = vld [vmem:[#allocation2 + $0x198] sm:$0xff]
      %v8099 = vld [vmem:[#allocation2 + $0x1a0] sm:$0xff]
      %v8100 = vld [vmem:[#allocation2 + $0x1a8] sm:$0xff]
      %v8101 = vld [vmem:[#allocation2 + $0x1b0] sm:$0xff]
      %v8102 = vld [vmem:[#allocation2 + $0x1b8] sm:$0xff]
      %v8103 = vld [vmem:[#allocation2 + $0x1c0] sm:$0xff]
      %v8104 = vld [vmem:[#allocation2 + $0x1c8] sm:$0xff]
      %v8105 = vld [vmem:[#allocation2 + $0x1d0] sm:$0xff]
      %v8106 = vld [vmem:[#allocation2 + $0x1d8] sm:$0xff]
      %v8107 = vld [vmem:[#allocation2 + $0x1e0] sm:$0xff]
      %v8108 = vld [vmem:[#allocation2 + $0x1e8] sm:$0xff]
      %v8109 = vld [vmem:[#allocation2 + $0x1f0] sm:$0xff]
      %v8110 = vld [vmem:[#allocation2 + $0x1f8] sm:$0xff]
      %v8111 = vld [vmem:[#allocation2 + $0x200] sm:$0xff]
      %v8112 = vld [vmem:[#allocation2 + $0x208] sm:$0xff]
      %v8113 = vld [vmem:[#allocation2 + $0x210] sm:$0xff]
      %v8114 = vld [vmem:[#allocation2 + $0x218] sm:$0xff]
      %v8115 = vld [vmem:[#allocation2 + $0x220] sm:$0xff]
      %v8116 = vld [vmem:[#allocation2 + $0x228] sm:$0xff]
      %v8117 = vld [vmem:[#allocation2 + $0x230] sm:$0xff]
      %v8118 = vld [vmem:[#allocation2 + $0x238] sm:$0xff]
      %v8119 = vld [vmem:[#allocation2 + $0x240] sm:$0xff]
      %v8120 = vld [vmem:[#allocation2 + $0x248] sm:$0xff]
      %v8121 = vld [vmem:[#allocation2 + $0x250] sm:$0xff]
      %v8122 = vld [vmem:[#allocation2 + $0x258] sm:$0xff]
      %v8123 = vld [vmem:[#allocation2 + $0x260] sm:$0xff]
      %v8124 = vld [vmem:[#allocation2 + $0x268] sm:$0xff]
      %v8125 = vld [vmem:[#allocation2 + $0x270] sm:$0xff]
      %v8126 = vld [vmem:[#allocation2 + $0x278] sm:$0xff]
      %v8127 = vld [vmem:[#allocation2 + $0x280] sm:$0xff]
      %v8128 = vld [vmem:[#allocation2 + $0x288] sm:$0xff]
      %v8129 = vld [vmem:[#allocation2 + $0x290] sm:$0xff]
      %v8130 = vld [vmem:[#allocation2 + $0x298] sm:$0xff]
      %v8131 = vld [vmem:[#allocation2 + $0x2a0] sm:$0xff]
      %v8132 = vld [vmem:[#allocation2 + $0x2a8] sm:$0xff]
      %v8133 = vld [vmem:[#allocation2 + $0x2b0] sm:$0xff]
      %v8134 = vld [vmem:[#allocation2 + $0x2b8] sm:$0xff]
      %v8135 = vld [vmem:[#allocation2 + $0x2c0] sm:$0xff]
      %v8136 = vld [vmem:[#allocation2 + $0x2c8] sm:$0xff]
      %v8137 = vld [vmem:[#allocation2 + $0x2d0] sm:$0xff]
      %v8138 = vld [vmem:[#allocation2 + $0x2d8] sm:$0xff]
      %v8139 = vld [vmem:[#allocation2 + $0x2e0] sm:$0xff]
      %v8140 = vld [vmem:[#allocation2 + $0x2e8] sm:$0xff]
      %v8141 = vld [vmem:[#allocation2 + $0x2f0] sm:$0xff]
      %v8142 = vld [vmem:[#allocation2 + $0x2f8] sm:$0xff]
      %v8143 = vld [vmem:[#allocation2 + $0x300] sm:$0xff]
      %v8144 = vld [vmem:[#allocation2 + $0x308] sm:$0xff]
      %v8145 = vld [vmem:[#allocation2 + $0x310] sm:$0xff]
      %v8146 = vld [vmem:[#allocation2 + $0x318] sm:$0xff]
      %v8147 = vld [vmem:[#allocation2 + $0x320] sm:$0xff]
      %v8148 = vld [vmem:[#allocation2 + $0x328] sm:$0xff]
      %v8149 = vld [vmem:[#allocation2 + $0x330] sm:$0xff]
      %v8150 = vld [vmem:[#allocation2 + $0x338] sm:$0xff]
      %v8151 = vld [vmem:[#allocation2 + $0x340] sm:$0xff]
      %v8152 = vld [vmem:[#allocation2 + $0x348] sm:$0xff]
      %v8153 = vld [vmem:[#allocation2 + $0x350] sm:$0xff]
      %v8154 = vld [vmem:[#allocation2 + $0x358] sm:$0xff]
      %v8155 = vld [vmem:[#allocation2 + $0x360] sm:$0xff]
      %v8156 = vld [vmem:[#allocation2 + $0x368] sm:$0xff]
      %v8157 = vld [vmem:[#allocation2 + $0x370] sm:$0xff]
      %v8158 = vld [vmem:[#allocation2 + $0x378] sm:$0xff]
      %v8159 = vld [vmem:[#allocation2 + $0x380] sm:$0xff]
      %v8160 = vld [vmem:[#allocation2 + $0x388] sm:$0xff]
      %v8161 = vld [vmem:[%s3955] sm:$0xf]
      %v8162 = vld [vmem:[%s3955 + $0x4] sm:$0xf]
      %v8163 = vld [vmem:[%s3955 + $0x8] sm:$0xf]
      %v8164 = vld [vmem:[%s3955 + $0xc] sm:$0xf]
      %v8165 = vld [vmem:[%s3955 + $0x10] sm:$0xf]
      %v8166 = vld [vmem:[%s3955 + $0x14] sm:$0xf]
      %v8167 = vld [vmem:[%s3955 + $0x18] sm:$0xf]
      %v8168 = vld [vmem:[%s3955 + $0x1c] sm:$0xf]
      %v8169 = vld [vmem:[%s3955 + $0x20] sm:$0xf]
      %v8170 = vld [vmem:[%s3955 + $0x24] sm:$0xf]
      %v8171 = vld [vmem:[%s3955 + $0x28] sm:$0xf]
      %v8172 = vld [vmem:[%s3955 + $0x2c] sm:$0xf]
      %v8173 = vld [vmem:[%s3955 + $0x30] sm:$0xf]
      %v8174 = vld [vmem:[%s3955 + $0x34] sm:$0xf]
      %v8175 = vld [vmem:[%s3955 + $0x38] sm:$0xf]
      %v8176 = vld [vmem:[%s3955 + $0x3c] sm:$0xf]
      %v8177 = vld [vmem:[%s3955 + $0x40] sm:$0xf]
      %v8178 = vld [vmem:[%s3955 + $0x44] sm:$0xf]
      %v8179 = vld [vmem:[%s3955 + $0x48] sm:$0xf]
      %v8180 = vld [vmem:[%s3955 + $0x4c] sm:$0xf]
      %v8181 = vld [vmem:[%s3955 + $0x50] sm:$0xf]
      %v8182 = vld [vmem:[%s3955 + $0x54] sm:$0xf]
      %v8183 = vld [vmem:[%s3955 + $0x58] sm:$0xf]
      %v8184 = vld [vmem:[%s3955 + $0x5c] sm:$0xf]
      %v8185 = vld [vmem:[%s3955 + $0x60] sm:$0xf]
      %v8186 = vld [vmem:[%s3955 + $0x64] sm:$0xf]
      %v8187 = vld [vmem:[%s3955 + $0x68] sm:$0xf]
      %v8188 = vld [vmem:[%s3955 + $0x6c] sm:$0xf]
      %v8189 = vld [vmem:[%s3955 + $0x70] sm:$0xf]
      %v8190 = vld [vmem:[%s3955 + $0x74] sm:$0xf]
      %v8191 = vld [vmem:[%s3955 + $0x78] sm:$0xf]
      %v8192 = vld [vmem:[%s3955 + $0x7c] sm:$0xf]
      %v8193 = vld [vmem:[%s3955 + $0x80] sm:$0xf]
      %v8194 = vld [vmem:[%s3955 + $0x84] sm:$0xf]
      %v8195 = vld [vmem:[%s3955 + $0x88] sm:$0xf]
      %v8196 = vld [vmem:[%s3955 + $0x8c] sm:$0xf]
      %v8197 = vld [vmem:[%s3955 + $0x90] sm:$0xf]
      %v8198 = vld [vmem:[%s3955 + $0x94] sm:$0xf]
      %v8199 = vld [vmem:[%s3955 + $0x98] sm:$0xf]
      %v8200 = vld [vmem:[%s3955 + $0x9c] sm:$0xf]
      %v8201 = vld [vmem:[%s3955 + $0xa0] sm:$0xf]
      %v8202 = vld [vmem:[%s3955 + $0xa4] sm:$0xf]
      %v8203 = vld [vmem:[%s3955 + $0xa8] sm:$0xf]
      %v8204 = vld [vmem:[%s3955 + $0xac] sm:$0xf]
      %v8205 = vld [vmem:[%s3955 + $0xb0] sm:$0xf]
      %v8206 = vld [vmem:[%s3955 + $0xb4] sm:$0xf]
      %v8207 = vld [vmem:[%s3955 + $0xb8] sm:$0xf]
      %v8208 = vld [vmem:[%s3955 + $0xbc] sm:$0xf]
      %v8257 = vunpack.c.l.b16 %v8161
      %v8258 = vunpack.c.l.b16 %v8162
      %v8259 = vunpack.c.l.b16 %v8163
      %v8260 = vunpack.c.l.b16 %v8164
      %v8261 = vunpack.c.l.b16 %v8165
      %v8262 = vunpack.c.l.b16 %v8166
      %v8263 = vunpack.c.l.b16 %v8167
      %v8264 = vunpack.c.l.b16 %v8168
      %v8265 = vunpack.c.l.b16 %v8169
      %v8266 = vunpack.c.l.b16 %v8170
      %v8267 = vunpack.c.l.b16 %v8171
      %v8268 = vunpack.c.l.b16 %v8172
      %v8269 = vunpack.c.l.b16 %v8173
      %v8270 = vunpack.c.l.b16 %v8174
      %v8271 = vunpack.c.l.b16 %v8175
      %v8272 = vunpack.c.l.b16 %v8176
      %v8273 = vunpack.c.l.b16 %v8177
      %v8274 = vunpack.c.l.b16 %v8178
      %v8275 = vunpack.c.l.b16 %v8179
      %v8276 = vunpack.c.l.b16 %v8180
      %v8277 = vunpack.c.l.b16 %v8181
      %v8278 = vunpack.c.l.b16 %v8182
      %v8279 = vunpack.c.l.b16 %v8183
      %v8280 = vunpack.c.l.b16 %v8184
      %v8281 = vunpack.c.l.b16 %v8185
      %v8282 = vunpack.c.l.b16 %v8186
      %v8283 = vunpack.c.l.b16 %v8187
      %v8284 = vunpack.c.l.b16 %v8188
      %v8285 = vunpack.c.l.b16 %v8189
      %v8286 = vunpack.c.l.b16 %v8190
      %v8287 = vunpack.c.l.b16 %v8191
      %v8288 = vunpack.c.l.b16 %v8192
      %v8289 = vunpack.c.l.b16 %v8193
      %v8290 = vunpack.c.l.b16 %v8194
      %v8291 = vunpack.c.l.b16 %v8195
      %v8292 = vunpack.c.l.b16 %v8196
      %v8293 = vunpack.c.l.b16 %v8197
      %v8294 = vunpack.c.l.b16 %v8198
      %v8295 = vunpack.c.l.b16 %v8199
      %v8296 = vunpack.c.l.b16 %v8200
      %v8297 = vunpack.c.l.b16 %v8201
      %v8298 = vunpack.c.l.b16 %v8202
      %v8299 = vunpack.c.l.b16 %v8203
      %v8300 = vunpack.c.l.b16 %v8204
      %v8301 = vunpack.c.l.b16 %v8205
      %v8302 = vunpack.c.l.b16 %v8206
      %v8303 = vunpack.c.l.b16 %v8207
      %v8304 = vunpack.c.l.b16 %v8208
      %v8305 = vpack.c.b16 %v8258, %v8257
      %v8306 = vpack.c.b16 %v8260, %v8259
      %v8307 = vpack.c.b16 %v8262, %v8261
      %v8308 = vpack.c.b16 %v8264, %v8263
      %v8309 = vpack.c.b16 %v8266, %v8265
      %v8310 = vpack.c.b16 %v8268, %v8267
      %v8311 = vpack.c.b16 %v8270, %v8269
      %v8312 = vpack.c.b16 %v8272, %v8271
      %v8313 = vpack.c.b16 %v8274, %v8273
      %v8314 = vpack.c.b16 %v8276, %v8275
      %v8315 = vpack.c.b16 %v8278, %v8277
      %v8316 = vpack.c.b16 %v8280, %v8279
      %v8317 = vpack.c.b16 %v8282, %v8281
      %v8318 = vpack.c.b16 %v8284, %v8283
      %v8319 = vpack.c.b16 %v8286, %v8285
      %v8320 = vpack.c.b16 %v8288, %v8287
      %v8321 = vpack.c.b16 %v8290, %v8289
      %v8322 = vpack.c.b16 %v8292, %v8291
      %v8323 = vpack.c.b16 %v8294, %v8293
      %v8324 = vpack.c.b16 %v8296, %v8295
      %v8325 = vpack.c.b16 %v8298, %v8297
      %v8326 = vpack.c.b16 %v8300, %v8299
      %v8327 = vpack.c.b16 %v8302, %v8301
      %v8328 = vpack.c.b16 %v8304, %v8303
      %8353 = vmatprep.subr.bf16.mxu0 0
      %8354 = vmatpush1.bf16.msra.mxu0 %v8305
      %8355 = vmatprep.subr.bf16.mxu0 0
      %8356 = vmatpush1.bf16.msra.mxu0 %v8306
      %8357 = vmatprep.subr.bf16.mxu0 0
      %8358 = vmatpush1.bf16.msra.mxu0 %v8307
      %8359 = vmatprep.subr.bf16.mxu0 0
      %8360 = vmatpush1.bf16.msra.mxu0 %v8308
      %8361 = vmatprep.subr.bf16.mxu0 0
      %8362 = vmatpush1.bf16.msra.mxu0 %v8309
      %8363 = vmatprep.subr.bf16.mxu0 0
      %8364 = vmatpush1.bf16.msra.mxu0 %v8310
      %8365 = vmatprep.subr.bf16.mxu0 0
      %8366 = vmatpush1.bf16.msra.mxu0 %v8311
      %8367 = vmatprep.subr.bf16.mxu0 0
      %8368 = vmatpush1.bf16.msra.mxu0 %v8312
      %8369 = vmatprep.subr.bf16.mxu0 0
      %8370 = vmatpush1.bf16.msra.mxu0 %v8313
      %8371 = vmatprep.subr.bf16.mxu0 0
      %8372 = vmatpush1.bf16.msra.mxu0 %v8314
      %8373 = vmatprep.subr.bf16.mxu0 0
      %8374 = vmatpush1.bf16.msra.mxu0 %v8315
      %8375 = vmatprep.subr.bf16.mxu0 0
      %8376 = vmatpush1.bf16.msra.mxu0 %v8316
      %8377 = vmatprep.subr.bf16.mxu0 0
      %8378 = vmatpush1.bf16.msra.mxu0 %v8317
      %8379 = vmatprep.subr.bf16.mxu0 0
      %8380 = vmatpush1.bf16.msra.mxu0 %v8318
      %8381 = vmatprep.subr.bf16.mxu0 0
      %8382 = vmatpush1.bf16.msra.mxu0 %v8319
      %8383 = vmatprep.subr.bf16.mxu0 0
      %8384 = vmatpush1.bf16.msra.mxu0 %v8320
      %8385 = vmatprep.mubr.bf16.mxu0 %v8066
      %8386 = vmatmul.mubr.bf16.gmra.mrb[0].mxu0 %v8065
      %v8387 = vpop.f32.mrb[0].mxu0
      %v8388 = vadd.f32 0.0, %v8387
      %v8389 = vpop.f32.mrb[0].mxu0
      %v8390 = vpop.f32.mrb[0].mxu0
      %v8391 = vadd.f32 0.0, %v8390
      %v8392 = vpop.f32.mrb[0].mxu0
      %8393 = vmatprep.mubr.bf16.mxu0 %v8069
      %8394 = vmatmul.mubr.bf16.gmra.mrb[0].mxu0 %v8068
      %v8395 = vpop.f32.mrb[0].mxu0
      %v8396 = vadd.f32 0.0, %v8395
      %v8397 = vpop.f32.mrb[0].mxu0
      %v8398 = vpop.f32.mrb[0].mxu0
      %v8399 = vadd.f32 0.0, %v8398
      %v8400 = vpop.f32.mrb[0].mxu0
      %8401 = vmatprep.mubr.bf16.mxu0 %v8072
      %8402 = vmatmul.mubr.bf16.gmra.mrb[0].mxu0 %v8071
      %v8403 = vpop.f32.mrb[0].mxu0
      %v8404 = vadd.f32 0.0, %v8403
      %v8405 = vpop.f32.mrb[0].mxu0
      %v8406 = vpop.f32.mrb[0].mxu0
      %v8407 = vadd.f32 0.0, %v8406
      %v8408 = vpop.f32.mrb[0].mxu0
      %8409 = vmatprep.mubr.bf16.mxu0 %v8075
      %8410 = vmatmul.mubr.bf16.gmra.mrb[0].mxu0 %v8074
      %v8411 = vpop.f32.mrb[0].mxu0
      %v8412 = vadd.f32 0.0, %v8411
      %v8413 = vpop.f32.mrb[0].mxu0
      %v8414 = vpop.f32.mrb[0].mxu0
      %v8415 = vadd.f32 0.0, %v8414
      %v8416 = vpop.f32.mrb[0].mxu0
      %8417 = vmatprep.mubr.bf16.mxu0 %v8078
      %8418 = vmatmul.mubr.bf16.gmra.mrb[0].mxu0 %v8077
      %v8419 = vpop.f32.mrb[0].mxu0
      %v8420 = vadd.f32 0.0, %v8419
      %v8421 = vpop.f32.mrb[0].mxu0
      %v8422 = vpop.f32.mrb[0].mxu0
      %v8423 = vadd.f32 0.0, %v8422
      %v8424 = vpop.f32.mrb[0].mxu0
      %8425 = vmatprep.mubr.bf16.mxu0 %v8081
      %8426 = vmatmul.mubr.bf16.gmra.mrb[0].mxu0 %v8080
      %v8427 = vpop.f32.mrb[0].mxu0
      %v8428 = vadd.f32 0.0, %v8427
      %v8429 = vpop.f32.mrb[0].mxu0
      %v8430 = vpop.f32.mrb[0].mxu0
      %v8431 = vadd.f32 0.0, %v8430
      %v8432 = vpop.f32.mrb[0].mxu0
      %8433 = vmatprep.mubr.bf16.mxu0 %v8084
      %8434 = vmatmul.mubr.bf16.gmra.mrb[0].mxu0 %v8083
      %v8435 = vpop.f32.mrb[0].mxu0
      %v8436 = vadd.f32 0.0, %v8435
      %v8437 = vpop.f32.mrb[0].mxu0
      %v8438 = vpop.f32.mrb[0].mxu0
      %v8439 = vadd.f32 0.0, %v8438
      %v8440 = vpop.f32.mrb[0].mxu0
      %8441 = vmatprep.mubr.bf16.mxu0 %v8087
      %8442 = vmatmul.mubr.bf16.gmra.mrb[0].mxu0 %v8086
      %v8443 = vpop.f32.mrb[0].mxu0
      %v8444 = vadd.f32 0.0, %v8443
      %v8445 = vpop.f32.mrb[0].mxu0
      %v8446 = vpop.f32.mrb[0].mxu0
      %v8447 = vadd.f32 0.0, %v8446
      %v8448 = vpop.f32.mrb[0].mxu0
      %8449 = vmatprep.mubr.bf16.mxu0 %v8090
      %8450 = vmatmul.mubr.bf16.gmra.mrb[0].mxu0 %v8089
      %v8451 = vpop.f32.mrb[0].mxu0
      %v8452 = vadd.f32 0.0, %v8451
      %v8453 = vpop.f32.mrb[0].mxu0
      %v8454 = vpop.f32.mrb[0].mxu0
      %v8455 = vadd.f32 0.0, %v8454
      %v8456 = vpop.f32.mrb[0].mxu0
      %8457 = vmatprep.mubr.bf16.mxu0 %v8093
      %8458 = vmatmul.mubr.bf16.gmra.mrb[0].mxu0 %v8092
      %v8459 = vpop.f32.mrb[0].mxu0
      %v8460 = vadd.f32 0.0, %v8459
      %v8461 = vpop.f32.mrb[0].mxu0
      %v8462 = vpop.f32.mrb[0].mxu0
      %v8463 = vadd.f32 0.0, %v8462
      %v8464 = vpop.f32.mrb[0].mxu0
      %8465 = vmatprep.mubr.bf16.mxu0 %v8096
      %8466 = vmatmul.mubr.bf16.gmra.mrb[0].mxu0 %v8095
      %v8467 = vpop.f32.mrb[0].mxu0
      %v8468 = vadd.f32 0.0, %v8467
      %v8469 = vpop.f32.mrb[0].mxu0
      %v8470 = vpop.f32.mrb[0].mxu0
      %v8471 = vadd.f32 0.0, %v8470
      %v8472 = vpop.f32.mrb[0].mxu0
      %8473 = vmatprep.mubr.bf16.mxu0 %v8099
      %8474 = vmatmul.mubr.bf16.gmra.mrb[0].mxu0 %v8098
      %v8475 = vpop.f32.mrb[0].mxu0
      %v8476 = vadd.f32 0.0, %v8475
      %v8477 = vpop.f32.mrb[0].mxu0
      %v8478 = vpop.f32.mrb[0].mxu0
      %v8479 = vadd.f32 0.0, %v8478
      %v8480 = vpop.f32.mrb[0].mxu0
      %8481 = vmatprep.mubr.bf16.mxu0 %v8102
      %8482 = vmatmul.mubr.bf16.gmra.mrb[0].mxu0 %v8101
      %v8483 = vpop.f32.mrb[0].mxu0
      %v8484 = vadd.f32 0.0, %v8483
      %v8485 = vpop.f32.mrb[0].mxu0
      %v8486 = vpop.f32.mrb[0].mxu0
      %v8487 = vadd.f32 0.0, %v8486
      %v8488 = vpop.f32.mrb[0].mxu0
      %8489 = vmatprep.mubr.bf16.mxu0 %v8105
      %8490 = vmatmul.mubr.bf16.gmra.mrb[0].mxu0 %v8104
      %v8491 = vpop.f32.mrb[0].mxu0
      %v8492 = vadd.f32 0.0, %v8491
      %v8493 = vpop.f32.mrb[0].mxu0
      %v8494 = vpop.f32.mrb[0].mxu0
      %v8495 = vadd.f32 0.0, %v8494
      %v8496 = vpop.f32.mrb[0].mxu0
      %8497 = vmatprep.mubr.bf16.mxu0 %v8108
      %8498 = vmatmul.mubr.bf16.gmra.mrb[0].mxu0 %v8107
      %v8499 = vpop.f32.mrb[0].mxu0
      %v8500 = vadd.f32 0.0, %v8499
      %v8501 = vpop.f32.mrb[0].mxu0
      %v8502 = vpop.f32.mrb[0].mxu0
      %v8503 = vadd.f32 0.0, %v8502
      %v8504 = vpop.f32.mrb[0].mxu0
      %8505 = vmatprep.mubr.bf16.mxu0 %v8111
      %8506 = vmatmul.mubr.bf16.gmra.mrb[0].mxu0 %v8110
      %v8507 = vpop.f32.mrb[0].mxu0
      %v8508 = vadd.f32 0.0, %v8507
      %v8509 = vpop.f32.mrb[0].mxu0
      %v8510 = vpop.f32.mrb[0].mxu0
      %v8511 = vadd.f32 0.0, %v8510
      %v8512 = vpop.f32.mrb[0].mxu0
      %8513 = vmatprep.mubr.bf16.mxu0 %v8114
      %8514 = vmatmul.mubr.bf16.gmra.mrb[0].mxu0 %v8113
      %v8515 = vpop.f32.mrb[0].mxu0
      %v8516 = vadd.f32 0.0, %v8515
      %v8517 = vpop.f32.mrb[0].mxu0
      %v8518 = vpop.f32.mrb[0].mxu0
      %v8519 = vadd.f32 0.0, %v8518
      %v8520 = vpop.f32.mrb[0].mxu0
      %8521 = vmatprep.mubr.bf16.mxu0 %v8117
      %8522 = vmatmul.mubr.bf16.gmra.mrb[0].mxu0 %v8116
      %v8523 = vpop.f32.mrb[0].mxu0
      %v8524 = vadd.f32 0.0, %v8523
      %v8525 = vpop.f32.mrb[0].mxu0
      %v8526 = vpop.f32.mrb[0].mxu0
      %v8527 = vadd.f32 0.0, %v8526
      %v8528 = vpop.f32.mrb[0].mxu0
      %8529 = vmatprep.mubr.bf16.mxu0 %v8120
      %8530 = vmatmul.mubr.bf16.gmra.mrb[0].mxu0 %v8119
      %v8531 = vpop.f32.mrb[0].mxu0
      %v8532 = vadd.f32 0.0, %v8531
      %v8533 = vpop.f32.mrb[0].mxu0
      %v8534 = vpop.f32.mrb[0].mxu0
      %v8535 = vadd.f32 0.0, %v8534
      %v8536 = vpop.f32.mrb[0].mxu0
      %8537 = vmatprep.mubr.bf16.mxu0 %v8123
      %8538 = vmatmul.mubr.bf16.gmra.mrb[0].mxu0 %v8122
      %v8539 = vpop.f32.mrb[0].mxu0
      %v8540 = vadd.f32 0.0, %v8539
      %v8541 = vpop.f32.mrb[0].mxu0
      %v8542 = vpop.f32.mrb[0].mxu0
      %v8543 = vadd.f32 0.0, %v8542
      %v8544 = vpop.f32.mrb[0].mxu0
      %8545 = vmatprep.mubr.bf16.mxu0 %v8126
      %8546 = vmatmul.mubr.bf16.gmra.mrb[0].mxu0 %v8125
      %v8547 = vpop.f32.mrb[0].mxu0
      %v8548 = vadd.f32 0.0, %v8547
      %v8549 = vpop.f32.mrb[0].mxu0
      %v8550 = vpop.f32.mrb[0].mxu0
      %v8551 = vadd.f32 0.0, %v8550
      %v8552 = vpop.f32.mrb[0].mxu0
      %8553 = vmatprep.mubr.bf16.mxu0 %v8129
      %8554 = vmatmul.mubr.bf16.gmra.mrb[0].mxu0 %v8128
      %v8555 = vpop.f32.mrb[0].mxu0
      %v8556 = vadd.f32 0.0, %v8555
      %v8557 = vpop.f32.mrb[0].mxu0
      %v8558 = vpop.f32.mrb[0].mxu0
      %v8559 = vadd.f32 0.0, %v8558
      %v8560 = vpop.f32.mrb[0].mxu0
      %8561 = vmatprep.mubr.bf16.mxu0 %v8132
      %8562 = vmatmul.mubr.bf16.gmra.mrb[0].mxu0 %v8131
      %v8563 = vpop.f32.mrb[0].mxu0
      %v8564 = vadd.f32 0.0, %v8563
      %v8565 = vpop.f32.mrb[0].mxu0
      %v8566 = vpop.f32.mrb[0].mxu0
      %v8567 = vadd.f32 0.0, %v8566
      %v8568 = vpop.f32.mrb[0].mxu0
      %8569 = vmatprep.mubr.bf16.mxu0 %v8135
      %8570 = vmatmul.mubr.bf16.gmra.mrb[0].mxu0 %v8134
      %v8571 = vpop.f32.mrb[0].mxu0
      %v8572 = vadd.f32 0.0, %v8571
      %v8573 = vpop.f32.mrb[0].mxu0
      %v8574 = vpop.f32.mrb[0].mxu0
      %v8575 = vadd.f32 0.0, %v8574
      %v8576 = vpop.f32.mrb[0].mxu0
      %8577 = vmatprep.mubr.bf16.mxu0 %v8138
      %8578 = vmatmul.mubr.bf16.gmra.mrb[0].mxu0 %v8137
      %v8579 = vpop.f32.mrb[0].mxu0
      %v8580 = vadd.f32 0.0, %v8579
      %v8581 = vpop.f32.mrb[0].mxu0
      %v8582 = vpop.f32.mrb[0].mxu0
      %v8583 = vadd.f32 0.0, %v8582
      %v8584 = vpop.f32.mrb[0].mxu0
      %8585 = vmatprep.mubr.bf16.mxu0 %v8141
      %8586 = vmatmul.mubr.bf16.gmra.mrb[0].mxu0 %v8140
      %v8587 = vpop.f32.mrb[0].mxu0
      %v8588 = vadd.f32 0.0, %v8587
      %v8589 = vpop.f32.mrb[0].mxu0
      %v8590 = vpop.f32.mrb[0].mxu0
      %v8591 = vadd.f32 0.0, %v8590
      %v8592 = vpop.f32.mrb[0].mxu0
      %8593 = vmatprep.mubr.bf16.mxu0 %v8144
      %8594 = vmatmul.mubr.bf16.gmra.mrb[0].mxu0 %v8143
      %v8595 = vpop.f32.mrb[0].mxu0
      %v8596 = vadd.f32 0.0, %v8595
      %v8597 = vpop.f32.mrb[0].mxu0
      %v8598 = vpop.f32.mrb[0].mxu0
      %v8599 = vadd.f32 0.0, %v8598
      %v8600 = vpop.f32.mrb[0].mxu0
      %8601 = vmatprep.mubr.bf16.mxu0 %v8147
      %8602 = vmatmul.mubr.bf16.gmra.mrb[0].mxu0 %v8146
      %v8603 = vpop.f32.mrb[0].mxu0
      %v8604 = vadd.f32 0.0, %v8603
      %v8605 = vpop.f32.mrb[0].mxu0
      %v8606 = vpop.f32.mrb[0].mxu0
      %v8607 = vadd.f32 0.0, %v8606
      %v8608 = vpop.f32.mrb[0].mxu0
      %8609 = vmatprep.mubr.bf16.mxu0 %v8150
      %8610 = vmatmul.mubr.bf16.gmra.mrb[0].mxu0 %v8149
      %v8611 = vpop.f32.mrb[0].mxu0
      %v8612 = vadd.f32 0.0, %v8611
      %v8613 = vpop.f32.mrb[0].mxu0
      %v8614 = vpop.f32.mrb[0].mxu0
      %v8615 = vadd.f32 0.0, %v8614
      %v8616 = vpop.f32.mrb[0].mxu0
      %8617 = vmatprep.mubr.bf16.mxu0 %v8153
      %8618 = vmatmul.mubr.bf16.gmra.mrb[0].mxu0 %v8152
      %v8619 = vpop.f32.mrb[0].mxu0
      %v8620 = vadd.f32 0.0, %v8619
      %v8621 = vpop.f32.mrb[0].mxu0
      %v8622 = vpop.f32.mrb[0].mxu0
      %v8623 = vadd.f32 0.0, %v8622
      %v8624 = vpop.f32.mrb[0].mxu0
      %8625 = vmatprep.mubr.bf16.mxu0 %v8156
      %8626 = vmatmul.mubr.bf16.gmra.mrb[0].mxu0 %v8155
      %v8627 = vpop.f32.mrb[0].mxu0
      %v8628 = vadd.f32 0.0, %v8627
      %v8629 = vpop.f32.mrb[0].mxu0
      %v8630 = vpop.f32.mrb[0].mxu0
      %v8631 = vadd.f32 0.0, %v8630
      %v8632 = vpop.f32.mrb[0].mxu0
      %8633 = vmatprep.mubr.bf16.mxu0 %v8159
      %8634 = vmatmul.mubr.bf16.gmra.mrb[0].mxu0 %v8158
      %v8635 = vpop.f32.mrb[0].mxu0
      %v8636 = vadd.f32 0.0, %v8635
      %v8637 = vpop.f32.mrb[0].mxu0
      %v8638 = vpop.f32.mrb[0].mxu0
      %v8639 = vadd.f32 0.0, %v8638
      %v8640 = vpop.f32.mrb[0].mxu0
      %8641 = vdwg.mxu0
      %8642 = vmatprep.subr.bf16.mxu0 0
      %8643 = vmatpush1.bf16.msra.mxu0 %v8321
      %8644 = vmatprep.subr.bf16.mxu0 0
      %8645 = vmatpush1.bf16.msra.mxu0 %v8322
      %8646 = vmatprep.subr.bf16.mxu0 0
      %8647 = vmatpush1.bf16.msra.mxu0 %v8323
      %8648 = vmatprep.subr.bf16.mxu0 0
      %8649 = vmatpush1.bf16.msra.mxu0 %v8324
      %8650 = vmatprep.subr.bf16.mxu0 0
      %8651 = vmatpush1.bf16.msra.mxu0 %v8325
      %8652 = vmatprep.subr.bf16.mxu0 0
      %8653 = vmatpush1.bf16.msra.mxu0 %v8326
      %8654 = vmatprep.subr.bf16.mxu0 0
      %8655 = vmatpush1.bf16.msra.mxu0 %v8327
      %8656 = vmatprep.subr.bf16.mxu0 0
      %8657 = vmatpush1.bf16.msra.mxu0 %v8328
      %8658 = vmatprep.subr.bf16.mxu0 0
      %8659 = vmatpush1.bf16.msra.mxu0 0
      %8660 = vmatprep.subr.bf16.mxu0 0
      %8661 = vmatpush1.bf16.msra.mxu0 0
      %8662 = vmatprep.subr.bf16.mxu0 0
      %8663 = vmatpush1.bf16.msra.mxu0 0
      %8664 = vmatprep.subr.bf16.mxu0 0
      %8665 = vmatpush1.bf16.msra.mxu0 0
      %8666 = vmatprep.subr.bf16.mxu0 0
      %8667 = vmatpush1.bf16.msra.mxu0 0
      %8668 = vmatprep.subr.bf16.mxu0 0
      %8669 = vmatpush1.bf16.msra.mxu0 0
      %8670 = vmatprep.subr.bf16.mxu0 0
      %8671 = vmatpush1.bf16.msra.mxu0 0
      %8672 = vmatprep.subr.bf16.mxu0 0
      %8673 = vmatpush1.bf16.msra.mxu0 0
      %8674 = vmatprep.mubr.bf16.mxu0 0
      %8675 = vmatmul.mubr.bf16.gmra.mrb[0].mxu0 %v8067
      %v8676 = vpop.f32.mrb[0].mxu0
      %v8677 = vadd.f32 %v8388, %v8676
      %v8678 = vpop.f32.mrb[0].mxu0
      %v8679 = vpop.f32.mrb[0].mxu0
      %v8680 = vadd.f32 %v8391, %v8679
      %v8681 = vpop.f32.mrb[0].mxu0
      %8682 = vmatprep.mubr.bf16.mxu0 0
      %8683 = vmatmul.mubr.bf16.gmra.mrb[0].mxu0 %v8070
      %v8684 = vpop.f32.mrb[0].mxu0
      %v8685 = vadd.f32 %v8396, %v8684
      %v8686 = vpop.f32.mrb[0].mxu0
      %v8687 = vpop.f32.mrb[0].mxu0
      %v8688 = vadd.f32 %v8399, %v8687
      %v8689 = vpop.f32.mrb[0].mxu0
      %8690 = vmatprep.mubr.bf16.mxu0 0
      %8691 = vmatmul.mubr.bf16.gmra.mrb[0].mxu0 %v8073
      %v8692 = vpop.f32.mrb[0].mxu0
      %v8693 = vadd.f32 %v8404, %v8692
      %v8694 = vpop.f32.mrb[0].mxu0
      %v8695 = vpop.f32.mrb[0].mxu0
      %v8696 = vadd.f32 %v8407, %v8695
      %v8697 = vpop.f32.mrb[0].mxu0
      %8698 = vmatprep.mubr.bf16.mxu0 0
      %8699 = vmatmul.mubr.bf16.gmra.mrb[0].mxu0 %v8076
      %v8700 = vpop.f32.mrb[0].mxu0
      %v8701 = vadd.f32 %v8412, %v8700
      %v8702 = vpop.f32.mrb[0].mxu0
      %v8703 = vpop.f32.mrb[0].mxu0
      %v8704 = vadd.f32 %v8415, %v8703
      %v8705 = vpop.f32.mrb[0].mxu0
      %8706 = vmatprep.mubr.bf16.mxu0 0
      %8707 = vmatmul.mubr.bf16.gmra.mrb[0].mxu0 %v8079
      %v8708 = vpop.f32.mrb[0].mxu0
      %v8709 = vadd.f32 %v8420, %v8708
      %v8710 = vpop.f32.mrb[0].mxu0
      %v8711 = vpop.f32.mrb[0].mxu0
      %v8712 = vadd.f32 %v8423, %v8711
      %v8713 = vpop.f32.mrb[0].mxu0
      %8714 = vmatprep.mubr.bf16.mxu0 0
      %8715 = vmatmul.mubr.bf16.gmra.mrb[0].mxu0 %v8082
      %v8716 = vpop.f32.mrb[0].mxu0
      %v8717 = vadd.f32 %v8428, %v8716
      %v8718 = vpop.f32.mrb[0].mxu0
      %v8719 = vpop.f32.mrb[0].mxu0
      %v8720 = vadd.f32 %v8431, %v8719
      %v8721 = vpop.f32.mrb[0].mxu0
      %8722 = vmatprep.mubr.bf16.mxu0 0
      %8723 = vmatmul.mubr.bf16.gmra.mrb[0].mxu0 %v8085
      %v8724 = vpop.f32.mrb[0].mxu0
      %v8725 = vadd.f32 %v8436, %v8724
      %v8726 = vpop.f32.mrb[0].mxu0
      %v8727 = vpop.f32.mrb[0].mxu0
      %v8728 = vadd.f32 %v8439, %v8727
      %v8729 = vpop.f32.mrb[0].mxu0
      %8730 = vmatprep.mubr.bf16.mxu0 0
      %8731 = vmatmul.mubr.bf16.gmra.mrb[0].mxu0 %v8088
      %v8732 = vpop.f32.mrb[0].mxu0
      %v8733 = vadd.f32 %v8444, %v8732
      %v8734 = vpop.f32.mrb[0].mxu0
      %v8735 = vpop.f32.mrb[0].mxu0
      %v8736 = vadd.f32 %v8447, %v8735
      %v8737 = vpop.f32.mrb[0].mxu0
      %8738 = vmatprep.mubr.bf16.mxu0 0
      %8739 = vmatmul.mubr.bf16.gmra.mrb[0].mxu0 %v8091
      %v8740 = vpop.f32.mrb[0].mxu0
      %v8741 = vadd.f32 %v8452, %v8740
      %v8742 = vpop.f32.mrb[0].mxu0
      %v8743 = vpop.f32.mrb[0].mxu0
      %v8744 = vadd.f32 %v8455, %v8743
      %v8745 = vpop.f32.mrb[0].mxu0
      %8746 = vmatprep.mubr.bf16.mxu0 0
      %8747 = vmatmul.mubr.bf16.gmra.mrb[0].mxu0 %v8094
      %v8748 = vpop.f32.mrb[0].mxu0
      %v8749 = vadd.f32 %v8460, %v8748
      %v8750 = vpop.f32.mrb[0].mxu0
      %v8751 = vpop.f32.mrb[0].mxu0
      %v8752 = vadd.f32 %v8463, %v8751
      %v8753 = vpop.f32.mrb[0].mxu0
      %8754 = vmatprep.mubr.bf16.mxu0 0
      %8755 = vmatmul.mubr.bf16.gmra.mrb[0].mxu0 %v8097
      %v8756 = vpop.f32.mrb[0].mxu0
      %v8757 = vadd.f32 %v8468, %v8756
      %v8758 = vpop.f32.mrb[0].mxu0
      %v8759 = vpop.f32.mrb[0].mxu0
      %v8760 = vadd.f32 %v8471, %v8759
      %v8761 = vpop.f32.mrb[0].mxu0
      %8762 = vmatprep.mubr.bf16.mxu0 0
      %8763 = vmatmul.mubr.bf16.gmra.mrb[0].mxu0 %v8100
      %v8764 = vpop.f32.mrb[0].mxu0
      %v8765 = vadd.f32 %v8476, %v8764
      %v8766 = vpop.f32.mrb[0].mxu0
      %v8767 = vpop.f32.mrb[0].mxu0
      %v8768 = vadd.f32 %v8479, %v8767
      %v8769 = vpop.f32.mrb[0].mxu0
      %8770 = vmatprep.mubr.bf16.mxu0 0
      %8771 = vmatmul.mubr.bf16.gmra.mrb[0].mxu0 %v8103
      %v8772 = vpop.f32.mrb[0].mxu0
      %v8773 = vadd.f32 %v8484, %v8772
      %v8774 = vpop.f32.mrb[0].mxu0
      %v8775 = vpop.f32.mrb[0].mxu0
      %v8776 = vadd.f32 %v8487, %v8775
      %v8777 = vpop.f32.mrb[0].mxu0
      %8778 = vmatprep.mubr.bf16.mxu0 0
      %8779 = vmatmul.mubr.bf16.gmra.mrb[0].mxu0 %v8106
      %v8780 = vpop.f32.mrb[0].mxu0
      %v8781 = vadd.f32 %v8492, %v8780
      %v8782 = vpop.f32.mrb[0].mxu0
      %v8783 = vpop.f32.mrb[0].mxu0
      %v8784 = vadd.f32 %v8495, %v8783
      %v8785 = vpop.f32.mrb[0].mxu0
      %8786 = vmatprep.mubr.bf16.mxu0 0
      %8787 = vmatmul.mubr.bf16.gmra.mrb[0].mxu0 %v8109
      %v8788 = vpop.f32.mrb[0].mxu0
      %v8789 = vadd.f32 %v8500, %v8788
      %v8790 = vpop.f32.mrb[0].mxu0
      %v8791 = vpop.f32.mrb[0].mxu0
      %v8792 = vadd.f32 %v8503, %v8791
      %v8793 = vpop.f32.mrb[0].mxu0
      %8794 = vmatprep.mubr.bf16.mxu0 0
      %8795 = vmatmul.mubr.bf16.gmra.mrb[0].mxu0 %v8112
      %v8796 = vpop.f32.mrb[0].mxu0
      %v8797 = vadd.f32 %v8508, %v8796
      %v8798 = vpop.f32.mrb[0].mxu0
      %v8799 = vpop.f32.mrb[0].mxu0
      %v8800 = vadd.f32 %v8511, %v8799
      %v8801 = vpop.f32.mrb[0].mxu0
      %8802 = vmatprep.mubr.bf16.mxu0 0
      %8803 = vmatmul.mubr.bf16.gmra.mrb[0].mxu0 %v8115
      %v8804 = vpop.f32.mrb[0].mxu0
      %v8805 = vadd.f32 %v8516, %v8804
      %v8806 = vpop.f32.mrb[0].mxu0
      %v8807 = vpop.f32.mrb[0].mxu0
      %v8808 = vadd.f32 %v8519, %v8807
      %v8809 = vpop.f32.mrb[0].mxu0
      %8810 = vmatprep.mubr.bf16.mxu0 0
      %8811 = vmatmul.mubr.bf16.gmra.mrb[0].mxu0 %v8118
      %v8812 = vpop.f32.mrb[0].mxu0
      %v8813 = vadd.f32 %v8524, %v8812
      %v8814 = vpop.f32.mrb[0].mxu0
      %v8815 = vpop.f32.mrb[0].mxu0
      %v8816 = vadd.f32 %v8527, %v8815
      %v8817 = vpop.f32.mrb[0].mxu0
      %8818 = vmatprep.mubr.bf16.mxu0 0
      %8819 = vmatmul.mubr.bf16.gmra.mrb[0].mxu0 %v8121
      %v8820 = vpop.f32.mrb[0].mxu0
      %v8821 = vadd.f32 %v8532, %v8820
      %v8822 = vpop.f32.mrb[0].mxu0
      %v8823 = vpop.f32.mrb[0].mxu0
      %v8824 = vadd.f32 %v8535, %v8823
      %v8825 = vpop.f32.mrb[0].mxu0
      %8826 = vmatprep.mubr.bf16.mxu0 0
      %8827 = vmatmul.mubr.bf16.gmra.mrb[0].mxu0 %v8124
      %v8828 = vpop.f32.mrb[0].mxu0
      %v8829 = vadd.f32 %v8540, %v8828
      %v8830 = vpop.f32.mrb[0].mxu0
      %v8831 = vpop.f32.mrb[0].mxu0
      %v8832 = vadd.f32 %v8543, %v8831
      %v8833 = vpop.f32.mrb[0].mxu0
      %8834 = vmatprep.mubr.bf16.mxu0 0
      %8835 = vmatmul.mubr.bf16.gmra.mrb[0].mxu0 %v8127
      %v8836 = vpop.f32.mrb[0].mxu0
      %v8837 = vadd.f32 %v8548, %v8836
      %v8838 = vpop.f32.mrb[0].mxu0
      %v8839 = vpop.f32.mrb[0].mxu0
      %v8840 = vadd.f32 %v8551, %v8839
      %v8841 = vpop.f32.mrb[0].mxu0
      %8842 = vmatprep.mubr.bf16.mxu0 0
      %8843 = vmatmul.mubr.bf16.gmra.mrb[0].mxu0 %v8130
      %v8844 = vpop.f32.mrb[0].mxu0
      %v8845 = vadd.f32 %v8556, %v8844
      %v8846 = vpop.f32.mrb[0].mxu0
      %v8847 = vpop.f32.mrb[0].mxu0
      %v8848 = vadd.f32 %v8559, %v8847
      %v8849 = vpop.f32.mrb[0].mxu0
      %8850 = vmatprep.mubr.bf16.mxu0 0
      %8851 = vmatmul.mubr.bf16.gmra.mrb[0].mxu0 %v8133
      %v8852 = vpop.f32.mrb[0].mxu0
      %v8853 = vadd.f32 %v8564, %v8852
      %v8854 = vpop.f32.mrb[0].mxu0
      %v8855 = vpop.f32.mrb[0].mxu0
      %v8856 = vadd.f32 %v8567, %v8855
      %v8857 = vpop.f32.mrb[0].mxu0
      %8858 = vmatprep.mubr.bf16.mxu0 0
      %8859 = vmatmul.mubr.bf16.gmra.mrb[0].mxu0 %v8136
      %v8860 = vpop.f32.mrb[0].mxu0
      %v8861 = vadd.f32 %v8572, %v8860
      %v8862 = vpop.f32.mrb[0].mxu0
      %v8863 = vpop.f32.mrb[0].mxu0
      %v8864 = vadd.f32 %v8575, %v8863
      %v8865 = vpop.f32.mrb[0].mxu0
      %8866 = vmatprep.mubr.bf16.mxu0 0
      %8867 = vmatmul.mubr.bf16.gmra.mrb[0].mxu0 %v8139
      %v8868 = vpop.f32.mrb[0].mxu0
      %v8869 = vadd.f32 %v8580, %v8868
      %v8870 = vpop.f32.mrb[0].mxu0
      %v8871 = vpop.f32.mrb[0].mxu0
      %v8872 = vadd.f32 %v8583, %v8871
      %v8873 = vpop.f32.mrb[0].mxu0
      %8874 = vmatprep.mubr.bf16.mxu0 0
      %8875 = vmatmul.mubr.bf16.gmra.mrb[0].mxu0 %v8142
      %v8876 = vpop.f32.mrb[0].mxu0
      %v8877 = vadd.f32 %v8588, %v8876
      %v8878 = vpop.f32.mrb[0].mxu0
      %v8879 = vpop.f32.mrb[0].mxu0
      %v8880 = vadd.f32 %v8591, %v8879
      %v8881 = vpop.f32.mrb[0].mxu0
      %8882 = vmatprep.mubr.bf16.mxu0 0
      %8883 = vmatmul.mubr.bf16.gmra.mrb[0].mxu0 %v8145
      %v8884 = vpop.f32.mrb[0].mxu0
      %v8885 = vadd.f32 %v8596, %v8884
      %v8886 = vpop.f32.mrb[0].mxu0
      %v8887 = vpop.f32.mrb[0].mxu0
      %v8888 = vadd.f32 %v8599, %v8887
      %v8889 = vpop.f32.mrb[0].mxu0
      %8890 = vmatprep.mubr.bf16.mxu0 0
      %8891 = vmatmul.mubr.bf16.gmra.mrb[0].mxu0 %v8148
      %v8892 = vpop.f32.mrb[0].mxu0
      %v8893 = vadd.f32 %v8604, %v8892
      %v8894 = vpop.f32.mrb[0].mxu0
      %v8895 = vpop.f32.mrb[0].mxu0
      %v8896 = vadd.f32 %v8607, %v8895
      %v8897 = vpop.f32.mrb[0].mxu0
      %8898 = vmatprep.mubr.bf16.mxu0 0
      %8899 = vmatmul.mubr.bf16.gmra.mrb[0].mxu0 %v8151
      %v8900 = vpop.f32.mrb[0].mxu0
      %v8901 = vadd.f32 %v8612, %v8900
      %v8902 = vpop.f32.mrb[0].mxu0
      %v8903 = vpop.f32.mrb[0].mxu0
      %v8904 = vadd.f32 %v8615, %v8903
      %v8905 = vpop.f32.mrb[0].mxu0
      %8906 = vmatprep.mubr.bf16.mxu0 0
      %8907 = vmatmul.mubr.bf16.gmra.mrb[0].mxu0 %v8154
      %v8908 = vpop.f32.mrb[0].mxu0
      %v8909 = vadd.f32 %v8620, %v8908
      %v8910 = vpop.f32.mrb[0].mxu0
      %v8911 = vpop.f32.mrb[0].mxu0
      %v8912 = vadd.f32 %v8623, %v8911
      %v8913 = vpop.f32.mrb[0].mxu0
      %8914 = vmatprep.mubr.bf16.mxu0 0
      %8915 = vmatmul.mubr.bf16.gmra.mrb[0].mxu0 %v8157
      %v8916 = vpop.f32.mrb[0].mxu0
      %v8917 = vadd.f32 %v8628, %v8916
      %v8918 = vpop.f32.mrb[0].mxu0
      %v8919 = vpop.f32.mrb[0].mxu0
      %v8920 = vadd.f32 %v8631, %v8919
      %v8921 = vpop.f32.mrb[0].mxu0
      %8922 = vmatprep.mubr.bf16.mxu0 0
      %8923 = vmatmul.mubr.bf16.gmra.mrb[0].mxu0 %v8160
      %v8924 = vpop.f32.mrb[0].mxu0
      %v8925 = vadd.f32 %v8636, %v8924
      %v8926 = vpop.f32.mrb[0].mxu0
      %v8927 = vpop.f32.mrb[0].mxu0
      %v8928 = vadd.f32 %v8639, %v8927
      %v8929 = vpop.f32.mrb[0].mxu0
      %8930 = vdwg.mxu0
      %v8931 = vadd.f32 %v7811, %v8677
      %v8932 = vadd.f32 %v7814, %v8680
      %v8933 = vadd.f32 %v7819, %v8685
      %v8934 = vadd.f32 %v7822, %v8688
      %v8935 = vadd.f32 %v7827, %v8693
      %v8936 = vadd.f32 %v7830, %v8696
      %v8937 = vadd.f32 %v7835, %v8701
      %v8938 = vadd.f32 %v7838, %v8704
      %v8939 = vadd.f32 %v7843, %v8709
      %v8940 = vadd.f32 %v7846, %v8712
      %v8941 = vadd.f32 %v7851, %v8717
      %v8942 = vadd.f32 %v7854, %v8720
      %v8943 = vadd.f32 %v7859, %v8725
      %v8944 = vadd.f32 %v7862, %v8728
      %v8945 = vadd.f32 %v7867, %v8733
      %v8946 = vadd.f32 %v7870, %v8736
      %v8947 = vadd.f32 %v7875, %v8741
      %v8948 = vadd.f32 %v7878, %v8744
      %v8949 = vadd.f32 %v7883, %v8749
      %v8950 = vadd.f32 %v7886, %v8752
      %v8951 = vadd.f32 %v7891, %v8757
      %v8952 = vadd.f32 %v7894, %v8760
      %v8953 = vadd.f32 %v7899, %v8765
      %v8954 = vadd.f32 %v7902, %v8768
      %v8955 = vadd.f32 %v7907, %v8773
      %v8956 = vadd.f32 %v7910, %v8776
      %v8957 = vadd.f32 %v7915, %v8781
      %v8958 = vadd.f32 %v7918, %v8784
      %v8959 = vadd.f32 %v7923, %v8789
      %v8960 = vadd.f32 %v7926, %v8792
      %v8961 = vadd.f32 %v7931, %v8797
      %v8962 = vadd.f32 %v7934, %v8800
      %v8963 = vadd.f32 %v7939, %v8805
      %v8964 = vadd.f32 %v7942, %v8808
      %v8965 = vadd.f32 %v7947, %v8813
      %v8966 = vadd.f32 %v7950, %v8816
      %v8967 = vadd.f32 %v7955, %v8821
      %v8968 = vadd.f32 %v7958, %v8824
      %v8969 = vadd.f32 %v7963, %v8829
      %v8970 = vadd.f32 %v7966, %v8832
      %v8971 = vadd.f32 %v7971, %v8837
      %v8972 = vadd.f32 %v7974, %v8840
      %v8973 = vadd.f32 %v7979, %v8845
      %v8974 = vadd.f32 %v7982, %v8848
      %v8975 = vadd.f32 %v7987, %v8853
      %v8976 = vadd.f32 %v7990, %v8856
      %v8977 = vadd.f32 %v7995, %v8861
      %v8978 = vadd.f32 %v7998, %v8864
      %v8979 = vadd.f32 %v8003, %v8869
      %v8980 = vadd.f32 %v8006, %v8872
      %v8981 = vadd.f32 %v8011, %v8877
      %v8982 = vadd.f32 %v8014, %v8880
      %v8983 = vadd.f32 %v8019, %v8885
      %v8984 = vadd.f32 %v8022, %v8888
      %v8985 = vadd.f32 %v8027, %v8893
      %v8986 = vadd.f32 %v8030, %v8896
      %v8987 = vadd.f32 %v8035, %v8901
      %v8988 = vadd.f32 %v8038, %v8904
      %v8989 = vadd.f32 %v8043, %v8909
      %v8990 = vadd.f32 %v8046, %v8912
      %v8991 = vadd.f32 %v8051, %v8917
      %v8992 = vadd.f32 %v8054, %v8920
      %v8993 = vadd.f32 %v8059, %v8925
      %v8994 = vadd.f32 %v8062, %v8928
      %v8995 = vld [vmem:[%s5] sm:$0x1]
      %v8997 = vlaneseq
      %v8998 = vshrl.u32 %v8997, 7
      %v8999 = vsub.s32 0, %v8998
      %v9000 = vrot.slane %v8995, %v8999
      %v9002 = vadd.f32 %v8931, %v9000
      %v9003 = vadd.f32 %v8932, %v9000
      %v9004 = vadd.f32 %v8933, %v9000
      %v9005 = vadd.f32 %v8934, %v9000
      %v9006 = vadd.f32 %v8935, %v9000
      %v9007 = vadd.f32 %v8936, %v9000
      %v9008 = vadd.f32 %v8937, %v9000
      %v9009 = vadd.f32 %v8938, %v9000
      %v9010 = vadd.f32 %v8939, %v9000
      %v9011 = vadd.f32 %v8940, %v9000
      %v9012 = vadd.f32 %v8941, %v9000
      %v9013 = vadd.f32 %v8942, %v9000
      %v9014 = vadd.f32 %v8943, %v9000
      %v9015 = vadd.f32 %v8944, %v9000
      %v9016 = vadd.f32 %v8945, %v9000
      %v9017 = vadd.f32 %v8946, %v9000
      %v9018 = vadd.f32 %v8947, %v9000
      %v9019 = vadd.f32 %v8948, %v9000
      %v9020 = vadd.f32 %v8949, %v9000
      %v9021 = vadd.f32 %v8950, %v9000
      %v9022 = vadd.f32 %v8951, %v9000
      %v9023 = vadd.f32 %v8952, %v9000
      %v9024 = vadd.f32 %v8953, %v9000
      %v9025 = vadd.f32 %v8954, %v9000
      %v9026 = vadd.f32 %v8955, %v9000
      %v9027 = vadd.f32 %v8956, %v9000
      %v9028 = vadd.f32 %v8957, %v9000
      %v9029 = vadd.f32 %v8958, %v9000
      %v9030 = vadd.f32 %v8959, %v9000
      %v9031 = vadd.f32 %v8960, %v9000
      %v9032 = vadd.f32 %v8961, %v9000
      %v9033 = vadd.f32 %v8962, %v9000
      %v9034 = vadd.f32 %v8963, %v9000
      %v9035 = vadd.f32 %v8964, %v9000
      %v9036 = vadd.f32 %v8965, %v9000
      %v9037 = vadd.f32 %v8966, %v9000
      %v9038 = vadd.f32 %v8967, %v9000
      %v9039 = vadd.f32 %v8968, %v9000
      %v9040 = vadd.f32 %v8969, %v9000
      %v9041 = vadd.f32 %v8970, %v9000
      %v9042 = vadd.f32 %v8971, %v9000
      %v9043 = vadd.f32 %v8972, %v9000
      %v9044 = vadd.f32 %v8973, %v9000
      %v9045 = vadd.f32 %v8974, %v9000
      %v9046 = vadd.f32 %v8975, %v9000
      %v9047 = vadd.f32 %v8976, %v9000
      %v9048 = vadd.f32 %v8977, %v9000
      %v9049 = vadd.f32 %v8978, %v9000
      %v9050 = vadd.f32 %v8979, %v9000
      %v9051 = vadd.f32 %v8980, %v9000
      %v9052 = vadd.f32 %v8981, %v9000
      %v9053 = vadd.f32 %v8982, %v9000
      %v9054 = vadd.f32 %v8983, %v9000
      %v9055 = vadd.f32 %v8984, %v9000
      %v9056 = vadd.f32 %v8985, %v9000
      %v9057 = vadd.f32 %v8986, %v9000
      %v9058 = vadd.f32 %v8987, %v9000
      %v9059 = vadd.f32 %v8988, %v9000
      %v9060 = vadd.f32 %v8989, %v9000
      %v9061 = vadd.f32 %v8990, %v9000
      %v9062 = vadd.f32 %v8991, %v9000
      %v9063 = vadd.f32 %v8992, %v9000
      %v9064 = vadd.f32 %v8993, %v9000
      %v9065 = vadd.f32 %v8994, %v9000
      %v9066 = vmax.f32 %v9002, 0.0
      %v9067 = vmax.f32 %v9003, 0.0
      %v9068 = vmax.f32 %v9004, 0.0
      %v9069 = vmax.f32 %v9005, 0.0
      %v9070 = vmax.f32 %v9006, 0.0
      %v9071 = vmax.f32 %v9007, 0.0
      %v9072 = vmax.f32 %v9008, 0.0
      %v9073 = vmax.f32 %v9009, 0.0
      %v9074 = vmax.f32 %v9010, 0.0
      %v9075 = vmax.f32 %v9011, 0.0
      %v9076 = vmax.f32 %v9012, 0.0
      %v9077 = vmax.f32 %v9013, 0.0
      %v9078 = vmax.f32 %v9014, 0.0
      %v9079 = vmax.f32 %v9015, 0.0
      %v9080 = vmax.f32 %v9016, 0.0
      %v9081 = vmax.f32 %v9017, 0.0
      %v9082 = vmax.f32 %v9018, 0.0
      %v9083 = vmax.f32 %v9019, 0.0
      %v9084 = vmax.f32 %v9020, 0.0
      %v9085 = vmax.f32 %v9021, 0.0
      %v9086 = vmax.f32 %v9022, 0.0
      %v9087 = vmax.f32 %v9023, 0.0
      %v9088 = vmax.f32 %v9024, 0.0
      %v9089 = vmax.f32 %v9025, 0.0
      %v9090 = vmax.f32 %v9026, 0.0
      %v9091 = vmax.f32 %v9027, 0.0
      %v9092 = vmax.f32 %v9028, 0.0
      %v9093 = vmax.f32 %v9029, 0.0
      %v9094 = vmax.f32 %v9030, 0.0
      %v9095 = vmax.f32 %v9031, 0.0
      %v9096 = vmax.f32 %v9032, 0.0
      %v9097 = vmax.f32 %v9033, 0.0
      %v9098 = vmax.f32 %v9034, 0.0
      %v9099 = vmax.f32 %v9035, 0.0
      %v9100 = vmax.f32 %v9036, 0.0
      %v9101 = vmax.f32 %v9037, 0.0
      %v9102 = vmax.f32 %v9038, 0.0
      %v9103 = vmax.f32 %v9039, 0.0
      %v9104 = vmax.f32 %v9040, 0.0
      %v9105 = vmax.f32 %v9041, 0.0
      %v9106 = vmax.f32 %v9042, 0.0
      %v9107 = vmax.f32 %v9043, 0.0
      %v9108 = vmax.f32 %v9044, 0.0
      %v9109 = vmax.f32 %v9045, 0.0
      %v9110 = vmax.f32 %v9046, 0.0
      %v9111 = vmax.f32 %v9047, 0.0
      %v9112 = vmax.f32 %v9048, 0.0
      %v9113 = vmax.f32 %v9049, 0.0
      %v9114 = vmax.f32 %v9050, 0.0
      %v9115 = vmax.f32 %v9051, 0.0
      %v9116 = vmax.f32 %v9052, 0.0
      %v9117 = vmax.f32 %v9053, 0.0
      %v9118 = vmax.f32 %v9054, 0.0
      %v9119 = vmax.f32 %v9055, 0.0
      %v9120 = vmax.f32 %v9056, 0.0
      %v9121 = vmax.f32 %v9057, 0.0
      %v9122 = vmax.f32 %v9058, 0.0
      %v9123 = vmax.f32 %v9059, 0.0
      %v9124 = vmax.f32 %v9060, 0.0
      %v9125 = vmax.f32 %v9061, 0.0
      %v9126 = vmax.f32 %v9062, 0.0
      %v9127 = vmax.f32 %v9063, 0.0
      %v9128 = vmax.f32 %v9064, 0.0
      %v9129 = vmax.f32 %v9065, 0.0
      %v9130 = vsub.f32 %v4861, %v9066
      %v9131 = vsub.f32 %v4862, %v9067
      %v9132 = vsub.f32 %v4863, %v9068
      %v9133 = vsub.f32 %v4864, %v9069
      %v9134 = vsub.f32 %v4865, %v9070
      %v9135 = vsub.f32 %v4866, %v9071
      %v9136 = vsub.f32 %v4867, %v9072
      %v9137 = vsub.f32 %v4868, %v9073
      %v9138 = vsub.f32 %v4869, %v9074
      %v9139 = vsub.f32 %v4870, %v9075
      %v9140 = vsub.f32 %v4871, %v9076
      %v9141 = vsub.f32 %v4872, %v9077
      %v9142 = vsub.f32 %v4873, %v9078
      %v9143 = vsub.f32 %v4874, %v9079
      %v9144 = vsub.f32 %v4875, %v9080
      %v9145 = vsub.f32 %v4876, %v9081
      %v9146 = vsub.f32 %v4877, %v9082
      %v9147 = vsub.f32 %v4878, %v9083
      %v9148 = vsub.f32 %v4879, %v9084
      %v9149 = vsub.f32 %v4880, %v9085
      %v9150 = vsub.f32 %v4881, %v9086
      %v9151 = vsub.f32 %v4882, %v9087
      %v9152 = vsub.f32 %v4883, %v9088
      %v9153 = vsub.f32 %v4884, %v9089
      %v9154 = vsub.f32 %v4885, %v9090
      %v9155 = vsub.f32 %v4886, %v9091
      %v9156 = vsub.f32 %v4887, %v9092
      %v9157 = vsub.f32 %v4888, %v9093
      %v9158 = vsub.f32 %v4889, %v9094
      %v9159 = vsub.f32 %v4890, %v9095
      %v9160 = vsub.f32 %v4891, %v9096
      %v9161 = vsub.f32 %v4892, %v9097
      %v9162 = vsub.f32 %v4893, %v9098
      %v9163 = vsub.f32 %v4894, %v9099
      %v9164 = vsub.f32 %v4895, %v9100
      %v9165 = vsub.f32 %v4896, %v9101
      %v9166 = vsub.f32 %v4897, %v9102
      %v9167 = vsub.f32 %v4898, %v9103
      %v9168 = vsub.f32 %v4899, %v9104
      %v9169 = vsub.f32 %v4900, %v9105
      %v9170 = vsub.f32 %v4901, %v9106
      %v9171 = vsub.f32 %v4902, %v9107
      %v9172 = vsub.f32 %v4903, %v9108
      %v9173 = vsub.f32 %v4904, %v9109
      %v9174 = vsub.f32 %v4905, %v9110
      %v9175 = vsub.f32 %v4906, %v9111
      %v9176 = vsub.f32 %v4907, %v9112
      %v9177 = vsub.f32 %v4908, %v9113
      %v9178 = vsub.f32 %v4909, %v9114
      %v9179 = vsub.f32 %v4910, %v9115
      %v9180 = vsub.f32 %v4911, %v9116
      %v9181 = vsub.f32 %v4912, %v9117
      %v9182 = vsub.f32 %v4913, %v9118
      %v9183 = vsub.f32 %v4914, %v9119
      %v9184 = vsub.f32 %v4915, %v9120
      %v9185 = vsub.f32 %v4916, %v9121
      %v9186 = vsub.f32 %v4917, %v9122
      %v9187 = vsub.f32 %v4918, %v9123
      %v9188 = vsub.f32 %v4919, %v9124
      %v9189 = vsub.f32 %v4920, %v9125
      %v9190 = vsub.f32 %v4921, %v9126
      %v9191 = vsub.f32 %v4922, %v9127
      %v9192 = vsub.f32 %v4923, %v9128
      %v9193 = vsub.f32 %v4924, %v9129
      %v9194 = vmul.f32 %v9130, %v9130
      %v9195 = vmul.f32 %v9131, %v9131
      %v9196 = vmul.f32 %v9132, %v9132
      %v9197 = vmul.f32 %v9133, %v9133
      %v9198 = vmul.f32 %v9134, %v9134
      %v9199 = vmul.f32 %v9135, %v9135
      %v9200 = vmul.f32 %v9136, %v9136
      %v9201 = vmul.f32 %v9137, %v9137
      %v9202 = vmul.f32 %v9138, %v9138
      %v9203 = vmul.f32 %v9139, %v9139
      %v9204 = vmul.f32 %v9140, %v9140
      %v9205 = vmul.f32 %v9141, %v9141
      %v9206 = vmul.f32 %v9142, %v9142
      %v9207 = vmul.f32 %v9143, %v9143
      %v9208 = vmul.f32 %v9144, %v9144
      %v9209 = vmul.f32 %v9145, %v9145
      %v9210 = vmul.f32 %v9146, %v9146
      %v9211 = vmul.f32 %v9147, %v9147
      %v9212 = vmul.f32 %v9148, %v9148
      %v9213 = vmul.f32 %v9149, %v9149
      %v9214 = vmul.f32 %v9150, %v9150
      %v9215 = vmul.f32 %v9151, %v9151
      %v9216 = vmul.f32 %v9152, %v9152
      %v9217 = vmul.f32 %v9153, %v9153
      %v9218 = vmul.f32 %v9154, %v9154
      %v9219 = vmul.f32 %v9155, %v9155
      %v9220 = vmul.f32 %v9156, %v9156
      %v9221 = vmul.f32 %v9157, %v9157
      %v9222 = vmul.f32 %v9158, %v9158
      %v9223 = vmul.f32 %v9159, %v9159
      %v9224 = vmul.f32 %v9160, %v9160
      %v9225 = vmul.f32 %v9161, %v9161
      %v9226 = vmul.f32 %v9162, %v9162
      %v9227 = vmul.f32 %v9163, %v9163
      %v9228 = vmul.f32 %v9164, %v9164
      %v9229 = vmul.f32 %v9165, %v9165
      %v9230 = vmul.f32 %v9166, %v9166
      %v9231 = vmul.f32 %v9167, %v9167
      %v9232 = vmul.f32 %v9168, %v9168
      %v9233 = vmul.f32 %v9169, %v9169
      %v9234 = vmul.f32 %v9170, %v9170
      %v9235 = vmul.f32 %v9171, %v9171
      %v9236 = vmul.f32 %v9172, %v9172
      %v9237 = vmul.f32 %v9173, %v9173
      %v9238 = vmul.f32 %v9174, %v9174
      %v9239 = vmul.f32 %v9175, %v9175
      %v9240 = vmul.f32 %v9176, %v9176
      %v9241 = vmul.f32 %v9177, %v9177
      %v9242 = vmul.f32 %v9178, %v9178
      %v9243 = vmul.f32 %v9179, %v9179
      %v9244 = vmul.f32 %v9180, %v9180
      %v9245 = vmul.f32 %v9181, %v9181
      %v9246 = vmul.f32 %v9182, %v9182
      %v9247 = vmul.f32 %v9183, %v9183
      %v9248 = vmul.f32 %v9184, %v9184
      %v9249 = vmul.f32 %v9185, %v9185
      %v9250 = vmul.f32 %v9186, %v9186
      %v9251 = vmul.f32 %v9187, %v9187
      %v9252 = vmul.f32 %v9188, %v9188
      %v9253 = vmul.f32 %v9189, %v9189
      %v9254 = vmul.f32 %v9190, %v9190
      %v9255 = vmul.f32 %v9191, %v9191
      %v9256 = vmul.f32 %v9192, %v9192
      %v9257 = vmul.f32 %v9193, %v9193
      %v9258 = vmul.f32 %v9194, %v709
      %v9259 = vmul.f32 %v9195, %v710
      %v9260 = vmul.f32 %v9196, %v711
      %v9261 = vmul.f32 %v9197, %v712
      %v9262 = vmul.f32 %v9198, %v709
      %v9263 = vmul.f32 %v9199, %v710
      %v9264 = vmul.f32 %v9200, %v711
      %v9265 = vmul.f32 %v9201, %v712
      %v9266 = vmul.f32 %v9202, %v709
      %v9267 = vmul.f32 %v9203, %v710
      %v9268 = vmul.f32 %v9204, %v711
      %v9269 = vmul.f32 %v9205, %v712
      %v9270 = vmul.f32 %v9206, %v709
      %v9271 = vmul.f32 %v9207, %v710
      %v9272 = vmul.f32 %v9208, %v711
      %v9273 = vmul.f32 %v9209, %v712
      %v9274 = vmul.f32 %v9210, %v709
      %v9275 = vmul.f32 %v9211, %v710
      %v9276 = vmul.f32 %v9212, %v711
      %v9277 = vmul.f32 %v9213, %v712
      %v9278 = vmul.f32 %v9214, %v709
      %v9279 = vmul.f32 %v9215, %v710
      %v9280 = vmul.f32 %v9216, %v711
      %v9281 = vmul.f32 %v9217, %v712
      %v9282 = vmul.f32 %v9218, %v709
      %v9283 = vmul.f32 %v9219, %v710
      %v9284 = vmul.f32 %v9220, %v711
      %v9285 = vmul.f32 %v9221, %v712
      %v9286 = vmul.f32 %v9222, %v709
      %v9287 = vmul.f32 %v9223, %v710
      %v9288 = vmul.f32 %v9224, %v711
      %v9289 = vmul.f32 %v9225, %v712
      %v9290 = vmul.f32 %v9226, %v709
      %v9291 = vmul.f32 %v9227, %v710
      %v9292 = vmul.f32 %v9228, %v711
      %v9293 = vmul.f32 %v9229, %v712
      %v9294 = vmul.f32 %v9230, %v709
      %v9295 = vmul.f32 %v9231, %v710
      %v9296 = vmul.f32 %v9232, %v711
      %v9297 = vmul.f32 %v9233, %v712
      %v9298 = vmul.f32 %v9234, %v709
      %v9299 = vmul.f32 %v9235, %v710
      %v9300 = vmul.f32 %v9236, %v711
      %v9301 = vmul.f32 %v9237, %v712
      %v9302 = vmul.f32 %v9238, %v709
      %v9303 = vmul.f32 %v9239, %v710
      %v9304 = vmul.f32 %v9240, %v711
      %v9305 = vmul.f32 %v9241, %v712
      %v9306 = vmul.f32 %v9242, %v709
      %v9307 = vmul.f32 %v9243, %v710
      %v9308 = vmul.f32 %v9244, %v711
      %v9309 = vmul.f32 %v9245, %v712
      %v9310 = vmul.f32 %v9246, %v709
      %v9311 = vmul.f32 %v9247, %v710
      %v9312 = vmul.f32 %v9248, %v711
      %v9313 = vmul.f32 %v9249, %v712
      %v9314 = vmul.f32 %v9250, %v709
      %v9315 = vmul.f32 %v9251, %v710
      %v9316 = vmul.f32 %v9252, %v711
      %v9317 = vmul.f32 %v9253, %v712
      %v9318 = vmul.f32 %v9254, %v709
      %v9319 = vmul.f32 %v9255, %v710
      %v9320 = vmul.f32 %v9256, %v711
      %v9321 = vmul.f32 %v9257, %v712
      %9322 = vadd.xlane.f32.xlu0 %v9258
      %v9323 = vpop.xlane.xlu0 %9322
      %9324 = vadd.xlane.f32.xlu0 %v9259
      %v9325 = vpop.xlane.xlu0 %9324
      %9326 = vadd.xlane.f32.xlu0 %v9260
      %v9327 = vpop.xlane.xlu0 %9326
      %9328 = vadd.xlane.f32.xlu0 %v9261
      %v9329 = vpop.xlane.xlu0 %9328
      %9330 = vadd.xlane.f32.xlu0 %v9262
      %v9331 = vpop.xlane.xlu0 %9330
      %9332 = vadd.xlane.f32.xlu0 %v9263
      %v9333 = vpop.xlane.xlu0 %9332
      %9334 = vadd.xlane.f32.xlu0 %v9264
      %v9335 = vpop.xlane.xlu0 %9334
      %9336 = vadd.xlane.f32.xlu0 %v9265
      %v9337 = vpop.xlane.xlu0 %9336
      %9338 = vadd.xlane.f32.xlu0 %v9266
      %v9339 = vpop.xlane.xlu0 %9338
      %9340 = vadd.xlane.f32.xlu0 %v9267
      %v9341 = vpop.xlane.xlu0 %9340
      %9342 = vadd.xlane.f32.xlu0 %v9268
      %v9343 = vpop.xlane.xlu0 %9342
      %9344 = vadd.xlane.f32.xlu0 %v9269
      %v9345 = vpop.xlane.xlu0 %9344
      %9346 = vadd.xlane.f32.xlu0 %v9270
      %v9347 = vpop.xlane.xlu0 %9346
      %9348 = vadd.xlane.f32.xlu0 %v9271
      %v9349 = vpop.xlane.xlu0 %9348
      %9350 = vadd.xlane.f32.xlu0 %v9272
      %v9351 = vpop.xlane.xlu0 %9350
      %9352 = vadd.xlane.f32.xlu0 %v9273
      %v9353 = vpop.xlane.xlu0 %9352
      %9354 = vadd.xlane.f32.xlu0 %v9274
      %v9355 = vpop.xlane.xlu0 %9354
      %9356 = vadd.xlane.f32.xlu0 %v9275
      %v9357 = vpop.xlane.xlu0 %9356
      %9358 = vadd.xlane.f32.xlu0 %v9276
      %v9359 = vpop.xlane.xlu0 %9358
      %9360 = vadd.xlane.f32.xlu0 %v9277
      %v9361 = vpop.xlane.xlu0 %9360
      %9362 = vadd.xlane.f32.xlu0 %v9278
      %v9363 = vpop.xlane.xlu0 %9362
      %9364 = vadd.xlane.f32.xlu0 %v9279
      %v9365 = vpop.xlane.xlu0 %9364
      %9366 = vadd.xlane.f32.xlu0 %v9280
      %v9367 = vpop.xlane.xlu0 %9366
      %9368 = vadd.xlane.f32.xlu0 %v9281
      %v9369 = vpop.xlane.xlu0 %9368
      %9370 = vadd.xlane.f32.xlu0 %v9282
      %v9371 = vpop.xlane.xlu0 %9370
      %9372 = vadd.xlane.f32.xlu0 %v9283
      %v9373 = vpop.xlane.xlu0 %9372
      %9374 = vadd.xlane.f32.xlu0 %v9284
      %v9375 = vpop.xlane.xlu0 %9374
      %9376 = vadd.xlane.f32.xlu0 %v9285
      %v9377 = vpop.xlane.xlu0 %9376
      %9378 = vadd.xlane.f32.xlu0 %v9286
      %v9379 = vpop.xlane.xlu0 %9378
      %9380 = vadd.xlane.f32.xlu0 %v9287
      %v9381 = vpop.xlane.xlu0 %9380
      %9382 = vadd.xlane.f32.xlu0 %v9288
      %v9383 = vpop.xlane.xlu0 %9382
      %9384 = vadd.xlane.f32.xlu0 %v9289
      %v9385 = vpop.xlane.xlu0 %9384
      %9386 = vadd.xlane.f32.xlu0 %v9290
      %v9387 = vpop.xlane.xlu0 %9386
      %9388 = vadd.xlane.f32.xlu0 %v9291
      %v9389 = vpop.xlane.xlu0 %9388
      %9390 = vadd.xlane.f32.xlu0 %v9292
      %v9391 = vpop.xlane.xlu0 %9390
      %9392 = vadd.xlane.f32.xlu0 %v9293
      %v9393 = vpop.xlane.xlu0 %9392
      %9394 = vadd.xlane.f32.xlu0 %v9294
      %v9395 = vpop.xlane.xlu0 %9394
      %9396 = vadd.xlane.f32.xlu0 %v9295
      %v9397 = vpop.xlane.xlu0 %9396
      %9398 = vadd.xlane.f32.xlu0 %v9296
      %v9399 = vpop.xlane.xlu0 %9398
      %9400 = vadd.xlane.f32.xlu0 %v9297
      %v9401 = vpop.xlane.xlu0 %9400
      %9402 = vadd.xlane.f32.xlu0 %v9298
      %v9403 = vpop.xlane.xlu0 %9402
      %9404 = vadd.xlane.f32.xlu0 %v9299
      %v9405 = vpop.xlane.xlu0 %9404
      %9406 = vadd.xlane.f32.xlu0 %v9300
      %v9407 = vpop.xlane.xlu0 %9406
      %9408 = vadd.xlane.f32.xlu0 %v9301
      %v9409 = vpop.xlane.xlu0 %9408
      %9410 = vadd.xlane.f32.xlu0 %v9302
      %v9411 = vpop.xlane.xlu0 %9410
      %9412 = vadd.xlane.f32.xlu0 %v9303
      %v9413 = vpop.xlane.xlu0 %9412
      %9414 = vadd.xlane.f32.xlu0 %v9304
      %v9415 = vpop.xlane.xlu0 %9414
      %9416 = vadd.xlane.f32.xlu0 %v9305
      %v9417 = vpop.xlane.xlu0 %9416
      %9418 = vadd.xlane.f32.xlu0 %v9306
      %v9419 = vpop.xlane.xlu0 %9418
      %9420 = vadd.xlane.f32.xlu0 %v9307
      %v9421 = vpop.xlane.xlu0 %9420
      %9422 = vadd.xlane.f32.xlu0 %v9308
      %v9423 = vpop.xlane.xlu0 %9422
      %9424 = vadd.xlane.f32.xlu0 %v9309
      %v9425 = vpop.xlane.xlu0 %9424
      %9426 = vadd.xlane.f32.xlu0 %v9310
      %v9427 = vpop.xlane.xlu0 %9426
      %9428 = vadd.xlane.f32.xlu0 %v9311
      %v9429 = vpop.xlane.xlu0 %9428
      %9430 = vadd.xlane.f32.xlu0 %v9312
      %v9431 = vpop.xlane.xlu0 %9430
      %9432 = vadd.xlane.f32.xlu0 %v9313
      %v9433 = vpop.xlane.xlu0 %9432
      %9434 = vadd.xlane.f32.xlu0 %v9314
      %v9435 = vpop.xlane.xlu0 %9434
      %9436 = vadd.xlane.f32.xlu0 %v9315
      %v9437 = vpop.xlane.xlu0 %9436
      %9438 = vadd.xlane.f32.xlu0 %v9316
      %v9439 = vpop.xlane.xlu0 %9438
      %9440 = vadd.xlane.f32.xlu0 %v9317
      %v9441 = vpop.xlane.xlu0 %9440
      %9442 = vadd.xlane.f32.xlu0 %v9318
      %v9443 = vpop.xlane.xlu0 %9442
      %9444 = vadd.xlane.f32.xlu0 %v9319
      %v9445 = vpop.xlane.xlu0 %9444
      %9446 = vadd.xlane.f32.xlu0 %v9320
      %v9447 = vpop.xlane.xlu0 %9446
      %9448 = vadd.xlane.f32.xlu0 %v9321
      %v9449 = vpop.xlane.xlu0 %9448
      %v9450 = vadd.f32 %v9323, %v9325
      %v9451 = vadd.f32 %v9450, %v9327
      %v9452 = vadd.f32 %v9451, %v9329
      %v9453 = vadd.f32 %v9452, %v9331
      %v9454 = vadd.f32 %v9453, %v9333
      %v9455 = vadd.f32 %v9454, %v9335
      %v9456 = vadd.f32 %v9455, %v9337
      %v9457 = vadd.f32 %v9456, %v9339
      %v9458 = vadd.f32 %v9457, %v9341
      %v9459 = vadd.f32 %v9458, %v9343
      %v9460 = vadd.f32 %v9459, %v9345
      %v9461 = vadd.f32 %v9460, %v9347
      %v9462 = vadd.f32 %v9461, %v9349
      %v9463 = vadd.f32 %v9462, %v9351
      %v9464 = vadd.f32 %v9463, %v9353
      %v9465 = vadd.f32 %v9464, %v9355
      %v9466 = vadd.f32 %v9465, %v9357
      %v9467 = vadd.f32 %v9466, %v9359
      %v9468 = vadd.f32 %v9467, %v9361
      %v9469 = vadd.f32 %v9468, %v9363
      %v9470 = vadd.f32 %v9469, %v9365
      %v9471 = vadd.f32 %v9470, %v9367
      %v9472 = vadd.f32 %v9471, %v9369
      %v9473 = vadd.f32 %v9472, %v9371
      %v9474 = vadd.f32 %v9473, %v9373
      %v9475 = vadd.f32 %v9474, %v9375
      %v9476 = vadd.f32 %v9475, %v9377
      %v9477 = vadd.f32 %v9476, %v9379
      %v9478 = vadd.f32 %v9477, %v9381
      %v9479 = vadd.f32 %v9478, %v9383
      %v9480 = vadd.f32 %v9479, %v9385
      %v9481 = vadd.f32 %v9480, %v9387
      %v9482 = vadd.f32 %v9481, %v9389
      %v9483 = vadd.f32 %v9482, %v9391
      %v9484 = vadd.f32 %v9483, %v9393
      %v9485 = vadd.f32 %v9484, %v9395
      %v9486 = vadd.f32 %v9485, %v9397
      %v9487 = vadd.f32 %v9486, %v9399
      %v9488 = vadd.f32 %v9487, %v9401
      %v9489 = vadd.f32 %v9488, %v9403
      %v9490 = vadd.f32 %v9489, %v9405
      %v9491 = vadd.f32 %v9490, %v9407
      %v9492 = vadd.f32 %v9491, %v9409
      %v9493 = vadd.f32 %v9492, %v9411
      %v9494 = vadd.f32 %v9493, %v9413
      %v9495 = vadd.f32 %v9494, %v9415
      %v9496 = vadd.f32 %v9495, %v9417
      %v9497 = vadd.f32 %v9496, %v9419
      %v9498 = vadd.f32 %v9497, %v9421
      %v9499 = vadd.f32 %v9498, %v9423
      %v9500 = vadd.f32 %v9499, %v9425
      %v9501 = vadd.f32 %v9500, %v9427
      %v9502 = vadd.f32 %v9501, %v9429
      %v9503 = vadd.f32 %v9502, %v9431
      %v9504 = vadd.f32 %v9503, %v9433
      %v9505 = vadd.f32 %v9504, %v9435
      %v9506 = vadd.f32 %v9505, %v9437
      %v9507 = vadd.f32 %v9506, %v9439
      %v9508 = vadd.f32 %v9507, %v9441
      %v9509 = vadd.f32 %v9508, %v9443
      %v9510 = vadd.f32 %v9509, %v9445
      %v9511 = vadd.f32 %v9510, %v9447
      %v9512 = vadd.f32 %v9511, %v9449
      %v9513 = vrot.slane %v9512, 4
      %v9514 = vadd.f32 %v9512, %v9513
      %v9515 = vrot.slane %v9514, 2
      %v9516 = vadd.f32 %v9514, %v9515
      %v9517 = vrot.slane %v9516, 1
      %v9518 = vadd.f32 %v9516, %v9517
      %vm9519 = vcmask 0
      %9520 = vst.msk [vmem:[%s283] sm:$0x1] %vm9519, %v9518
      %s9521 = sadd.s32 %s21, %s22
      %p9522 = scmp.lt.s32.totalorder %s9521, 1
      %s9523 = scalar_select %p9522, %s9521, 1
      %s9524 = scalar_lea.vmem %s6, %s9523
      // Predicated region
      $region45: #{perceptual_loss.1} parent=43 // pred_check
        %p9525 = pneg %p185
      $region46: #{perceptual_loss.1} parent=43 // pred_check_branch
        %9527 = sbr.rel (%p9525) target = $region48
      $region47: #{perceptual_loss.1} parent=43 // pred_region
        %s9528 = sadd.s32 %s21, %s22
      $region48: #{perceptual_loss.1} parent=43 // pred_fallthru
        _
    $region44: #{perceptual_loss.1} parent=5 // pred_fallthru
      _
    %p9529 = scmp.le.s32.totalorder 2, %s12
    // Predicated region
    $region49: #{perceptual_loss.1} parent=5 // pred_check
      %p9530 = pneg %p9529
    $region50: #{perceptual_loss.1} parent=5 // pred_check_branch
      %9532 = sbr.rel (%p9530) target = $region52
    $region51: #{perceptual_loss.1} parent=5 // pred_region
      %s9533 = ssub.s32 %s12, 2
      // Predicated region
      $region53: #{perceptual_loss.1} parent=51 // pred_check
        %p9534 = pneg %p191
      $region54: #{perceptual_loss.1} parent=51 // pred_check_branch
        %9536 = sbr.rel (%p9534) target = $region56
      $region55: #{perceptual_loss.1} parent=51 // pred_region
        %s9537 = sadd.s32 %s23, %s24
        %p9538 = scmp.lt.s32.totalorder %s9537, 1
        %s9539 = scalar_select %p9538, %s9537, 1
        %s9540 = scalar_lea.vmem %s6, %s9539
      $region56: #{perceptual_loss.1} parent=51 // pred_fallthru
        _
    $region52: #{perceptual_loss.1} parent=5 // pred_fallthru
      _
  $region6: #{perceptual_loss.1} parent=0 // loop_footer
    %s16 = sadd.s32 1, %s12
  $region7: #{perceptual_loss.1} parent=0 // loop_footer_branch
    %11 = sbr.rel target = $region3
  $region8: #{perceptual_loss.1} parent=0 // loop_exit
    _

</llo_original>
